<compile_context>
chip_gen: v5e
topology: v5e:2x2
jax: 0.10.0
libtpu: 0.0.40
codegen_flags: <defaults>
</compile_context>

<pallas_src>
import jax
import jax.numpy as jnp
from jax import lax
from jax.experimental import pallas as pl
from jax.experimental.pallas import tpu as pltpu

CFG = {
    'VGG11': [64, 'M', 128, 'M', 256, 256, 'M', 512, 512, 'M', 512, 512, 'M'],
    'VGG13': [64, 64, 'M', 128, 128, 'M', 256, 256, 'M', 512, 512, 'M', 512, 512, 'M'],
    'VGG16': [64, 64, 'M', 128, 128, 'M', 256, 256, 256, 'M', 512, 512, 512, 'M', 512, 512, 512],
    'Custom': [512, 'M', 512, 256, 256, 'M', 64, 512, 128, 'M', 512, 64, 128, 64, 64],
    'Custom_3': [512, 'M', 512, 512, 32, 'M', 256, 16, 512, 'M', 128, 64, 64, 16, 256],
    'SNN_1': [64, 64, 'M', 64, 512, 'M', 128, 256, 64, 'M', 64, 128, 512, 'M', 256, 64, 512],
    'SNN_2': [64, 128, 'M', 64, 64, 'M', 512, 128, 64, 'M', 64, 256, 64, 'M', 256, 64, 512],
    'SNN_3': [128, 128, 'M', 64, 64, 'M', 128, 256, 128, 'M', 512, 256, 64, 'M', 512, 128, 256],
    'VGG19': [64, 64, 'M', 128, 128, 'M', 256, 256, 256, 256, 'M', 512, 512, 512, 512, 'M',
              512, 512, 512, 512, 'M'],
}


# ----------------------------------------------------------------------------
# Pallas kernels
# ----------------------------------------------------------------------------
def _make_conv_kernel(H, W, Cin, Cout, pool):
    """Fused 3x3 conv (pad=1) + BN(eval) + ReLU [+ 2x2/2 maxpool] for one batch elem.

    x_ref : (1, 3, (H+2)*W, Cin) bf16  -- dx-shifted, zero-padded, row-flattened input
    w_ref : (9, Cin, Cout)       bf16  -- taps ordered (ky, kx)
    s_ref : (1, Cout) f32, b_ref: (1, Cout) f32  -- folded BN scale / bias
    o_ref : (1, M_out, Cout) bf16 with M_out = H*W (no pool) or H*W/4 (pooled)
    scr_ref (pool only): (H*W, Cout) f32 scratch holding the pre-pool activation.
    """
    M = H * W
    MB = 256 if (M > 256 and M % 256 == 0) else M   # row chunk to keep acc small
    nchunk = M // MB

    def body(x_ref, w_ref, s_ref, b_ref, o_ref, scr_ref):
        scale = s_ref[...]                 # (1, Cout) f32
        bias = b_ref[...]
        for c in range(nchunk):            # static, unrolled
            m0 = c * MB
            acc = None
            for ky in range(3):
                for kx in range(3):
                    # tap (ky, kx): rows [m0 + ky*W, m0 + ky*W + MB) of plane kx
                    sl = x_ref[0, kx, pl.ds(m0 + ky * W, MB), :]          # (MB, Cin) bf16
                    d = jnp.dot(sl, w_ref[ky * 3 + kx],
                                preferred_element_type=jnp.float32)        # (MB, Cout) f32
                    acc = d if acc is None else acc + d
            act = jnp.maximum(acc * scale + bias, 0.0)                      # BN + ReLU, f32
            if pool:
                scr_ref[pl.ds(m0, MB), :] = act
            else:
                o_ref[0, pl.ds(m0, MB), :] = act.astype(o_ref.dtype)

        if pool:
            # Fused MaxPool2d(kernel=2, stride=2) on the (M, Cout) activation held
            # in scratch (row m = h*W + w).  Column decimation is done with tiny
            # 0/1 selection matmuls -> no strided or reshaped vector ops needed.
            Ho, Wo = H // 2, W // 2
            rr = lax.broadcasted_iota(jnp.int32, (Wo, W), 0)
            cc = lax.broadcasted_iota(jnp.int32, (Wo, W), 1)
            sel_even = (cc == 2 * rr).astype(jnp.float32)                   # (Wo, W)
            sel_odd = (cc == 2 * rr + 1).astype(jnp.float32)
            for i in range(Ho):            # static, unrolled (Ho <= 16)
                ra = scr_ref[pl.ds((2 * i) * W, W), :]                      # row 2i
                rb = scr_ref[pl.ds((2 * i + 1) * W, W), :]                  # row 2i+1
                hm = jnp.maximum(ra, rb)                                    # (W, Cout)
                pooled = jnp.maximum(
                    jnp.dot(sel_even, hm, preferred_element_type=jnp.float32),
                    jnp.dot(sel_odd, hm, preferred_element_type=jnp.float32))
                o_ref[0, pl.ds(i * Wo, Wo), :] = pooled.astype(o_ref.dtype)

    if pool:
        def kernel(x_ref, w_ref, s_ref, b_ref, o_ref, scr_ref):
            body(x_ref, w_ref, s_ref, b_ref, o_ref, scr_ref)
    else:
        def kernel(x_ref, w_ref, s_ref, b_ref, o_ref):
            body(x_ref, w_ref, s_ref, b_ref, o_ref, None)
    return kernel


def _head_kernel(x_ref, w_ref, b_ref, o_ref):
    # x_ref: (N, 4, C) bf16  -- last conv output, 2x2 spatial flattened
    # AvgPool2d(2, stride=1) on a 2x2 map == mean of the 4 positions -> (N, C);
    # spatial is 1x1 so torch's NCHW flatten order is just the channel vector.
    x0 = x_ref[:, 0, :].astype(jnp.float32)
    x1 = x_ref[:, 1, :].astype(jnp.float32)
    x2 = x_ref[:, 2, :].astype(jnp.float32)
    x3 = x_ref[:, 3, :].astype(jnp.float32)
    feat = (x0 + x1 + x2 + x3) * 0.25                                       # (N, C) f32
    o_ref[...] = (jnp.dot(feat, w_ref[...], preferred_element_type=jnp.float32)
                  + b_ref[...])


# ----------------------------------------------------------------------------
# Wrappers (cheap glue in plain JAX; hot path in Pallas)
# ----------------------------------------------------------------------------
def conv_bn_relu_maxpool(x_flat, H, W, w9, scale, bias, pool):
    """x_flat: (N, H*W, Cin) bf16 (row-major NHWC) -> (N, M_out, Cout) bf16."""
    N, M, Cin = x_flat.shape
    assert M == H * W
    Cout = w9.shape[-1]
    dt = x_flat.dtype

    # Build 3 column-shifted (dx = -1, 0, +1), zero-padded copies; pad H by 1 row
    # top/bottom and flatten spatial.  ~3x activation size instead of 9x im2col.
    x4 = x_flat.reshape(N, H, W, Cin)
    zcol = jnp.zeros((N, H, 1, Cin), dt)
    left = jnp.concatenate([zcol, x4[:, :, :W - 1, :]], axis=2)   # [h, w] = x[h, w-1]
    right = jnp.concatenate([x4[:, :, 1:, :], zcol], axis=2)      # [h, w] = x[h, w+1]
    planes = jnp.stack([left, x4, right], axis=1)                 # (N, 3, H, W, Cin)
    zrow = jnp.zeros((N, 3, 1, W, Cin), dt)
    padded = jnp.concatenate([zrow, planes, zrow], axis=2)        # (N, 3, H+2, W, Cin)
    L = (H + 2) * W
    xin = padded.reshape(N, 3, L, Cin)

    M_out = M // 4 if pool else M
    kernel = _make_conv_kernel(H, W, Cin, Cout, pool)
    scratch = [pltpu.VMEM((M, Cout), jnp.float32)] if pool else []

    out = pl.pallas_call(
        kernel,
        grid=(N,),
        in_specs=[
            pl.BlockSpec((1, 3, L, Cin), lambda n: (n, 0, 0, 0)),
            pl.BlockSpec((9, Cin, Cout), lambda n: (0, 0, 0)),
            pl.BlockSpec((1, Cout), lambda n: (0, 0)),
            pl.BlockSpec((1, Cout), lambda n: (0, 0)),
        ],
        out_specs=pl.BlockSpec((1, M_out, Cout), lambda n: (n, 0, 0)),
        out_shape=jax.ShapeDtypeStruct((N, M_out, Cout), jnp.bfloat16),
        scratch_shapes=scratch,
        compiler_params=pltpu.CompilerParams(
            dimension_semantics=("parallel",),
            vmem_limit_bytes=32 * 1024 * 1024),
    )(xin, w9, scale.reshape(1, Cout), bias.reshape(1, Cout))
    return out


def head_avgpool_flatten_linear(x_flat, fc_w, fc_b):
    """x_flat: (N, 4, 256) bf16 -> logits (N, 10) f32 (avgpool + flatten + linear)."""
    N = x_flat.shape[0]
    return pl.pallas_call(
        _head_kernel,
        out_shape=jax.ShapeDtypeStruct((N, 10), jnp.float32),
    )(x_flat, fc_w, fc_b.reshape(1, 10))


# ----------------------------------------------------------------------------
# Parameter init (deterministic, synthetic) and forward pass
# ----------------------------------------------------------------------------
def init_params(cfg_name, key):
    layers = []
    in_ch = 3
    eps = 1e-5
    for v in CFG[cfg_name]:
        if v == 'M':
            layers.append(('maxpool', None))
            continue
        key, k1, k2, k3, k4, k5, k6 = jax.random.split(key, 7)
        w = jax.random.normal(k1, (3, 3, in_ch, v), jnp.float32) * jnp.sqrt(2.0 / (9.0 * in_ch))
        conv_b = 0.01 * jax.random.normal(k2, (v,), jnp.float32)
        gamma = 1.0 + 0.1 * jax.random.normal(k3, (v,), jnp.float32)
        beta = 0.1 * jax.random.normal(k4, (v,), jnp.float32)
        run_mean = 0.1 * jax.random.normal(k5, (v,), jnp.float32)
        run_var = 1.0 + 0.1 * jax.random.uniform(k6, (v,), jnp.float32)
        # Fold eval-mode BN (and conv bias) into per-channel scale / bias.
        scale = gamma / jnp.sqrt(run_var + eps)
        bias = beta + (conv_b - run_mean) * scale
        w9 = w.reshape(9, in_ch, v).astype(jnp.bfloat16)   # taps ordered (ky, kx)
        layers.append(('conv', (w9, scale, bias)))
        in_ch = v
    key, kw, kb = jax.random.split(key, 3)
    fc_w = jax.random.normal(kw, (256, 10), jnp.float32) / jnp.sqrt(256.0)
    fc_b = 0.01 * jax.random.normal(kb, (10,), jnp.float32)
    return layers, (fc_w, fc_b)


def vgg_soft_forward(x_nchw, layers, fc):
    x = jnp.transpose(x_nchw, (0, 2, 3, 1)).astype(jnp.bfloat16)   # NCHW -> NHWC, bf16
    N, H, W, C = x.shape
    x = x.reshape(N, H * W, C)                                     # flat row-major spatial
    i = 0
    while i < len(layers):
        kind, p = layers[i]
        if kind != 'conv':
            raise ValueError("unexpected standalone maxpool in cfg")
        # Fuse a following MaxPool2d(2,2) into the conv kernel's epilogue.
        pool = (i + 1 < len(layers)) and (layers[i + 1][0] == 'maxpool')
        w9, scale, bias = p
        x = conv_bn_relu_maxpool(x, H, W, w9, scale, bias, pool)
        C = w9.shape[-1]
        if pool:
            H //= 2
            W //= 2
            i += 2
        else:
            i += 1
    # Fused head: AvgPool2d(2, stride=1) on the 2x2 map + flatten + Linear(256, 10).
    assert H == 2 and W == 2 and C == 256 and x.shape == (N, 4, 256), x.shape
    return head_avgpool_flatten_linear(x, fc[0], fc[1])


if __name__ == "__main__":
    key = jax.random.PRNGKey(0)
    pkey, xkey = jax.random.split(key)
    layers, fc = init_params('SNN_3', pkey)
    # Input matches the PyTorch module's NCHW convention; 32x32 is required so that
    # the flattened feature size equals the classifier's in_features (256).
    x = jax.random.normal(xkey, (2, 3, 32, 32), jnp.float32)
    out = vgg_soft_forward(x, layers, fc)
    out = jax.block_until_ready(out)
    assert out.shape == (2, 10) and out.dtype == jnp.float32
    print("KERNEL_OK")
</pallas_src>

<mosaic_0001>
module attributes {stable_mosaic.version = 11 : i64} {
  func.func @kernel(%arg0: i32, %arg1: memref<1x3x1088x3xbf16, #tpu.memory_space<vmem>>, %arg2: memref<9x3x128xbf16, #tpu.memory_space<vmem>>, %arg3: memref<1x128xf32, #tpu.memory_space<vmem>>, %arg4: memref<1x128xf32, #tpu.memory_space<vmem>>, %arg5: memref<1x1024x128xbf16, #tpu.memory_space<vmem>>) attributes {dimension_semantics = [#tpu.dimension_semantics<parallel>], iteration_bounds = array<i64: 2>, scalar_prefetch = 0 : i64, scratch_operands = 0 : i64, tpu.core_type = #tpu.core_type<tc>, window_params = [{transform_indices = @transform_0, window_bounds = array<i64: 1, 3, 1088, 3>}, {pipeline_mode = #tpu.pipeline_mode<synchronous>, transform_indices = @transform_1, window_bounds = array<i64: 9, 3, 128>}, {pipeline_mode = #tpu.pipeline_mode<synchronous>, transform_indices = @transform_2, window_bounds = array<i64: 1, 128>}, {pipeline_mode = #tpu.pipeline_mode<synchronous>, transform_indices = @transform_3, window_bounds = array<i64: 1, 128>}, {transform_indices = @transform_4, window_bounds = array<i64: 1, 1024, 128>}]} {
    %c0 = arith.constant 0 : index
    %c0_0 = arith.constant 0 : index
    %0 = vector.load %arg3[%c0, %c0_0] : memref<1x128xf32, #tpu.memory_space<vmem>>, vector<1x128xf32>
    %c0_1 = arith.constant 0 : index
    %c0_2 = arith.constant 0 : index
    %1 = vector.load %arg4[%c0_1, %c0_2] : memref<1x128xf32, #tpu.memory_space<vmem>>, vector<1x128xf32>
    %c0_3 = arith.constant 0 : index
    %c0_4 = arith.constant 0 : index
    %c0_5 = arith.constant 0 : index
    %c0_6 = arith.constant 0 : index
    %2 = vector.load %arg1[%c0_3, %c0_4, %c0_5, %c0_6] : memref<1x3x1088x3xbf16, #tpu.memory_space<vmem>>, vector<1x1x256x3xbf16>
    %3 = vector.shape_cast %2 : vector<1x1x256x3xbf16> to vector<256x3xbf16>
    %c0_7 = arith.constant 0 : index
    %c0_8 = arith.constant 0 : index
    %c0_9 = arith.constant 0 : index
    %4 = vector.load %arg2[%c0_7, %c0_8, %c0_9] : memref<9x3x128xbf16, #tpu.memory_space<vmem>>, vector<1x3x128xbf16>
    %5 = vector.shape_cast %4 : vector<1x3x128xbf16> to vector<3x128xbf16>
    %cst = arith.constant dense<0.000000e+00> : vector<256x128xf32>
    %6 = tpu.matmul %3, %5, %cst {dimension_numbers = #tpu.dot_dimension_numbers<[1], [0], [0], [1], [0, 0, 1, 1], [], []>} : vector<256x3xbf16>, vector<3x128xbf16>, vector<256x128xf32> -> vector<256x128xf32>
    %c0_10 = arith.constant 0 : index
    %c1 = arith.constant 1 : index
    %c0_11 = arith.constant 0 : index
    %c0_12 = arith.constant 0 : index
    %7 = vector.load %arg1[%c0_10, %c1, %c0_11, %c0_12] : memref<1x3x1088x3xbf16, #tpu.memory_space<vmem>>, vector<1x1x256x3xbf16>
    %8 = vector.shape_cast %7 : vector<1x1x256x3xbf16> to vector<256x3xbf16>
    %c1_13 = arith.constant 1 : index
    %c0_14 = arith.constant 0 : index
    %c0_15 = arith.constant 0 : index
    %9 = vector.load %arg2[%c1_13, %c0_14, %c0_15] : memref<9x3x128xbf16, #tpu.memory_space<vmem>>, vector<1x3x128xbf16>
    %10 = vector.shape_cast %9 : vector<1x3x128xbf16> to vector<3x128xbf16>
    %cst_16 = arith.constant dense<0.000000e+00> : vector<256x128xf32>
    %11 = tpu.matmul %8, %10, %cst_16 {dimension_numbers = #tpu.dot_dimension_numbers<[1], [0], [0], [1], [0, 0, 1, 1], [], []>} : vector<256x3xbf16>, vector<3x128xbf16>, vector<256x128xf32> -> vector<256x128xf32>
    %12 = arith.addf %6, %11 : vector<256x128xf32>
    %c0_17 = arith.constant 0 : index
    %c2 = arith.constant 2 : index
    %c0_18 = arith.constant 0 : index
    %c0_19 = arith.constant 0 : index
    %13 = vector.load %arg1[%c0_17, %c2, %c0_18, %c0_19] : memref<1x3x1088x3xbf16, #tpu.memory_space<vmem>>, vector<1x1x256x3xbf16>
    %14 = vector.shape_cast %13 : vector<1x1x256x3xbf16> to vector<256x3xbf16>
    %c2_20 = arith.constant 2 : index
    %c0_21 = arith.constant 0 : index
    %c0_22 = arith.constant 0 : index
    %15 = vector.load %arg2[%c2_20, %c0_21, %c0_22] : memref<9x3x128xbf16, #tpu.memory_space<vmem>>, vector<1x3x128xbf16>
    %16 = vector.shape_cast %15 : vector<1x3x128xbf16> to vector<3x128xbf16>
    %cst_23 = arith.constant dense<0.000000e+00> : vector<256x128xf32>
    %17 = tpu.matmul %14, %16, %cst_23 {dimension_numbers = #tpu.dot_dimension_numbers<[1], [0], [0], [1], [0, 0, 1, 1], [], []>} : vector<256x3xbf16>, vector<3x128xbf16>, vector<256x128xf32> -> vector<256x128xf32>
    %18 = arith.addf %12, %17 : vector<256x128xf32>
    %c0_24 = arith.constant 0 : index
    %c0_25 = arith.constant 0 : index
    %c32 = arith.constant 32 : index
    %c0_26 = arith.constant 0 : index
    %19 = vector.load %arg1[%c0_24, %c0_25, %c32, %c0_26] : memref<1x3x1088x3xbf16, #tpu.memory_space<vmem>>, vector<1x1x256x3xbf16>
    %20 = vector.shape_cast %19 : vector<1x1x256x3xbf16> to vector<256x3xbf16>
    %c3 = arith.constant 3 : index
    %c0_27 = arith.constant 0 : index
    %c0_28 = arith.constant 0 : index
    %21 = vector.load %arg2[%c3, %c0_27, %c0_28] : memref<9x3x128xbf16, #tpu.memory_space<vmem>>, vector<1x3x128xbf16>
    %22 = vector.shape_cast %21 : vector<1x3x128xbf16> to vector<3x128xbf16>
    %cst_29 = arith.constant dense<0.000000e+00> : vector<256x128xf32>
    %23 = tpu.matmul %20, %22, %cst_29 {dimension_numbers = #tpu.dot_dimension_numbers<[1], [0], [0], [1], [0, 0, 1, 1], [], []>} : vector<256x3xbf16>, vector<3x128xbf16>, vector<256x128xf32> -> vector<256x128xf32>
    %24 = arith.addf %18, %23 : vector<256x128xf32>
    %c0_30 = arith.constant 0 : index
    %c1_31 = arith.constant 1 : index
    %c32_32 = arith.constant 32 : index
    %c0_33 = arith.constant 0 : index
    %25 = vector.load %arg1[%c0_30, %c1_31, %c32_32, %c0_33] : memref<1x3x1088x3xbf16, #tpu.memory_space<vmem>>, vector<1x1x256x3xbf16>
    %26 = vector.shape_cast %25 : vector<1x1x256x3xbf16> to vector<256x3xbf16>
    %c4 = arith.constant 4 : index
    %c0_34 = arith.constant 0 : index
    %c0_35 = arith.constant 0 : index
    %27 = vector.load %arg2[%c4, %c0_34, %c0_35] : memref<9x3x128xbf16, #tpu.memory_space<vmem>>, vector<1x3x128xbf16>
    %28 = vector.shape_cast %27 : vector<1x3x128xbf16> to vector<3x128xbf16>
    %cst_36 = arith.constant dense<0.000000e+00> : vector<256x128xf32>
    %29 = tpu.matmul %26, %28, %cst_36 {dimension_numbers = #tpu.dot_dimension_numbers<[1], [0], [0], [1], [0, 0, 1, 1], [], []>} : vector<256x3xbf16>, vector<3x128xbf16>, vector<256x128xf32> -> vector<256x128xf32>
    %30 = arith.addf %24, %29 : vector<256x128xf32>
    %c0_37 = arith.constant 0 : index
    %c2_38 = arith.constant 2 : index
    %c32_39 = arith.constant 32 : index
    %c0_40 = arith.constant 0 : index
    %31 = vector.load %arg1[%c0_37, %c2_38, %c32_39, %c0_40] : memref<1x3x1088x3xbf16, #tpu.memory_space<vmem>>, vector<1x1x256x3xbf16>
    %32 = vector.shape_cast %31 : vector<1x1x256x3xbf16> to vector<256x3xbf16>
    %c5 = arith.constant 5 : index
    %c0_41 = arith.constant 0 : index
    %c0_42 = arith.constant 0 : index
    %33 = vector.load %arg2[%c5, %c0_41, %c0_42] : memref<9x3x128xbf16, #tpu.memory_space<vmem>>, vector<1x3x128xbf16>
    %34 = vector.shape_cast %33 : vector<1x3x128xbf16> to vector<3x128xbf16>
    %cst_43 = arith.constant dense<0.000000e+00> : vector<256x128xf32>
    %35 = tpu.matmul %32, %34, %cst_43 {dimension_numbers = #tpu.dot_dimension_numbers<[1], [0], [0], [1], [0, 0, 1, 1], [], []>} : vector<256x3xbf16>, vector<3x128xbf16>, vector<256x128xf32> -> vector<256x128xf32>
    %36 = arith.addf %30, %35 : vector<256x128xf32>
    %c0_44 = arith.constant 0 : index
    %c0_45 = arith.constant 0 : index
    %c64 = arith.constant 64 : index
    %c0_46 = arith.constant 0 : index
    %37 = vector.load %arg1[%c0_44, %c0_45, %c64, %c0_46] : memref<1x3x1088x3xbf16, #tpu.memory_space<vmem>>, vector<1x1x256x3xbf16>
    %38 = vector.shape_cast %37 : vector<1x1x256x3xbf16> to vector<256x3xbf16>
    %c6 = arith.constant 6 : index
    %c0_47 = arith.constant 0 : index
    %c0_48 = arith.constant 0 : index
    %39 = vector.load %arg2[%c6, %c0_47, %c0_48] : memref<9x3x128xbf16, #tpu.memory_space<vmem>>, vector<1x3x128xbf16>
    %40 = vector.shape_cast %39 : vector<1x3x128xbf16> to vector<3x128xbf16>
    %cst_49 = arith.constant dense<0.000000e+00> : vector<256x128xf32>
    %41 = tpu.matmul %38, %40, %cst_49 {dimension_numbers = #tpu.dot_dimension_numbers<[1], [0], [0], [1], [0, 0, 1, 1], [], []>} : vector<256x3xbf16>, vector<3x128xbf16>, vector<256x128xf32> -> vector<256x128xf32>
    %42 = arith.addf %36, %41 : vector<256x128xf32>
    %c0_50 = arith.constant 0 : index
    %c1_51 = arith.constant 1 : index
    %c64_52 = arith.constant 64 : index
    %c0_53 = arith.constant 0 : index
    %43 = vector.load %arg1[%c0_50, %c1_51, %c64_52, %c0_53] : memref<1x3x1088x3xbf16, #tpu.memory_space<vmem>>, vector<1x1x256x3xbf16>
    %44 = vector.shape_cast %43 : vector<1x1x256x3xbf16> to vector<256x3xbf16>
    %c7 = arith.constant 7 : index
    %c0_54 = arith.constant 0 : index
    %c0_55 = arith.constant 0 : index
    %45 = vector.load %arg2[%c7, %c0_54, %c0_55] : memref<9x3x128xbf16, #tpu.memory_space<vmem>>, vector<1x3x128xbf16>
    %46 = vector.shape_cast %45 : vector<1x3x128xbf16> to vector<3x128xbf16>
    %cst_56 = arith.constant dense<0.000000e+00> : vector<256x128xf32>
    %47 = tpu.matmul %44, %46, %cst_56 {dimension_numbers = #tpu.dot_dimension_numbers<[1], [0], [0], [1], [0, 0, 1, 1], [], []>} : vector<256x3xbf16>, vector<3x128xbf16>, vector<256x128xf32> -> vector<256x128xf32>
    %48 = arith.addf %42, %47 : vector<256x128xf32>
    %c0_57 = arith.constant 0 : index
    %c2_58 = arith.constant 2 : index
    %c64_59 = arith.constant 64 : index
    %c0_60 = arith.constant 0 : index
    %49 = vector.load %arg1[%c0_57, %c2_58, %c64_59, %c0_60] : memref<1x3x1088x3xbf16, #tpu.memory_space<vmem>>, vector<1x1x256x3xbf16>
    %50 = vector.shape_cast %49 : vector<1x1x256x3xbf16> to vector<256x3xbf16>
    %c8 = arith.constant 8 : index
    %c0_61 = arith.constant 0 : index
    %c0_62 = arith.constant 0 : index
    %51 = vector.load %arg2[%c8, %c0_61, %c0_62] : memref<9x3x128xbf16, #tpu.memory_space<vmem>>, vector<1x3x128xbf16>
    %52 = vector.shape_cast %51 : vector<1x3x128xbf16> to vector<3x128xbf16>
    %cst_63 = arith.constant dense<0.000000e+00> : vector<256x128xf32>
    %53 = tpu.matmul %50, %52, %cst_63 {dimension_numbers = #tpu.dot_dimension_numbers<[1], [0], [0], [1], [0, 0, 1, 1], [], []>} : vector<256x3xbf16>, vector<3x128xbf16>, vector<256x128xf32> -> vector<256x128xf32>
    %54 = arith.addf %48, %53 : vector<256x128xf32>
    %55 = vector.broadcast %0 : vector<1x128xf32> to vector<256x128xf32>
    %56 = arith.mulf %54, %55 : vector<256x128xf32>
    %57 = vector.broadcast %1 : vector<1x128xf32> to vector<256x128xf32>
    %58 = arith.addf %56, %57 : vector<256x128xf32>
    %cst_64 = arith.constant 0.000000e+00 : f32
    %59 = vector.broadcast %cst_64 : f32 to vector<256x128xf32>
    %60 = arith.maximumf %58, %59 : vector<256x128xf32>
    %61 = arith.truncf %60 : vector<256x128xf32> to vector<256x128xbf16>
    %c0_65 = arith.constant 0 : index
    %c0_66 = arith.constant 0 : index
    %c0_67 = arith.constant 0 : index
    %62 = vector.load %arg5[%c0_65, %c0_66, %c0_67] : memref<1x1024x128xbf16, #tpu.memory_space<vmem>>, vector<1x256x128xbf16>
    %63 = vector.shape_cast %62 : vector<1x256x128xbf16> to vector<256x128xbf16>
    %64 = vector.shape_cast %61 : vector<256x128xbf16> to vector<1x256x128xbf16>
    tpu.vector_store %arg5[%c0_65, %c0_66, %c0_67], %64 {strides = array<i32>} : memref<1x1024x128xbf16, #tpu.memory_space<vmem>>, vector<1x256x128xbf16>,
    %c0_68 = arith.constant 0 : index
    %c0_69 = arith.constant 0 : index
    %c256 = arith.constant 256 : index
    %c0_70 = arith.constant 0 : index
    %65 = vector.load %arg1[%c0_68, %c0_69, %c256, %c0_70] : memref<1x3x1088x3xbf16, #tpu.memory_space<vmem>>, vector<1x1x256x3xbf16>
    %66 = vector.shape_cast %65 : vector<1x1x256x3xbf16> to vector<256x3xbf16>
    %c0_71 = arith.constant 0 : index
    %c0_72 = arith.constant 0 : index
    %c0_73 = arith.constant 0 : index
    %67 = vector.load %arg2[%c0_71, %c0_72, %c0_73] : memref<9x3x128xbf16, #tpu.memory_space<vmem>>, vector<1x3x128xbf16>
    %68 = vector.shape_cast %67 : vector<1x3x128xbf16> to vector<3x128xbf16>
    %cst_74 = arith.constant dense<0.000000e+00> : vector<256x128xf32>
    %69 = tpu.matmul %66, %68, %cst_74 {dimension_numbers = #tpu.dot_dimension_numbers<[1], [0], [0], [1], [0, 0, 1, 1], [], []>} : vector<256x3xbf16>, vector<3x128xbf16>, vector<256x128xf32> -> vector<256x128xf32>
    %c0_75 = arith.constant 0 : index
    %c1_76 = arith.constant 1 : index
    %c256_77 = arith.constant 256 : index
    %c0_78 = arith.constant 0 : index
    %70 = vector.load %arg1[%c0_75, %c1_76, %c256_77, %c0_78] : memref<1x3x1088x3xbf16, #tpu.memory_space<vmem>>, vector<1x1x256x3xbf16>
    %71 = vector.shape_cast %70 : vector<1x1x256x3xbf16> to vector<256x3xbf16>
    %c1_79 = arith.constant 1 : index
    %c0_80 = arith.constant 0 : index
    %c0_81 = arith.constant 0 : index
    %72 = vector.load %arg2[%c1_79, %c0_80, %c0_81] : memref<9x3x128xbf16, #tpu.memory_space<vmem>>, vector<1x3x128xbf16>
    %73 = vector.shape_cast %72 : vector<1x3x128xbf16> to vector<3x128xbf16>
    %cst_82 = arith.constant dense<0.000000e+00> : vector<256x128xf32>
    %74 = tpu.matmul %71, %73, %cst_82 {dimension_numbers = #tpu.dot_dimension_numbers<[1], [0], [0], [1], [0, 0, 1, 1], [], []>} : vector<256x3xbf16>, vector<3x128xbf16>, vector<256x128xf32> -> vector<256x128xf32>
    %75 = arith.addf %69, %74 : vector<256x128xf32>
    %c0_83 = arith.constant 0 : index
    %c2_84 = arith.constant 2 : index
    %c256_85 = arith.constant 256 : index
    %c0_86 = arith.constant 0 : index
    %76 = vector.load %arg1[%c0_83, %c2_84, %c256_85, %c0_86] : memref<1x3x1088x3xbf16, #tpu.memory_space<vmem>>, vector<1x1x256x3xbf16>
    %77 = vector.shape_cast %76 : vector<1x1x256x3xbf16> to vector<256x3xbf16>
    %c2_87 = arith.constant 2 : index
    %c0_88 = arith.constant 0 : index
    %c0_89 = arith.constant 0 : index
    %78 = vector.load %arg2[%c2_87, %c0_88, %c0_89] : memref<9x3x128xbf16, #tpu.memory_space<vmem>>, vector<1x3x128xbf16>
    %79 = vector.shape_cast %78 : vector<1x3x128xbf16> to vector<3x128xbf16>
    %cst_90 = arith.constant dense<0.000000e+00> : vector<256x128xf32>
    %80 = tpu.matmul %77, %79, %cst_90 {dimension_numbers = #tpu.dot_dimension_numbers<[1], [0], [0], [1], [0, 0, 1, 1], [], []>} : vector<256x3xbf16>, vector<3x128xbf16>, vector<256x128xf32> -> vector<256x128xf32>
    %81 = arith.addf %75, %80 : vector<256x128xf32>
    %c0_91 = arith.constant 0 : index
    %c0_92 = arith.constant 0 : index
    %c288 = arith.constant 288 : index
    %c0_93 = arith.constant 0 : index
    %82 = vector.load %arg1[%c0_91, %c0_92, %c288, %c0_93] : memref<1x3x1088x3xbf16, #tpu.memory_space<vmem>>, vector<1x1x256x3xbf16>
    %83 = vector.shape_cast %82 : vector<1x1x256x3xbf16> to vector<256x3xbf16>
    %c3_94 = arith.constant 3 : index
    %c0_95 = arith.constant 0 : index
    %c0_96 = arith.constant 0 : index
    %84 = vector.load %arg2[%c3_94, %c0_95, %c0_96] : memref<9x3x128xbf16, #tpu.memory_space<vmem>>, vector<1x3x128xbf16>
    %85 = vector.shape_cast %84 : vector<1x3x128xbf16> to vector<3x128xbf16>
    %cst_97 = arith.constant dense<0.000000e+00> : vector<256x128xf32>
    %86 = tpu.matmul %83, %85, %cst_97 {dimension_numbers = #tpu.dot_dimension_numbers<[1], [0], [0], [1], [0, 0, 1, 1], [], []>} : vector<256x3xbf16>, vector<3x128xbf16>, vector<256x128xf32> -> vector<256x128xf32>
    %87 = arith.addf %81, %86 : vector<256x128xf32>
    %c0_98 = arith.constant 0 : index
    %c1_99 = arith.constant 1 : index
    %c288_100 = arith.constant 288 : index
    %c0_101 = arith.constant 0 : index
    %88 = vector.load %arg1[%c0_98, %c1_99, %c288_100, %c0_101] : memref<1x3x1088x3xbf16, #tpu.memory_space<vmem>>, vector<1x1x256x3xbf16>
    %89 = vector.shape_cast %88 : vector<1x1x256x3xbf16> to vector<256x3xbf16>
    %c4_102 = arith.constant 4 : index
    %c0_103 = arith.constant 0 : index
    %c0_104 = arith.constant 0 : index
    %90 = vector.load %arg2[%c4_102, %c0_103, %c0_104] : memref<9x3x128xbf16, #tpu.memory_space<vmem>>, vector<1x3x128xbf16>
    %91 = vector.shape_cast %90 : vector<1x3x128xbf16> to vector<3x128xbf16>
    %cst_105 = arith.constant dense<0.000000e+00> : vector<256x128xf32>
    %92 = tpu.matmul %89, %91, %cst_105 {dimension_numbers = #tpu.dot_dimension_numbers<[1], [0], [0], [1], [0, 0, 1, 1], [], []>} : vector<256x3xbf16>, vector<3x128xbf16>, vector<256x128xf32> -> vector<256x128xf32>
    %93 = arith.addf %87, %92 : vector<256x128xf32>
    %c0_106 = arith.constant 0 : index
    %c2_107 = arith.constant 2 : index
    %c288_108 = arith.constant 288 : index
    %c0_109 = arith.constant 0 : index
    %94 = vector.load %arg1[%c0_106, %c2_107, %c288_108, %c0_109] : memref<1x3x1088x3xbf16, #tpu.memory_space<vmem>>, vector<1x1x256x3xbf16>
    %95 = vector.shape_cast %94 : vector<1x1x256x3xbf16> to vector<256x3xbf16>
    %c5_110 = arith.constant 5 : index
    %c0_111 = arith.constant 0 : index
    %c0_112 = arith.constant 0 : index
    %96 = vector.load %arg2[%c5_110, %c0_111, %c0_112] : memref<9x3x128xbf16, #tpu.memory_space<vmem>>, vector<1x3x128xbf16>
    %97 = vector.shape_cast %96 : vector<1x3x128xbf16> to vector<3x128xbf16>
    %cst_113 = arith.constant dense<0.000000e+00> : vector<256x128xf32>
    %98 = tpu.matmul %95, %97, %cst_113 {dimension_numbers = #tpu.dot_dimension_numbers<[1], [0], [0], [1], [0, 0, 1, 1], [], []>} : vector<256x3xbf16>, vector<3x128xbf16>, vector<256x128xf32> -> vector<256x128xf32>
    %99 = arith.addf %93, %98 : vector<256x128xf32>
    %c0_114 = arith.constant 0 : index
    %c0_115 = arith.constant 0 : index
    %c320 = arith.constant 320 : index
    %c0_116 = arith.constant 0 : index
    %100 = vector.load %arg1[%c0_114, %c0_115, %c320, %c0_116] : memref<1x3x1088x3xbf16, #tpu.memory_space<vmem>>, vector<1x1x256x3xbf16>
    %101 = vector.shape_cast %100 : vector<1x1x256x3xbf16> to vector<256x3xbf16>
    %c6_117 = arith.constant 6 : index
    %c0_118 = arith.constant 0 : index
    %c0_119 = arith.constant 0 : index
    %102 = vector.load %arg2[%c6_117, %c0_118, %c0_119] : memref<9x3x128xbf16, #tpu.memory_space<vmem>>, vector<1x3x128xbf16>
    %103 = vector.shape_cast %102 : vector<1x3x128xbf16> to vector<3x128xbf16>
    %cst_120 = arith.constant dense<0.000000e+00> : vector<256x128xf32>
    %104 = tpu.matmul %101, %103, %cst_120 {dimension_numbers = #tpu.dot_dimension_numbers<[1], [0], [0], [1], [0, 0, 1, 1], [], []>} : vector<256x3xbf16>, vector<3x128xbf16>, vector<256x128xf32> -> vector<256x128xf32>
    %105 = arith.addf %99, %104 : vector<256x128xf32>
    %c0_121 = arith.constant 0 : index
    %c1_122 = arith.constant 1 : index
    %c320_123 = arith.constant 320 : index
    %c0_124 = arith.constant 0 : index
    %106 = vector.load %arg1[%c0_121, %c1_122, %c320_123, %c0_124] : memref<1x3x1088x3xbf16, #tpu.memory_space<vmem>>, vector<1x1x256x3xbf16>
    %107 = vector.shape_cast %106 : vector<1x1x256x3xbf16> to vector<256x3xbf16>
    %c7_125 = arith.constant 7 : index
    %c0_126 = arith.constant 0 : index
    %c0_127 = arith.constant 0 : index
    %108 = vector.load %arg2[%c7_125, %c0_126, %c0_127] : memref<9x3x128xbf16, #tpu.memory_space<vmem>>, vector<1x3x128xbf16>
    %109 = vector.shape_cast %108 : vector<1x3x128xbf16> to vector<3x128xbf16>
    %cst_128 = arith.constant dense<0.000000e+00> : vector<256x128xf32>
    %110 = tpu.matmul %107, %109, %cst_128 {dimension_numbers = #tpu.dot_dimension_numbers<[1], [0], [0], [1], [0, 0, 1, 1], [], []>} : vector<256x3xbf16>, vector<3x128xbf16>, vector<256x128xf32> -> vector<256x128xf32>
    %111 = arith.addf %105, %110 : vector<256x128xf32>
    %c0_129 = arith.constant 0 : index
    %c2_130 = arith.constant 2 : index
    %c320_131 = arith.constant 320 : index
    %c0_132 = arith.constant 0 : index
    %112 = vector.load %arg1[%c0_129, %c2_130, %c320_131, %c0_132] : memref<1x3x1088x3xbf16, #tpu.memory_space<vmem>>, vector<1x1x256x3xbf16>
    %113 = vector.shape_cast %112 : vector<1x1x256x3xbf16> to vector<256x3xbf16>
    %c8_133 = arith.constant 8 : index
    %c0_134 = arith.constant 0 : index
    %c0_135 = arith.constant 0 : index
    %114 = vector.load %arg2[%c8_133, %c0_134, %c0_135] : memref<9x3x128xbf16, #tpu.memory_space<vmem>>, vector<1x3x128xbf16>
    %115 = vector.shape_cast %114 : vector<1x3x128xbf16> to vector<3x128xbf16>
    %cst_136 = arith.constant dense<0.000000e+00> : vector<256x128xf32>
    %116 = tpu.matmul %113, %115, %cst_136 {dimension_numbers = #tpu.dot_dimension_numbers<[1], [0], [0], [1], [0, 0, 1, 1], [], []>} : vector<256x3xbf16>, vector<3x128xbf16>, vector<256x128xf32> -> vector<256x128xf32>
    %117 = arith.addf %111, %116 : vector<256x128xf32>
    %118 = vector.broadcast %0 : vector<1x128xf32> to vector<256x128xf32>
    %119 = arith.mulf %117, %118 : vector<256x128xf32>
    %120 = vector.broadcast %1 : vector<1x128xf32> to vector<256x128xf32>
    %121 = arith.addf %119, %120 : vector<256x128xf32>
    %cst_137 = arith.constant 0.000000e+00 : f32
    %122 = vector.broadcast %cst_137 : f32 to vector<256x128xf32>
    %123 = arith.maximumf %121, %122 : vector<256x128xf32>
    %124 = arith.truncf %123 : vector<256x128xf32> to vector<256x128xbf16>
    %c0_138 = arith.constant 0 : index
    %c256_139 = arith.constant 256 : index
    %c0_140 = arith.constant 0 : index
    %125 = vector.load %arg5[%c0_138, %c256_139, %c0_140] : memref<1x1024x128xbf16, #tpu.memory_space<vmem>>, vector<1x256x128xbf16>
    %126 = vector.shape_cast %125 : vector<1x256x128xbf16> to vector<256x128xbf16>
    %127 = vector.shape_cast %124 : vector<256x128xbf16> to vector<1x256x128xbf16>
    tpu.vector_store %arg5[%c0_138, %c256_139, %c0_140], %127 {strides = array<i32>} : memref<1x1024x128xbf16, #tpu.memory_space<vmem>>, vector<1x256x128xbf16>,
    %c0_141 = arith.constant 0 : index
    %c0_142 = arith.constant 0 : index
    %c512 = arith.constant 512 : index
    %c0_143 = arith.constant 0 : index
    %128 = vector.load %arg1[%c0_141, %c0_142, %c512, %c0_143] : memref<1x3x1088x3xbf16, #tpu.memory_space<vmem>>, vector<1x1x256x3xbf16>
    %129 = vector.shape_cast %128 : vector<1x1x256x3xbf16> to vector<256x3xbf16>
    %c0_144 = arith.constant 0 : index
    %c0_145 = arith.constant 0 : index
    %c0_146 = arith.constant 0 : index
    %130 = vector.load %arg2[%c0_144, %c0_145, %c0_146] : memref<9x3x128xbf16, #tpu.memory_space<vmem>>, vector<1x3x128xbf16>
    %131 = vector.shape_cast %130 : vector<1x3x128xbf16> to vector<3x128xbf16>
    %cst_147 = arith.constant dense<0.000000e+00> : vector<256x128xf32>
    %132 = tpu.matmul %129, %131, %cst_147 {dimension_numbers = #tpu.dot_dimension_numbers<[1], [0], [0], [1], [0, 0, 1, 1], [], []>} : vector<256x3xbf16>, vector<3x128xbf16>, vector<256x128xf32> -> vector<256x128xf32>
    %c0_148 = arith.constant 0 : index
    %c1_149 = arith.constant 1 : index
    %c512_150 = arith.constant 512 : index
    %c0_151 = arith.constant 0 : index
    %133 = vector.load %arg1[%c0_148, %c1_149, %c512_150, %c0_151] : memref<1x3x1088x3xbf16, #tpu.memory_space<vmem>>, vector<1x1x256x3xbf16>
    %134 = vector.shape_cast %133 : vector<1x1x256x3xbf16> to vector<256x3xbf16>
    %c1_152 = arith.constant 1 : index
    %c0_153 = arith.constant 0 : index
    %c0_154 = arith.constant 0 : index
    %135 = vector.load %arg2[%c1_152, %c0_153, %c0_154] : memref<9x3x128xbf16, #tpu.memory_space<vmem>>, vector<1x3x128xbf16>
    %136 = vector.shape_cast %135 : vector<1x3x128xbf16> to vector<3x128xbf16>
    %cst_155 = arith.constant dense<0.000000e+00> : vector<256x128xf32>
    %137 = tpu.matmul %134, %136, %cst_155 {dimension_numbers = #tpu.dot_dimension_numbers<[1], [0], [0], [1], [0, 0, 1, 1], [], []>} : vector<256x3xbf16>, vector<3x128xbf16>, vector<256x128xf32> -> vector<256x128xf32>
    %138 = arith.addf %132, %137 : vector<256x128xf32>
    %c0_156 = arith.constant 0 : index
    %c2_157 = arith.constant 2 : index
    %c512_158 = arith.constant 512 : index
    %c0_159 = arith.constant 0 : index
    %139 = vector.load %arg1[%c0_156, %c2_157, %c512_158, %c0_159] : memref<1x3x1088x3xbf16, #tpu.memory_space<vmem>>, vector<1x1x256x3xbf16>
    %140 = vector.shape_cast %139 : vector<1x1x256x3xbf16> to vector<256x3xbf16>
    %c2_160 = arith.constant 2 : index
    %c0_161 = arith.constant 0 : index
    %c0_162 = arith.constant 0 : index
    %141 = vector.load %arg2[%c2_160, %c0_161, %c0_162] : memref<9x3x128xbf16, #tpu.memory_space<vmem>>, vector<1x3x128xbf16>
    %142 = vector.shape_cast %141 : vector<1x3x128xbf16> to vector<3x128xbf16>
    %cst_163 = arith.constant dense<0.000000e+00> : vector<256x128xf32>
    %143 = tpu.matmul %140, %142, %cst_163 {dimension_numbers = #tpu.dot_dimension_numbers<[1], [0], [0], [1], [0, 0, 1, 1], [], []>} : vector<256x3xbf16>, vector<3x128xbf16>, vector<256x128xf32> -> vector<256x128xf32>
    %144 = arith.addf %138, %143 : vector<256x128xf32>
    %c0_164 = arith.constant 0 : index
    %c0_165 = arith.constant 0 : index
    %c544 = arith.constant 544 : index
    %c0_166 = arith.constant 0 : index
    %145 = vector.load %arg1[%c0_164, %c0_165, %c544, %c0_166] : memref<1x3x1088x3xbf16, #tpu.memory_space<vmem>>, vector<1x1x256x3xbf16>
    %146 = vector.shape_cast %145 : vector<1x1x256x3xbf16> to vector<256x3xbf16>
    %c3_167 = arith.constant 3 : index
    %c0_168 = arith.constant 0 : index
    %c0_169 = arith.constant 0 : index
    %147 = vector.load %arg2[%c3_167, %c0_168, %c0_169] : memref<9x3x128xbf16, #tpu.memory_space<vmem>>, vector<1x3x128xbf16>
    %148 = vector.shape_cast %147 : vector<1x3x128xbf16> to vector<3x128xbf16>
    %cst_170 = arith.constant dense<0.000000e+00> : vector<256x128xf32>
    %149 = tpu.matmul %146, %148, %cst_170 {dimension_numbers = #tpu.dot_dimension_numbers<[1], [0], [0], [1], [0, 0, 1, 1], [], []>} : vector<256x3xbf16>, vector<3x128xbf16>, vector<256x128xf32> -> vector<256x128xf32>
    %150 = arith.addf %144, %149 : vector<256x128xf32>
    %c0_171 = arith.constant 0 : index
    %c1_172 = arith.constant 1 : index
    %c544_173 = arith.constant 544 : index
    %c0_174 = arith.constant 0 : index
    %151 = vector.load %arg1[%c0_171, %c1_172, %c544_173, %c0_174] : memref<1x3x1088x3xbf16, #tpu.memory_space<vmem>>, vector<1x1x256x3xbf16>
    %152 = vector.shape_cast %151 : vector<1x1x256x3xbf16> to vector<256x3xbf16>
    %c4_175 = arith.constant 4 : index
    %c0_176 = arith.constant 0 : index
    %c0_177 = arith.constant 0 : index
    %153 = vector.load %arg2[%c4_175, %c0_176, %c0_177] : memref<9x3x128xbf16, #tpu.memory_space<vmem>>, vector<1x3x128xbf16>
    %154 = vector.shape_cast %153 : vector<1x3x128xbf16> to vector<3x128xbf16>
    %cst_178 = arith.constant dense<0.000000e+00> : vector<256x128xf32>
    %155 = tpu.matmul %152, %154, %cst_178 {dimension_numbers = #tpu.dot_dimension_numbers<[1], [0], [0], [1], [0, 0, 1, 1], [], []>} : vector<256x3xbf16>, vector<3x128xbf16>, vector<256x128xf32> -> vector<256x128xf32>
    %156 = arith.addf %150, %155 : vector<256x128xf32>
    %c0_179 = arith.constant 0 : index
    %c2_180 = arith.constant 2 : index
    %c544_181 = arith.constant 544 : index
    %c0_182 = arith.constant 0 : index
    %157 = vector.load %arg1[%c0_179, %c2_180, %c544_181, %c0_182] : memref<1x3x1088x3xbf16, #tpu.memory_space<vmem>>, vector<1x1x256x3xbf16>
    %158 = vector.shape_cast %157 : vector<1x1x256x3xbf16> to vector<256x3xbf16>
    %c5_183 = arith.constant 5 : index
    %c0_184 = arith.constant 0 : index
    %c0_185 = arith.constant 0 : index
    %159 = vector.load %arg2[%c5_183, %c0_184, %c0_185] : memref<9x3x128xbf16, #tpu.memory_space<vmem>>, vector<1x3x128xbf16>
    %160 = vector.shape_cast %159 : vector<1x3x128xbf16> to vector<3x128xbf16>
    %cst_186 = arith.constant dense<0.000000e+00> : vector<256x128xf32>
    %161 = tpu.matmul %158, %160, %cst_186 {dimension_numbers = #tpu.dot_dimension_numbers<[1], [0], [0], [1], [0, 0, 1, 1], [], []>} : vector<256x3xbf16>, vector<3x128xbf16>, vector<256x128xf32> -> vector<256x128xf32>
    %162 = arith.addf %156, %161 : vector<256x128xf32>
    %c0_187 = arith.constant 0 : index
    %c0_188 = arith.constant 0 : index
    %c576 = arith.constant 576 : index
    %c0_189 = arith.constant 0 : index
    %163 = vector.load %arg1[%c0_187, %c0_188, %c576, %c0_189] : memref<1x3x1088x3xbf16, #tpu.memory_space<vmem>>, vector<1x1x256x3xbf16>
    %164 = vector.shape_cast %163 : vector<1x1x256x3xbf16> to vector<256x3xbf16>
    %c6_190 = arith.constant 6 : index
    %c0_191 = arith.constant 0 : index
    %c0_192 = arith.constant 0 : index
    %165 = vector.load %arg2[%c6_190, %c0_191, %c0_192] : memref<9x3x128xbf16, #tpu.memory_space<vmem>>, vector<1x3x128xbf16>
    %166 = vector.shape_cast %165 : vector<1x3x128xbf16> to vector<3x128xbf16>
    %cst_193 = arith.constant dense<0.000000e+00> : vector<256x128xf32>
    %167 = tpu.matmul %164, %166, %cst_193 {dimension_numbers = #tpu.dot_dimension_numbers<[1], [0], [0], [1], [0, 0, 1, 1], [], []>} : vector<256x3xbf16>, vector<3x128xbf16>, vector<256x128xf32> -> vector<256x128xf32>
    %168 = arith.addf %162, %167 : vector<256x128xf32>
    %c0_194 = arith.constant 0 : index
    %c1_195 = arith.constant 1 : index
    %c576_196 = arith.constant 576 : index
    %c0_197 = arith.constant 0 : index
    %169 = vector.load %arg1[%c0_194, %c1_195, %c576_196, %c0_197] : memref<1x3x1088x3xbf16, #tpu.memory_space<vmem>>, vector<1x1x256x3xbf16>
    %170 = vector.shape_cast %169 : vector<1x1x256x3xbf16> to vector<256x3xbf16>
    %c7_198 = arith.constant 7 : index
    %c0_199 = arith.constant 0 : index
    %c0_200 = arith.constant 0 : index
    %171 = vector.load %arg2[%c7_198, %c0_199, %c0_200] : memref<9x3x128xbf16, #tpu.memory_space<vmem>>, vector<1x3x128xbf16>
    %172 = vector.shape_cast %171 : vector<1x3x128xbf16> to vector<3x128xbf16>
    %cst_201 = arith.constant dense<0.000000e+00> : vector<256x128xf32>
    %173 = tpu.matmul %170, %172, %cst_201 {dimension_numbers = #tpu.dot_dimension_numbers<[1], [0], [0], [1], [0, 0, 1, 1], [], []>} : vector<256x3xbf16>, vector<3x128xbf16>, vector<256x128xf32> -> vector<256x128xf32>
    %174 = arith.addf %168, %173 : vector<256x128xf32>
    %c0_202 = arith.constant 0 : index
    %c2_203 = arith.constant 2 : index
    %c576_204 = arith.constant 576 : index
    %c0_205 = arith.constant 0 : index
    %175 = vector.load %arg1[%c0_202, %c2_203, %c576_204, %c0_205] : memref<1x3x1088x3xbf16, #tpu.memory_space<vmem>>, vector<1x1x256x3xbf16>
    %176 = vector.shape_cast %175 : vector<1x1x256x3xbf16> to vector<256x3xbf16>
    %c8_206 = arith.constant 8 : index
    %c0_207 = arith.constant 0 : index
    %c0_208 = arith.constant 0 : index
    %177 = vector.load %arg2[%c8_206, %c0_207, %c0_208] : memref<9x3x128xbf16, #tpu.memory_space<vmem>>, vector<1x3x128xbf16>
    %178 = vector.shape_cast %177 : vector<1x3x128xbf16> to vector<3x128xbf16>
    %cst_209 = arith.constant dense<0.000000e+00> : vector<256x128xf32>
    %179 = tpu.matmul %176, %178, %cst_209 {dimension_numbers = #tpu.dot_dimension_numbers<[1], [0], [0], [1], [0, 0, 1, 1], [], []>} : vector<256x3xbf16>, vector<3x128xbf16>, vector<256x128xf32> -> vector<256x128xf32>
    %180 = arith.addf %174, %179 : vector<256x128xf32>
    %181 = vector.broadcast %0 : vector<1x128xf32> to vector<256x128xf32>
    %182 = arith.mulf %180, %181 : vector<256x128xf32>
    %183 = vector.broadcast %1 : vector<1x128xf32> to vector<256x128xf32>
    %184 = arith.addf %182, %183 : vector<256x128xf32>
    %cst_210 = arith.constant 0.000000e+00 : f32
    %185 = vector.broadcast %cst_210 : f32 to vector<256x128xf32>
    %186 = arith.maximumf %184, %185 : vector<256x128xf32>
    %187 = arith.truncf %186 : vector<256x128xf32> to vector<256x128xbf16>
    %c0_211 = arith.constant 0 : index
    %c512_212 = arith.constant 512 : index
    %c0_213 = arith.constant 0 : index
    %188 = vector.load %arg5[%c0_211, %c512_212, %c0_213] : memref<1x1024x128xbf16, #tpu.memory_space<vmem>>, vector<1x256x128xbf16>
    %189 = vector.shape_cast %188 : vector<1x256x128xbf16> to vector<256x128xbf16>
    %190 = vector.shape_cast %187 : vector<256x128xbf16> to vector<1x256x128xbf16>
    tpu.vector_store %arg5[%c0_211, %c512_212, %c0_213], %190 {strides = array<i32>} : memref<1x1024x128xbf16, #tpu.memory_space<vmem>>, vector<1x256x128xbf16>,
    %c0_214 = arith.constant 0 : index
    %c0_215 = arith.constant 0 : index
    %c768 = arith.constant 768 : index
    %c0_216 = arith.constant 0 : index
    %191 = vector.load %arg1[%c0_214, %c0_215, %c768, %c0_216] : memref<1x3x1088x3xbf16, #tpu.memory_space<vmem>>, vector<1x1x256x3xbf16>
    %192 = vector.shape_cast %191 : vector<1x1x256x3xbf16> to vector<256x3xbf16>
    %c0_217 = arith.constant 0 : index
    %c0_218 = arith.constant 0 : index
    %c0_219 = arith.constant 0 : index
    %193 = vector.load %arg2[%c0_217, %c0_218, %c0_219] : memref<9x3x128xbf16, #tpu.memory_space<vmem>>, vector<1x3x128xbf16>
    %194 = vector.shape_cast %193 : vector<1x3x128xbf16> to vector<3x128xbf16>
    %cst_220 = arith.constant dense<0.000000e+00> : vector<256x128xf32>
    %195 = tpu.matmul %192, %194, %cst_220 {dimension_numbers = #tpu.dot_dimension_numbers<[1], [0], [0], [1], [0, 0, 1, 1], [], []>} : vector<256x3xbf16>, vector<3x128xbf16>, vector<256x128xf32> -> vector<256x128xf32>
    %c0_221 = arith.constant 0 : index
    %c1_222 = arith.constant 1 : index
    %c768_223 = arith.constant 768 : index
    %c0_224 = arith.constant 0 : index
    %196 = vector.load %arg1[%c0_221, %c1_222, %c768_223, %c0_224] : memref<1x3x1088x3xbf16, #tpu.memory_space<vmem>>, vector<1x1x256x3xbf16>
    %197 = vector.shape_cast %196 : vector<1x1x256x3xbf16> to vector<256x3xbf16>
    %c1_225 = arith.constant 1 : index
    %c0_226 = arith.constant 0 : index
    %c0_227 = arith.constant 0 : index
    %198 = vector.load %arg2[%c1_225, %c0_226, %c0_227] : memref<9x3x128xbf16, #tpu.memory_space<vmem>>, vector<1x3x128xbf16>
    %199 = vector.shape_cast %198 : vector<1x3x128xbf16> to vector<3x128xbf16>
    %cst_228 = arith.constant dense<0.000000e+00> : vector<256x128xf32>
    %200 = tpu.matmul %197, %199, %cst_228 {dimension_numbers = #tpu.dot_dimension_numbers<[1], [0], [0], [1], [0, 0, 1, 1], [], []>} : vector<256x3xbf16>, vector<3x128xbf16>, vector<256x128xf32> -> vector<256x128xf32>
    %201 = arith.addf %195, %200 : vector<256x128xf32>
    %c0_229 = arith.constant 0 : index
    %c2_230 = arith.constant 2 : index
    %c768_231 = arith.constant 768 : index
    %c0_232 = arith.constant 0 : index
    %202 = vector.load %arg1[%c0_229, %c2_230, %c768_231, %c0_232] : memref<1x3x1088x3xbf16, #tpu.memory_space<vmem>>, vector<1x1x256x3xbf16>
    %203 = vector.shape_cast %202 : vector<1x1x256x3xbf16> to vector<256x3xbf16>
    %c2_233 = arith.constant 2 : index
    %c0_234 = arith.constant 0 : index
    %c0_235 = arith.constant 0 : index
    %204 = vector.load %arg2[%c2_233, %c0_234, %c0_235] : memref<9x3x128xbf16, #tpu.memory_space<vmem>>, vector<1x3x128xbf16>
    %205 = vector.shape_cast %204 : vector<1x3x128xbf16> to vector<3x128xbf16>
    %cst_236 = arith.constant dense<0.000000e+00> : vector<256x128xf32>
    %206 = tpu.matmul %203, %205, %cst_236 {dimension_numbers = #tpu.dot_dimension_numbers<[1], [0], [0], [1], [0, 0, 1, 1], [], []>} : vector<256x3xbf16>, vector<3x128xbf16>, vector<256x128xf32> -> vector<256x128xf32>
    %207 = arith.addf %201, %206 : vector<256x128xf32>
    %c0_237 = arith.constant 0 : index
    %c0_238 = arith.constant 0 : index
    %c800 = arith.constant 800 : index
    %c0_239 = arith.constant 0 : index
    %208 = vector.load %arg1[%c0_237, %c0_238, %c800, %c0_239] : memref<1x3x1088x3xbf16, #tpu.memory_space<vmem>>, vector<1x1x256x3xbf16>
    %209 = vector.shape_cast %208 : vector<1x1x256x3xbf16> to vector<256x3xbf16>
    %c3_240 = arith.constant 3 : index
    %c0_241 = arith.constant 0 : index
    %c0_242 = arith.constant 0 : index
    %210 = vector.load %arg2[%c3_240, %c0_241, %c0_242] : memref<9x3x128xbf16, #tpu.memory_space<vmem>>, vector<1x3x128xbf16>
    %211 = vector.shape_cast %210 : vector<1x3x128xbf16> to vector<3x128xbf16>
    %cst_243 = arith.constant dense<0.000000e+00> : vector<256x128xf32>
    %212 = tpu.matmul %209, %211, %cst_243 {dimension_numbers = #tpu.dot_dimension_numbers<[1], [0], [0], [1], [0, 0, 1, 1], [], []>} : vector<256x3xbf16>, vector<3x128xbf16>, vector<256x128xf32> -> vector<256x128xf32>
    %213 = arith.addf %207, %212 : vector<256x128xf32>
    %c0_244 = arith.constant 0 : index
    %c1_245 = arith.constant 1 : index
    %c800_246 = arith.constant 800 : index
    %c0_247 = arith.constant 0 : index
    %214 = vector.load %arg1[%c0_244, %c1_245, %c800_246, %c0_247] : memref<1x3x1088x3xbf16, #tpu.memory_space<vmem>>, vector<1x1x256x3xbf16>
    %215 = vector.shape_cast %214 : vector<1x1x256x3xbf16> to vector<256x3xbf16>
    %c4_248 = arith.constant 4 : index
    %c0_249 = arith.constant 0 : index
    %c0_250 = arith.constant 0 : index
    %216 = vector.load %arg2[%c4_248, %c0_249, %c0_250] : memref<9x3x128xbf16, #tpu.memory_space<vmem>>, vector<1x3x128xbf16>
    %217 = vector.shape_cast %216 : vector<1x3x128xbf16> to vector<3x128xbf16>
    %cst_251 = arith.constant dense<0.000000e+00> : vector<256x128xf32>
    %218 = tpu.matmul %215, %217, %cst_251 {dimension_numbers = #tpu.dot_dimension_numbers<[1], [0], [0], [1], [0, 0, 1, 1], [], []>} : vector<256x3xbf16>, vector<3x128xbf16>, vector<256x128xf32> -> vector<256x128xf32>
    %219 = arith.addf %213, %218 : vector<256x128xf32>
    %c0_252 = arith.constant 0 : index
    %c2_253 = arith.constant 2 : index
    %c800_254 = arith.constant 800 : index
    %c0_255 = arith.constant 0 : index
    %220 = vector.load %arg1[%c0_252, %c2_253, %c800_254, %c0_255] : memref<1x3x1088x3xbf16, #tpu.memory_space<vmem>>, vector<1x1x256x3xbf16>
    %221 = vector.shape_cast %220 : vector<1x1x256x3xbf16> to vector<256x3xbf16>
    %c5_256 = arith.constant 5 : index
    %c0_257 = arith.constant 0 : index
    %c0_258 = arith.constant 0 : index
    %222 = vector.load %arg2[%c5_256, %c0_257, %c0_258] : memref<9x3x128xbf16, #tpu.memory_space<vmem>>, vector<1x3x128xbf16>
    %223 = vector.shape_cast %222 : vector<1x3x128xbf16> to vector<3x128xbf16>
    %cst_259 = arith.constant dense<0.000000e+00> : vector<256x128xf32>
    %224 = tpu.matmul %221, %223, %cst_259 {dimension_numbers = #tpu.dot_dimension_numbers<[1], [0], [0], [1], [0, 0, 1, 1], [], []>} : vector<256x3xbf16>, vector<3x128xbf16>, vector<256x128xf32> -> vector<256x128xf32>
    %225 = arith.addf %219, %224 : vector<256x128xf32>
    %c0_260 = arith.constant 0 : index
    %c0_261 = arith.constant 0 : index
    %c832 = arith.constant 832 : index
    %c0_262 = arith.constant 0 : index
    %226 = vector.load %arg1[%c0_260, %c0_261, %c832, %c0_262] : memref<1x3x1088x3xbf16, #tpu.memory_space<vmem>>, vector<1x1x256x3xbf16>
    %227 = vector.shape_cast %226 : vector<1x1x256x3xbf16> to vector<256x3xbf16>
    %c6_263 = arith.constant 6 : index
    %c0_264 = arith.constant 0 : index
    %c0_265 = arith.constant 0 : index
    %228 = vector.load %arg2[%c6_263, %c0_264, %c0_265] : memref<9x3x128xbf16, #tpu.memory_space<vmem>>, vector<1x3x128xbf16>
    %229 = vector.shape_cast %228 : vector<1x3x128xbf16> to vector<3x128xbf16>
    %cst_266 = arith.constant dense<0.000000e+00> : vector<256x128xf32>
    %230 = tpu.matmul %227, %229, %cst_266 {dimension_numbers = #tpu.dot_dimension_numbers<[1], [0], [0], [1], [0, 0, 1, 1], [], []>} : vector<256x3xbf16>, vector<3x128xbf16>, vector<256x128xf32> -> vector<256x128xf32>
    %231 = arith.addf %225, %230 : vector<256x128xf32>
    %c0_267 = arith.constant 0 : index
    %c1_268 = arith.constant 1 : index
    %c832_269 = arith.constant 832 : index
    %c0_270 = arith.constant 0 : index
    %232 = vector.load %arg1[%c0_267, %c1_268, %c832_269, %c0_270] : memref<1x3x1088x3xbf16, #tpu.memory_space<vmem>>, vector<1x1x256x3xbf16>
    %233 = vector.shape_cast %232 : vector<1x1x256x3xbf16> to vector<256x3xbf16>
    %c7_271 = arith.constant 7 : index
    %c0_272 = arith.constant 0 : index
    %c0_273 = arith.constant 0 : index
    %234 = vector.load %arg2[%c7_271, %c0_272, %c0_273] : memref<9x3x128xbf16, #tpu.memory_space<vmem>>, vector<1x3x128xbf16>
    %235 = vector.shape_cast %234 : vector<1x3x128xbf16> to vector<3x128xbf16>
    %cst_274 = arith.constant dense<0.000000e+00> : vector<256x128xf32>
    %236 = tpu.matmul %233, %235, %cst_274 {dimension_numbers = #tpu.dot_dimension_numbers<[1], [0], [0], [1], [0, 0, 1, 1], [], []>} : vector<256x3xbf16>, vector<3x128xbf16>, vector<256x128xf32> -> vector<256x128xf32>
    %237 = arith.addf %231, %236 : vector<256x128xf32>
    %c0_275 = arith.constant 0 : index
    %c2_276 = arith.constant 2 : index
    %c832_277 = arith.constant 832 : index
    %c0_278 = arith.constant 0 : index
    %238 = vector.load %arg1[%c0_275, %c2_276, %c832_277, %c0_278] : memref<1x3x1088x3xbf16, #tpu.memory_space<vmem>>, vector<1x1x256x3xbf16>
    %239 = vector.shape_cast %238 : vector<1x1x256x3xbf16> to vector<256x3xbf16>
    %c8_279 = arith.constant 8 : index
    %c0_280 = arith.constant 0 : index
    %c0_281 = arith.constant 0 : index
    %240 = vector.load %arg2[%c8_279, %c0_280, %c0_281] : memref<9x3x128xbf16, #tpu.memory_space<vmem>>, vector<1x3x128xbf16>
    %241 = vector.shape_cast %240 : vector<1x3x128xbf16> to vector<3x128xbf16>
    %cst_282 = arith.constant dense<0.000000e+00> : vector<256x128xf32>
    %242 = tpu.matmul %239, %241, %cst_282 {dimension_numbers = #tpu.dot_dimension_numbers<[1], [0], [0], [1], [0, 0, 1, 1], [], []>} : vector<256x3xbf16>, vector<3x128xbf16>, vector<256x128xf32> -> vector<256x128xf32>
    %243 = arith.addf %237, %242 : vector<256x128xf32>
    %244 = vector.broadcast %0 : vector<1x128xf32> to vector<256x128xf32>
    %245 = arith.mulf %243, %244 : vector<256x128xf32>
    %246 = vector.broadcast %1 : vector<1x128xf32> to vector<256x128xf32>
    %247 = arith.addf %245, %246 : vector<256x128xf32>
    %cst_283 = arith.constant 0.000000e+00 : f32
    %248 = vector.broadcast %cst_283 : f32 to vector<256x128xf32>
    %249 = arith.maximumf %247, %248 : vector<256x128xf32>
    %250 = arith.truncf %249 : vector<256x128xf32> to vector<256x128xbf16>
    %c0_284 = arith.constant 0 : index
    %c768_285 = arith.constant 768 : index
    %c0_286 = arith.constant 0 : index
    %251 = vector.load %arg5[%c0_284, %c768_285, %c0_286] : memref<1x1024x128xbf16, #tpu.memory_space<vmem>>, vector<1x256x128xbf16>
    %252 = vector.shape_cast %251 : vector<1x256x128xbf16> to vector<256x128xbf16>
    %253 = vector.shape_cast %250 : vector<256x128xbf16> to vector<1x256x128xbf16>
    tpu.vector_store %arg5[%c0_284, %c768_285, %c0_286], %253 {strides = array<i32>} : memref<1x1024x128xbf16, #tpu.memory_space<vmem>>, vector<1x256x128xbf16>,
    return
  }
  func.func @transform_0(%arg0: i32) -> (i32, i32, i32, i32) {
    %c0_i32 = arith.constant 0 : i32
    %c0_i32_0 = arith.constant 0 : i32
    %c0_i32_1 = arith.constant 0 : i32
    %c0_i32_2 = arith.constant 0 : i32
    return %arg0, %c0_i32, %c0_i32_0, %c0_i32_1 : i32, i32, i32, i32
  }
  func.func @transform_1(%arg0: i32) -> (i32, i32, i32) {
    %c0_i32 = arith.constant 0 : i32
    %c0_i32_0 = arith.constant 0 : i32
    %c0_i32_1 = arith.constant 0 : i32
    %c0_i32_2 = arith.constant 0 : i32
    return %c0_i32, %c0_i32_0, %c0_i32_1 : i32, i32, i32
  }
  func.func @transform_2(%arg0: i32) -> (i32, i32) {
    %c0_i32 = arith.constant 0 : i32
    %c0_i32_0 = arith.constant 0 : i32
    %c0_i32_1 = arith.constant 0 : i32
    return %c0_i32, %c0_i32_0 : i32, i32
  }
  func.func @transform_3(%arg0: i32) -> (i32, i32) {
    %c0_i32 = arith.constant 0 : i32
    %c0_i32_0 = arith.constant 0 : i32
    %c0_i32_1 = arith.constant 0 : i32
    return %c0_i32, %c0_i32_0 : i32, i32
  }
  func.func @transform_4(%arg0: i32) -> (i32, i32, i32) {
    %c0_i32 = arith.constant 0 : i32
    %c0_i32_0 = arith.constant 0 : i32
    %c0_i32_1 = arith.constant 0 : i32
    return %arg0, %c0_i32, %c0_i32_0 : i32, i32, i32
  }
}

</mosaic_0001>

<llo_original>
// kernel: tpu_custom_call.1
$region0: #{tpu_custom_call.1}
  #allocation0 [shape = 'u32[]', space=smem, size = 0x4, offset = 0x4, fixed_abs, tag = 'smem constant byte address 0x4 - core index']
  #allocation1 [shape = 'u32[72,128]{1,0:T(1,128)}', space=vmem, size = 0x9000, scoped, tag = 'internal scratch']
  %s0 = inlined_call_operand.vmem [shape: bf16[2,3,1088,3], index: 0, kind: input, shape index: {}]
  %s1 = inlined_call_operand.vmem [shape: bf16[9,3,128], index: 1, kind: input, shape index: {}]
  %s2 = inlined_call_operand.vmem [shape: f32[1,128], index: 2, kind: input, shape index: {}]
  %s3 = inlined_call_operand.vmem [shape: f32[1,128], index: 3, kind: input, shape index: {}]
  %s4 = inlined_call_operand.hbm [shape: bf16[2,1024,128], index: 4, kind: output, shape index: {}]
  %s5 = sld [smem:[#allocation0]]
  $region49: #{tpu_custom_call.1} parent=0
    _
  %s7 = ssub.s32 1, %s5
  %s8 = scalar_select 0, %s7, %s5
  $region1: #{tpu_custom_call.1} parent=0
    #allocation2 [shape = 'u8[524288]{0}', space=vmem, size = 0x80000, scoped, tag = 'output window, operand 0']
    #allocation3 [shape = 's32[2]{0}', space=sflag, size = 0x8, scoped, tag = 'scoped memory for tpu_custom_call.1']
    %9 = vsyncpa [#allocation3], 0
    %s10 = scalar_lea.sflag [#allocation3], 1
    %11 = vsyncpa %s10, 0
    loop: start=0, step=1, limit=4
    $region2: #{tpu_custom_call.1} parent=1 // loop_pre_header
      _
    $region3: #{tpu_custom_call.1} parent=1 // loop_header
      %s13 = sphi 0, %s17
      %p14 = scmp.ge.s32.totalorder %s13, 4
      %s23 = sphi 0, %s25
      %s26 = sphi 0, %s23
      %s27 = sphi 0, %s26
      %s43 = sphi 0, %s27
      %s47 = sphi 0, %s47
      %s49 = sphi 0, %s47
      %s50 = sphi 0, %s49
      %s64 = sphi 0, %s50
      %s68 = sphi 0, %s68
      %s70 = sphi 0, %s68
      %s71 = sphi 0, %s70
      %s85 = sphi 0, %s71
      %s89 = sphi 0, %s89
      %s91 = sphi 0, %s89
      %s92 = sphi 0, %s91
      %s106 = sphi 0, %s92
      %s112 = sphi 0, %s114
      %s115 = sphi 0, %s112
      %s116 = sphi 0, %s115
      %s132 = sphi 0, %s116
    $region4: #{tpu_custom_call.1} parent=1 // loop_header_branch
      %16 = sbr.rel (%p14) target = $region8
    $region5: #{tpu_custom_call.1} parent=1 // loop_body
      %s18 = ssub.s32 %s13, 1
      %s19 = ssub.s32 %s13, 2
      %s20 = sadd.s32 %s13, 1
      %s21 = ssub.s32 %s13, %s20
      %p22 = scmp.eq.s32.totalorder %s21, 0
      %s24 = sadd.s32 %s23, 1
      %s25 = scalar_select %p22, %s23, %s24
      %p28 = pneg %p22
      %p29 = scmp.eq.s32.totalorder %s13, 1
      %p30 = por %p28, %p29
      %p31 = scmp.ne.s32.totalorder %s23, %s26
      %p32 = scmp.eq.s32.totalorder %s13, 0
      %p33 = por %p31, %p32
      %p34 = scmp.ne.s32.totalorder %s23, %s26
      %p35 = scmp.eq.s32.totalorder %s18, 1
      %p36 = por %p34, %p35
      %p37 = scmp.ne.s32.totalorder %s26, %s27
      %p38 = scmp.eq.s32.totalorder %s18, 0
      %p39 = por %p37, %p38
      %p40 = scmp.ne.s32.totalorder %s26, %s27
      %p41 = scmp.eq.s32.totalorder %s19, 1
      %p42 = por %p40, %p41
      %p44 = scmp.ne.s32.totalorder %s27, %s43
      %p45 = scmp.eq.s32.totalorder %s19, 0
      %p46 = por %p44, %p45
      %s48 = sadd.s32 %s47, 1
      %p51 = scmp.eq.s32.totalorder %s13, 1
      %p52 = scmp.ne.s32.totalorder %s47, %s49
      %p53 = scmp.eq.s32.totalorder %s13, 0
      %p54 = por %p52, %p53
      %p55 = scmp.ne.s32.totalorder %s47, %s49
      %p56 = scmp.eq.s32.totalorder %s18, 1
      %p57 = por %p55, %p56
      %p58 = scmp.ne.s32.totalorder %s49, %s50
      %p59 = scmp.eq.s32.totalorder %s18, 0
      %p60 = por %p58, %p59
      %p61 = scmp.ne.s32.totalorder %s49, %s50
      %p62 = scmp.eq.s32.totalorder %s19, 1
      %p63 = por %p61, %p62
      %p65 = scmp.ne.s32.totalorder %s50, %s64
      %p66 = scmp.eq.s32.totalorder %s19, 0
      %p67 = por %p65, %p66
      %s69 = sadd.s32 %s68, 1
      %p72 = scmp.eq.s32.totalorder %s13, 1
      %p73 = scmp.ne.s32.totalorder %s68, %s70
      %p74 = scmp.eq.s32.totalorder %s13, 0
      %p75 = por %p73, %p74
      %p76 = scmp.ne.s32.totalorder %s68, %s70
      %p77 = scmp.eq.s32.totalorder %s18, 1
      %p78 = por %p76, %p77
      %p79 = scmp.ne.s32.totalorder %s70, %s71
      %p80 = scmp.eq.s32.totalorder %s18, 0
      %p81 = por %p79, %p80
      %p82 = scmp.ne.s32.totalorder %s70, %s71
      %p83 = scmp.eq.s32.totalorder %s19, 1
      %p84 = por %p82, %p83
      %p86 = scmp.ne.s32.totalorder %s71, %s85
      %p87 = scmp.eq.s32.totalorder %s19, 0
      %p88 = por %p86, %p87
      %s90 = sadd.s32 %s89, 1
      %p93 = scmp.eq.s32.totalorder %s13, 1
      %p94 = scmp.ne.s32.totalorder %s89, %s91
      %p95 = scmp.eq.s32.totalorder %s13, 0
      %p96 = por %p94, %p95
      %p97 = scmp.ne.s32.totalorder %s89, %s91
      %p98 = scmp.eq.s32.totalorder %s18, 1
      %p99 = por %p97, %p98
      %p100 = scmp.ne.s32.totalorder %s91, %s92
      %p101 = scmp.eq.s32.totalorder %s18, 0
      %p102 = por %p100, %p101
      %p103 = scmp.ne.s32.totalorder %s91, %s92
      %p104 = scmp.eq.s32.totalorder %s19, 1
      %p105 = por %p103, %p104
      %p107 = scmp.ne.s32.totalorder %s92, %s106
      %p108 = scmp.eq.s32.totalorder %s19, 0
      %p109 = por %p107, %p108
      %s110 = ssub.s32 %s13, %s20
      %p111 = scmp.eq.s32.totalorder %s110, 0
      %s113 = sadd.s32 %s112, 1
      %s114 = scalar_select %p111, %s112, %s113
      %p117 = pneg %p111
      %p118 = scmp.eq.s32.totalorder %s13, 1
      %p119 = por %p117, %p118
      %p120 = scmp.ne.s32.totalorder %s112, %s115
      %p121 = scmp.eq.s32.totalorder %s13, 0
      %p122 = por %p120, %p121
      %p123 = scmp.ne.s32.totalorder %s112, %s115
      %p124 = scmp.eq.s32.totalorder %s18, 1
      %p125 = por %p123, %p124
      %p126 = scmp.ne.s32.totalorder %s115, %s116
      %p127 = scmp.eq.s32.totalorder %s18, 0
      %p128 = por %p126, %p127
      %p129 = scmp.ne.s32.totalorder %s115, %s116
      %p130 = scmp.eq.s32.totalorder %s19, 1
      %p131 = por %p129, %p130
      %p133 = scmp.ne.s32.totalorder %s116, %s132
      %p134 = scmp.eq.s32.totalorder %s19, 0
      %p135 = por %p133, %p134
      %p136 = scmp.le.s32.totalorder 1, %s13
      %p137 = scmp.lt.s32.totalorder %s13, 3
      %p138 = pnand %p136, %p137
      %p139 = pneg %p138
      // Predicated region
      $region9: #{tpu_custom_call.1} parent=5 // pred_check
        _
      $region10: #{tpu_custom_call.1} parent=5 // pred_check_branch
        %141 = sbr.rel (%p138) target = $region12
      $region11: #{tpu_custom_call.1} parent=5 // pred_region
        %s142 = ssub.s32 %s13, 1
        // Predicated region
        $region13: #{tpu_custom_call.1} parent=11 // pred_check
          %p143 = pneg %p60
        $region14: #{tpu_custom_call.1} parent=11 // pred_check_branch
          %145 = sbr.rel (%p143) target = $region16
        $region15: #{tpu_custom_call.1} parent=11 // pred_region
          _
        $region16: #{tpu_custom_call.1} parent=11 // pred_fallthru
          _
        // Predicated region
        $region17: #{tpu_custom_call.1} parent=11 // pred_check
          %p146 = pneg %p81
        $region18: #{tpu_custom_call.1} parent=11 // pred_check_branch
          %148 = sbr.rel (%p146) target = $region20
        $region19: #{tpu_custom_call.1} parent=11 // pred_region
          _
        $region20: #{tpu_custom_call.1} parent=11 // pred_fallthru
          _
        // Predicated region
        $region21: #{tpu_custom_call.1} parent=11 // pred_check
          %p149 = pneg %p102
        $region22: #{tpu_custom_call.1} parent=11 // pred_check_branch
          %151 = sbr.rel (%p149) target = $region24
        $region23: #{tpu_custom_call.1} parent=11 // pred_region
          _
        $region24: #{tpu_custom_call.1} parent=11 // pred_fallthru
          _
      $region12: #{tpu_custom_call.1} parent=5 // pred_fallthru
        _
      %p152 = scmp.lt.s32.totalorder %s13, 2
      // Predicated region
      $region25: #{tpu_custom_call.1} parent=5 // pred_check
        %p153 = pneg %p152
      $region26: #{tpu_custom_call.1} parent=5 // pred_check_branch
        %155 = sbr.rel (%p153) target = $region28
      $region27: #{tpu_custom_call.1} parent=5 // pred_region
        // Predicated region
        $region29: #{tpu_custom_call.1} parent=27 // pred_check
          %p156 = pneg %p33
        $region30: #{tpu_custom_call.1} parent=27 // pred_check_branch
          %158 = sbr.rel (%p156) target = $region32
        $region31: #{tpu_custom_call.1} parent=27 // pred_region
          %p159 = scmp.lt.s32.totalorder %s13, 1
          %s160 = scalar_select %p159, %s13, 1
          %s161 = smul.addr %s160, 408
          %s162 = smul.addr %s161, 4
          %s163 = scalar_lea.vmem %s0, %s162
        $region32: #{tpu_custom_call.1} parent=27 // pred_fallthru
          _
      $region28: #{tpu_custom_call.1} parent=5 // pred_fallthru
        _
      %p164 = scmp.le.s32.totalorder 1, %s13
      %p165 = scmp.lt.s32.totalorder %s13, 3
      %p166 = pnand %p164, %p165
      %p167 = pneg %p166
      // Predicated region
      $region33: #{tpu_custom_call.1} parent=5 // pred_check
        _
      $region34: #{tpu_custom_call.1} parent=5 // pred_check_branch
        %169 = sbr.rel (%p166) target = $region36
      $region35: #{tpu_custom_call.1} parent=5 // pred_region
        %s170 = ssub.s32 %s13, 1
        %p171 = scmp.lt.s32.totalorder %s18, 1
        %s172 = scalar_select %p171, %s18, 1
        %s173 = smul.addr %s172, 408
        %s174 = smul.addr %s173, 4
        %s175 = scalar_lea.vmem %s0, %s174
        %p176 = pneg %p39
        %p177 = pneg %p36
        %p178 = pneg %p60
        %p179 = pneg %p57
        %p180 = pneg %p81
        %p181 = pneg %p78
        %p182 = pneg %p102
        %p183 = pneg %p99
        %p184 = pneg %p128
        %p185 = pneg %p125
        %s186 = sand.u32 %s115, 1
        %s187 = scalar_lea.sflag [#allocation3], %s186
        %s188 = sand.u32 %s115, 1
        %s189 = smul.addr %s188, 512
        %s190 = scalar_lea.vmem [#allocation2], %s189
        %p191 = scmp.lt.s32.totalorder %s18, 1
        %s192 = scalar_select %p191, %s18, 1
        %s193 = smul.addr %s192, 408
        %s194 = smul.addr %s193, 4
        %s195 = scalar_lea.vmem %s0, %s194
        %v197 = vld [vmem:[%s2] sm:$0x1]
        %v198 = vld [vmem:[%s3] sm:$0x1]
        %v199 = vld [vmem:[%s195] sm:$0xf]
        %v200 = vld [vmem:[%s195 + $0x4] sm:$0xf]
        %v201 = vld [vmem:[%s195 + $0x8] sm:$0xf]
        %v202 = vld [vmem:[%s195 + $0xc] sm:$0xf]
        %v203 = vld [vmem:[%s195 + $0x10] sm:$0xf]
        %v204 = vld [vmem:[%s195 + $0x14] sm:$0xf]
        %v205 = vld [vmem:[%s195 + $0x18] sm:$0xf]
        %v206 = vld [vmem:[%s195 + $0x1c] sm:$0xf]
        %v207 = vld [vmem:[%s195 + $0x20] sm:$0xf]
        %v208 = vld [vmem:[%s195 + $0x24] sm:$0xf]
        %v209 = vld [vmem:[%s195 + $0x28] sm:$0xf]
        %v210 = vld [vmem:[%s195 + $0x2c] sm:$0xf]
        %v211 = vld [vmem:[%s195 + $0x30] sm:$0xf]
        %v212 = vld [vmem:[%s195 + $0x34] sm:$0xf]
        %v213 = vld [vmem:[%s195 + $0x38] sm:$0xf]
        %v214 = vld [vmem:[%s195 + $0x3c] sm:$0xf]
        %v215 = vld [vmem:[%s195 + $0x40] sm:$0xf]
        %v216 = vld [vmem:[%s195 + $0x44] sm:$0xf]
        %v217 = vld [vmem:[%s195 + $0x48] sm:$0xf]
        %v218 = vld [vmem:[%s195 + $0x4c] sm:$0xf]
        %v219 = vld [vmem:[%s195 + $0x50] sm:$0xf]
        %v220 = vld [vmem:[%s195 + $0x54] sm:$0xf]
        %v221 = vld [vmem:[%s195 + $0x58] sm:$0xf]
        %v222 = vld [vmem:[%s195 + $0x5c] sm:$0xf]
        %v223 = vld [vmem:[%s195 + $0x60] sm:$0xf]
        %v224 = vld [vmem:[%s195 + $0x64] sm:$0xf]
        %v225 = vld [vmem:[%s195 + $0x68] sm:$0xf]
        %v226 = vld [vmem:[%s195 + $0x6c] sm:$0xf]
        %v227 = vld [vmem:[%s195 + $0x70] sm:$0xf]
        %v228 = vld [vmem:[%s195 + $0x74] sm:$0xf]
        %v229 = vld [vmem:[%s195 + $0x78] sm:$0xf]
        %v230 = vld [vmem:[%s195 + $0x7c] sm:$0xf]
        %v231 = vld [vmem:[%s1] sm:$0x3]
        %s232 = scalar_lea.vmem %s195, 544
        %v233 = vld [vmem:[%s232] sm:$0xf]
        %v234 = vld [vmem:[%s232 + $0x4] sm:$0xf]
        %v235 = vld [vmem:[%s232 + $0x8] sm:$0xf]
        %v236 = vld [vmem:[%s232 + $0xc] sm:$0xf]
        %v237 = vld [vmem:[%s232 + $0x10] sm:$0xf]
        %v238 = vld [vmem:[%s232 + $0x14] sm:$0xf]
        %v239 = vld [vmem:[%s232 + $0x18] sm:$0xf]
        %v240 = vld [vmem:[%s232 + $0x1c] sm:$0xf]
        %v241 = vld [vmem:[%s232 + $0x20] sm:$0xf]
        %v242 = vld [vmem:[%s232 + $0x24] sm:$0xf]
        %v243 = vld [vmem:[%s232 + $0x28] sm:$0xf]
        %v244 = vld [vmem:[%s232 + $0x2c] sm:$0xf]
        %v245 = vld [vmem:[%s232 + $0x30] sm:$0xf]
        %v246 = vld [vmem:[%s232 + $0x34] sm:$0xf]
        %v247 = vld [vmem:[%s232 + $0x38] sm:$0xf]
        %v248 = vld [vmem:[%s232 + $0x3c] sm:$0xf]
        %v249 = vld [vmem:[%s232 + $0x40] sm:$0xf]
        %v250 = vld [vmem:[%s232 + $0x44] sm:$0xf]
        %v251 = vld [vmem:[%s232 + $0x48] sm:$0xf]
        %v252 = vld [vmem:[%s232 + $0x4c] sm:$0xf]
        %v253 = vld [vmem:[%s232 + $0x50] sm:$0xf]
        %v254 = vld [vmem:[%s232 + $0x54] sm:$0xf]
        %v255 = vld [vmem:[%s232 + $0x58] sm:$0xf]
        %v256 = vld [vmem:[%s232 + $0x5c] sm:$0xf]
        %v257 = vld [vmem:[%s232 + $0x60] sm:$0xf]
        %v258 = vld [vmem:[%s232 + $0x64] sm:$0xf]
        %v259 = vld [vmem:[%s232 + $0x68] sm:$0xf]
        %v260 = vld [vmem:[%s232 + $0x6c] sm:$0xf]
        %v261 = vld [vmem:[%s232 + $0x70] sm:$0xf]
        %v262 = vld [vmem:[%s232 + $0x74] sm:$0xf]
        %v263 = vld [vmem:[%s232 + $0x78] sm:$0xf]
        %v264 = vld [vmem:[%s232 + $0x7c] sm:$0xf]
        %s265 = scalar_lea.vmem %s1, 2
        %v266 = vld [vmem:[%s265] sm:$0x3]
        %v299 = vunpack.c.l.b16 %v233
        %v300 = vunpack.c.l.b16 %v234
        %v301 = vunpack.c.l.b16 %v235
        %v302 = vunpack.c.l.b16 %v236
        %v303 = vunpack.c.l.b16 %v237
        %v304 = vunpack.c.l.b16 %v238
        %v305 = vunpack.c.l.b16 %v239
        %v306 = vunpack.c.l.b16 %v240
        %v307 = vunpack.c.l.b16 %v241
        %v308 = vunpack.c.l.b16 %v242
        %v309 = vunpack.c.l.b16 %v243
        %v310 = vunpack.c.l.b16 %v244
        %v311 = vunpack.c.l.b16 %v245
        %v312 = vunpack.c.l.b16 %v246
        %v313 = vunpack.c.l.b16 %v247
        %v314 = vunpack.c.l.b16 %v248
        %v315 = vunpack.c.l.b16 %v249
        %v316 = vunpack.c.l.b16 %v250
        %v317 = vunpack.c.l.b16 %v251
        %v318 = vunpack.c.l.b16 %v252
        %v319 = vunpack.c.l.b16 %v253
        %v320 = vunpack.c.l.b16 %v254
        %v321 = vunpack.c.l.b16 %v255
        %v322 = vunpack.c.l.b16 %v256
        %v323 = vunpack.c.l.b16 %v257
        %v324 = vunpack.c.l.b16 %v258
        %v325 = vunpack.c.l.b16 %v259
        %v326 = vunpack.c.l.b16 %v260
        %v327 = vunpack.c.l.b16 %v261
        %v328 = vunpack.c.l.b16 %v262
        %v329 = vunpack.c.l.b16 %v263
        %v330 = vunpack.c.l.b16 %v264
        %v331 = vpack.c.b16 %v300, %v299
        %v332 = vpack.c.b16 %v302, %v301
        %v333 = vpack.c.b16 %v304, %v303
        %v334 = vpack.c.b16 %v306, %v305
        %v335 = vpack.c.b16 %v308, %v307
        %v336 = vpack.c.b16 %v310, %v309
        %v337 = vpack.c.b16 %v312, %v311
        %v338 = vpack.c.b16 %v314, %v313
        %v339 = vpack.c.b16 %v316, %v315
        %v340 = vpack.c.b16 %v318, %v317
        %v341 = vpack.c.b16 %v320, %v319
        %v342 = vpack.c.b16 %v322, %v321
        %v343 = vpack.c.b16 %v324, %v323
        %v344 = vpack.c.b16 %v326, %v325
        %v345 = vpack.c.b16 %v328, %v327
        %v346 = vpack.c.b16 %v330, %v329
        %vm347 = vcmask 23552
        %v349 = vsel %vm347, %v331, 0
        %v352 = vsel %vm347, %v332, 0
        %v355 = vsel %vm347, %v333, 0
        %v358 = vsel %vm347, %v334, 0
        %v361 = vsel %vm347, %v335, 0
        %v364 = vsel %vm347, %v336, 0
        %v367 = vsel %vm347, %v337, 0
        %v370 = vsel %vm347, %v338, 0
        %v373 = vsel %vm347, %v339, 0
        %v376 = vsel %vm347, %v340, 0
        %v379 = vsel %vm347, %v341, 0
        %v382 = vsel %vm347, %v342, 0
        %v385 = vsel %vm347, %v343, 0
        %v388 = vsel %vm347, %v344, 0
        %v391 = vsel %vm347, %v345, 0
        %v394 = vsel %vm347, %v346, 0
        %vm396 = vcmask 1040384
        %vm397 = vcmask 1041408
        %v398 = vsel %vm396, 4294967295, 65535
        %v399 = vsel %vm397, %v398, 0
        %v401 = vand.u32 %v266, %v399
        %403 = vmatpush.bf16.msra.mxu0 0
        %404 = vmatpush.bf16.msra.mxu0 0
        %405 = vmatpush.bf16.msra.mxu0 0
        %406 = vmatpush.bf16.msra.mxu0 0
        %407 = vmatpush.bf16.msra.mxu0 0
        %408 = vmatpush.bf16.msra.mxu0 0
        %409 = vmatpush.bf16.msra.mxu0 0
        %410 = vmatpush.bf16.msra.mxu0 %v401
        %411 = vmatmul.bf16.gmra.mxu0 %v349
        %v412 = vpop.f32.mrf.mxu0
        %v413 = vadd.f32 0.0, %v412
        %v414 = vpop.f32.mrf.mxu0
        %v415 = vadd.f32 0.0, %v414
        %416 = vmatmul.bf16.gmra.mxu0 %v352
        %v417 = vpop.f32.mrf.mxu0
        %v418 = vadd.f32 0.0, %v417
        %v419 = vpop.f32.mrf.mxu0
        %v420 = vadd.f32 0.0, %v419
        %421 = vmatmul.bf16.gmra.mxu0 %v355
        %v422 = vpop.f32.mrf.mxu0
        %v423 = vadd.f32 0.0, %v422
        %v424 = vpop.f32.mrf.mxu0
        %v425 = vadd.f32 0.0, %v424
        %426 = vmatmul.bf16.gmra.mxu0 %v358
        %v427 = vpop.f32.mrf.mxu0
        %v428 = vadd.f32 0.0, %v427
        %v429 = vpop.f32.mrf.mxu0
        %v430 = vadd.f32 0.0, %v429
        %431 = vmatmul.bf16.gmra.mxu0 %v361
        %v432 = vpop.f32.mrf.mxu0
        %v433 = vadd.f32 0.0, %v432
        %v434 = vpop.f32.mrf.mxu0
        %v435 = vadd.f32 0.0, %v434
        %436 = vmatmul.bf16.gmra.mxu0 %v364
        %v437 = vpop.f32.mrf.mxu0
        %v438 = vadd.f32 0.0, %v437
        %v439 = vpop.f32.mrf.mxu0
        %v440 = vadd.f32 0.0, %v439
        %441 = vmatmul.bf16.gmra.mxu0 %v367
        %v442 = vpop.f32.mrf.mxu0
        %v443 = vadd.f32 0.0, %v442
        %v444 = vpop.f32.mrf.mxu0
        %v445 = vadd.f32 0.0, %v444
        %446 = vmatmul.bf16.gmra.mxu0 %v370
        %v447 = vpop.f32.mrf.mxu0
        %v448 = vadd.f32 0.0, %v447
        %v449 = vpop.f32.mrf.mxu0
        %v450 = vadd.f32 0.0, %v449
        %451 = vmatmul.bf16.gmra.mxu0 %v373
        %v452 = vpop.f32.mrf.mxu0
        %v453 = vadd.f32 0.0, %v452
        %v454 = vpop.f32.mrf.mxu0
        %v455 = vadd.f32 0.0, %v454
        %456 = vmatmul.bf16.gmra.mxu0 %v376
        %v457 = vpop.f32.mrf.mxu0
        %v458 = vadd.f32 0.0, %v457
        %v459 = vpop.f32.mrf.mxu0
        %v460 = vadd.f32 0.0, %v459
        %461 = vmatmul.bf16.gmra.mxu0 %v379
        %v462 = vpop.f32.mrf.mxu0
        %v463 = vadd.f32 0.0, %v462
        %v464 = vpop.f32.mrf.mxu0
        %v465 = vadd.f32 0.0, %v464
        %466 = vmatmul.bf16.gmra.mxu0 %v382
        %v467 = vpop.f32.mrf.mxu0
        %v468 = vadd.f32 0.0, %v467
        %v469 = vpop.f32.mrf.mxu0
        %v470 = vadd.f32 0.0, %v469
        %471 = vmatmul.bf16.gmra.mxu0 %v385
        %v472 = vpop.f32.mrf.mxu0
        %v473 = vadd.f32 0.0, %v472
        %v474 = vpop.f32.mrf.mxu0
        %v475 = vadd.f32 0.0, %v474
        %476 = vmatmul.bf16.gmra.mxu0 %v388
        %v477 = vpop.f32.mrf.mxu0
        %v478 = vadd.f32 0.0, %v477
        %v479 = vpop.f32.mrf.mxu0
        %v480 = vadd.f32 0.0, %v479
        %481 = vmatmul.bf16.gmra.mxu0 %v391
        %v482 = vpop.f32.mrf.mxu0
        %v483 = vadd.f32 0.0, %v482
        %v484 = vpop.f32.mrf.mxu0
        %v485 = vadd.f32 0.0, %v484
        %486 = vmatmul.bf16.gmra.mxu0 %v394
        %v487 = vpop.f32.mrf.mxu0
        %v488 = vadd.f32 0.0, %v487
        %v489 = vpop.f32.mrf.mxu0
        %v490 = vadd.f32 0.0, %v489
        %491 = vdwg.mxu0
        %v524 = vunpack.c.l.b16 %v199
        %v525 = vunpack.c.l.b16 %v200
        %v526 = vunpack.c.l.b16 %v201
        %v527 = vunpack.c.l.b16 %v202
        %v528 = vunpack.c.l.b16 %v203
        %v529 = vunpack.c.l.b16 %v204
        %v530 = vunpack.c.l.b16 %v205
        %v531 = vunpack.c.l.b16 %v206
        %v532 = vunpack.c.l.b16 %v207
        %v533 = vunpack.c.l.b16 %v208
        %v534 = vunpack.c.l.b16 %v209
        %v535 = vunpack.c.l.b16 %v210
        %v536 = vunpack.c.l.b16 %v211
        %v537 = vunpack.c.l.b16 %v212
        %v538 = vunpack.c.l.b16 %v213
        %v539 = vunpack.c.l.b16 %v214
        %v540 = vunpack.c.l.b16 %v215
        %v541 = vunpack.c.l.b16 %v216
        %v542 = vunpack.c.l.b16 %v217
        %v543 = vunpack.c.l.b16 %v218
        %v544 = vunpack.c.l.b16 %v219
        %v545 = vunpack.c.l.b16 %v220
        %v546 = vunpack.c.l.b16 %v221
        %v547 = vunpack.c.l.b16 %v222
        %v548 = vunpack.c.l.b16 %v223
        %v549 = vunpack.c.l.b16 %v224
        %v550 = vunpack.c.l.b16 %v225
        %v551 = vunpack.c.l.b16 %v226
        %v552 = vunpack.c.l.b16 %v227
        %v553 = vunpack.c.l.b16 %v228
        %v554 = vunpack.c.l.b16 %v229
        %v555 = vunpack.c.l.b16 %v230
        %v556 = vpack.c.b16 %v525, %v524
        %v557 = vpack.c.b16 %v527, %v526
        %v558 = vpack.c.b16 %v529, %v528
        %v559 = vpack.c.b16 %v531, %v530
        %v560 = vpack.c.b16 %v533, %v532
        %v561 = vpack.c.b16 %v535, %v534
        %v562 = vpack.c.b16 %v537, %v536
        %v563 = vpack.c.b16 %v539, %v538
        %v564 = vpack.c.b16 %v541, %v540
        %v565 = vpack.c.b16 %v543, %v542
        %v566 = vpack.c.b16 %v545, %v544
        %v567 = vpack.c.b16 %v547, %v546
        %v568 = vpack.c.b16 %v549, %v548
        %v569 = vpack.c.b16 %v551, %v550
        %v570 = vpack.c.b16 %v553, %v552
        %v571 = vpack.c.b16 %v555, %v554
        %v573 = vsel %vm347, %v556, 0
        %v576 = vsel %vm347, %v557, 0
        %v579 = vsel %vm347, %v558, 0
        %v582 = vsel %vm347, %v559, 0
        %v585 = vsel %vm347, %v560, 0
        %v588 = vsel %vm347, %v561, 0
        %v591 = vsel %vm347, %v562, 0
        %v594 = vsel %vm347, %v563, 0
        %v597 = vsel %vm347, %v564, 0
        %v600 = vsel %vm347, %v565, 0
        %v603 = vsel %vm347, %v566, 0
        %v606 = vsel %vm347, %v567, 0
        %v609 = vsel %vm347, %v568, 0
        %v612 = vsel %vm347, %v569, 0
        %v615 = vsel %vm347, %v570, 0
        %v618 = vsel %vm347, %v571, 0
        %v621 = vand.u32 %v231, %v399
        %623 = vmatpush.bf16.msra.mxu0 0
        %624 = vmatpush.bf16.msra.mxu0 0
        %625 = vmatpush.bf16.msra.mxu0 0
        %626 = vmatpush.bf16.msra.mxu0 0
        %627 = vmatpush.bf16.msra.mxu0 0
        %628 = vmatpush.bf16.msra.mxu0 0
        %629 = vmatpush.bf16.msra.mxu0 0
        %630 = vmatpush.bf16.msra.mxu0 %v621
        %631 = vmatmul.bf16.gmra.mxu0 %v573
        %v632 = vpop.f32.mrf.mxu0
        %v633 = vadd.f32 %v413, %v632
        %v634 = vpop.f32.mrf.mxu0
        %v635 = vadd.f32 %v415, %v634
        %636 = vmatmul.bf16.gmra.mxu0 %v576
        %v637 = vpop.f32.mrf.mxu0
        %v638 = vadd.f32 %v418, %v637
        %v639 = vpop.f32.mrf.mxu0
        %v640 = vadd.f32 %v420, %v639
        %641 = vmatmul.bf16.gmra.mxu0 %v579
        %v642 = vpop.f32.mrf.mxu0
        %v643 = vadd.f32 %v423, %v642
        %v644 = vpop.f32.mrf.mxu0
        %v645 = vadd.f32 %v425, %v644
        %646 = vmatmul.bf16.gmra.mxu0 %v582
        %v647 = vpop.f32.mrf.mxu0
        %v648 = vadd.f32 %v428, %v647
        %v649 = vpop.f32.mrf.mxu0
        %v650 = vadd.f32 %v430, %v649
        %651 = vmatmul.bf16.gmra.mxu0 %v585
        %v652 = vpop.f32.mrf.mxu0
        %v653 = vadd.f32 %v433, %v652
        %v654 = vpop.f32.mrf.mxu0
        %v655 = vadd.f32 %v435, %v654
        %656 = vmatmul.bf16.gmra.mxu0 %v588
        %v657 = vpop.f32.mrf.mxu0
        %v658 = vadd.f32 %v438, %v657
        %v659 = vpop.f32.mrf.mxu0
        %v660 = vadd.f32 %v440, %v659
        %661 = vmatmul.bf16.gmra.mxu0 %v591
        %v662 = vpop.f32.mrf.mxu0
        %v663 = vadd.f32 %v443, %v662
        %v664 = vpop.f32.mrf.mxu0
        %v665 = vadd.f32 %v445, %v664
        %666 = vmatmul.bf16.gmra.mxu0 %v594
        %v667 = vpop.f32.mrf.mxu0
        %v668 = vadd.f32 %v448, %v667
        %v669 = vpop.f32.mrf.mxu0
        %v670 = vadd.f32 %v450, %v669
        %671 = vmatmul.bf16.gmra.mxu0 %v597
        %v672 = vpop.f32.mrf.mxu0
        %v673 = vadd.f32 %v453, %v672
        %v674 = vpop.f32.mrf.mxu0
        %v675 = vadd.f32 %v455, %v674
        %676 = vmatmul.bf16.gmra.mxu0 %v600
        %v677 = vpop.f32.mrf.mxu0
        %v678 = vadd.f32 %v458, %v677
        %v679 = vpop.f32.mrf.mxu0
        %v680 = vadd.f32 %v460, %v679
        %681 = vmatmul.bf16.gmra.mxu0 %v603
        %v682 = vpop.f32.mrf.mxu0
        %v683 = vadd.f32 %v463, %v682
        %v684 = vpop.f32.mrf.mxu0
        %v685 = vadd.f32 %v465, %v684
        %686 = vmatmul.bf16.gmra.mxu0 %v606
        %v687 = vpop.f32.mrf.mxu0
        %v688 = vadd.f32 %v468, %v687
        %v689 = vpop.f32.mrf.mxu0
        %v690 = vadd.f32 %v470, %v689
        %691 = vmatmul.bf16.gmra.mxu0 %v609
        %v692 = vpop.f32.mrf.mxu0
        %v693 = vadd.f32 %v473, %v692
        %v694 = vpop.f32.mrf.mxu0
        %v695 = vadd.f32 %v475, %v694
        %696 = vmatmul.bf16.gmra.mxu0 %v612
        %v697 = vpop.f32.mrf.mxu0
        %v698 = vadd.f32 %v478, %v697
        %v699 = vpop.f32.mrf.mxu0
        %v700 = vadd.f32 %v480, %v699
        %701 = vmatmul.bf16.gmra.mxu0 %v615
        %v702 = vpop.f32.mrf.mxu0
        %v703 = vadd.f32 %v483, %v702
        %v704 = vpop.f32.mrf.mxu0
        %v705 = vadd.f32 %v485, %v704
        %706 = vmatmul.bf16.gmra.mxu0 %v618
        %v707 = vpop.f32.mrf.mxu0
        %v708 = vadd.f32 %v488, %v707
        %v709 = vpop.f32.mrf.mxu0
        %v710 = vadd.f32 %v490, %v709
        %711 = vdwg.mxu0
        %s712 = scalar_lea.vmem %s195, 1088
        %v713 = vld [vmem:[%s712] sm:$0xf]
        %v714 = vld [vmem:[%s712 + $0x4] sm:$0xf]
        %v715 = vld [vmem:[%s712 + $0x8] sm:$0xf]
        %v716 = vld [vmem:[%s712 + $0xc] sm:$0xf]
        %v717 = vld [vmem:[%s712 + $0x10] sm:$0xf]
        %v718 = vld [vmem:[%s712 + $0x14] sm:$0xf]
        %v719 = vld [vmem:[%s712 + $0x18] sm:$0xf]
        %v720 = vld [vmem:[%s712 + $0x1c] sm:$0xf]
        %v721 = vld [vmem:[%s712 + $0x20] sm:$0xf]
        %v722 = vld [vmem:[%s712 + $0x24] sm:$0xf]
        %v723 = vld [vmem:[%s712 + $0x28] sm:$0xf]
        %v724 = vld [vmem:[%s712 + $0x2c] sm:$0xf]
        %v725 = vld [vmem:[%s712 + $0x30] sm:$0xf]
        %v726 = vld [vmem:[%s712 + $0x34] sm:$0xf]
        %v727 = vld [vmem:[%s712 + $0x38] sm:$0xf]
        %v728 = vld [vmem:[%s712 + $0x3c] sm:$0xf]
        %v729 = vld [vmem:[%s712 + $0x40] sm:$0xf]
        %v730 = vld [vmem:[%s712 + $0x44] sm:$0xf]
        %v731 = vld [vmem:[%s712 + $0x48] sm:$0xf]
        %v732 = vld [vmem:[%s712 + $0x4c] sm:$0xf]
        %v733 = vld [vmem:[%s712 + $0x50] sm:$0xf]
        %v734 = vld [vmem:[%s712 + $0x54] sm:$0xf]
        %v735 = vld [vmem:[%s712 + $0x58] sm:$0xf]
        %v736 = vld [vmem:[%s712 + $0x5c] sm:$0xf]
        %v737 = vld [vmem:[%s712 + $0x60] sm:$0xf]
        %v738 = vld [vmem:[%s712 + $0x64] sm:$0xf]
        %v739 = vld [vmem:[%s712 + $0x68] sm:$0xf]
        %v740 = vld [vmem:[%s712 + $0x6c] sm:$0xf]
        %v741 = vld [vmem:[%s712 + $0x70] sm:$0xf]
        %v742 = vld [vmem:[%s712 + $0x74] sm:$0xf]
        %v743 = vld [vmem:[%s712 + $0x78] sm:$0xf]
        %v744 = vld [vmem:[%s712 + $0x7c] sm:$0xf]
        %s745 = scalar_lea.vmem %s1, 4
        %v746 = vld [vmem:[%s745] sm:$0x3]
        %v779 = vunpack.c.l.b16 %v713
        %v780 = vunpack.c.l.b16 %v714
        %v781 = vunpack.c.l.b16 %v715
        %v782 = vunpack.c.l.b16 %v716
        %v783 = vunpack.c.l.b16 %v717
        %v784 = vunpack.c.l.b16 %v718
        %v785 = vunpack.c.l.b16 %v719
        %v786 = vunpack.c.l.b16 %v720
        %v787 = vunpack.c.l.b16 %v721
        %v788 = vunpack.c.l.b16 %v722
        %v789 = vunpack.c.l.b16 %v723
        %v790 = vunpack.c.l.b16 %v724
        %v791 = vunpack.c.l.b16 %v725
        %v792 = vunpack.c.l.b16 %v726
        %v793 = vunpack.c.l.b16 %v727
        %v794 = vunpack.c.l.b16 %v728
        %v795 = vunpack.c.l.b16 %v729
        %v796 = vunpack.c.l.b16 %v730
        %v797 = vunpack.c.l.b16 %v731
        %v798 = vunpack.c.l.b16 %v732
        %v799 = vunpack.c.l.b16 %v733
        %v800 = vunpack.c.l.b16 %v734
        %v801 = vunpack.c.l.b16 %v735
        %v802 = vunpack.c.l.b16 %v736
        %v803 = vunpack.c.l.b16 %v737
        %v804 = vunpack.c.l.b16 %v738
        %v805 = vunpack.c.l.b16 %v739
        %v806 = vunpack.c.l.b16 %v740
        %v807 = vunpack.c.l.b16 %v741
        %v808 = vunpack.c.l.b16 %v742
        %v809 = vunpack.c.l.b16 %v743
        %v810 = vunpack.c.l.b16 %v744
        %v811 = vpack.c.b16 %v780, %v779
        %v812 = vpack.c.b16 %v782, %v781
        %v813 = vpack.c.b16 %v784, %v783
        %v814 = vpack.c.b16 %v786, %v785
        %v815 = vpack.c.b16 %v788, %v787
        %v816 = vpack.c.b16 %v790, %v789
        %v817 = vpack.c.b16 %v792, %v791
        %v818 = vpack.c.b16 %v794, %v793
        %v819 = vpack.c.b16 %v796, %v795
        %v820 = vpack.c.b16 %v798, %v797
        %v821 = vpack.c.b16 %v800, %v799
        %v822 = vpack.c.b16 %v802, %v801
        %v823 = vpack.c.b16 %v804, %v803
        %v824 = vpack.c.b16 %v806, %v805
        %v825 = vpack.c.b16 %v808, %v807
        %v826 = vpack.c.b16 %v810, %v809
        %v828 = vsel %vm347, %v811, 0
        %v831 = vsel %vm347, %v812, 0
        %v834 = vsel %vm347, %v813, 0
        %v837 = vsel %vm347, %v814, 0
        %v840 = vsel %vm347, %v815, 0
        %v843 = vsel %vm347, %v816, 0
        %v846 = vsel %vm347, %v817, 0
        %v849 = vsel %vm347, %v818, 0
        %v852 = vsel %vm347, %v819, 0
        %v855 = vsel %vm347, %v820, 0
        %v858 = vsel %vm347, %v821, 0
        %v861 = vsel %vm347, %v822, 0
        %v864 = vsel %vm347, %v823, 0
        %v867 = vsel %vm347, %v824, 0
        %v870 = vsel %vm347, %v825, 0
        %v873 = vsel %vm347, %v826, 0
        %v876 = vand.u32 %v746, %v399
        %878 = vmatpush.bf16.msra.mxu0 0
        %879 = vmatpush.bf16.msra.mxu0 0
        %880 = vmatpush.bf16.msra.mxu0 0
        %881 = vmatpush.bf16.msra.mxu0 0
        %882 = vmatpush.bf16.msra.mxu0 0
        %883 = vmatpush.bf16.msra.mxu0 0
        %884 = vmatpush.bf16.msra.mxu0 0
        %885 = vmatpush.bf16.msra.mxu0 %v876
        %886 = vmatmul.bf16.gmra.mxu0 %v828
        %v887 = vpop.f32.mrf.mxu0
        %v888 = vadd.f32 0.0, %v887
        %v889 = vpop.f32.mrf.mxu0
        %v890 = vadd.f32 0.0, %v889
        %891 = vmatmul.bf16.gmra.mxu0 %v831
        %v892 = vpop.f32.mrf.mxu0
        %v893 = vadd.f32 0.0, %v892
        %v894 = vpop.f32.mrf.mxu0
        %v895 = vadd.f32 0.0, %v894
        %896 = vmatmul.bf16.gmra.mxu0 %v834
        %v897 = vpop.f32.mrf.mxu0
        %v898 = vadd.f32 0.0, %v897
        %v899 = vpop.f32.mrf.mxu0
        %v900 = vadd.f32 0.0, %v899
        %901 = vmatmul.bf16.gmra.mxu0 %v837
        %v902 = vpop.f32.mrf.mxu0
        %v903 = vadd.f32 0.0, %v902
        %v904 = vpop.f32.mrf.mxu0
        %v905 = vadd.f32 0.0, %v904
        %906 = vmatmul.bf16.gmra.mxu0 %v840
        %v907 = vpop.f32.mrf.mxu0
        %v908 = vadd.f32 0.0, %v907
        %v909 = vpop.f32.mrf.mxu0
        %v910 = vadd.f32 0.0, %v909
        %911 = vmatmul.bf16.gmra.mxu0 %v843
        %v912 = vpop.f32.mrf.mxu0
        %v913 = vadd.f32 0.0, %v912
        %v914 = vpop.f32.mrf.mxu0
        %v915 = vadd.f32 0.0, %v914
        %916 = vmatmul.bf16.gmra.mxu0 %v846
        %v917 = vpop.f32.mrf.mxu0
        %v918 = vadd.f32 0.0, %v917
        %v919 = vpop.f32.mrf.mxu0
        %v920 = vadd.f32 0.0, %v919
        %921 = vmatmul.bf16.gmra.mxu0 %v849
        %v922 = vpop.f32.mrf.mxu0
        %v923 = vadd.f32 0.0, %v922
        %v924 = vpop.f32.mrf.mxu0
        %v925 = vadd.f32 0.0, %v924
        %926 = vmatmul.bf16.gmra.mxu0 %v852
        %v927 = vpop.f32.mrf.mxu0
        %v928 = vadd.f32 0.0, %v927
        %v929 = vpop.f32.mrf.mxu0
        %v930 = vadd.f32 0.0, %v929
        %931 = vmatmul.bf16.gmra.mxu0 %v855
        %v932 = vpop.f32.mrf.mxu0
        %v933 = vadd.f32 0.0, %v932
        %v934 = vpop.f32.mrf.mxu0
        %v935 = vadd.f32 0.0, %v934
        %936 = vmatmul.bf16.gmra.mxu0 %v858
        %v937 = vpop.f32.mrf.mxu0
        %v938 = vadd.f32 0.0, %v937
        %v939 = vpop.f32.mrf.mxu0
        %v940 = vadd.f32 0.0, %v939
        %941 = vmatmul.bf16.gmra.mxu0 %v861
        %v942 = vpop.f32.mrf.mxu0
        %v943 = vadd.f32 0.0, %v942
        %v944 = vpop.f32.mrf.mxu0
        %v945 = vadd.f32 0.0, %v944
        %946 = vmatmul.bf16.gmra.mxu0 %v864
        %v947 = vpop.f32.mrf.mxu0
        %v948 = vadd.f32 0.0, %v947
        %v949 = vpop.f32.mrf.mxu0
        %v950 = vadd.f32 0.0, %v949
        %951 = vmatmul.bf16.gmra.mxu0 %v867
        %v952 = vpop.f32.mrf.mxu0
        %v953 = vadd.f32 0.0, %v952
        %v954 = vpop.f32.mrf.mxu0
        %v955 = vadd.f32 0.0, %v954
        %956 = vmatmul.bf16.gmra.mxu0 %v870
        %v957 = vpop.f32.mrf.mxu0
        %v958 = vadd.f32 0.0, %v957
        %v959 = vpop.f32.mrf.mxu0
        %v960 = vadd.f32 0.0, %v959
        %961 = vmatmul.bf16.gmra.mxu0 %v873
        %v962 = vpop.f32.mrf.mxu0
        %v963 = vadd.f32 0.0, %v962
        %v964 = vpop.f32.mrf.mxu0
        %v965 = vadd.f32 0.0, %v964
        %966 = vdwg.mxu0
        %v967 = vadd.f32 %v633, %v888
        %v968 = vadd.f32 %v635, %v890
        %v969 = vadd.f32 %v638, %v893
        %v970 = vadd.f32 %v640, %v895
        %v971 = vadd.f32 %v643, %v898
        %v972 = vadd.f32 %v645, %v900
        %v973 = vadd.f32 %v648, %v903
        %v974 = vadd.f32 %v650, %v905
        %v975 = vadd.f32 %v653, %v908
        %v976 = vadd.f32 %v655, %v910
        %v977 = vadd.f32 %v658, %v913
        %v978 = vadd.f32 %v660, %v915
        %v979 = vadd.f32 %v663, %v918
        %v980 = vadd.f32 %v665, %v920
        %v981 = vadd.f32 %v668, %v923
        %v982 = vadd.f32 %v670, %v925
        %v983 = vadd.f32 %v673, %v928
        %v984 = vadd.f32 %v675, %v930
        %v985 = vadd.f32 %v678, %v933
        %v986 = vadd.f32 %v680, %v935
        %v987 = vadd.f32 %v683, %v938
        %v988 = vadd.f32 %v685, %v940
        %v989 = vadd.f32 %v688, %v943
        %v990 = vadd.f32 %v690, %v945
        %v991 = vadd.f32 %v693, %v948
        %v992 = vadd.f32 %v695, %v950
        %v993 = vadd.f32 %v698, %v953
        %v994 = vadd.f32 %v700, %v955
        %v995 = vadd.f32 %v703, %v958
        %v996 = vadd.f32 %v705, %v960
        %v997 = vadd.f32 %v708, %v963
        %v998 = vadd.f32 %v710, %v965
        %v999 = vld [vmem:[%s195 + $0x10] sm:$0xf]
        %v1000 = vld [vmem:[%s195 + $0x14] sm:$0xf]
        %v1001 = vld [vmem:[%s195 + $0x18] sm:$0xf]
        %v1002 = vld [vmem:[%s195 + $0x1c] sm:$0xf]
        %v1003 = vld [vmem:[%s195 + $0x20] sm:$0xf]
        %v1004 = vld [vmem:[%s195 + $0x24] sm:$0xf]
        %v1005 = vld [vmem:[%s195 + $0x28] sm:$0xf]
        %v1006 = vld [vmem:[%s195 + $0x2c] sm:$0xf]
        %v1007 = vld [vmem:[%s195 + $0x30] sm:$0xf]
        %v1008 = vld [vmem:[%s195 + $0x34] sm:$0xf]
        %v1009 = vld [vmem:[%s195 + $0x38] sm:$0xf]
        %v1010 = vld [vmem:[%s195 + $0x3c] sm:$0xf]
        %v1011 = vld [vmem:[%s195 + $0x40] sm:$0xf]
        %v1012 = vld [vmem:[%s195 + $0x44] sm:$0xf]
        %v1013 = vld [vmem:[%s195 + $0x48] sm:$0xf]
        %v1014 = vld [vmem:[%s195 + $0x4c] sm:$0xf]
        %v1015 = vld [vmem:[%s195 + $0x50] sm:$0xf]
        %v1016 = vld [vmem:[%s195 + $0x54] sm:$0xf]
        %v1017 = vld [vmem:[%s195 + $0x58] sm:$0xf]
        %v1018 = vld [vmem:[%s195 + $0x5c] sm:$0xf]
        %v1019 = vld [vmem:[%s195 + $0x60] sm:$0xf]
        %v1020 = vld [vmem:[%s195 + $0x64] sm:$0xf]
        %v1021 = vld [vmem:[%s195 + $0x68] sm:$0xf]
        %v1022 = vld [vmem:[%s195 + $0x6c] sm:$0xf]
        %v1023 = vld [vmem:[%s195 + $0x70] sm:$0xf]
        %v1024 = vld [vmem:[%s195 + $0x74] sm:$0xf]
        %v1025 = vld [vmem:[%s195 + $0x78] sm:$0xf]
        %v1026 = vld [vmem:[%s195 + $0x7c] sm:$0xf]
        %v1027 = vld [vmem:[%s195 + $0x80] sm:$0xf]
        %v1028 = vld [vmem:[%s195 + $0x84] sm:$0xf]
        %v1029 = vld [vmem:[%s195 + $0x88] sm:$0xf]
        %v1030 = vld [vmem:[%s195 + $0x8c] sm:$0xf]
        %s1031 = scalar_lea.vmem %s1, 6
        %v1032 = vld [vmem:[%s1031] sm:$0x3]
        %v1065 = vunpack.c.l.b16 %v999
        %v1066 = vunpack.c.l.b16 %v1000
        %v1067 = vunpack.c.l.b16 %v1001
        %v1068 = vunpack.c.l.b16 %v1002
        %v1069 = vunpack.c.l.b16 %v1003
        %v1070 = vunpack.c.l.b16 %v1004
        %v1071 = vunpack.c.l.b16 %v1005
        %v1072 = vunpack.c.l.b16 %v1006
        %v1073 = vunpack.c.l.b16 %v1007
        %v1074 = vunpack.c.l.b16 %v1008
        %v1075 = vunpack.c.l.b16 %v1009
        %v1076 = vunpack.c.l.b16 %v1010
        %v1077 = vunpack.c.l.b16 %v1011
        %v1078 = vunpack.c.l.b16 %v1012
        %v1079 = vunpack.c.l.b16 %v1013
        %v1080 = vunpack.c.l.b16 %v1014
        %v1081 = vunpack.c.l.b16 %v1015
        %v1082 = vunpack.c.l.b16 %v1016
        %v1083 = vunpack.c.l.b16 %v1017
        %v1084 = vunpack.c.l.b16 %v1018
        %v1085 = vunpack.c.l.b16 %v1019
        %v1086 = vunpack.c.l.b16 %v1020
        %v1087 = vunpack.c.l.b16 %v1021
        %v1088 = vunpack.c.l.b16 %v1022
        %v1089 = vunpack.c.l.b16 %v1023
        %v1090 = vunpack.c.l.b16 %v1024
        %v1091 = vunpack.c.l.b16 %v1025
        %v1092 = vunpack.c.l.b16 %v1026
        %v1093 = vunpack.c.l.b16 %v1027
        %v1094 = vunpack.c.l.b16 %v1028
        %v1095 = vunpack.c.l.b16 %v1029
        %v1096 = vunpack.c.l.b16 %v1030
        %v1097 = vpack.c.b16 %v1066, %v1065
        %v1098 = vpack.c.b16 %v1068, %v1067
        %v1099 = vpack.c.b16 %v1070, %v1069
        %v1100 = vpack.c.b16 %v1072, %v1071
        %v1101 = vpack.c.b16 %v1074, %v1073
        %v1102 = vpack.c.b16 %v1076, %v1075
        %v1103 = vpack.c.b16 %v1078, %v1077
        %v1104 = vpack.c.b16 %v1080, %v1079
        %v1105 = vpack.c.b16 %v1082, %v1081
        %v1106 = vpack.c.b16 %v1084, %v1083
        %v1107 = vpack.c.b16 %v1086, %v1085
        %v1108 = vpack.c.b16 %v1088, %v1087
        %v1109 = vpack.c.b16 %v1090, %v1089
        %v1110 = vpack.c.b16 %v1092, %v1091
        %v1111 = vpack.c.b16 %v1094, %v1093
        %v1112 = vpack.c.b16 %v1096, %v1095
        %v1114 = vsel %vm347, %v1097, 0
        %v1117 = vsel %vm347, %v1098, 0
        %v1120 = vsel %vm347, %v1099, 0
        %v1123 = vsel %vm347, %v1100, 0
        %v1126 = vsel %vm347, %v1101, 0
        %v1129 = vsel %vm347, %v1102, 0
        %v1132 = vsel %vm347, %v1103, 0
        %v1135 = vsel %vm347, %v1104, 0
        %v1138 = vsel %vm347, %v1105, 0
        %v1141 = vsel %vm347, %v1106, 0
        %v1144 = vsel %vm347, %v1107, 0
        %v1147 = vsel %vm347, %v1108, 0
        %v1150 = vsel %vm347, %v1109, 0
        %v1153 = vsel %vm347, %v1110, 0
        %v1156 = vsel %vm347, %v1111, 0
        %v1159 = vsel %vm347, %v1112, 0
        %v1162 = vand.u32 %v1032, %v399
        %1164 = vmatpush.bf16.msra.mxu0 0
        %1165 = vmatpush.bf16.msra.mxu0 0
        %1166 = vmatpush.bf16.msra.mxu0 0
        %1167 = vmatpush.bf16.msra.mxu0 0
        %1168 = vmatpush.bf16.msra.mxu0 0
        %1169 = vmatpush.bf16.msra.mxu0 0
        %1170 = vmatpush.bf16.msra.mxu0 0
        %1171 = vmatpush.bf16.msra.mxu0 %v1162
        %1172 = vmatmul.bf16.gmra.mxu0 %v1114
        %v1173 = vpop.f32.mrf.mxu0
        %v1174 = vadd.f32 0.0, %v1173
        %v1175 = vpop.f32.mrf.mxu0
        %v1176 = vadd.f32 0.0, %v1175
        %1177 = vmatmul.bf16.gmra.mxu0 %v1117
        %v1178 = vpop.f32.mrf.mxu0
        %v1179 = vadd.f32 0.0, %v1178
        %v1180 = vpop.f32.mrf.mxu0
        %v1181 = vadd.f32 0.0, %v1180
        %1182 = vmatmul.bf16.gmra.mxu0 %v1120
        %v1183 = vpop.f32.mrf.mxu0
        %v1184 = vadd.f32 0.0, %v1183
        %v1185 = vpop.f32.mrf.mxu0
        %v1186 = vadd.f32 0.0, %v1185
        %1187 = vmatmul.bf16.gmra.mxu0 %v1123
        %v1188 = vpop.f32.mrf.mxu0
        %v1189 = vadd.f32 0.0, %v1188
        %v1190 = vpop.f32.mrf.mxu0
        %v1191 = vadd.f32 0.0, %v1190
        %1192 = vmatmul.bf16.gmra.mxu0 %v1126
        %v1193 = vpop.f32.mrf.mxu0
        %v1194 = vadd.f32 0.0, %v1193
        %v1195 = vpop.f32.mrf.mxu0
        %v1196 = vadd.f32 0.0, %v1195
        %1197 = vmatmul.bf16.gmra.mxu0 %v1129
        %v1198 = vpop.f32.mrf.mxu0
        %v1199 = vadd.f32 0.0, %v1198
        %v1200 = vpop.f32.mrf.mxu0
        %v1201 = vadd.f32 0.0, %v1200
        %1202 = vmatmul.bf16.gmra.mxu0 %v1132
        %v1203 = vpop.f32.mrf.mxu0
        %v1204 = vadd.f32 0.0, %v1203
        %v1205 = vpop.f32.mrf.mxu0
        %v1206 = vadd.f32 0.0, %v1205
        %1207 = vmatmul.bf16.gmra.mxu0 %v1135
        %v1208 = vpop.f32.mrf.mxu0
        %v1209 = vadd.f32 0.0, %v1208
        %v1210 = vpop.f32.mrf.mxu0
        %v1211 = vadd.f32 0.0, %v1210
        %1212 = vmatmul.bf16.gmra.mxu0 %v1138
        %v1213 = vpop.f32.mrf.mxu0
        %v1214 = vadd.f32 0.0, %v1213
        %v1215 = vpop.f32.mrf.mxu0
        %v1216 = vadd.f32 0.0, %v1215
        %1217 = vmatmul.bf16.gmra.mxu0 %v1141
        %v1218 = vpop.f32.mrf.mxu0
        %v1219 = vadd.f32 0.0, %v1218
        %v1220 = vpop.f32.mrf.mxu0
        %v1221 = vadd.f32 0.0, %v1220
        %1222 = vmatmul.bf16.gmra.mxu0 %v1144
        %v1223 = vpop.f32.mrf.mxu0
        %v1224 = vadd.f32 0.0, %v1223
        %v1225 = vpop.f32.mrf.mxu0
        %v1226 = vadd.f32 0.0, %v1225
        %1227 = vmatmul.bf16.gmra.mxu0 %v1147
        %v1228 = vpop.f32.mrf.mxu0
        %v1229 = vadd.f32 0.0, %v1228
        %v1230 = vpop.f32.mrf.mxu0
        %v1231 = vadd.f32 0.0, %v1230
        %1232 = vmatmul.bf16.gmra.mxu0 %v1150
        %v1233 = vpop.f32.mrf.mxu0
        %v1234 = vadd.f32 0.0, %v1233
        %v1235 = vpop.f32.mrf.mxu0
        %v1236 = vadd.f32 0.0, %v1235
        %1237 = vmatmul.bf16.gmra.mxu0 %v1153
        %v1238 = vpop.f32.mrf.mxu0
        %v1239 = vadd.f32 0.0, %v1238
        %v1240 = vpop.f32.mrf.mxu0
        %v1241 = vadd.f32 0.0, %v1240
        %1242 = vmatmul.bf16.gmra.mxu0 %v1156
        %v1243 = vpop.f32.mrf.mxu0
        %v1244 = vadd.f32 0.0, %v1243
        %v1245 = vpop.f32.mrf.mxu0
        %v1246 = vadd.f32 0.0, %v1245
        %1247 = vmatmul.bf16.gmra.mxu0 %v1159
        %v1248 = vpop.f32.mrf.mxu0
        %v1249 = vadd.f32 0.0, %v1248
        %v1250 = vpop.f32.mrf.mxu0
        %v1251 = vadd.f32 0.0, %v1250
        %1252 = vdwg.mxu0
        %v1253 = vadd.f32 %v967, %v1174
        %v1254 = vadd.f32 %v968, %v1176
        %v1255 = vadd.f32 %v969, %v1179
        %v1256 = vadd.f32 %v970, %v1181
        %v1257 = vadd.f32 %v971, %v1184
        %v1258 = vadd.f32 %v972, %v1186
        %v1259 = vadd.f32 %v973, %v1189
        %v1260 = vadd.f32 %v974, %v1191
        %v1261 = vadd.f32 %v975, %v1194
        %v1262 = vadd.f32 %v976, %v1196
        %v1263 = vadd.f32 %v977, %v1199
        %v1264 = vadd.f32 %v978, %v1201
        %v1265 = vadd.f32 %v979, %v1204
        %v1266 = vadd.f32 %v980, %v1206
        %v1267 = vadd.f32 %v981, %v1209
        %v1268 = vadd.f32 %v982, %v1211
        %v1269 = vadd.f32 %v983, %v1214
        %v1270 = vadd.f32 %v984, %v1216
        %v1271 = vadd.f32 %v985, %v1219
        %v1272 = vadd.f32 %v986, %v1221
        %v1273 = vadd.f32 %v987, %v1224
        %v1274 = vadd.f32 %v988, %v1226
        %v1275 = vadd.f32 %v989, %v1229
        %v1276 = vadd.f32 %v990, %v1231
        %v1277 = vadd.f32 %v991, %v1234
        %v1278 = vadd.f32 %v992, %v1236
        %v1279 = vadd.f32 %v993, %v1239
        %v1280 = vadd.f32 %v994, %v1241
        %v1281 = vadd.f32 %v995, %v1244
        %v1282 = vadd.f32 %v996, %v1246
        %v1283 = vadd.f32 %v997, %v1249
        %v1284 = vadd.f32 %v998, %v1251
        %v1285 = vld [vmem:[%s232 + $0x10] sm:$0xf]
        %v1286 = vld [vmem:[%s232 + $0x14] sm:$0xf]
        %v1287 = vld [vmem:[%s232 + $0x18] sm:$0xf]
        %v1288 = vld [vmem:[%s232 + $0x1c] sm:$0xf]
        %v1289 = vld [vmem:[%s232 + $0x20] sm:$0xf]
        %v1290 = vld [vmem:[%s232 + $0x24] sm:$0xf]
        %v1291 = vld [vmem:[%s232 + $0x28] sm:$0xf]
        %v1292 = vld [vmem:[%s232 + $0x2c] sm:$0xf]
        %v1293 = vld [vmem:[%s232 + $0x30] sm:$0xf]
        %v1294 = vld [vmem:[%s232 + $0x34] sm:$0xf]
        %v1295 = vld [vmem:[%s232 + $0x38] sm:$0xf]
        %v1296 = vld [vmem:[%s232 + $0x3c] sm:$0xf]
        %v1297 = vld [vmem:[%s232 + $0x40] sm:$0xf]
        %v1298 = vld [vmem:[%s232 + $0x44] sm:$0xf]
        %v1299 = vld [vmem:[%s232 + $0x48] sm:$0xf]
        %v1300 = vld [vmem:[%s232 + $0x4c] sm:$0xf]
        %v1301 = vld [vmem:[%s232 + $0x50] sm:$0xf]
        %v1302 = vld [vmem:[%s232 + $0x54] sm:$0xf]
        %v1303 = vld [vmem:[%s232 + $0x58] sm:$0xf]
        %v1304 = vld [vmem:[%s232 + $0x5c] sm:$0xf]
        %v1305 = vld [vmem:[%s232 + $0x60] sm:$0xf]
        %v1306 = vld [vmem:[%s232 + $0x64] sm:$0xf]
        %v1307 = vld [vmem:[%s232 + $0x68] sm:$0xf]
        %v1308 = vld [vmem:[%s232 + $0x6c] sm:$0xf]
        %v1309 = vld [vmem:[%s232 + $0x70] sm:$0xf]
        %v1310 = vld [vmem:[%s232 + $0x74] sm:$0xf]
        %v1311 = vld [vmem:[%s232 + $0x78] sm:$0xf]
        %v1312 = vld [vmem:[%s232 + $0x7c] sm:$0xf]
        %v1313 = vld [vmem:[%s232 + $0x80] sm:$0xf]
        %v1314 = vld [vmem:[%s232 + $0x84] sm:$0xf]
        %v1315 = vld [vmem:[%s232 + $0x88] sm:$0xf]
        %v1316 = vld [vmem:[%s232 + $0x8c] sm:$0xf]
        %s1317 = scalar_lea.vmem %s1, 8
        %v1318 = vld [vmem:[%s1317] sm:$0x3]
        %v1351 = vunpack.c.l.b16 %v1285
        %v1352 = vunpack.c.l.b16 %v1286
        %v1353 = vunpack.c.l.b16 %v1287
        %v1354 = vunpack.c.l.b16 %v1288
        %v1355 = vunpack.c.l.b16 %v1289
        %v1356 = vunpack.c.l.b16 %v1290
        %v1357 = vunpack.c.l.b16 %v1291
        %v1358 = vunpack.c.l.b16 %v1292
        %v1359 = vunpack.c.l.b16 %v1293
        %v1360 = vunpack.c.l.b16 %v1294
        %v1361 = vunpack.c.l.b16 %v1295
        %v1362 = vunpack.c.l.b16 %v1296
        %v1363 = vunpack.c.l.b16 %v1297
        %v1364 = vunpack.c.l.b16 %v1298
        %v1365 = vunpack.c.l.b16 %v1299
        %v1366 = vunpack.c.l.b16 %v1300
        %v1367 = vunpack.c.l.b16 %v1301
        %v1368 = vunpack.c.l.b16 %v1302
        %v1369 = vunpack.c.l.b16 %v1303
        %v1370 = vunpack.c.l.b16 %v1304
        %v1371 = vunpack.c.l.b16 %v1305
        %v1372 = vunpack.c.l.b16 %v1306
        %v1373 = vunpack.c.l.b16 %v1307
        %v1374 = vunpack.c.l.b16 %v1308
        %v1375 = vunpack.c.l.b16 %v1309
        %v1376 = vunpack.c.l.b16 %v1310
        %v1377 = vunpack.c.l.b16 %v1311
        %v1378 = vunpack.c.l.b16 %v1312
        %v1379 = vunpack.c.l.b16 %v1313
        %v1380 = vunpack.c.l.b16 %v1314
        %v1381 = vunpack.c.l.b16 %v1315
        %v1382 = vunpack.c.l.b16 %v1316
        %v1383 = vpack.c.b16 %v1352, %v1351
        %v1384 = vpack.c.b16 %v1354, %v1353
        %v1385 = vpack.c.b16 %v1356, %v1355
        %v1386 = vpack.c.b16 %v1358, %v1357
        %v1387 = vpack.c.b16 %v1360, %v1359
        %v1388 = vpack.c.b16 %v1362, %v1361
        %v1389 = vpack.c.b16 %v1364, %v1363
        %v1390 = vpack.c.b16 %v1366, %v1365
        %v1391 = vpack.c.b16 %v1368, %v1367
        %v1392 = vpack.c.b16 %v1370, %v1369
        %v1393 = vpack.c.b16 %v1372, %v1371
        %v1394 = vpack.c.b16 %v1374, %v1373
        %v1395 = vpack.c.b16 %v1376, %v1375
        %v1396 = vpack.c.b16 %v1378, %v1377
        %v1397 = vpack.c.b16 %v1380, %v1379
        %v1398 = vpack.c.b16 %v1382, %v1381
        %v1400 = vsel %vm347, %v1383, 0
        %v1403 = vsel %vm347, %v1384, 0
        %v1406 = vsel %vm347, %v1385, 0
        %v1409 = vsel %vm347, %v1386, 0
        %v1412 = vsel %vm347, %v1387, 0
        %v1415 = vsel %vm347, %v1388, 0
        %v1418 = vsel %vm347, %v1389, 0
        %v1421 = vsel %vm347, %v1390, 0
        %v1424 = vsel %vm347, %v1391, 0
        %v1427 = vsel %vm347, %v1392, 0
        %v1430 = vsel %vm347, %v1393, 0
        %v1433 = vsel %vm347, %v1394, 0
        %v1436 = vsel %vm347, %v1395, 0
        %v1439 = vsel %vm347, %v1396, 0
        %v1442 = vsel %vm347, %v1397, 0
        %v1445 = vsel %vm347, %v1398, 0
        %v1448 = vand.u32 %v1318, %v399
        %1450 = vmatpush.bf16.msra.mxu0 0
        %1451 = vmatpush.bf16.msra.mxu0 0
        %1452 = vmatpush.bf16.msra.mxu0 0
        %1453 = vmatpush.bf16.msra.mxu0 0
        %1454 = vmatpush.bf16.msra.mxu0 0
        %1455 = vmatpush.bf16.msra.mxu0 0
        %1456 = vmatpush.bf16.msra.mxu0 0
        %1457 = vmatpush.bf16.msra.mxu0 %v1448
        %1458 = vmatmul.bf16.gmra.mxu0 %v1400
        %v1459 = vpop.f32.mrf.mxu0
        %v1460 = vadd.f32 0.0, %v1459
        %v1461 = vpop.f32.mrf.mxu0
        %v1462 = vadd.f32 0.0, %v1461
        %1463 = vmatmul.bf16.gmra.mxu0 %v1403
        %v1464 = vpop.f32.mrf.mxu0
        %v1465 = vadd.f32 0.0, %v1464
        %v1466 = vpop.f32.mrf.mxu0
        %v1467 = vadd.f32 0.0, %v1466
        %1468 = vmatmul.bf16.gmra.mxu0 %v1406
        %v1469 = vpop.f32.mrf.mxu0
        %v1470 = vadd.f32 0.0, %v1469
        %v1471 = vpop.f32.mrf.mxu0
        %v1472 = vadd.f32 0.0, %v1471
        %1473 = vmatmul.bf16.gmra.mxu0 %v1409
        %v1474 = vpop.f32.mrf.mxu0
        %v1475 = vadd.f32 0.0, %v1474
        %v1476 = vpop.f32.mrf.mxu0
        %v1477 = vadd.f32 0.0, %v1476
        %1478 = vmatmul.bf16.gmra.mxu0 %v1412
        %v1479 = vpop.f32.mrf.mxu0
        %v1480 = vadd.f32 0.0, %v1479
        %v1481 = vpop.f32.mrf.mxu0
        %v1482 = vadd.f32 0.0, %v1481
        %1483 = vmatmul.bf16.gmra.mxu0 %v1415
        %v1484 = vpop.f32.mrf.mxu0
        %v1485 = vadd.f32 0.0, %v1484
        %v1486 = vpop.f32.mrf.mxu0
        %v1487 = vadd.f32 0.0, %v1486
        %1488 = vmatmul.bf16.gmra.mxu0 %v1418
        %v1489 = vpop.f32.mrf.mxu0
        %v1490 = vadd.f32 0.0, %v1489
        %v1491 = vpop.f32.mrf.mxu0
        %v1492 = vadd.f32 0.0, %v1491
        %1493 = vmatmul.bf16.gmra.mxu0 %v1421
        %v1494 = vpop.f32.mrf.mxu0
        %v1495 = vadd.f32 0.0, %v1494
        %v1496 = vpop.f32.mrf.mxu0
        %v1497 = vadd.f32 0.0, %v1496
        %1498 = vmatmul.bf16.gmra.mxu0 %v1424
        %v1499 = vpop.f32.mrf.mxu0
        %v1500 = vadd.f32 0.0, %v1499
        %v1501 = vpop.f32.mrf.mxu0
        %v1502 = vadd.f32 0.0, %v1501
        %1503 = vmatmul.bf16.gmra.mxu0 %v1427
        %v1504 = vpop.f32.mrf.mxu0
        %v1505 = vadd.f32 0.0, %v1504
        %v1506 = vpop.f32.mrf.mxu0
        %v1507 = vadd.f32 0.0, %v1506
        %1508 = vmatmul.bf16.gmra.mxu0 %v1430
        %v1509 = vpop.f32.mrf.mxu0
        %v1510 = vadd.f32 0.0, %v1509
        %v1511 = vpop.f32.mrf.mxu0
        %v1512 = vadd.f32 0.0, %v1511
        %1513 = vmatmul.bf16.gmra.mxu0 %v1433
        %v1514 = vpop.f32.mrf.mxu0
        %v1515 = vadd.f32 0.0, %v1514
        %v1516 = vpop.f32.mrf.mxu0
        %v1517 = vadd.f32 0.0, %v1516
        %1518 = vmatmul.bf16.gmra.mxu0 %v1436
        %v1519 = vpop.f32.mrf.mxu0
        %v1520 = vadd.f32 0.0, %v1519
        %v1521 = vpop.f32.mrf.mxu0
        %v1522 = vadd.f32 0.0, %v1521
        %1523 = vmatmul.bf16.gmra.mxu0 %v1439
        %v1524 = vpop.f32.mrf.mxu0
        %v1525 = vadd.f32 0.0, %v1524
        %v1526 = vpop.f32.mrf.mxu0
        %v1527 = vadd.f32 0.0, %v1526
        %1528 = vmatmul.bf16.gmra.mxu0 %v1442
        %v1529 = vpop.f32.mrf.mxu0
        %v1530 = vadd.f32 0.0, %v1529
        %v1531 = vpop.f32.mrf.mxu0
        %v1532 = vadd.f32 0.0, %v1531
        %1533 = vmatmul.bf16.gmra.mxu0 %v1445
        %v1534 = vpop.f32.mrf.mxu0
        %v1535 = vadd.f32 0.0, %v1534
        %v1536 = vpop.f32.mrf.mxu0
        %v1537 = vadd.f32 0.0, %v1536
        %1538 = vdwg.mxu0
        %v1539 = vadd.f32 %v1253, %v1460
        %v1540 = vadd.f32 %v1254, %v1462
        %v1541 = vadd.f32 %v1255, %v1465
        %v1542 = vadd.f32 %v1256, %v1467
        %v1543 = vadd.f32 %v1257, %v1470
        %v1544 = vadd.f32 %v1258, %v1472
        %v1545 = vadd.f32 %v1259, %v1475
        %v1546 = vadd.f32 %v1260, %v1477
        %v1547 = vadd.f32 %v1261, %v1480
        %v1548 = vadd.f32 %v1262, %v1482
        %v1549 = vadd.f32 %v1263, %v1485
        %v1550 = vadd.f32 %v1264, %v1487
        %v1551 = vadd.f32 %v1265, %v1490
        %v1552 = vadd.f32 %v1266, %v1492
        %v1553 = vadd.f32 %v1267, %v1495
        %v1554 = vadd.f32 %v1268, %v1497
        %v1555 = vadd.f32 %v1269, %v1500
        %v1556 = vadd.f32 %v1270, %v1502
        %v1557 = vadd.f32 %v1271, %v1505
        %v1558 = vadd.f32 %v1272, %v1507
        %v1559 = vadd.f32 %v1273, %v1510
        %v1560 = vadd.f32 %v1274, %v1512
        %v1561 = vadd.f32 %v1275, %v1515
        %v1562 = vadd.f32 %v1276, %v1517
        %v1563 = vadd.f32 %v1277, %v1520
        %v1564 = vadd.f32 %v1278, %v1522
        %v1565 = vadd.f32 %v1279, %v1525
        %v1566 = vadd.f32 %v1280, %v1527
        %v1567 = vadd.f32 %v1281, %v1530
        %v1568 = vadd.f32 %v1282, %v1532
        %v1569 = vadd.f32 %v1283, %v1535
        %v1570 = vadd.f32 %v1284, %v1537
        %v1571 = vld [vmem:[%s712 + $0x10] sm:$0xf]
        %v1572 = vld [vmem:[%s712 + $0x14] sm:$0xf]
        %v1573 = vld [vmem:[%s712 + $0x18] sm:$0xf]
        %v1574 = vld [vmem:[%s712 + $0x1c] sm:$0xf]
        %v1575 = vld [vmem:[%s712 + $0x20] sm:$0xf]
        %v1576 = vld [vmem:[%s712 + $0x24] sm:$0xf]
        %v1577 = vld [vmem:[%s712 + $0x28] sm:$0xf]
        %v1578 = vld [vmem:[%s712 + $0x2c] sm:$0xf]
        %v1579 = vld [vmem:[%s712 + $0x30] sm:$0xf]
        %v1580 = vld [vmem:[%s712 + $0x34] sm:$0xf]
        %v1581 = vld [vmem:[%s712 + $0x38] sm:$0xf]
        %v1582 = vld [vmem:[%s712 + $0x3c] sm:$0xf]
        %v1583 = vld [vmem:[%s712 + $0x40] sm:$0xf]
        %v1584 = vld [vmem:[%s712 + $0x44] sm:$0xf]
        %v1585 = vld [vmem:[%s712 + $0x48] sm:$0xf]
        %v1586 = vld [vmem:[%s712 + $0x4c] sm:$0xf]
        %v1587 = vld [vmem:[%s712 + $0x50] sm:$0xf]
        %v1588 = vld [vmem:[%s712 + $0x54] sm:$0xf]
        %v1589 = vld [vmem:[%s712 + $0x58] sm:$0xf]
        %v1590 = vld [vmem:[%s712 + $0x5c] sm:$0xf]
        %v1591 = vld [vmem:[%s712 + $0x60] sm:$0xf]
        %v1592 = vld [vmem:[%s712 + $0x64] sm:$0xf]
        %v1593 = vld [vmem:[%s712 + $0x68] sm:$0xf]
        %v1594 = vld [vmem:[%s712 + $0x6c] sm:$0xf]
        %v1595 = vld [vmem:[%s712 + $0x70] sm:$0xf]
        %v1596 = vld [vmem:[%s712 + $0x74] sm:$0xf]
        %v1597 = vld [vmem:[%s712 + $0x78] sm:$0xf]
        %v1598 = vld [vmem:[%s712 + $0x7c] sm:$0xf]
        %v1599 = vld [vmem:[%s712 + $0x80] sm:$0xf]
        %v1600 = vld [vmem:[%s712 + $0x84] sm:$0xf]
        %v1601 = vld [vmem:[%s712 + $0x88] sm:$0xf]
        %v1602 = vld [vmem:[%s712 + $0x8c] sm:$0xf]
        %s1603 = scalar_lea.vmem %s1, 10
        %v1604 = vld [vmem:[%s1603] sm:$0x3]
        %v1637 = vunpack.c.l.b16 %v1571
        %v1638 = vunpack.c.l.b16 %v1572
        %v1639 = vunpack.c.l.b16 %v1573
        %v1640 = vunpack.c.l.b16 %v1574
        %v1641 = vunpack.c.l.b16 %v1575
        %v1642 = vunpack.c.l.b16 %v1576
        %v1643 = vunpack.c.l.b16 %v1577
        %v1644 = vunpack.c.l.b16 %v1578
        %v1645 = vunpack.c.l.b16 %v1579
        %v1646 = vunpack.c.l.b16 %v1580
        %v1647 = vunpack.c.l.b16 %v1581
        %v1648 = vunpack.c.l.b16 %v1582
        %v1649 = vunpack.c.l.b16 %v1583
        %v1650 = vunpack.c.l.b16 %v1584
        %v1651 = vunpack.c.l.b16 %v1585
        %v1652 = vunpack.c.l.b16 %v1586
        %v1653 = vunpack.c.l.b16 %v1587
        %v1654 = vunpack.c.l.b16 %v1588
        %v1655 = vunpack.c.l.b16 %v1589
        %v1656 = vunpack.c.l.b16 %v1590
        %v1657 = vunpack.c.l.b16 %v1591
        %v1658 = vunpack.c.l.b16 %v1592
        %v1659 = vunpack.c.l.b16 %v1593
        %v1660 = vunpack.c.l.b16 %v1594
        %v1661 = vunpack.c.l.b16 %v1595
        %v1662 = vunpack.c.l.b16 %v1596
        %v1663 = vunpack.c.l.b16 %v1597
        %v1664 = vunpack.c.l.b16 %v1598
        %v1665 = vunpack.c.l.b16 %v1599
        %v1666 = vunpack.c.l.b16 %v1600
        %v1667 = vunpack.c.l.b16 %v1601
        %v1668 = vunpack.c.l.b16 %v1602
        %v1669 = vpack.c.b16 %v1638, %v1637
        %v1670 = vpack.c.b16 %v1640, %v1639
        %v1671 = vpack.c.b16 %v1642, %v1641
        %v1672 = vpack.c.b16 %v1644, %v1643
        %v1673 = vpack.c.b16 %v1646, %v1645
        %v1674 = vpack.c.b16 %v1648, %v1647
        %v1675 = vpack.c.b16 %v1650, %v1649
        %v1676 = vpack.c.b16 %v1652, %v1651
        %v1677 = vpack.c.b16 %v1654, %v1653
        %v1678 = vpack.c.b16 %v1656, %v1655
        %v1679 = vpack.c.b16 %v1658, %v1657
        %v1680 = vpack.c.b16 %v1660, %v1659
        %v1681 = vpack.c.b16 %v1662, %v1661
        %v1682 = vpack.c.b16 %v1664, %v1663
        %v1683 = vpack.c.b16 %v1666, %v1665
        %v1684 = vpack.c.b16 %v1668, %v1667
        %v1686 = vsel %vm347, %v1669, 0
        %v1689 = vsel %vm347, %v1670, 0
        %v1692 = vsel %vm347, %v1671, 0
        %v1695 = vsel %vm347, %v1672, 0
        %v1698 = vsel %vm347, %v1673, 0
        %v1701 = vsel %vm347, %v1674, 0
        %v1704 = vsel %vm347, %v1675, 0
        %v1707 = vsel %vm347, %v1676, 0
        %v1710 = vsel %vm347, %v1677, 0
        %v1713 = vsel %vm347, %v1678, 0
        %v1716 = vsel %vm347, %v1679, 0
        %v1719 = vsel %vm347, %v1680, 0
        %v1722 = vsel %vm347, %v1681, 0
        %v1725 = vsel %vm347, %v1682, 0
        %v1728 = vsel %vm347, %v1683, 0
        %v1731 = vsel %vm347, %v1684, 0
        %v1734 = vand.u32 %v1604, %v399
        %1736 = vmatpush.bf16.msra.mxu0 0
        %1737 = vmatpush.bf16.msra.mxu0 0
        %1738 = vmatpush.bf16.msra.mxu0 0
        %1739 = vmatpush.bf16.msra.mxu0 0
        %1740 = vmatpush.bf16.msra.mxu0 0
        %1741 = vmatpush.bf16.msra.mxu0 0
        %1742 = vmatpush.bf16.msra.mxu0 0
        %1743 = vmatpush.bf16.msra.mxu0 %v1734
        %1744 = vmatmul.bf16.gmra.mxu0 %v1686
        %v1745 = vpop.f32.mrf.mxu0
        %v1746 = vadd.f32 0.0, %v1745
        %v1747 = vpop.f32.mrf.mxu0
        %v1748 = vadd.f32 0.0, %v1747
        %1749 = vmatmul.bf16.gmra.mxu0 %v1689
        %v1750 = vpop.f32.mrf.mxu0
        %v1751 = vadd.f32 0.0, %v1750
        %v1752 = vpop.f32.mrf.mxu0
        %v1753 = vadd.f32 0.0, %v1752
        %1754 = vmatmul.bf16.gmra.mxu0 %v1692
        %v1755 = vpop.f32.mrf.mxu0
        %v1756 = vadd.f32 0.0, %v1755
        %v1757 = vpop.f32.mrf.mxu0
        %v1758 = vadd.f32 0.0, %v1757
        %1759 = vmatmul.bf16.gmra.mxu0 %v1695
        %v1760 = vpop.f32.mrf.mxu0
        %v1761 = vadd.f32 0.0, %v1760
        %v1762 = vpop.f32.mrf.mxu0
        %v1763 = vadd.f32 0.0, %v1762
        %1764 = vmatmul.bf16.gmra.mxu0 %v1698
        %v1765 = vpop.f32.mrf.mxu0
        %v1766 = vadd.f32 0.0, %v1765
        %v1767 = vpop.f32.mrf.mxu0
        %v1768 = vadd.f32 0.0, %v1767
        %1769 = vmatmul.bf16.gmra.mxu0 %v1701
        %v1770 = vpop.f32.mrf.mxu0
        %v1771 = vadd.f32 0.0, %v1770
        %v1772 = vpop.f32.mrf.mxu0
        %v1773 = vadd.f32 0.0, %v1772
        %1774 = vmatmul.bf16.gmra.mxu0 %v1704
        %v1775 = vpop.f32.mrf.mxu0
        %v1776 = vadd.f32 0.0, %v1775
        %v1777 = vpop.f32.mrf.mxu0
        %v1778 = vadd.f32 0.0, %v1777
        %1779 = vmatmul.bf16.gmra.mxu0 %v1707
        %v1780 = vpop.f32.mrf.mxu0
        %v1781 = vadd.f32 0.0, %v1780
        %v1782 = vpop.f32.mrf.mxu0
        %v1783 = vadd.f32 0.0, %v1782
        %1784 = vmatmul.bf16.gmra.mxu0 %v1710
        %v1785 = vpop.f32.mrf.mxu0
        %v1786 = vadd.f32 0.0, %v1785
        %v1787 = vpop.f32.mrf.mxu0
        %v1788 = vadd.f32 0.0, %v1787
        %1789 = vmatmul.bf16.gmra.mxu0 %v1713
        %v1790 = vpop.f32.mrf.mxu0
        %v1791 = vadd.f32 0.0, %v1790
        %v1792 = vpop.f32.mrf.mxu0
        %v1793 = vadd.f32 0.0, %v1792
        %1794 = vmatmul.bf16.gmra.mxu0 %v1716
        %v1795 = vpop.f32.mrf.mxu0
        %v1796 = vadd.f32 0.0, %v1795
        %v1797 = vpop.f32.mrf.mxu0
        %v1798 = vadd.f32 0.0, %v1797
        %1799 = vmatmul.bf16.gmra.mxu0 %v1719
        %v1800 = vpop.f32.mrf.mxu0
        %v1801 = vadd.f32 0.0, %v1800
        %v1802 = vpop.f32.mrf.mxu0
        %v1803 = vadd.f32 0.0, %v1802
        %1804 = vmatmul.bf16.gmra.mxu0 %v1722
        %v1805 = vpop.f32.mrf.mxu0
        %v1806 = vadd.f32 0.0, %v1805
        %v1807 = vpop.f32.mrf.mxu0
        %v1808 = vadd.f32 0.0, %v1807
        %1809 = vmatmul.bf16.gmra.mxu0 %v1725
        %v1810 = vpop.f32.mrf.mxu0
        %v1811 = vadd.f32 0.0, %v1810
        %v1812 = vpop.f32.mrf.mxu0
        %v1813 = vadd.f32 0.0, %v1812
        %1814 = vmatmul.bf16.gmra.mxu0 %v1728
        %v1815 = vpop.f32.mrf.mxu0
        %v1816 = vadd.f32 0.0, %v1815
        %v1817 = vpop.f32.mrf.mxu0
        %v1818 = vadd.f32 0.0, %v1817
        %1819 = vmatmul.bf16.gmra.mxu0 %v1731
        %v1820 = vpop.f32.mrf.mxu0
        %v1821 = vadd.f32 0.0, %v1820
        %v1822 = vpop.f32.mrf.mxu0
        %v1823 = vadd.f32 0.0, %v1822
        %1824 = vdwg.mxu0
        %v1825 = vadd.f32 %v1539, %v1746
        %v1826 = vadd.f32 %v1540, %v1748
        %v1827 = vadd.f32 %v1541, %v1751
        %v1828 = vadd.f32 %v1542, %v1753
        %v1829 = vadd.f32 %v1543, %v1756
        %v1830 = vadd.f32 %v1544, %v1758
        %v1831 = vadd.f32 %v1545, %v1761
        %v1832 = vadd.f32 %v1546, %v1763
        %v1833 = vadd.f32 %v1547, %v1766
        %v1834 = vadd.f32 %v1548, %v1768
        %v1835 = vadd.f32 %v1549, %v1771
        %v1836 = vadd.f32 %v1550, %v1773
        %v1837 = vadd.f32 %v1551, %v1776
        %v1838 = vadd.f32 %v1552, %v1778
        %v1839 = vadd.f32 %v1553, %v1781
        %v1840 = vadd.f32 %v1554, %v1783
        %v1841 = vadd.f32 %v1555, %v1786
        %v1842 = vadd.f32 %v1556, %v1788
        %v1843 = vadd.f32 %v1557, %v1791
        %v1844 = vadd.f32 %v1558, %v1793
        %v1845 = vadd.f32 %v1559, %v1796
        %v1846 = vadd.f32 %v1560, %v1798
        %v1847 = vadd.f32 %v1561, %v1801
        %v1848 = vadd.f32 %v1562, %v1803
        %v1849 = vadd.f32 %v1563, %v1806
        %v1850 = vadd.f32 %v1564, %v1808
        %v1851 = vadd.f32 %v1565, %v1811
        %v1852 = vadd.f32 %v1566, %v1813
        %v1853 = vadd.f32 %v1567, %v1816
        %v1854 = vadd.f32 %v1568, %v1818
        %v1855 = vadd.f32 %v1569, %v1821
        %v1856 = vadd.f32 %v1570, %v1823
        %v1857 = vld [vmem:[%s195 + $0x20] sm:$0xf]
        %v1858 = vld [vmem:[%s195 + $0x24] sm:$0xf]
        %v1859 = vld [vmem:[%s195 + $0x28] sm:$0xf]
        %v1860 = vld [vmem:[%s195 + $0x2c] sm:$0xf]
        %v1861 = vld [vmem:[%s195 + $0x30] sm:$0xf]
        %v1862 = vld [vmem:[%s195 + $0x34] sm:$0xf]
        %v1863 = vld [vmem:[%s195 + $0x38] sm:$0xf]
        %v1864 = vld [vmem:[%s195 + $0x3c] sm:$0xf]
        %v1865 = vld [vmem:[%s195 + $0x40] sm:$0xf]
        %v1866 = vld [vmem:[%s195 + $0x44] sm:$0xf]
        %v1867 = vld [vmem:[%s195 + $0x48] sm:$0xf]
        %v1868 = vld [vmem:[%s195 + $0x4c] sm:$0xf]
        %v1869 = vld [vmem:[%s195 + $0x50] sm:$0xf]
        %v1870 = vld [vmem:[%s195 + $0x54] sm:$0xf]
        %v1871 = vld [vmem:[%s195 + $0x58] sm:$0xf]
        %v1872 = vld [vmem:[%s195 + $0x5c] sm:$0xf]
        %v1873 = vld [vmem:[%s195 + $0x60] sm:$0xf]
        %v1874 = vld [vmem:[%s195 + $0x64] sm:$0xf]
        %v1875 = vld [vmem:[%s195 + $0x68] sm:$0xf]
        %v1876 = vld [vmem:[%s195 + $0x6c] sm:$0xf]
        %v1877 = vld [vmem:[%s195 + $0x70] sm:$0xf]
        %v1878 = vld [vmem:[%s195 + $0x74] sm:$0xf]
        %v1879 = vld [vmem:[%s195 + $0x78] sm:$0xf]
        %v1880 = vld [vmem:[%s195 + $0x7c] sm:$0xf]
        %v1881 = vld [vmem:[%s195 + $0x80] sm:$0xf]
        %v1882 = vld [vmem:[%s195 + $0x84] sm:$0xf]
        %v1883 = vld [vmem:[%s195 + $0x88] sm:$0xf]
        %v1884 = vld [vmem:[%s195 + $0x8c] sm:$0xf]
        %v1885 = vld [vmem:[%s195 + $0x90] sm:$0xf]
        %v1886 = vld [vmem:[%s195 + $0x94] sm:$0xf]
        %v1887 = vld [vmem:[%s195 + $0x98] sm:$0xf]
        %v1888 = vld [vmem:[%s195 + $0x9c] sm:$0xf]
        %s1889 = scalar_lea.vmem %s1, 12
        %v1890 = vld [vmem:[%s1889] sm:$0x3]
        %v1923 = vunpack.c.l.b16 %v1857
        %v1924 = vunpack.c.l.b16 %v1858
        %v1925 = vunpack.c.l.b16 %v1859
        %v1926 = vunpack.c.l.b16 %v1860
        %v1927 = vunpack.c.l.b16 %v1861
        %v1928 = vunpack.c.l.b16 %v1862
        %v1929 = vunpack.c.l.b16 %v1863
        %v1930 = vunpack.c.l.b16 %v1864
        %v1931 = vunpack.c.l.b16 %v1865
        %v1932 = vunpack.c.l.b16 %v1866
        %v1933 = vunpack.c.l.b16 %v1867
        %v1934 = vunpack.c.l.b16 %v1868
        %v1935 = vunpack.c.l.b16 %v1869
        %v1936 = vunpack.c.l.b16 %v1870
        %v1937 = vunpack.c.l.b16 %v1871
        %v1938 = vunpack.c.l.b16 %v1872
        %v1939 = vunpack.c.l.b16 %v1873
        %v1940 = vunpack.c.l.b16 %v1874
        %v1941 = vunpack.c.l.b16 %v1875
        %v1942 = vunpack.c.l.b16 %v1876
        %v1943 = vunpack.c.l.b16 %v1877
        %v1944 = vunpack.c.l.b16 %v1878
        %v1945 = vunpack.c.l.b16 %v1879
        %v1946 = vunpack.c.l.b16 %v1880
        %v1947 = vunpack.c.l.b16 %v1881
        %v1948 = vunpack.c.l.b16 %v1882
        %v1949 = vunpack.c.l.b16 %v1883
        %v1950 = vunpack.c.l.b16 %v1884
        %v1951 = vunpack.c.l.b16 %v1885
        %v1952 = vunpack.c.l.b16 %v1886
        %v1953 = vunpack.c.l.b16 %v1887
        %v1954 = vunpack.c.l.b16 %v1888
        %v1955 = vpack.c.b16 %v1924, %v1923
        %v1956 = vpack.c.b16 %v1926, %v1925
        %v1957 = vpack.c.b16 %v1928, %v1927
        %v1958 = vpack.c.b16 %v1930, %v1929
        %v1959 = vpack.c.b16 %v1932, %v1931
        %v1960 = vpack.c.b16 %v1934, %v1933
        %v1961 = vpack.c.b16 %v1936, %v1935
        %v1962 = vpack.c.b16 %v1938, %v1937
        %v1963 = vpack.c.b16 %v1940, %v1939
        %v1964 = vpack.c.b16 %v1942, %v1941
        %v1965 = vpack.c.b16 %v1944, %v1943
        %v1966 = vpack.c.b16 %v1946, %v1945
        %v1967 = vpack.c.b16 %v1948, %v1947
        %v1968 = vpack.c.b16 %v1950, %v1949
        %v1969 = vpack.c.b16 %v1952, %v1951
        %v1970 = vpack.c.b16 %v1954, %v1953
        %v1972 = vsel %vm347, %v1955, 0
        %v1975 = vsel %vm347, %v1956, 0
        %v1978 = vsel %vm347, %v1957, 0
        %v1981 = vsel %vm347, %v1958, 0
        %v1984 = vsel %vm347, %v1959, 0
        %v1987 = vsel %vm347, %v1960, 0
        %v1990 = vsel %vm347, %v1961, 0
        %v1993 = vsel %vm347, %v1962, 0
        %v1996 = vsel %vm347, %v1963, 0
        %v1999 = vsel %vm347, %v1964, 0
        %v2002 = vsel %vm347, %v1965, 0
        %v2005 = vsel %vm347, %v1966, 0
        %v2008 = vsel %vm347, %v1967, 0
        %v2011 = vsel %vm347, %v1968, 0
        %v2014 = vsel %vm347, %v1969, 0
        %v2017 = vsel %vm347, %v1970, 0
        %v2020 = vand.u32 %v1890, %v399
        %2022 = vmatpush.bf16.msra.mxu0 0
        %2023 = vmatpush.bf16.msra.mxu0 0
        %2024 = vmatpush.bf16.msra.mxu0 0
        %2025 = vmatpush.bf16.msra.mxu0 0
        %2026 = vmatpush.bf16.msra.mxu0 0
        %2027 = vmatpush.bf16.msra.mxu0 0
        %2028 = vmatpush.bf16.msra.mxu0 0
        %2029 = vmatpush.bf16.msra.mxu0 %v2020
        %2030 = vmatmul.bf16.gmra.mxu0 %v1972
        %v2031 = vpop.f32.mrf.mxu0
        %v2032 = vadd.f32 0.0, %v2031
        %v2033 = vpop.f32.mrf.mxu0
        %v2034 = vadd.f32 0.0, %v2033
        %2035 = vmatmul.bf16.gmra.mxu0 %v1975
        %v2036 = vpop.f32.mrf.mxu0
        %v2037 = vadd.f32 0.0, %v2036
        %v2038 = vpop.f32.mrf.mxu0
        %v2039 = vadd.f32 0.0, %v2038
        %2040 = vmatmul.bf16.gmra.mxu0 %v1978
        %v2041 = vpop.f32.mrf.mxu0
        %v2042 = vadd.f32 0.0, %v2041
        %v2043 = vpop.f32.mrf.mxu0
        %v2044 = vadd.f32 0.0, %v2043
        %2045 = vmatmul.bf16.gmra.mxu0 %v1981
        %v2046 = vpop.f32.mrf.mxu0
        %v2047 = vadd.f32 0.0, %v2046
        %v2048 = vpop.f32.mrf.mxu0
        %v2049 = vadd.f32 0.0, %v2048
        %2050 = vmatmul.bf16.gmra.mxu0 %v1984
        %v2051 = vpop.f32.mrf.mxu0
        %v2052 = vadd.f32 0.0, %v2051
        %v2053 = vpop.f32.mrf.mxu0
        %v2054 = vadd.f32 0.0, %v2053
        %2055 = vmatmul.bf16.gmra.mxu0 %v1987
        %v2056 = vpop.f32.mrf.mxu0
        %v2057 = vadd.f32 0.0, %v2056
        %v2058 = vpop.f32.mrf.mxu0
        %v2059 = vadd.f32 0.0, %v2058
        %2060 = vmatmul.bf16.gmra.mxu0 %v1990
        %v2061 = vpop.f32.mrf.mxu0
        %v2062 = vadd.f32 0.0, %v2061
        %v2063 = vpop.f32.mrf.mxu0
        %v2064 = vadd.f32 0.0, %v2063
        %2065 = vmatmul.bf16.gmra.mxu0 %v1993
        %v2066 = vpop.f32.mrf.mxu0
        %v2067 = vadd.f32 0.0, %v2066
        %v2068 = vpop.f32.mrf.mxu0
        %v2069 = vadd.f32 0.0, %v2068
        %2070 = vmatmul.bf16.gmra.mxu0 %v1996
        %v2071 = vpop.f32.mrf.mxu0
        %v2072 = vadd.f32 0.0, %v2071
        %v2073 = vpop.f32.mrf.mxu0
        %v2074 = vadd.f32 0.0, %v2073
        %2075 = vmatmul.bf16.gmra.mxu0 %v1999
        %v2076 = vpop.f32.mrf.mxu0
        %v2077 = vadd.f32 0.0, %v2076
        %v2078 = vpop.f32.mrf.mxu0
        %v2079 = vadd.f32 0.0, %v2078
        %2080 = vmatmul.bf16.gmra.mxu0 %v2002
        %v2081 = vpop.f32.mrf.mxu0
        %v2082 = vadd.f32 0.0, %v2081
        %v2083 = vpop.f32.mrf.mxu0
        %v2084 = vadd.f32 0.0, %v2083
        %2085 = vmatmul.bf16.gmra.mxu0 %v2005
        %v2086 = vpop.f32.mrf.mxu0
        %v2087 = vadd.f32 0.0, %v2086
        %v2088 = vpop.f32.mrf.mxu0
        %v2089 = vadd.f32 0.0, %v2088
        %2090 = vmatmul.bf16.gmra.mxu0 %v2008
        %v2091 = vpop.f32.mrf.mxu0
        %v2092 = vadd.f32 0.0, %v2091
        %v2093 = vpop.f32.mrf.mxu0
        %v2094 = vadd.f32 0.0, %v2093
        %2095 = vmatmul.bf16.gmra.mxu0 %v2011
        %v2096 = vpop.f32.mrf.mxu0
        %v2097 = vadd.f32 0.0, %v2096
        %v2098 = vpop.f32.mrf.mxu0
        %v2099 = vadd.f32 0.0, %v2098
        %2100 = vmatmul.bf16.gmra.mxu0 %v2014
        %v2101 = vpop.f32.mrf.mxu0
        %v2102 = vadd.f32 0.0, %v2101
        %v2103 = vpop.f32.mrf.mxu0
        %v2104 = vadd.f32 0.0, %v2103
        %2105 = vmatmul.bf16.gmra.mxu0 %v2017
        %v2106 = vpop.f32.mrf.mxu0
        %v2107 = vadd.f32 0.0, %v2106
        %v2108 = vpop.f32.mrf.mxu0
        %v2109 = vadd.f32 0.0, %v2108
        %2110 = vdwg.mxu0
        %v2111 = vadd.f32 %v1825, %v2032
        %v2112 = vadd.f32 %v1826, %v2034
        %v2113 = vadd.f32 %v1827, %v2037
        %v2114 = vadd.f32 %v1828, %v2039
        %v2115 = vadd.f32 %v1829, %v2042
        %v2116 = vadd.f32 %v1830, %v2044
        %v2117 = vadd.f32 %v1831, %v2047
        %v2118 = vadd.f32 %v1832, %v2049
        %v2119 = vadd.f32 %v1833, %v2052
        %v2120 = vadd.f32 %v1834, %v2054
        %v2121 = vadd.f32 %v1835, %v2057
        %v2122 = vadd.f32 %v1836, %v2059
        %v2123 = vadd.f32 %v1837, %v2062
        %v2124 = vadd.f32 %v1838, %v2064
        %v2125 = vadd.f32 %v1839, %v2067
        %v2126 = vadd.f32 %v1840, %v2069
        %v2127 = vadd.f32 %v1841, %v2072
        %v2128 = vadd.f32 %v1842, %v2074
        %v2129 = vadd.f32 %v1843, %v2077
        %v2130 = vadd.f32 %v1844, %v2079
        %v2131 = vadd.f32 %v1845, %v2082
        %v2132 = vadd.f32 %v1846, %v2084
        %v2133 = vadd.f32 %v1847, %v2087
        %v2134 = vadd.f32 %v1848, %v2089
        %v2135 = vadd.f32 %v1849, %v2092
        %v2136 = vadd.f32 %v1850, %v2094
        %v2137 = vadd.f32 %v1851, %v2097
        %v2138 = vadd.f32 %v1852, %v2099
        %v2139 = vadd.f32 %v1853, %v2102
        %v2140 = vadd.f32 %v1854, %v2104
        %v2141 = vadd.f32 %v1855, %v2107
        %v2142 = vadd.f32 %v1856, %v2109
        %v2143 = vld [vmem:[%s232 + $0x20] sm:$0xf]
        %v2144 = vld [vmem:[%s232 + $0x24] sm:$0xf]
        %v2145 = vld [vmem:[%s232 + $0x28] sm:$0xf]
        %v2146 = vld [vmem:[%s232 + $0x2c] sm:$0xf]
        %v2147 = vld [vmem:[%s232 + $0x30] sm:$0xf]
        %v2148 = vld [vmem:[%s232 + $0x34] sm:$0xf]
        %v2149 = vld [vmem:[%s232 + $0x38] sm:$0xf]
        %v2150 = vld [vmem:[%s232 + $0x3c] sm:$0xf]
        %v2151 = vld [vmem:[%s232 + $0x40] sm:$0xf]
        %v2152 = vld [vmem:[%s232 + $0x44] sm:$0xf]
        %v2153 = vld [vmem:[%s232 + $0x48] sm:$0xf]
        %v2154 = vld [vmem:[%s232 + $0x4c] sm:$0xf]
        %v2155 = vld [vmem:[%s232 + $0x50] sm:$0xf]
        %v2156 = vld [vmem:[%s232 + $0x54] sm:$0xf]
        %v2157 = vld [vmem:[%s232 + $0x58] sm:$0xf]
        %v2158 = vld [vmem:[%s232 + $0x5c] sm:$0xf]
        %v2159 = vld [vmem:[%s232 + $0x60] sm:$0xf]
        %v2160 = vld [vmem:[%s232 + $0x64] sm:$0xf]
        %v2161 = vld [vmem:[%s232 + $0x68] sm:$0xf]
        %v2162 = vld [vmem:[%s232 + $0x6c] sm:$0xf]
        %v2163 = vld [vmem:[%s232 + $0x70] sm:$0xf]
        %v2164 = vld [vmem:[%s232 + $0x74] sm:$0xf]
        %v2165 = vld [vmem:[%s232 + $0x78] sm:$0xf]
        %v2166 = vld [vmem:[%s232 + $0x7c] sm:$0xf]
        %v2167 = vld [vmem:[%s232 + $0x80] sm:$0xf]
        %v2168 = vld [vmem:[%s232 + $0x84] sm:$0xf]
        %v2169 = vld [vmem:[%s232 + $0x88] sm:$0xf]
        %v2170 = vld [vmem:[%s232 + $0x8c] sm:$0xf]
        %v2171 = vld [vmem:[%s232 + $0x90] sm:$0xf]
        %v2172 = vld [vmem:[%s232 + $0x94] sm:$0xf]
        %v2173 = vld [vmem:[%s232 + $0x98] sm:$0xf]
        %v2174 = vld [vmem:[%s232 + $0x9c] sm:$0xf]
        %s2175 = scalar_lea.vmem %s1, 14
        %v2176 = vld [vmem:[%s2175] sm:$0x3]
        %v2209 = vunpack.c.l.b16 %v2143
        %v2210 = vunpack.c.l.b16 %v2144
        %v2211 = vunpack.c.l.b16 %v2145
        %v2212 = vunpack.c.l.b16 %v2146
        %v2213 = vunpack.c.l.b16 %v2147
        %v2214 = vunpack.c.l.b16 %v2148
        %v2215 = vunpack.c.l.b16 %v2149
        %v2216 = vunpack.c.l.b16 %v2150
        %v2217 = vunpack.c.l.b16 %v2151
        %v2218 = vunpack.c.l.b16 %v2152
        %v2219 = vunpack.c.l.b16 %v2153
        %v2220 = vunpack.c.l.b16 %v2154
        %v2221 = vunpack.c.l.b16 %v2155
        %v2222 = vunpack.c.l.b16 %v2156
        %v2223 = vunpack.c.l.b16 %v2157
        %v2224 = vunpack.c.l.b16 %v2158
        %v2225 = vunpack.c.l.b16 %v2159
        %v2226 = vunpack.c.l.b16 %v2160
        %v2227 = vunpack.c.l.b16 %v2161
        %v2228 = vunpack.c.l.b16 %v2162
        %v2229 = vunpack.c.l.b16 %v2163
        %v2230 = vunpack.c.l.b16 %v2164
        %v2231 = vunpack.c.l.b16 %v2165
        %v2232 = vunpack.c.l.b16 %v2166
        %v2233 = vunpack.c.l.b16 %v2167
        %v2234 = vunpack.c.l.b16 %v2168
        %v2235 = vunpack.c.l.b16 %v2169
        %v2236 = vunpack.c.l.b16 %v2170
        %v2237 = vunpack.c.l.b16 %v2171
        %v2238 = vunpack.c.l.b16 %v2172
        %v2239 = vunpack.c.l.b16 %v2173
        %v2240 = vunpack.c.l.b16 %v2174
        %v2241 = vpack.c.b16 %v2210, %v2209
        %v2242 = vpack.c.b16 %v2212, %v2211
        %v2243 = vpack.c.b16 %v2214, %v2213
        %v2244 = vpack.c.b16 %v2216, %v2215
        %v2245 = vpack.c.b16 %v2218, %v2217
        %v2246 = vpack.c.b16 %v2220, %v2219
        %v2247 = vpack.c.b16 %v2222, %v2221
        %v2248 = vpack.c.b16 %v2224, %v2223
        %v2249 = vpack.c.b16 %v2226, %v2225
        %v2250 = vpack.c.b16 %v2228, %v2227
        %v2251 = vpack.c.b16 %v2230, %v2229
        %v2252 = vpack.c.b16 %v2232, %v2231
        %v2253 = vpack.c.b16 %v2234, %v2233
        %v2254 = vpack.c.b16 %v2236, %v2235
        %v2255 = vpack.c.b16 %v2238, %v2237
        %v2256 = vpack.c.b16 %v2240, %v2239
        %v2258 = vsel %vm347, %v2241, 0
        %v2261 = vsel %vm347, %v2242, 0
        %v2264 = vsel %vm347, %v2243, 0
        %v2267 = vsel %vm347, %v2244, 0
        %v2270 = vsel %vm347, %v2245, 0
        %v2273 = vsel %vm347, %v2246, 0
        %v2276 = vsel %vm347, %v2247, 0
        %v2279 = vsel %vm347, %v2248, 0
        %v2282 = vsel %vm347, %v2249, 0
        %v2285 = vsel %vm347, %v2250, 0
        %v2288 = vsel %vm347, %v2251, 0
        %v2291 = vsel %vm347, %v2252, 0
        %v2294 = vsel %vm347, %v2253, 0
        %v2297 = vsel %vm347, %v2254, 0
        %v2300 = vsel %vm347, %v2255, 0
        %v2303 = vsel %vm347, %v2256, 0
        %v2306 = vand.u32 %v2176, %v399
        %2308 = vmatpush.bf16.msra.mxu0 0
        %2309 = vmatpush.bf16.msra.mxu0 0
        %2310 = vmatpush.bf16.msra.mxu0 0
        %2311 = vmatpush.bf16.msra.mxu0 0
        %2312 = vmatpush.bf16.msra.mxu0 0
        %2313 = vmatpush.bf16.msra.mxu0 0
        %2314 = vmatpush.bf16.msra.mxu0 0
        %2315 = vmatpush.bf16.msra.mxu0 %v2306
        %2316 = vmatmul.bf16.gmra.mxu0 %v2258
        %v2317 = vpop.f32.mrf.mxu0
        %v2318 = vadd.f32 0.0, %v2317
        %v2319 = vpop.f32.mrf.mxu0
        %v2320 = vadd.f32 0.0, %v2319
        %2321 = vmatmul.bf16.gmra.mxu0 %v2261
        %v2322 = vpop.f32.mrf.mxu0
        %v2323 = vadd.f32 0.0, %v2322
        %v2324 = vpop.f32.mrf.mxu0
        %v2325 = vadd.f32 0.0, %v2324
        %2326 = vmatmul.bf16.gmra.mxu0 %v2264
        %v2327 = vpop.f32.mrf.mxu0
        %v2328 = vadd.f32 0.0, %v2327
        %v2329 = vpop.f32.mrf.mxu0
        %v2330 = vadd.f32 0.0, %v2329
        %2331 = vmatmul.bf16.gmra.mxu0 %v2267
        %v2332 = vpop.f32.mrf.mxu0
        %v2333 = vadd.f32 0.0, %v2332
        %v2334 = vpop.f32.mrf.mxu0
        %v2335 = vadd.f32 0.0, %v2334
        %2336 = vmatmul.bf16.gmra.mxu0 %v2270
        %v2337 = vpop.f32.mrf.mxu0
        %v2338 = vadd.f32 0.0, %v2337
        %v2339 = vpop.f32.mrf.mxu0
        %v2340 = vadd.f32 0.0, %v2339
        %2341 = vmatmul.bf16.gmra.mxu0 %v2273
        %v2342 = vpop.f32.mrf.mxu0
        %v2343 = vadd.f32 0.0, %v2342
        %v2344 = vpop.f32.mrf.mxu0
        %v2345 = vadd.f32 0.0, %v2344
        %2346 = vmatmul.bf16.gmra.mxu0 %v2276
        %v2347 = vpop.f32.mrf.mxu0
        %v2348 = vadd.f32 0.0, %v2347
        %v2349 = vpop.f32.mrf.mxu0
        %v2350 = vadd.f32 0.0, %v2349
        %2351 = vmatmul.bf16.gmra.mxu0 %v2279
        %v2352 = vpop.f32.mrf.mxu0
        %v2353 = vadd.f32 0.0, %v2352
        %v2354 = vpop.f32.mrf.mxu0
        %v2355 = vadd.f32 0.0, %v2354
        %2356 = vmatmul.bf16.gmra.mxu0 %v2282
        %v2357 = vpop.f32.mrf.mxu0
        %v2358 = vadd.f32 0.0, %v2357
        %v2359 = vpop.f32.mrf.mxu0
        %v2360 = vadd.f32 0.0, %v2359
        %2361 = vmatmul.bf16.gmra.mxu0 %v2285
        %v2362 = vpop.f32.mrf.mxu0
        %v2363 = vadd.f32 0.0, %v2362
        %v2364 = vpop.f32.mrf.mxu0
        %v2365 = vadd.f32 0.0, %v2364
        %2366 = vmatmul.bf16.gmra.mxu0 %v2288
        %v2367 = vpop.f32.mrf.mxu0
        %v2368 = vadd.f32 0.0, %v2367
        %v2369 = vpop.f32.mrf.mxu0
        %v2370 = vadd.f32 0.0, %v2369
        %2371 = vmatmul.bf16.gmra.mxu0 %v2291
        %v2372 = vpop.f32.mrf.mxu0
        %v2373 = vadd.f32 0.0, %v2372
        %v2374 = vpop.f32.mrf.mxu0
        %v2375 = vadd.f32 0.0, %v2374
        %2376 = vmatmul.bf16.gmra.mxu0 %v2294
        %v2377 = vpop.f32.mrf.mxu0
        %v2378 = vadd.f32 0.0, %v2377
        %v2379 = vpop.f32.mrf.mxu0
        %v2380 = vadd.f32 0.0, %v2379
        %2381 = vmatmul.bf16.gmra.mxu0 %v2297
        %v2382 = vpop.f32.mrf.mxu0
        %v2383 = vadd.f32 0.0, %v2382
        %v2384 = vpop.f32.mrf.mxu0
        %v2385 = vadd.f32 0.0, %v2384
        %2386 = vmatmul.bf16.gmra.mxu0 %v2300
        %v2387 = vpop.f32.mrf.mxu0
        %v2388 = vadd.f32 0.0, %v2387
        %v2389 = vpop.f32.mrf.mxu0
        %v2390 = vadd.f32 0.0, %v2389
        %2391 = vmatmul.bf16.gmra.mxu0 %v2303
        %v2392 = vpop.f32.mrf.mxu0
        %v2393 = vadd.f32 0.0, %v2392
        %v2394 = vpop.f32.mrf.mxu0
        %v2395 = vadd.f32 0.0, %v2394
        %2396 = vdwg.mxu0
        %v2397 = vadd.f32 %v2111, %v2318
        %v2398 = vadd.f32 %v2112, %v2320
        %v2399 = vadd.f32 %v2113, %v2323
        %v2400 = vadd.f32 %v2114, %v2325
        %v2401 = vadd.f32 %v2115, %v2328
        %v2402 = vadd.f32 %v2116, %v2330
        %v2403 = vadd.f32 %v2117, %v2333
        %v2404 = vadd.f32 %v2118, %v2335
        %v2405 = vadd.f32 %v2119, %v2338
        %v2406 = vadd.f32 %v2120, %v2340
        %v2407 = vadd.f32 %v2121, %v2343
        %v2408 = vadd.f32 %v2122, %v2345
        %v2409 = vadd.f32 %v2123, %v2348
        %v2410 = vadd.f32 %v2124, %v2350
        %v2411 = vadd.f32 %v2125, %v2353
        %v2412 = vadd.f32 %v2126, %v2355
        %v2413 = vadd.f32 %v2127, %v2358
        %v2414 = vadd.f32 %v2128, %v2360
        %v2415 = vadd.f32 %v2129, %v2363
        %v2416 = vadd.f32 %v2130, %v2365
        %v2417 = vadd.f32 %v2131, %v2368
        %v2418 = vadd.f32 %v2132, %v2370
        %v2419 = vadd.f32 %v2133, %v2373
        %v2420 = vadd.f32 %v2134, %v2375
        %v2421 = vadd.f32 %v2135, %v2378
        %v2422 = vadd.f32 %v2136, %v2380
        %v2423 = vadd.f32 %v2137, %v2383
        %v2424 = vadd.f32 %v2138, %v2385
        %v2425 = vadd.f32 %v2139, %v2388
        %v2426 = vadd.f32 %v2140, %v2390
        %v2427 = vadd.f32 %v2141, %v2393
        %v2428 = vadd.f32 %v2142, %v2395
        %v2429 = vld [vmem:[%s712 + $0x20] sm:$0xf]
        %v2430 = vld [vmem:[%s712 + $0x24] sm:$0xf]
        %v2431 = vld [vmem:[%s712 + $0x28] sm:$0xf]
        %v2432 = vld [vmem:[%s712 + $0x2c] sm:$0xf]
        %v2433 = vld [vmem:[%s712 + $0x30] sm:$0xf]
        %v2434 = vld [vmem:[%s712 + $0x34] sm:$0xf]
        %v2435 = vld [vmem:[%s712 + $0x38] sm:$0xf]
        %v2436 = vld [vmem:[%s712 + $0x3c] sm:$0xf]
        %v2437 = vld [vmem:[%s712 + $0x40] sm:$0xf]
        %v2438 = vld [vmem:[%s712 + $0x44] sm:$0xf]
        %v2439 = vld [vmem:[%s712 + $0x48] sm:$0xf]
        %v2440 = vld [vmem:[%s712 + $0x4c] sm:$0xf]
        %v2441 = vld [vmem:[%s712 + $0x50] sm:$0xf]
        %v2442 = vld [vmem:[%s712 + $0x54] sm:$0xf]
        %v2443 = vld [vmem:[%s712 + $0x58] sm:$0xf]
        %v2444 = vld [vmem:[%s712 + $0x5c] sm:$0xf]
        %v2445 = vld [vmem:[%s712 + $0x60] sm:$0xf]
        %v2446 = vld [vmem:[%s712 + $0x64] sm:$0xf]
        %v2447 = vld [vmem:[%s712 + $0x68] sm:$0xf]
        %v2448 = vld [vmem:[%s712 + $0x6c] sm:$0xf]
        %v2449 = vld [vmem:[%s712 + $0x70] sm:$0xf]
        %v2450 = vld [vmem:[%s712 + $0x74] sm:$0xf]
        %v2451 = vld [vmem:[%s712 + $0x78] sm:$0xf]
        %v2452 = vld [vmem:[%s712 + $0x7c] sm:$0xf]
        %v2453 = vld [vmem:[%s712 + $0x80] sm:$0xf]
        %v2454 = vld [vmem:[%s712 + $0x84] sm:$0xf]
        %v2455 = vld [vmem:[%s712 + $0x88] sm:$0xf]
        %v2456 = vld [vmem:[%s712 + $0x8c] sm:$0xf]
        %v2457 = vld [vmem:[%s712 + $0x90] sm:$0xf]
        %v2458 = vld [vmem:[%s712 + $0x94] sm:$0xf]
        %v2459 = vld [vmem:[%s712 + $0x98] sm:$0xf]
        %v2460 = vld [vmem:[%s712 + $0x9c] sm:$0xf]
        %s2461 = scalar_lea.vmem %s1, 16
        %v2462 = vld [vmem:[%s2461] sm:$0x3]
        %v2495 = vunpack.c.l.b16 %v2429
        %v2496 = vunpack.c.l.b16 %v2430
        %v2497 = vunpack.c.l.b16 %v2431
        %v2498 = vunpack.c.l.b16 %v2432
        %v2499 = vunpack.c.l.b16 %v2433
        %v2500 = vunpack.c.l.b16 %v2434
        %v2501 = vunpack.c.l.b16 %v2435
        %v2502 = vunpack.c.l.b16 %v2436
        %v2503 = vunpack.c.l.b16 %v2437
        %v2504 = vunpack.c.l.b16 %v2438
        %v2505 = vunpack.c.l.b16 %v2439
        %v2506 = vunpack.c.l.b16 %v2440
        %v2507 = vunpack.c.l.b16 %v2441
        %v2508 = vunpack.c.l.b16 %v2442
        %v2509 = vunpack.c.l.b16 %v2443
        %v2510 = vunpack.c.l.b16 %v2444
        %v2511 = vunpack.c.l.b16 %v2445
        %v2512 = vunpack.c.l.b16 %v2446
        %v2513 = vunpack.c.l.b16 %v2447
        %v2514 = vunpack.c.l.b16 %v2448
        %v2515 = vunpack.c.l.b16 %v2449
        %v2516 = vunpack.c.l.b16 %v2450
        %v2517 = vunpack.c.l.b16 %v2451
        %v2518 = vunpack.c.l.b16 %v2452
        %v2519 = vunpack.c.l.b16 %v2453
        %v2520 = vunpack.c.l.b16 %v2454
        %v2521 = vunpack.c.l.b16 %v2455
        %v2522 = vunpack.c.l.b16 %v2456
        %v2523 = vunpack.c.l.b16 %v2457
        %v2524 = vunpack.c.l.b16 %v2458
        %v2525 = vunpack.c.l.b16 %v2459
        %v2526 = vunpack.c.l.b16 %v2460
        %v2527 = vpack.c.b16 %v2496, %v2495
        %v2528 = vpack.c.b16 %v2498, %v2497
        %v2529 = vpack.c.b16 %v2500, %v2499
        %v2530 = vpack.c.b16 %v2502, %v2501
        %v2531 = vpack.c.b16 %v2504, %v2503
        %v2532 = vpack.c.b16 %v2506, %v2505
        %v2533 = vpack.c.b16 %v2508, %v2507
        %v2534 = vpack.c.b16 %v2510, %v2509
        %v2535 = vpack.c.b16 %v2512, %v2511
        %v2536 = vpack.c.b16 %v2514, %v2513
        %v2537 = vpack.c.b16 %v2516, %v2515
        %v2538 = vpack.c.b16 %v2518, %v2517
        %v2539 = vpack.c.b16 %v2520, %v2519
        %v2540 = vpack.c.b16 %v2522, %v2521
        %v2541 = vpack.c.b16 %v2524, %v2523
        %v2542 = vpack.c.b16 %v2526, %v2525
        %v2544 = vsel %vm347, %v2527, 0
        %v2547 = vsel %vm347, %v2528, 0
        %v2550 = vsel %vm347, %v2529, 0
        %v2553 = vsel %vm347, %v2530, 0
        %v2556 = vsel %vm347, %v2531, 0
        %v2559 = vsel %vm347, %v2532, 0
        %v2562 = vsel %vm347, %v2533, 0
        %v2565 = vsel %vm347, %v2534, 0
        %v2568 = vsel %vm347, %v2535, 0
        %v2571 = vsel %vm347, %v2536, 0
        %v2574 = vsel %vm347, %v2537, 0
        %v2577 = vsel %vm347, %v2538, 0
        %v2580 = vsel %vm347, %v2539, 0
        %v2583 = vsel %vm347, %v2540, 0
        %v2586 = vsel %vm347, %v2541, 0
        %v2589 = vsel %vm347, %v2542, 0
        %v2592 = vand.u32 %v2462, %v399
        %2594 = vmatpush.bf16.msra.mxu0 0
        %2595 = vmatpush.bf16.msra.mxu0 0
        %2596 = vmatpush.bf16.msra.mxu0 0
        %2597 = vmatpush.bf16.msra.mxu0 0
        %2598 = vmatpush.bf16.msra.mxu0 0
        %2599 = vmatpush.bf16.msra.mxu0 0
        %2600 = vmatpush.bf16.msra.mxu0 0
        %2601 = vmatpush.bf16.msra.mxu0 %v2592
        %2602 = vmatmul.bf16.gmra.mxu0 %v2544
        %v2603 = vpop.f32.mrf.mxu0
        %v2604 = vadd.f32 0.0, %v2603
        %v2605 = vpop.f32.mrf.mxu0
        %v2606 = vadd.f32 0.0, %v2605
        %2607 = vmatmul.bf16.gmra.mxu0 %v2547
        %v2608 = vpop.f32.mrf.mxu0
        %v2609 = vadd.f32 0.0, %v2608
        %v2610 = vpop.f32.mrf.mxu0
        %v2611 = vadd.f32 0.0, %v2610
        %2612 = vmatmul.bf16.gmra.mxu0 %v2550
        %v2613 = vpop.f32.mrf.mxu0
        %v2614 = vadd.f32 0.0, %v2613
        %v2615 = vpop.f32.mrf.mxu0
        %v2616 = vadd.f32 0.0, %v2615
        %2617 = vmatmul.bf16.gmra.mxu0 %v2553
        %v2618 = vpop.f32.mrf.mxu0
        %v2619 = vadd.f32 0.0, %v2618
        %v2620 = vpop.f32.mrf.mxu0
        %v2621 = vadd.f32 0.0, %v2620
        %2622 = vmatmul.bf16.gmra.mxu0 %v2556
        %v2623 = vpop.f32.mrf.mxu0
        %v2624 = vadd.f32 0.0, %v2623
        %v2625 = vpop.f32.mrf.mxu0
        %v2626 = vadd.f32 0.0, %v2625
        %2627 = vmatmul.bf16.gmra.mxu0 %v2559
        %v2628 = vpop.f32.mrf.mxu0
        %v2629 = vadd.f32 0.0, %v2628
        %v2630 = vpop.f32.mrf.mxu0
        %v2631 = vadd.f32 0.0, %v2630
        %2632 = vmatmul.bf16.gmra.mxu0 %v2562
        %v2633 = vpop.f32.mrf.mxu0
        %v2634 = vadd.f32 0.0, %v2633
        %v2635 = vpop.f32.mrf.mxu0
        %v2636 = vadd.f32 0.0, %v2635
        %2637 = vmatmul.bf16.gmra.mxu0 %v2565
        %v2638 = vpop.f32.mrf.mxu0
        %v2639 = vadd.f32 0.0, %v2638
        %v2640 = vpop.f32.mrf.mxu0
        %v2641 = vadd.f32 0.0, %v2640
        %2642 = vmatmul.bf16.gmra.mxu0 %v2568
        %v2643 = vpop.f32.mrf.mxu0
        %v2644 = vadd.f32 0.0, %v2643
        %v2645 = vpop.f32.mrf.mxu0
        %v2646 = vadd.f32 0.0, %v2645
        %2647 = vmatmul.bf16.gmra.mxu0 %v2571
        %v2648 = vpop.f32.mrf.mxu0
        %v2649 = vadd.f32 0.0, %v2648
        %v2650 = vpop.f32.mrf.mxu0
        %v2651 = vadd.f32 0.0, %v2650
        %2652 = vmatmul.bf16.gmra.mxu0 %v2574
        %v2653 = vpop.f32.mrf.mxu0
        %v2654 = vadd.f32 0.0, %v2653
        %v2655 = vpop.f32.mrf.mxu0
        %v2656 = vadd.f32 0.0, %v2655
        %2657 = vmatmul.bf16.gmra.mxu0 %v2577
        %v2658 = vpop.f32.mrf.mxu0
        %v2659 = vadd.f32 0.0, %v2658
        %v2660 = vpop.f32.mrf.mxu0
        %v2661 = vadd.f32 0.0, %v2660
        %2662 = vmatmul.bf16.gmra.mxu0 %v2580
        %v2663 = vpop.f32.mrf.mxu0
        %v2664 = vadd.f32 0.0, %v2663
        %v2665 = vpop.f32.mrf.mxu0
        %v2666 = vadd.f32 0.0, %v2665
        %2667 = vmatmul.bf16.gmra.mxu0 %v2583
        %v2668 = vpop.f32.mrf.mxu0
        %v2669 = vadd.f32 0.0, %v2668
        %v2670 = vpop.f32.mrf.mxu0
        %v2671 = vadd.f32 0.0, %v2670
        %2672 = vmatmul.bf16.gmra.mxu0 %v2586
        %v2673 = vpop.f32.mrf.mxu0
        %v2674 = vadd.f32 0.0, %v2673
        %v2675 = vpop.f32.mrf.mxu0
        %v2676 = vadd.f32 0.0, %v2675
        %2677 = vmatmul.bf16.gmra.mxu0 %v2589
        %v2678 = vpop.f32.mrf.mxu0
        %v2679 = vadd.f32 0.0, %v2678
        %v2680 = vpop.f32.mrf.mxu0
        %v2681 = vadd.f32 0.0, %v2680
        %2682 = vdwg.mxu0
        %v2683 = vadd.f32 %v2397, %v2604
        %v2684 = vadd.f32 %v2398, %v2606
        %v2685 = vadd.f32 %v2399, %v2609
        %v2686 = vadd.f32 %v2400, %v2611
        %v2687 = vadd.f32 %v2401, %v2614
        %v2688 = vadd.f32 %v2402, %v2616
        %v2689 = vadd.f32 %v2403, %v2619
        %v2690 = vadd.f32 %v2404, %v2621
        %v2691 = vadd.f32 %v2405, %v2624
        %v2692 = vadd.f32 %v2406, %v2626
        %v2693 = vadd.f32 %v2407, %v2629
        %v2694 = vadd.f32 %v2408, %v2631
        %v2695 = vadd.f32 %v2409, %v2634
        %v2696 = vadd.f32 %v2410, %v2636
        %v2697 = vadd.f32 %v2411, %v2639
        %v2698 = vadd.f32 %v2412, %v2641
        %v2699 = vadd.f32 %v2413, %v2644
        %v2700 = vadd.f32 %v2414, %v2646
        %v2701 = vadd.f32 %v2415, %v2649
        %v2702 = vadd.f32 %v2416, %v2651
        %v2703 = vadd.f32 %v2417, %v2654
        %v2704 = vadd.f32 %v2418, %v2656
        %v2705 = vadd.f32 %v2419, %v2659
        %v2706 = vadd.f32 %v2420, %v2661
        %v2707 = vadd.f32 %v2421, %v2664
        %v2708 = vadd.f32 %v2422, %v2666
        %v2709 = vadd.f32 %v2423, %v2669
        %v2710 = vadd.f32 %v2424, %v2671
        %v2711 = vadd.f32 %v2425, %v2674
        %v2712 = vadd.f32 %v2426, %v2676
        %v2713 = vadd.f32 %v2427, %v2679
        %v2714 = vadd.f32 %v2428, %v2681
        %v2716 = vperm.slane %v197, 0
        %v2718 = vmul.f32 %v2683, %v2716
        %v2719 = vmul.f32 %v2684, %v2716
        %v2720 = vmul.f32 %v2685, %v2716
        %v2721 = vmul.f32 %v2686, %v2716
        %v2722 = vmul.f32 %v2687, %v2716
        %v2723 = vmul.f32 %v2688, %v2716
        %v2724 = vmul.f32 %v2689, %v2716
        %v2725 = vmul.f32 %v2690, %v2716
        %v2726 = vmul.f32 %v2691, %v2716
        %v2727 = vmul.f32 %v2692, %v2716
        %v2728 = vmul.f32 %v2693, %v2716
        %v2729 = vmul.f32 %v2694, %v2716
        %v2730 = vmul.f32 %v2695, %v2716
        %v2731 = vmul.f32 %v2696, %v2716
        %v2732 = vmul.f32 %v2697, %v2716
        %v2733 = vmul.f32 %v2698, %v2716
        %v2734 = vmul.f32 %v2699, %v2716
        %v2735 = vmul.f32 %v2700, %v2716
        %v2736 = vmul.f32 %v2701, %v2716
        %v2737 = vmul.f32 %v2702, %v2716
        %v2738 = vmul.f32 %v2703, %v2716
        %v2739 = vmul.f32 %v2704, %v2716
        %v2740 = vmul.f32 %v2705, %v2716
        %v2741 = vmul.f32 %v2706, %v2716
        %v2742 = vmul.f32 %v2707, %v2716
        %v2743 = vmul.f32 %v2708, %v2716
        %v2744 = vmul.f32 %v2709, %v2716
        %v2745 = vmul.f32 %v2710, %v2716
        %v2746 = vmul.f32 %v2711, %v2716
        %v2747 = vmul.f32 %v2712, %v2716
        %v2748 = vmul.f32 %v2713, %v2716
        %v2749 = vmul.f32 %v2714, %v2716
        %v2751 = vperm.slane %v198, 0
        %v2753 = vadd.f32 %v2718, %v2751
        %v2754 = vadd.f32 %v2719, %v2751
        %v2755 = vadd.f32 %v2720, %v2751
        %v2756 = vadd.f32 %v2721, %v2751
        %v2757 = vadd.f32 %v2722, %v2751
        %v2758 = vadd.f32 %v2723, %v2751
        %v2759 = vadd.f32 %v2724, %v2751
        %v2760 = vadd.f32 %v2725, %v2751
        %v2761 = vadd.f32 %v2726, %v2751
        %v2762 = vadd.f32 %v2727, %v2751
        %v2763 = vadd.f32 %v2728, %v2751
        %v2764 = vadd.f32 %v2729, %v2751
        %v2765 = vadd.f32 %v2730, %v2751
        %v2766 = vadd.f32 %v2731, %v2751
        %v2767 = vadd.f32 %v2732, %v2751
        %v2768 = vadd.f32 %v2733, %v2751
        %v2769 = vadd.f32 %v2734, %v2751
        %v2770 = vadd.f32 %v2735, %v2751
        %v2771 = vadd.f32 %v2736, %v2751
        %v2772 = vadd.f32 %v2737, %v2751
        %v2773 = vadd.f32 %v2738, %v2751
        %v2774 = vadd.f32 %v2739, %v2751
        %v2775 = vadd.f32 %v2740, %v2751
        %v2776 = vadd.f32 %v2741, %v2751
        %v2777 = vadd.f32 %v2742, %v2751
        %v2778 = vadd.f32 %v2743, %v2751
        %v2779 = vadd.f32 %v2744, %v2751
        %v2780 = vadd.f32 %v2745, %v2751
        %v2781 = vadd.f32 %v2746, %v2751
        %v2782 = vadd.f32 %v2747, %v2751
        %v2783 = vadd.f32 %v2748, %v2751
        %v2784 = vadd.f32 %v2749, %v2751
        %v2785 = vmax.f32 %v2753, 0.0
        %v2786 = vmax.f32 %v2754, 0.0
        %v2787 = vmax.f32 %v2755, 0.0
        %v2788 = vmax.f32 %v2756, 0.0
        %v2789 = vmax.f32 %v2757, 0.0
        %v2790 = vmax.f32 %v2758, 0.0
        %v2791 = vmax.f32 %v2759, 0.0
        %v2792 = vmax.f32 %v2760, 0.0
        %v2793 = vmax.f32 %v2761, 0.0
        %v2794 = vmax.f32 %v2762, 0.0
        %v2795 = vmax.f32 %v2763, 0.0
        %v2796 = vmax.f32 %v2764, 0.0
        %v2797 = vmax.f32 %v2765, 0.0
        %v2798 = vmax.f32 %v2766, 0.0
        %v2799 = vmax.f32 %v2767, 0.0
        %v2800 = vmax.f32 %v2768, 0.0
        %v2801 = vmax.f32 %v2769, 0.0
        %v2802 = vmax.f32 %v2770, 0.0
        %v2803 = vmax.f32 %v2771, 0.0
        %v2804 = vmax.f32 %v2772, 0.0
        %v2805 = vmax.f32 %v2773, 0.0
        %v2806 = vmax.f32 %v2774, 0.0
        %v2807 = vmax.f32 %v2775, 0.0
        %v2808 = vmax.f32 %v2776, 0.0
        %v2809 = vmax.f32 %v2777, 0.0
        %v2810 = vmax.f32 %v2778, 0.0
        %v2811 = vmax.f32 %v2779, 0.0
        %v2812 = vmax.f32 %v2780, 0.0
        %v2813 = vmax.f32 %v2781, 0.0
        %v2814 = vmax.f32 %v2782, 0.0
        %v2815 = vmax.f32 %v2783, 0.0
        %v2816 = vmax.f32 %v2784, 0.0
        %v2817 = vpack.c.bf16 %v2785, %v2785
        %v2818 = vpack.c.bf16 %v2786, %v2786
        %v2819 = vpack.c.bf16 %v2787, %v2787
        %v2820 = vpack.c.bf16 %v2788, %v2788
        %v2821 = vpack.c.bf16 %v2789, %v2789
        %v2822 = vpack.c.bf16 %v2790, %v2790
        %v2823 = vpack.c.bf16 %v2791, %v2791
        %v2824 = vpack.c.bf16 %v2792, %v2792
        %v2825 = vpack.c.bf16 %v2793, %v2793
        %v2826 = vpack.c.bf16 %v2794, %v2794
        %v2827 = vpack.c.bf16 %v2795, %v2795
        %v2828 = vpack.c.bf16 %v2796, %v2796
        %v2829 = vpack.c.bf16 %v2797, %v2797
        %v2830 = vpack.c.bf16 %v2798, %v2798
        %v2831 = vpack.c.bf16 %v2799, %v2799
        %v2832 = vpack.c.bf16 %v2800, %v2800
        %v2833 = vpack.c.bf16 %v2801, %v2801
        %v2834 = vpack.c.bf16 %v2802, %v2802
        %v2835 = vpack.c.bf16 %v2803, %v2803
        %v2836 = vpack.c.bf16 %v2804, %v2804
        %v2837 = vpack.c.bf16 %v2805, %v2805
        %v2838 = vpack.c.bf16 %v2806, %v2806
        %v2839 = vpack.c.bf16 %v2807, %v2807
        %v2840 = vpack.c.bf16 %v2808, %v2808
        %v2841 = vpack.c.bf16 %v2809, %v2809
        %v2842 = vpack.c.bf16 %v2810, %v2810
        %v2843 = vpack.c.bf16 %v2811, %v2811
        %v2844 = vpack.c.bf16 %v2812, %v2812
        %v2845 = vpack.c.bf16 %v2813, %v2813
        %v2846 = vpack.c.bf16 %v2814, %v2814
        %v2847 = vpack.c.bf16 %v2815, %v2815
        %v2848 = vpack.c.bf16 %v2816, %v2816
        %2849 = vst [vmem:[%s190] sm:$0xf] %v2817
        %2850 = vst [vmem:[%s190 + $0x4] sm:$0xf] %v2818
        %2851 = vst [vmem:[%s190 + $0x8] sm:$0xf] %v2819
        %2852 = vst [vmem:[%s190 + $0xc] sm:$0xf] %v2820
        %2853 = vst [vmem:[%s190 + $0x10] sm:$0xf] %v2821
        %2854 = vst [vmem:[%s190 + $0x14] sm:$0xf] %v2822
        %2855 = vst [vmem:[%s190 + $0x18] sm:$0xf] %v2823
        %2856 = vst [vmem:[%s190 + $0x1c] sm:$0xf] %v2824
        %2857 = vst [vmem:[%s190 + $0x20] sm:$0xf] %v2825
        %2858 = vst [vmem:[%s190 + $0x24] sm:$0xf] %v2826
        %2859 = vst [vmem:[%s190 + $0x28] sm:$0xf] %v2827
        %2860 = vst [vmem:[%s190 + $0x2c] sm:$0xf] %v2828
        %2861 = vst [vmem:[%s190 + $0x30] sm:$0xf] %v2829
        %2862 = vst [vmem:[%s190 + $0x34] sm:$0xf] %v2830
        %2863 = vst [vmem:[%s190 + $0x38] sm:$0xf] %v2831
        %2864 = vst [vmem:[%s190 + $0x3c] sm:$0xf] %v2832
        %2865 = vst [vmem:[%s190 + $0x40] sm:$0xf] %v2833
        %2866 = vst [vmem:[%s190 + $0x44] sm:$0xf] %v2834
        %2867 = vst [vmem:[%s190 + $0x48] sm:$0xf] %v2835
        %2868 = vst [vmem:[%s190 + $0x4c] sm:$0xf] %v2836
        %2869 = vst [vmem:[%s190 + $0x50] sm:$0xf] %v2837
        %2870 = vst [vmem:[%s190 + $0x54] sm:$0xf] %v2838
        %2871 = vst [vmem:[%s190 + $0x58] sm:$0xf] %v2839
        %2872 = vst [vmem:[%s190 + $0x5c] sm:$0xf] %v2840
        %2873 = vst [vmem:[%s190 + $0x60] sm:$0xf] %v2841
        %2874 = vst [vmem:[%s190 + $0x64] sm:$0xf] %v2842
        %2875 = vst [vmem:[%s190 + $0x68] sm:$0xf] %v2843
        %2876 = vst [vmem:[%s190 + $0x6c] sm:$0xf] %v2844
        %2877 = vst [vmem:[%s190 + $0x70] sm:$0xf] %v2845
        %2878 = vst [vmem:[%s190 + $0x74] sm:$0xf] %v2846
        %2879 = vst [vmem:[%s190 + $0x78] sm:$0xf] %v2847
        %2880 = vst [vmem:[%s190 + $0x7c] sm:$0xf] %v2848
        %v2881 = vld [vmem:[%s195 + $0x80] sm:$0xf]
        %v2882 = vld [vmem:[%s195 + $0x84] sm:$0xf]
        %v2883 = vld [vmem:[%s195 + $0x88] sm:$0xf]
        %v2884 = vld [vmem:[%s195 + $0x8c] sm:$0xf]
        %v2885 = vld [vmem:[%s195 + $0x90] sm:$0xf]
        %v2886 = vld [vmem:[%s195 + $0x94] sm:$0xf]
        %v2887 = vld [vmem:[%s195 + $0x98] sm:$0xf]
        %v2888 = vld [vmem:[%s195 + $0x9c] sm:$0xf]
        %v2889 = vld [vmem:[%s195 + $0xa0] sm:$0xf]
        %v2890 = vld [vmem:[%s195 + $0xa4] sm:$0xf]
        %v2891 = vld [vmem:[%s195 + $0xa8] sm:$0xf]
        %v2892 = vld [vmem:[%s195 + $0xac] sm:$0xf]
        %v2893 = vld [vmem:[%s195 + $0xb0] sm:$0xf]
        %v2894 = vld [vmem:[%s195 + $0xb4] sm:$0xf]
        %v2895 = vld [vmem:[%s195 + $0xb8] sm:$0xf]
        %v2896 = vld [vmem:[%s195 + $0xbc] sm:$0xf]
        %v2897 = vld [vmem:[%s195 + $0xc0] sm:$0xf]
        %v2898 = vld [vmem:[%s195 + $0xc4] sm:$0xf]
        %v2899 = vld [vmem:[%s195 + $0xc8] sm:$0xf]
        %v2900 = vld [vmem:[%s195 + $0xcc] sm:$0xf]
        %v2901 = vld [vmem:[%s195 + $0xd0] sm:$0xf]
        %v2902 = vld [vmem:[%s195 + $0xd4] sm:$0xf]
        %v2903 = vld [vmem:[%s195 + $0xd8] sm:$0xf]
        %v2904 = vld [vmem:[%s195 + $0xdc] sm:$0xf]
        %v2905 = vld [vmem:[%s195 + $0xe0] sm:$0xf]
        %v2906 = vld [vmem:[%s195 + $0xe4] sm:$0xf]
        %v2907 = vld [vmem:[%s195 + $0xe8] sm:$0xf]
        %v2908 = vld [vmem:[%s195 + $0xec] sm:$0xf]
        %v2909 = vld [vmem:[%s195 + $0xf0] sm:$0xf]
        %v2910 = vld [vmem:[%s195 + $0xf4] sm:$0xf]
        %v2911 = vld [vmem:[%s195 + $0xf8] sm:$0xf]
        %v2912 = vld [vmem:[%s195 + $0xfc] sm:$0xf]
        %v2913 = vld [vmem:[%s1] sm:$0x3]
        %v2914 = vld [vmem:[%s232 + $0x80] sm:$0xf]
        %v2915 = vld [vmem:[%s232 + $0x84] sm:$0xf]
        %v2916 = vld [vmem:[%s232 + $0x88] sm:$0xf]
        %v2917 = vld [vmem:[%s232 + $0x8c] sm:$0xf]
        %v2918 = vld [vmem:[%s232 + $0x90] sm:$0xf]
        %v2919 = vld [vmem:[%s232 + $0x94] sm:$0xf]
        %v2920 = vld [vmem:[%s232 + $0x98] sm:$0xf]
        %v2921 = vld [vmem:[%s232 + $0x9c] sm:$0xf]
        %v2922 = vld [vmem:[%s232 + $0xa0] sm:$0xf]
        %v2923 = vld [vmem:[%s232 + $0xa4] sm:$0xf]
        %v2924 = vld [vmem:[%s232 + $0xa8] sm:$0xf]
        %v2925 = vld [vmem:[%s232 + $0xac] sm:$0xf]
        %v2926 = vld [vmem:[%s232 + $0xb0] sm:$0xf]
        %v2927 = vld [vmem:[%s232 + $0xb4] sm:$0xf]
        %v2928 = vld [vmem:[%s232 + $0xb8] sm:$0xf]
        %v2929 = vld [vmem:[%s232 + $0xbc] sm:$0xf]
        %v2930 = vld [vmem:[%s232 + $0xc0] sm:$0xf]
        %v2931 = vld [vmem:[%s232 + $0xc4] sm:$0xf]
        %v2932 = vld [vmem:[%s232 + $0xc8] sm:$0xf]
        %v2933 = vld [vmem:[%s232 + $0xcc] sm:$0xf]
        %v2934 = vld [vmem:[%s232 + $0xd0] sm:$0xf]
        %v2935 = vld [vmem:[%s232 + $0xd4] sm:$0xf]
        %v2936 = vld [vmem:[%s232 + $0xd8] sm:$0xf]
        %v2937 = vld [vmem:[%s232 + $0xdc] sm:$0xf]
        %v2938 = vld [vmem:[%s232 + $0xe0] sm:$0xf]
        %v2939 = vld [vmem:[%s232 + $0xe4] sm:$0xf]
        %v2940 = vld [vmem:[%s232 + $0xe8] sm:$0xf]
        %v2941 = vld [vmem:[%s232 + $0xec] sm:$0xf]
        %v2942 = vld [vmem:[%s232 + $0xf0] sm:$0xf]
        %v2943 = vld [vmem:[%s232 + $0xf4] sm:$0xf]
        %v2944 = vld [vmem:[%s232 + $0xf8] sm:$0xf]
        %v2945 = vld [vmem:[%s232 + $0xfc] sm:$0xf]
        %v2946 = vld [vmem:[%s265] sm:$0x3]
        %v2979 = vunpack.c.l.b16 %v2914
        %v2980 = vunpack.c.l.b16 %v2915
        %v2981 = vunpack.c.l.b16 %v2916
        %v2982 = vunpack.c.l.b16 %v2917
        %v2983 = vunpack.c.l.b16 %v2918
        %v2984 = vunpack.c.l.b16 %v2919
        %v2985 = vunpack.c.l.b16 %v2920
        %v2986 = vunpack.c.l.b16 %v2921
        %v2987 = vunpack.c.l.b16 %v2922
        %v2988 = vunpack.c.l.b16 %v2923
        %v2989 = vunpack.c.l.b16 %v2924
        %v2990 = vunpack.c.l.b16 %v2925
        %v2991 = vunpack.c.l.b16 %v2926
        %v2992 = vunpack.c.l.b16 %v2927
        %v2993 = vunpack.c.l.b16 %v2928
        %v2994 = vunpack.c.l.b16 %v2929
        %v2995 = vunpack.c.l.b16 %v2930
        %v2996 = vunpack.c.l.b16 %v2931
        %v2997 = vunpack.c.l.b16 %v2932
        %v2998 = vunpack.c.l.b16 %v2933
        %v2999 = vunpack.c.l.b16 %v2934
        %v3000 = vunpack.c.l.b16 %v2935
        %v3001 = vunpack.c.l.b16 %v2936
        %v3002 = vunpack.c.l.b16 %v2937
        %v3003 = vunpack.c.l.b16 %v2938
        %v3004 = vunpack.c.l.b16 %v2939
        %v3005 = vunpack.c.l.b16 %v2940
        %v3006 = vunpack.c.l.b16 %v2941
        %v3007 = vunpack.c.l.b16 %v2942
        %v3008 = vunpack.c.l.b16 %v2943
        %v3009 = vunpack.c.l.b16 %v2944
        %v3010 = vunpack.c.l.b16 %v2945
        %v3011 = vpack.c.b16 %v2980, %v2979
        %v3012 = vpack.c.b16 %v2982, %v2981
        %v3013 = vpack.c.b16 %v2984, %v2983
        %v3014 = vpack.c.b16 %v2986, %v2985
        %v3015 = vpack.c.b16 %v2988, %v2987
        %v3016 = vpack.c.b16 %v2990, %v2989
        %v3017 = vpack.c.b16 %v2992, %v2991
        %v3018 = vpack.c.b16 %v2994, %v2993
        %v3019 = vpack.c.b16 %v2996, %v2995
        %v3020 = vpack.c.b16 %v2998, %v2997
        %v3021 = vpack.c.b16 %v3000, %v2999
        %v3022 = vpack.c.b16 %v3002, %v3001
        %v3023 = vpack.c.b16 %v3004, %v3003
        %v3024 = vpack.c.b16 %v3006, %v3005
        %v3025 = vpack.c.b16 %v3008, %v3007
        %v3026 = vpack.c.b16 %v3010, %v3009
        %v3028 = vsel %vm347, %v3011, 0
        %v3031 = vsel %vm347, %v3012, 0
        %v3034 = vsel %vm347, %v3013, 0
        %v3037 = vsel %vm347, %v3014, 0
        %v3040 = vsel %vm347, %v3015, 0
        %v3043 = vsel %vm347, %v3016, 0
        %v3046 = vsel %vm347, %v3017, 0
        %v3049 = vsel %vm347, %v3018, 0
        %v3052 = vsel %vm347, %v3019, 0
        %v3055 = vsel %vm347, %v3020, 0
        %v3058 = vsel %vm347, %v3021, 0
        %v3061 = vsel %vm347, %v3022, 0
        %v3064 = vsel %vm347, %v3023, 0
        %v3067 = vsel %vm347, %v3024, 0
        %v3070 = vsel %vm347, %v3025, 0
        %v3073 = vsel %vm347, %v3026, 0
        %v3076 = vand.u32 %v2946, %v399
        %3078 = vmatpush.bf16.msra.mxu0 0
        %3079 = vmatpush.bf16.msra.mxu0 0
        %3080 = vmatpush.bf16.msra.mxu0 0
        %3081 = vmatpush.bf16.msra.mxu0 0
        %3082 = vmatpush.bf16.msra.mxu0 0
        %3083 = vmatpush.bf16.msra.mxu0 0
        %3084 = vmatpush.bf16.msra.mxu0 0
        %3085 = vmatpush.bf16.msra.mxu0 %v3076
        %3086 = vmatmul.bf16.gmra.mxu0 %v3028
        %v3087 = vpop.f32.mrf.mxu0
        %v3088 = vadd.f32 0.0, %v3087
        %v3089 = vpop.f32.mrf.mxu0
        %v3090 = vadd.f32 0.0, %v3089
        %3091 = vmatmul.bf16.gmra.mxu0 %v3031
        %v3092 = vpop.f32.mrf.mxu0
        %v3093 = vadd.f32 0.0, %v3092
        %v3094 = vpop.f32.mrf.mxu0
        %v3095 = vadd.f32 0.0, %v3094
        %3096 = vmatmul.bf16.gmra.mxu0 %v3034
        %v3097 = vpop.f32.mrf.mxu0
        %v3098 = vadd.f32 0.0, %v3097
        %v3099 = vpop.f32.mrf.mxu0
        %v3100 = vadd.f32 0.0, %v3099
        %3101 = vmatmul.bf16.gmra.mxu0 %v3037
        %v3102 = vpop.f32.mrf.mxu0
        %v3103 = vadd.f32 0.0, %v3102
        %v3104 = vpop.f32.mrf.mxu0
        %v3105 = vadd.f32 0.0, %v3104
        %3106 = vmatmul.bf16.gmra.mxu0 %v3040
        %v3107 = vpop.f32.mrf.mxu0
        %v3108 = vadd.f32 0.0, %v3107
        %v3109 = vpop.f32.mrf.mxu0
        %v3110 = vadd.f32 0.0, %v3109
        %3111 = vmatmul.bf16.gmra.mxu0 %v3043
        %v3112 = vpop.f32.mrf.mxu0
        %v3113 = vadd.f32 0.0, %v3112
        %v3114 = vpop.f32.mrf.mxu0
        %v3115 = vadd.f32 0.0, %v3114
        %3116 = vmatmul.bf16.gmra.mxu0 %v3046
        %v3117 = vpop.f32.mrf.mxu0
        %v3118 = vadd.f32 0.0, %v3117
        %v3119 = vpop.f32.mrf.mxu0
        %v3120 = vadd.f32 0.0, %v3119
        %3121 = vmatmul.bf16.gmra.mxu0 %v3049
        %v3122 = vpop.f32.mrf.mxu0
        %v3123 = vadd.f32 0.0, %v3122
        %v3124 = vpop.f32.mrf.mxu0
        %v3125 = vadd.f32 0.0, %v3124
        %3126 = vmatmul.bf16.gmra.mxu0 %v3052
        %v3127 = vpop.f32.mrf.mxu0
        %v3128 = vadd.f32 0.0, %v3127
        %v3129 = vpop.f32.mrf.mxu0
        %v3130 = vadd.f32 0.0, %v3129
        %3131 = vmatmul.bf16.gmra.mxu0 %v3055
        %v3132 = vpop.f32.mrf.mxu0
        %v3133 = vadd.f32 0.0, %v3132
        %v3134 = vpop.f32.mrf.mxu0
        %v3135 = vadd.f32 0.0, %v3134
        %3136 = vmatmul.bf16.gmra.mxu0 %v3058
        %v3137 = vpop.f32.mrf.mxu0
        %v3138 = vadd.f32 0.0, %v3137
        %v3139 = vpop.f32.mrf.mxu0
        %v3140 = vadd.f32 0.0, %v3139
        %3141 = vmatmul.bf16.gmra.mxu0 %v3061
        %v3142 = vpop.f32.mrf.mxu0
        %v3143 = vadd.f32 0.0, %v3142
        %v3144 = vpop.f32.mrf.mxu0
        %v3145 = vadd.f32 0.0, %v3144
        %3146 = vmatmul.bf16.gmra.mxu0 %v3064
        %v3147 = vpop.f32.mrf.mxu0
        %v3148 = vadd.f32 0.0, %v3147
        %v3149 = vpop.f32.mrf.mxu0
        %v3150 = vadd.f32 0.0, %v3149
        %3151 = vmatmul.bf16.gmra.mxu0 %v3067
        %v3152 = vpop.f32.mrf.mxu0
        %v3153 = vadd.f32 0.0, %v3152
        %v3154 = vpop.f32.mrf.mxu0
        %v3155 = vadd.f32 0.0, %v3154
        %3156 = vmatmul.bf16.gmra.mxu0 %v3070
        %v3157 = vpop.f32.mrf.mxu0
        %v3158 = vadd.f32 0.0, %v3157
        %v3159 = vpop.f32.mrf.mxu0
        %v3160 = vadd.f32 0.0, %v3159
        %3161 = vmatmul.bf16.gmra.mxu0 %v3073
        %v3162 = vpop.f32.mrf.mxu0
        %v3163 = vadd.f32 0.0, %v3162
        %v3164 = vpop.f32.mrf.mxu0
        %v3165 = vadd.f32 0.0, %v3164
        %3166 = vdwg.mxu0
        %v3199 = vunpack.c.l.b16 %v2881
        %v3200 = vunpack.c.l.b16 %v2882
        %v3201 = vunpack.c.l.b16 %v2883
        %v3202 = vunpack.c.l.b16 %v2884
        %v3203 = vunpack.c.l.b16 %v2885
        %v3204 = vunpack.c.l.b16 %v2886
        %v3205 = vunpack.c.l.b16 %v2887
        %v3206 = vunpack.c.l.b16 %v2888
        %v3207 = vunpack.c.l.b16 %v2889
        %v3208 = vunpack.c.l.b16 %v2890
        %v3209 = vunpack.c.l.b16 %v2891
        %v3210 = vunpack.c.l.b16 %v2892
        %v3211 = vunpack.c.l.b16 %v2893
        %v3212 = vunpack.c.l.b16 %v2894
        %v3213 = vunpack.c.l.b16 %v2895
        %v3214 = vunpack.c.l.b16 %v2896
        %v3215 = vunpack.c.l.b16 %v2897
        %v3216 = vunpack.c.l.b16 %v2898
        %v3217 = vunpack.c.l.b16 %v2899
        %v3218 = vunpack.c.l.b16 %v2900
        %v3219 = vunpack.c.l.b16 %v2901
        %v3220 = vunpack.c.l.b16 %v2902
        %v3221 = vunpack.c.l.b16 %v2903
        %v3222 = vunpack.c.l.b16 %v2904
        %v3223 = vunpack.c.l.b16 %v2905
        %v3224 = vunpack.c.l.b16 %v2906
        %v3225 = vunpack.c.l.b16 %v2907
        %v3226 = vunpack.c.l.b16 %v2908
        %v3227 = vunpack.c.l.b16 %v2909
        %v3228 = vunpack.c.l.b16 %v2910
        %v3229 = vunpack.c.l.b16 %v2911
        %v3230 = vunpack.c.l.b16 %v2912
        %v3231 = vpack.c.b16 %v3200, %v3199
        %v3232 = vpack.c.b16 %v3202, %v3201
        %v3233 = vpack.c.b16 %v3204, %v3203
        %v3234 = vpack.c.b16 %v3206, %v3205
        %v3235 = vpack.c.b16 %v3208, %v3207
        %v3236 = vpack.c.b16 %v3210, %v3209
        %v3237 = vpack.c.b16 %v3212, %v3211
        %v3238 = vpack.c.b16 %v3214, %v3213
        %v3239 = vpack.c.b16 %v3216, %v3215
        %v3240 = vpack.c.b16 %v3218, %v3217
        %v3241 = vpack.c.b16 %v3220, %v3219
        %v3242 = vpack.c.b16 %v3222, %v3221
        %v3243 = vpack.c.b16 %v3224, %v3223
        %v3244 = vpack.c.b16 %v3226, %v3225
        %v3245 = vpack.c.b16 %v3228, %v3227
        %v3246 = vpack.c.b16 %v3230, %v3229
        %v3248 = vsel %vm347, %v3231, 0
        %v3251 = vsel %vm347, %v3232, 0
        %v3254 = vsel %vm347, %v3233, 0
        %v3257 = vsel %vm347, %v3234, 0
        %v3260 = vsel %vm347, %v3235, 0
        %v3263 = vsel %vm347, %v3236, 0
        %v3266 = vsel %vm347, %v3237, 0
        %v3269 = vsel %vm347, %v3238, 0
        %v3272 = vsel %vm347, %v3239, 0
        %v3275 = vsel %vm347, %v3240, 0
        %v3278 = vsel %vm347, %v3241, 0
        %v3281 = vsel %vm347, %v3242, 0
        %v3284 = vsel %vm347, %v3243, 0
        %v3287 = vsel %vm347, %v3244, 0
        %v3290 = vsel %vm347, %v3245, 0
        %v3293 = vsel %vm347, %v3246, 0
        %v3296 = vand.u32 %v2913, %v399
        %3298 = vmatpush.bf16.msra.mxu0 0
        %3299 = vmatpush.bf16.msra.mxu0 0
        %3300 = vmatpush.bf16.msra.mxu0 0
        %3301 = vmatpush.bf16.msra.mxu0 0
        %3302 = vmatpush.bf16.msra.mxu0 0
        %3303 = vmatpush.bf16.msra.mxu0 0
        %3304 = vmatpush.bf16.msra.mxu0 0
        %3305 = vmatpush.bf16.msra.mxu0 %v3296
        %3306 = vmatmul.bf16.gmra.mxu0 %v3248
        %v3307 = vpop.f32.mrf.mxu0
        %v3308 = vadd.f32 %v3088, %v3307
        %v3309 = vpop.f32.mrf.mxu0
        %v3310 = vadd.f32 %v3090, %v3309
        %3311 = vmatmul.bf16.gmra.mxu0 %v3251
        %v3312 = vpop.f32.mrf.mxu0
        %v3313 = vadd.f32 %v3093, %v3312
        %v3314 = vpop.f32.mrf.mxu0
        %v3315 = vadd.f32 %v3095, %v3314
        %3316 = vmatmul.bf16.gmra.mxu0 %v3254
        %v3317 = vpop.f32.mrf.mxu0
        %v3318 = vadd.f32 %v3098, %v3317
        %v3319 = vpop.f32.mrf.mxu0
        %v3320 = vadd.f32 %v3100, %v3319
        %3321 = vmatmul.bf16.gmra.mxu0 %v3257
        %v3322 = vpop.f32.mrf.mxu0
        %v3323 = vadd.f32 %v3103, %v3322
        %v3324 = vpop.f32.mrf.mxu0
        %v3325 = vadd.f32 %v3105, %v3324
        %3326 = vmatmul.bf16.gmra.mxu0 %v3260
        %v3327 = vpop.f32.mrf.mxu0
        %v3328 = vadd.f32 %v3108, %v3327
        %v3329 = vpop.f32.mrf.mxu0
        %v3330 = vadd.f32 %v3110, %v3329
        %3331 = vmatmul.bf16.gmra.mxu0 %v3263
        %v3332 = vpop.f32.mrf.mxu0
        %v3333 = vadd.f32 %v3113, %v3332
        %v3334 = vpop.f32.mrf.mxu0
        %v3335 = vadd.f32 %v3115, %v3334
        %3336 = vmatmul.bf16.gmra.mxu0 %v3266
        %v3337 = vpop.f32.mrf.mxu0
        %v3338 = vadd.f32 %v3118, %v3337
        %v3339 = vpop.f32.mrf.mxu0
        %v3340 = vadd.f32 %v3120, %v3339
        %3341 = vmatmul.bf16.gmra.mxu0 %v3269
        %v3342 = vpop.f32.mrf.mxu0
        %v3343 = vadd.f32 %v3123, %v3342
        %v3344 = vpop.f32.mrf.mxu0
        %v3345 = vadd.f32 %v3125, %v3344
        %3346 = vmatmul.bf16.gmra.mxu0 %v3272
        %v3347 = vpop.f32.mrf.mxu0
        %v3348 = vadd.f32 %v3128, %v3347
        %v3349 = vpop.f32.mrf.mxu0
        %v3350 = vadd.f32 %v3130, %v3349
        %3351 = vmatmul.bf16.gmra.mxu0 %v3275
        %v3352 = vpop.f32.mrf.mxu0
        %v3353 = vadd.f32 %v3133, %v3352
        %v3354 = vpop.f32.mrf.mxu0
        %v3355 = vadd.f32 %v3135, %v3354
        %3356 = vmatmul.bf16.gmra.mxu0 %v3278
        %v3357 = vpop.f32.mrf.mxu0
        %v3358 = vadd.f32 %v3138, %v3357
        %v3359 = vpop.f32.mrf.mxu0
        %v3360 = vadd.f32 %v3140, %v3359
        %3361 = vmatmul.bf16.gmra.mxu0 %v3281
        %v3362 = vpop.f32.mrf.mxu0
        %v3363 = vadd.f32 %v3143, %v3362
        %v3364 = vpop.f32.mrf.mxu0
        %v3365 = vadd.f32 %v3145, %v3364
        %3366 = vmatmul.bf16.gmra.mxu0 %v3284
        %v3367 = vpop.f32.mrf.mxu0
        %v3368 = vadd.f32 %v3148, %v3367
        %v3369 = vpop.f32.mrf.mxu0
        %v3370 = vadd.f32 %v3150, %v3369
        %3371 = vmatmul.bf16.gmra.mxu0 %v3287
        %v3372 = vpop.f32.mrf.mxu0
        %v3373 = vadd.f32 %v3153, %v3372
        %v3374 = vpop.f32.mrf.mxu0
        %v3375 = vadd.f32 %v3155, %v3374
        %3376 = vmatmul.bf16.gmra.mxu0 %v3290
        %v3377 = vpop.f32.mrf.mxu0
        %v3378 = vadd.f32 %v3158, %v3377
        %v3379 = vpop.f32.mrf.mxu0
        %v3380 = vadd.f32 %v3160, %v3379
        %3381 = vmatmul.bf16.gmra.mxu0 %v3293
        %v3382 = vpop.f32.mrf.mxu0
        %v3383 = vadd.f32 %v3163, %v3382
        %v3384 = vpop.f32.mrf.mxu0
        %v3385 = vadd.f32 %v3165, %v3384
        %3386 = vdwg.mxu0
        %v3387 = vld [vmem:[%s712 + $0x80] sm:$0xf]
        %v3388 = vld [vmem:[%s712 + $0x84] sm:$0xf]
        %v3389 = vld [vmem:[%s712 + $0x88] sm:$0xf]
        %v3390 = vld [vmem:[%s712 + $0x8c] sm:$0xf]
        %v3391 = vld [vmem:[%s712 + $0x90] sm:$0xf]
        %v3392 = vld [vmem:[%s712 + $0x94] sm:$0xf]
        %v3393 = vld [vmem:[%s712 + $0x98] sm:$0xf]
        %v3394 = vld [vmem:[%s712 + $0x9c] sm:$0xf]
        %v3395 = vld [vmem:[%s712 + $0xa0] sm:$0xf]
        %v3396 = vld [vmem:[%s712 + $0xa4] sm:$0xf]
        %v3397 = vld [vmem:[%s712 + $0xa8] sm:$0xf]
        %v3398 = vld [vmem:[%s712 + $0xac] sm:$0xf]
        %v3399 = vld [vmem:[%s712 + $0xb0] sm:$0xf]
        %v3400 = vld [vmem:[%s712 + $0xb4] sm:$0xf]
        %v3401 = vld [vmem:[%s712 + $0xb8] sm:$0xf]
        %v3402 = vld [vmem:[%s712 + $0xbc] sm:$0xf]
        %v3403 = vld [vmem:[%s712 + $0xc0] sm:$0xf]
        %v3404 = vld [vmem:[%s712 + $0xc4] sm:$0xf]
        %v3405 = vld [vmem:[%s712 + $0xc8] sm:$0xf]
        %v3406 = vld [vmem:[%s712 + $0xcc] sm:$0xf]
        %v3407 = vld [vmem:[%s712 + $0xd0] sm:$0xf]
        %v3408 = vld [vmem:[%s712 + $0xd4] sm:$0xf]
        %v3409 = vld [vmem:[%s712 + $0xd8] sm:$0xf]
        %v3410 = vld [vmem:[%s712 + $0xdc] sm:$0xf]
        %v3411 = vld [vmem:[%s712 + $0xe0] sm:$0xf]
        %v3412 = vld [vmem:[%s712 + $0xe4] sm:$0xf]
        %v3413 = vld [vmem:[%s712 + $0xe8] sm:$0xf]
        %v3414 = vld [vmem:[%s712 + $0xec] sm:$0xf]
        %v3415 = vld [vmem:[%s712 + $0xf0] sm:$0xf]
        %v3416 = vld [vmem:[%s712 + $0xf4] sm:$0xf]
        %v3417 = vld [vmem:[%s712 + $0xf8] sm:$0xf]
        %v3418 = vld [vmem:[%s712 + $0xfc] sm:$0xf]
        %v3419 = vld [vmem:[%s745] sm:$0x3]
        %v3452 = vunpack.c.l.b16 %v3387
        %v3453 = vunpack.c.l.b16 %v3388
        %v3454 = vunpack.c.l.b16 %v3389
        %v3455 = vunpack.c.l.b16 %v3390
        %v3456 = vunpack.c.l.b16 %v3391
        %v3457 = vunpack.c.l.b16 %v3392
        %v3458 = vunpack.c.l.b16 %v3393
        %v3459 = vunpack.c.l.b16 %v3394
        %v3460 = vunpack.c.l.b16 %v3395
        %v3461 = vunpack.c.l.b16 %v3396
        %v3462 = vunpack.c.l.b16 %v3397
        %v3463 = vunpack.c.l.b16 %v3398
        %v3464 = vunpack.c.l.b16 %v3399
        %v3465 = vunpack.c.l.b16 %v3400
        %v3466 = vunpack.c.l.b16 %v3401
        %v3467 = vunpack.c.l.b16 %v3402
        %v3468 = vunpack.c.l.b16 %v3403
        %v3469 = vunpack.c.l.b16 %v3404
        %v3470 = vunpack.c.l.b16 %v3405
        %v3471 = vunpack.c.l.b16 %v3406
        %v3472 = vunpack.c.l.b16 %v3407
        %v3473 = vunpack.c.l.b16 %v3408
        %v3474 = vunpack.c.l.b16 %v3409
        %v3475 = vunpack.c.l.b16 %v3410
        %v3476 = vunpack.c.l.b16 %v3411
        %v3477 = vunpack.c.l.b16 %v3412
        %v3478 = vunpack.c.l.b16 %v3413
        %v3479 = vunpack.c.l.b16 %v3414
        %v3480 = vunpack.c.l.b16 %v3415
        %v3481 = vunpack.c.l.b16 %v3416
        %v3482 = vunpack.c.l.b16 %v3417
        %v3483 = vunpack.c.l.b16 %v3418
        %v3484 = vpack.c.b16 %v3453, %v3452
        %v3485 = vpack.c.b16 %v3455, %v3454
        %v3486 = vpack.c.b16 %v3457, %v3456
        %v3487 = vpack.c.b16 %v3459, %v3458
        %v3488 = vpack.c.b16 %v3461, %v3460
        %v3489 = vpack.c.b16 %v3463, %v3462
        %v3490 = vpack.c.b16 %v3465, %v3464
        %v3491 = vpack.c.b16 %v3467, %v3466
        %v3492 = vpack.c.b16 %v3469, %v3468
        %v3493 = vpack.c.b16 %v3471, %v3470
        %v3494 = vpack.c.b16 %v3473, %v3472
        %v3495 = vpack.c.b16 %v3475, %v3474
        %v3496 = vpack.c.b16 %v3477, %v3476
        %v3497 = vpack.c.b16 %v3479, %v3478
        %v3498 = vpack.c.b16 %v3481, %v3480
        %v3499 = vpack.c.b16 %v3483, %v3482
        %v3501 = vsel %vm347, %v3484, 0
        %v3504 = vsel %vm347, %v3485, 0
        %v3507 = vsel %vm347, %v3486, 0
        %v3510 = vsel %vm347, %v3487, 0
        %v3513 = vsel %vm347, %v3488, 0
        %v3516 = vsel %vm347, %v3489, 0
        %v3519 = vsel %vm347, %v3490, 0
        %v3522 = vsel %vm347, %v3491, 0
        %v3525 = vsel %vm347, %v3492, 0
        %v3528 = vsel %vm347, %v3493, 0
        %v3531 = vsel %vm347, %v3494, 0
        %v3534 = vsel %vm347, %v3495, 0
        %v3537 = vsel %vm347, %v3496, 0
        %v3540 = vsel %vm347, %v3497, 0
        %v3543 = vsel %vm347, %v3498, 0
        %v3546 = vsel %vm347, %v3499, 0
        %v3549 = vand.u32 %v3419, %v399
        %3551 = vmatpush.bf16.msra.mxu0 0
        %3552 = vmatpush.bf16.msra.mxu0 0
        %3553 = vmatpush.bf16.msra.mxu0 0
        %3554 = vmatpush.bf16.msra.mxu0 0
        %3555 = vmatpush.bf16.msra.mxu0 0
        %3556 = vmatpush.bf16.msra.mxu0 0
        %3557 = vmatpush.bf16.msra.mxu0 0
        %3558 = vmatpush.bf16.msra.mxu0 %v3549
        %3559 = vmatmul.bf16.gmra.mxu0 %v3501
        %v3560 = vpop.f32.mrf.mxu0
        %v3561 = vadd.f32 0.0, %v3560
        %v3562 = vpop.f32.mrf.mxu0
        %v3563 = vadd.f32 0.0, %v3562
        %3564 = vmatmul.bf16.gmra.mxu0 %v3504
        %v3565 = vpop.f32.mrf.mxu0
        %v3566 = vadd.f32 0.0, %v3565
        %v3567 = vpop.f32.mrf.mxu0
        %v3568 = vadd.f32 0.0, %v3567
        %3569 = vmatmul.bf16.gmra.mxu0 %v3507
        %v3570 = vpop.f32.mrf.mxu0
        %v3571 = vadd.f32 0.0, %v3570
        %v3572 = vpop.f32.mrf.mxu0
        %v3573 = vadd.f32 0.0, %v3572
        %3574 = vmatmul.bf16.gmra.mxu0 %v3510
        %v3575 = vpop.f32.mrf.mxu0
        %v3576 = vadd.f32 0.0, %v3575
        %v3577 = vpop.f32.mrf.mxu0
        %v3578 = vadd.f32 0.0, %v3577
        %3579 = vmatmul.bf16.gmra.mxu0 %v3513
        %v3580 = vpop.f32.mrf.mxu0
        %v3581 = vadd.f32 0.0, %v3580
        %v3582 = vpop.f32.mrf.mxu0
        %v3583 = vadd.f32 0.0, %v3582
        %3584 = vmatmul.bf16.gmra.mxu0 %v3516
        %v3585 = vpop.f32.mrf.mxu0
        %v3586 = vadd.f32 0.0, %v3585
        %v3587 = vpop.f32.mrf.mxu0
        %v3588 = vadd.f32 0.0, %v3587
        %3589 = vmatmul.bf16.gmra.mxu0 %v3519
        %v3590 = vpop.f32.mrf.mxu0
        %v3591 = vadd.f32 0.0, %v3590
        %v3592 = vpop.f32.mrf.mxu0
        %v3593 = vadd.f32 0.0, %v3592
        %3594 = vmatmul.bf16.gmra.mxu0 %v3522
        %v3595 = vpop.f32.mrf.mxu0
        %v3596 = vadd.f32 0.0, %v3595
        %v3597 = vpop.f32.mrf.mxu0
        %v3598 = vadd.f32 0.0, %v3597
        %3599 = vmatmul.bf16.gmra.mxu0 %v3525
        %v3600 = vpop.f32.mrf.mxu0
        %v3601 = vadd.f32 0.0, %v3600
        %v3602 = vpop.f32.mrf.mxu0
        %v3603 = vadd.f32 0.0, %v3602
        %3604 = vmatmul.bf16.gmra.mxu0 %v3528
        %v3605 = vpop.f32.mrf.mxu0
        %v3606 = vadd.f32 0.0, %v3605
        %v3607 = vpop.f32.mrf.mxu0
        %v3608 = vadd.f32 0.0, %v3607
        %3609 = vmatmul.bf16.gmra.mxu0 %v3531
        %v3610 = vpop.f32.mrf.mxu0
        %v3611 = vadd.f32 0.0, %v3610
        %v3612 = vpop.f32.mrf.mxu0
        %v3613 = vadd.f32 0.0, %v3612
        %3614 = vmatmul.bf16.gmra.mxu0 %v3534
        %v3615 = vpop.f32.mrf.mxu0
        %v3616 = vadd.f32 0.0, %v3615
        %v3617 = vpop.f32.mrf.mxu0
        %v3618 = vadd.f32 0.0, %v3617
        %3619 = vmatmul.bf16.gmra.mxu0 %v3537
        %v3620 = vpop.f32.mrf.mxu0
        %v3621 = vadd.f32 0.0, %v3620
        %v3622 = vpop.f32.mrf.mxu0
        %v3623 = vadd.f32 0.0, %v3622
        %3624 = vmatmul.bf16.gmra.mxu0 %v3540
        %v3625 = vpop.f32.mrf.mxu0
        %v3626 = vadd.f32 0.0, %v3625
        %v3627 = vpop.f32.mrf.mxu0
        %v3628 = vadd.f32 0.0, %v3627
        %3629 = vmatmul.bf16.gmra.mxu0 %v3543
        %v3630 = vpop.f32.mrf.mxu0
        %v3631 = vadd.f32 0.0, %v3630
        %v3632 = vpop.f32.mrf.mxu0
        %v3633 = vadd.f32 0.0, %v3632
        %3634 = vmatmul.bf16.gmra.mxu0 %v3546
        %v3635 = vpop.f32.mrf.mxu0
        %v3636 = vadd.f32 0.0, %v3635
        %v3637 = vpop.f32.mrf.mxu0
        %v3638 = vadd.f32 0.0, %v3637
        %3639 = vdwg.mxu0
        %v3640 = vadd.f32 %v3308, %v3561
        %v3641 = vadd.f32 %v3310, %v3563
        %v3642 = vadd.f32 %v3313, %v3566
        %v3643 = vadd.f32 %v3315, %v3568
        %v3644 = vadd.f32 %v3318, %v3571
        %v3645 = vadd.f32 %v3320, %v3573
        %v3646 = vadd.f32 %v3323, %v3576
        %v3647 = vadd.f32 %v3325, %v3578
        %v3648 = vadd.f32 %v3328, %v3581
        %v3649 = vadd.f32 %v3330, %v3583
        %v3650 = vadd.f32 %v3333, %v3586
        %v3651 = vadd.f32 %v3335, %v3588
        %v3652 = vadd.f32 %v3338, %v3591
        %v3653 = vadd.f32 %v3340, %v3593
        %v3654 = vadd.f32 %v3343, %v3596
        %v3655 = vadd.f32 %v3345, %v3598
        %v3656 = vadd.f32 %v3348, %v3601
        %v3657 = vadd.f32 %v3350, %v3603
        %v3658 = vadd.f32 %v3353, %v3606
        %v3659 = vadd.f32 %v3355, %v3608
        %v3660 = vadd.f32 %v3358, %v3611
        %v3661 = vadd.f32 %v3360, %v3613
        %v3662 = vadd.f32 %v3363, %v3616
        %v3663 = vadd.f32 %v3365, %v3618
        %v3664 = vadd.f32 %v3368, %v3621
        %v3665 = vadd.f32 %v3370, %v3623
        %v3666 = vadd.f32 %v3373, %v3626
        %v3667 = vadd.f32 %v3375, %v3628
        %v3668 = vadd.f32 %v3378, %v3631
        %v3669 = vadd.f32 %v3380, %v3633
        %v3670 = vadd.f32 %v3383, %v3636
        %v3671 = vadd.f32 %v3385, %v3638
        %v3672 = vld [vmem:[%s195 + $0x90] sm:$0xf]
        %v3673 = vld [vmem:[%s195 + $0x94] sm:$0xf]
        %v3674 = vld [vmem:[%s195 + $0x98] sm:$0xf]
        %v3675 = vld [vmem:[%s195 + $0x9c] sm:$0xf]
        %v3676 = vld [vmem:[%s195 + $0xa0] sm:$0xf]
        %v3677 = vld [vmem:[%s195 + $0xa4] sm:$0xf]
        %v3678 = vld [vmem:[%s195 + $0xa8] sm:$0xf]
        %v3679 = vld [vmem:[%s195 + $0xac] sm:$0xf]
        %v3680 = vld [vmem:[%s195 + $0xb0] sm:$0xf]
        %v3681 = vld [vmem:[%s195 + $0xb4] sm:$0xf]
        %v3682 = vld [vmem:[%s195 + $0xb8] sm:$0xf]
        %v3683 = vld [vmem:[%s195 + $0xbc] sm:$0xf]
        %v3684 = vld [vmem:[%s195 + $0xc0] sm:$0xf]
        %v3685 = vld [vmem:[%s195 + $0xc4] sm:$0xf]
        %v3686 = vld [vmem:[%s195 + $0xc8] sm:$0xf]
        %v3687 = vld [vmem:[%s195 + $0xcc] sm:$0xf]
        %v3688 = vld [vmem:[%s195 + $0xd0] sm:$0xf]
        %v3689 = vld [vmem:[%s195 + $0xd4] sm:$0xf]
        %v3690 = vld [vmem:[%s195 + $0xd8] sm:$0xf]
        %v3691 = vld [vmem:[%s195 + $0xdc] sm:$0xf]
        %v3692 = vld [vmem:[%s195 + $0xe0] sm:$0xf]
        %v3693 = vld [vmem:[%s195 + $0xe4] sm:$0xf]
        %v3694 = vld [vmem:[%s195 + $0xe8] sm:$0xf]
        %v3695 = vld [vmem:[%s195 + $0xec] sm:$0xf]
        %v3696 = vld [vmem:[%s195 + $0xf0] sm:$0xf]
        %v3697 = vld [vmem:[%s195 + $0xf4] sm:$0xf]
        %v3698 = vld [vmem:[%s195 + $0xf8] sm:$0xf]
        %v3699 = vld [vmem:[%s195 + $0xfc] sm:$0xf]
        %v3700 = vld [vmem:[%s195 + $0x100] sm:$0xf]
        %v3701 = vld [vmem:[%s195 + $0x104] sm:$0xf]
        %v3702 = vld [vmem:[%s195 + $0x108] sm:$0xf]
        %v3703 = vld [vmem:[%s195 + $0x10c] sm:$0xf]
        %v3704 = vld [vmem:[%s1031] sm:$0x3]
        %v3737 = vunpack.c.l.b16 %v3672
        %v3738 = vunpack.c.l.b16 %v3673
        %v3739 = vunpack.c.l.b16 %v3674
        %v3740 = vunpack.c.l.b16 %v3675
        %v3741 = vunpack.c.l.b16 %v3676
        %v3742 = vunpack.c.l.b16 %v3677
        %v3743 = vunpack.c.l.b16 %v3678
        %v3744 = vunpack.c.l.b16 %v3679
        %v3745 = vunpack.c.l.b16 %v3680
        %v3746 = vunpack.c.l.b16 %v3681
        %v3747 = vunpack.c.l.b16 %v3682
        %v3748 = vunpack.c.l.b16 %v3683
        %v3749 = vunpack.c.l.b16 %v3684
        %v3750 = vunpack.c.l.b16 %v3685
        %v3751 = vunpack.c.l.b16 %v3686
        %v3752 = vunpack.c.l.b16 %v3687
        %v3753 = vunpack.c.l.b16 %v3688
        %v3754 = vunpack.c.l.b16 %v3689
        %v3755 = vunpack.c.l.b16 %v3690
        %v3756 = vunpack.c.l.b16 %v3691
        %v3757 = vunpack.c.l.b16 %v3692
        %v3758 = vunpack.c.l.b16 %v3693
        %v3759 = vunpack.c.l.b16 %v3694
        %v3760 = vunpack.c.l.b16 %v3695
        %v3761 = vunpack.c.l.b16 %v3696
        %v3762 = vunpack.c.l.b16 %v3697
        %v3763 = vunpack.c.l.b16 %v3698
        %v3764 = vunpack.c.l.b16 %v3699
        %v3765 = vunpack.c.l.b16 %v3700
        %v3766 = vunpack.c.l.b16 %v3701
        %v3767 = vunpack.c.l.b16 %v3702
        %v3768 = vunpack.c.l.b16 %v3703
        %v3769 = vpack.c.b16 %v3738, %v3737
        %v3770 = vpack.c.b16 %v3740, %v3739
        %v3771 = vpack.c.b16 %v3742, %v3741
        %v3772 = vpack.c.b16 %v3744, %v3743
        %v3773 = vpack.c.b16 %v3746, %v3745
        %v3774 = vpack.c.b16 %v3748, %v3747
        %v3775 = vpack.c.b16 %v3750, %v3749
        %v3776 = vpack.c.b16 %v3752, %v3751
        %v3777 = vpack.c.b16 %v3754, %v3753
        %v3778 = vpack.c.b16 %v3756, %v3755
        %v3779 = vpack.c.b16 %v3758, %v3757
        %v3780 = vpack.c.b16 %v3760, %v3759
        %v3781 = vpack.c.b16 %v3762, %v3761
        %v3782 = vpack.c.b16 %v3764, %v3763
        %v3783 = vpack.c.b16 %v3766, %v3765
        %v3784 = vpack.c.b16 %v3768, %v3767
        %v3786 = vsel %vm347, %v3769, 0
        %v3789 = vsel %vm347, %v3770, 0
        %v3792 = vsel %vm347, %v3771, 0
        %v3795 = vsel %vm347, %v3772, 0
        %v3798 = vsel %vm347, %v3773, 0
        %v3801 = vsel %vm347, %v3774, 0
        %v3804 = vsel %vm347, %v3775, 0
        %v3807 = vsel %vm347, %v3776, 0
        %v3810 = vsel %vm347, %v3777, 0
        %v3813 = vsel %vm347, %v3778, 0
        %v3816 = vsel %vm347, %v3779, 0
        %v3819 = vsel %vm347, %v3780, 0
        %v3822 = vsel %vm347, %v3781, 0
        %v3825 = vsel %vm347, %v3782, 0
        %v3828 = vsel %vm347, %v3783, 0
        %v3831 = vsel %vm347, %v3784, 0
        %v3834 = vand.u32 %v3704, %v399
        %3836 = vmatpush.bf16.msra.mxu0 0
        %3837 = vmatpush.bf16.msra.mxu0 0
        %3838 = vmatpush.bf16.msra.mxu0 0
        %3839 = vmatpush.bf16.msra.mxu0 0
        %3840 = vmatpush.bf16.msra.mxu0 0
        %3841 = vmatpush.bf16.msra.mxu0 0
        %3842 = vmatpush.bf16.msra.mxu0 0
        %3843 = vmatpush.bf16.msra.mxu0 %v3834
        %3844 = vmatmul.bf16.gmra.mxu0 %v3786
        %v3845 = vpop.f32.mrf.mxu0
        %v3846 = vadd.f32 0.0, %v3845
        %v3847 = vpop.f32.mrf.mxu0
        %v3848 = vadd.f32 0.0, %v3847
        %3849 = vmatmul.bf16.gmra.mxu0 %v3789
        %v3850 = vpop.f32.mrf.mxu0
        %v3851 = vadd.f32 0.0, %v3850
        %v3852 = vpop.f32.mrf.mxu0
        %v3853 = vadd.f32 0.0, %v3852
        %3854 = vmatmul.bf16.gmra.mxu0 %v3792
        %v3855 = vpop.f32.mrf.mxu0
        %v3856 = vadd.f32 0.0, %v3855
        %v3857 = vpop.f32.mrf.mxu0
        %v3858 = vadd.f32 0.0, %v3857
        %3859 = vmatmul.bf16.gmra.mxu0 %v3795
        %v3860 = vpop.f32.mrf.mxu0
        %v3861 = vadd.f32 0.0, %v3860
        %v3862 = vpop.f32.mrf.mxu0
        %v3863 = vadd.f32 0.0, %v3862
        %3864 = vmatmul.bf16.gmra.mxu0 %v3798
        %v3865 = vpop.f32.mrf.mxu0
        %v3866 = vadd.f32 0.0, %v3865
        %v3867 = vpop.f32.mrf.mxu0
        %v3868 = vadd.f32 0.0, %v3867
        %3869 = vmatmul.bf16.gmra.mxu0 %v3801
        %v3870 = vpop.f32.mrf.mxu0
        %v3871 = vadd.f32 0.0, %v3870
        %v3872 = vpop.f32.mrf.mxu0
        %v3873 = vadd.f32 0.0, %v3872
        %3874 = vmatmul.bf16.gmra.mxu0 %v3804
        %v3875 = vpop.f32.mrf.mxu0
        %v3876 = vadd.f32 0.0, %v3875
        %v3877 = vpop.f32.mrf.mxu0
        %v3878 = vadd.f32 0.0, %v3877
        %3879 = vmatmul.bf16.gmra.mxu0 %v3807
        %v3880 = vpop.f32.mrf.mxu0
        %v3881 = vadd.f32 0.0, %v3880
        %v3882 = vpop.f32.mrf.mxu0
        %v3883 = vadd.f32 0.0, %v3882
        %3884 = vmatmul.bf16.gmra.mxu0 %v3810
        %v3885 = vpop.f32.mrf.mxu0
        %v3886 = vadd.f32 0.0, %v3885
        %v3887 = vpop.f32.mrf.mxu0
        %v3888 = vadd.f32 0.0, %v3887
        %3889 = vmatmul.bf16.gmra.mxu0 %v3813
        %v3890 = vpop.f32.mrf.mxu0
        %v3891 = vadd.f32 0.0, %v3890
        %v3892 = vpop.f32.mrf.mxu0
        %v3893 = vadd.f32 0.0, %v3892
        %3894 = vmatmul.bf16.gmra.mxu0 %v3816
        %v3895 = vpop.f32.mrf.mxu0
        %v3896 = vadd.f32 0.0, %v3895
        %v3897 = vpop.f32.mrf.mxu0
        %v3898 = vadd.f32 0.0, %v3897
        %3899 = vmatmul.bf16.gmra.mxu0 %v3819
        %v3900 = vpop.f32.mrf.mxu0
        %v3901 = vadd.f32 0.0, %v3900
        %v3902 = vpop.f32.mrf.mxu0
        %v3903 = vadd.f32 0.0, %v3902
        %3904 = vmatmul.bf16.gmra.mxu0 %v3822
        %v3905 = vpop.f32.mrf.mxu0
        %v3906 = vadd.f32 0.0, %v3905
        %v3907 = vpop.f32.mrf.mxu0
        %v3908 = vadd.f32 0.0, %v3907
        %3909 = vmatmul.bf16.gmra.mxu0 %v3825
        %v3910 = vpop.f32.mrf.mxu0
        %v3911 = vadd.f32 0.0, %v3910
        %v3912 = vpop.f32.mrf.mxu0
        %v3913 = vadd.f32 0.0, %v3912
        %3914 = vmatmul.bf16.gmra.mxu0 %v3828
        %v3915 = vpop.f32.mrf.mxu0
        %v3916 = vadd.f32 0.0, %v3915
        %v3917 = vpop.f32.mrf.mxu0
        %v3918 = vadd.f32 0.0, %v3917
        %3919 = vmatmul.bf16.gmra.mxu0 %v3831
        %v3920 = vpop.f32.mrf.mxu0
        %v3921 = vadd.f32 0.0, %v3920
        %v3922 = vpop.f32.mrf.mxu0
        %v3923 = vadd.f32 0.0, %v3922
        %3924 = vdwg.mxu0
        %v3925 = vadd.f32 %v3640, %v3846
        %v3926 = vadd.f32 %v3641, %v3848
        %v3927 = vadd.f32 %v3642, %v3851
        %v3928 = vadd.f32 %v3643, %v3853
        %v3929 = vadd.f32 %v3644, %v3856
        %v3930 = vadd.f32 %v3645, %v3858
        %v3931 = vadd.f32 %v3646, %v3861
        %v3932 = vadd.f32 %v3647, %v3863
        %v3933 = vadd.f32 %v3648, %v3866
        %v3934 = vadd.f32 %v3649, %v3868
        %v3935 = vadd.f32 %v3650, %v3871
        %v3936 = vadd.f32 %v3651, %v3873
        %v3937 = vadd.f32 %v3652, %v3876
        %v3938 = vadd.f32 %v3653, %v3878
        %v3939 = vadd.f32 %v3654, %v3881
        %v3940 = vadd.f32 %v3655, %v3883
        %v3941 = vadd.f32 %v3656, %v3886
        %v3942 = vadd.f32 %v3657, %v3888
        %v3943 = vadd.f32 %v3658, %v3891
        %v3944 = vadd.f32 %v3659, %v3893
        %v3945 = vadd.f32 %v3660, %v3896
        %v3946 = vadd.f32 %v3661, %v3898
        %v3947 = vadd.f32 %v3662, %v3901
        %v3948 = vadd.f32 %v3663, %v3903
        %v3949 = vadd.f32 %v3664, %v3906
        %v3950 = vadd.f32 %v3665, %v3908
        %v3951 = vadd.f32 %v3666, %v3911
        %v3952 = vadd.f32 %v3667, %v3913
        %v3953 = vadd.f32 %v3668, %v3916
        %v3954 = vadd.f32 %v3669, %v3918
        %v3955 = vadd.f32 %v3670, %v3921
        %v3956 = vadd.f32 %v3671, %v3923
        %v3957 = vld [vmem:[%s232 + $0x90] sm:$0xf]
        %v3958 = vld [vmem:[%s232 + $0x94] sm:$0xf]
        %v3959 = vld [vmem:[%s232 + $0x98] sm:$0xf]
        %v3960 = vld [vmem:[%s232 + $0x9c] sm:$0xf]
        %v3961 = vld [vmem:[%s232 + $0xa0] sm:$0xf]
        %v3962 = vld [vmem:[%s232 + $0xa4] sm:$0xf]
        %v3963 = vld [vmem:[%s232 + $0xa8] sm:$0xf]
        %v3964 = vld [vmem:[%s232 + $0xac] sm:$0xf]
        %v3965 = vld [vmem:[%s232 + $0xb0] sm:$0xf]
        %v3966 = vld [vmem:[%s232 + $0xb4] sm:$0xf]
        %v3967 = vld [vmem:[%s232 + $0xb8] sm:$0xf]
        %v3968 = vld [vmem:[%s232 + $0xbc] sm:$0xf]
        %v3969 = vld [vmem:[%s232 + $0xc0] sm:$0xf]
        %v3970 = vld [vmem:[%s232 + $0xc4] sm:$0xf]
        %v3971 = vld [vmem:[%s232 + $0xc8] sm:$0xf]
        %v3972 = vld [vmem:[%s232 + $0xcc] sm:$0xf]
        %v3973 = vld [vmem:[%s232 + $0xd0] sm:$0xf]
        %v3974 = vld [vmem:[%s232 + $0xd4] sm:$0xf]
        %v3975 = vld [vmem:[%s232 + $0xd8] sm:$0xf]
        %v3976 = vld [vmem:[%s232 + $0xdc] sm:$0xf]
        %v3977 = vld [vmem:[%s232 + $0xe0] sm:$0xf]
        %v3978 = vld [vmem:[%s232 + $0xe4] sm:$0xf]
        %v3979 = vld [vmem:[%s232 + $0xe8] sm:$0xf]
        %v3980 = vld [vmem:[%s232 + $0xec] sm:$0xf]
        %v3981 = vld [vmem:[%s232 + $0xf0] sm:$0xf]
        %v3982 = vld [vmem:[%s232 + $0xf4] sm:$0xf]
        %v3983 = vld [vmem:[%s232 + $0xf8] sm:$0xf]
        %v3984 = vld [vmem:[%s232 + $0xfc] sm:$0xf]
        %v3985 = vld [vmem:[%s232 + $0x100] sm:$0xf]
        %v3986 = vld [vmem:[%s232 + $0x104] sm:$0xf]
        %v3987 = vld [vmem:[%s232 + $0x108] sm:$0xf]
        %v3988 = vld [vmem:[%s232 + $0x10c] sm:$0xf]
        %v3989 = vld [vmem:[%s1317] sm:$0x3]
        %v4022 = vunpack.c.l.b16 %v3957
        %v4023 = vunpack.c.l.b16 %v3958
        %v4024 = vunpack.c.l.b16 %v3959
        %v4025 = vunpack.c.l.b16 %v3960
        %v4026 = vunpack.c.l.b16 %v3961
        %v4027 = vunpack.c.l.b16 %v3962
        %v4028 = vunpack.c.l.b16 %v3963
        %v4029 = vunpack.c.l.b16 %v3964
        %v4030 = vunpack.c.l.b16 %v3965
        %v4031 = vunpack.c.l.b16 %v3966
        %v4032 = vunpack.c.l.b16 %v3967
        %v4033 = vunpack.c.l.b16 %v3968
        %v4034 = vunpack.c.l.b16 %v3969
        %v4035 = vunpack.c.l.b16 %v3970
        %v4036 = vunpack.c.l.b16 %v3971
        %v4037 = vunpack.c.l.b16 %v3972
        %v4038 = vunpack.c.l.b16 %v3973
        %v4039 = vunpack.c.l.b16 %v3974
        %v4040 = vunpack.c.l.b16 %v3975
        %v4041 = vunpack.c.l.b16 %v3976
        %v4042 = vunpack.c.l.b16 %v3977
        %v4043 = vunpack.c.l.b16 %v3978
        %v4044 = vunpack.c.l.b16 %v3979
        %v4045 = vunpack.c.l.b16 %v3980
        %v4046 = vunpack.c.l.b16 %v3981
        %v4047 = vunpack.c.l.b16 %v3982
        %v4048 = vunpack.c.l.b16 %v3983
        %v4049 = vunpack.c.l.b16 %v3984
        %v4050 = vunpack.c.l.b16 %v3985
        %v4051 = vunpack.c.l.b16 %v3986
        %v4052 = vunpack.c.l.b16 %v3987
        %v4053 = vunpack.c.l.b16 %v3988
        %v4054 = vpack.c.b16 %v4023, %v4022
        %v4055 = vpack.c.b16 %v4025, %v4024
        %v4056 = vpack.c.b16 %v4027, %v4026
        %v4057 = vpack.c.b16 %v4029, %v4028
        %v4058 = vpack.c.b16 %v4031, %v4030
        %v4059 = vpack.c.b16 %v4033, %v4032
        %v4060 = vpack.c.b16 %v4035, %v4034
        %v4061 = vpack.c.b16 %v4037, %v4036
        %v4062 = vpack.c.b16 %v4039, %v4038
        %v4063 = vpack.c.b16 %v4041, %v4040
        %v4064 = vpack.c.b16 %v4043, %v4042
        %v4065 = vpack.c.b16 %v4045, %v4044
        %v4066 = vpack.c.b16 %v4047, %v4046
        %v4067 = vpack.c.b16 %v4049, %v4048
        %v4068 = vpack.c.b16 %v4051, %v4050
        %v4069 = vpack.c.b16 %v4053, %v4052
        %v4071 = vsel %vm347, %v4054, 0
        %v4074 = vsel %vm347, %v4055, 0
        %v4077 = vsel %vm347, %v4056, 0
        %v4080 = vsel %vm347, %v4057, 0
        %v4083 = vsel %vm347, %v4058, 0
        %v4086 = vsel %vm347, %v4059, 0
        %v4089 = vsel %vm347, %v4060, 0
        %v4092 = vsel %vm347, %v4061, 0
        %v4095 = vsel %vm347, %v4062, 0
        %v4098 = vsel %vm347, %v4063, 0
        %v4101 = vsel %vm347, %v4064, 0
        %v4104 = vsel %vm347, %v4065, 0
        %v4107 = vsel %vm347, %v4066, 0
        %v4110 = vsel %vm347, %v4067, 0
        %v4113 = vsel %vm347, %v4068, 0
        %v4116 = vsel %vm347, %v4069, 0
        %v4119 = vand.u32 %v3989, %v399
        %4121 = vmatpush.bf16.msra.mxu0 0
        %4122 = vmatpush.bf16.msra.mxu0 0
        %4123 = vmatpush.bf16.msra.mxu0 0
        %4124 = vmatpush.bf16.msra.mxu0 0
        %4125 = vmatpush.bf16.msra.mxu0 0
        %4126 = vmatpush.bf16.msra.mxu0 0
        %4127 = vmatpush.bf16.msra.mxu0 0
        %4128 = vmatpush.bf16.msra.mxu0 %v4119
        %4129 = vmatmul.bf16.gmra.mxu0 %v4071
        %v4130 = vpop.f32.mrf.mxu0
        %v4131 = vadd.f32 0.0, %v4130
        %v4132 = vpop.f32.mrf.mxu0
        %v4133 = vadd.f32 0.0, %v4132
        %4134 = vmatmul.bf16.gmra.mxu0 %v4074
        %v4135 = vpop.f32.mrf.mxu0
        %v4136 = vadd.f32 0.0, %v4135
        %v4137 = vpop.f32.mrf.mxu0
        %v4138 = vadd.f32 0.0, %v4137
        %4139 = vmatmul.bf16.gmra.mxu0 %v4077
        %v4140 = vpop.f32.mrf.mxu0
        %v4141 = vadd.f32 0.0, %v4140
        %v4142 = vpop.f32.mrf.mxu0
        %v4143 = vadd.f32 0.0, %v4142
        %4144 = vmatmul.bf16.gmra.mxu0 %v4080
        %v4145 = vpop.f32.mrf.mxu0
        %v4146 = vadd.f32 0.0, %v4145
        %v4147 = vpop.f32.mrf.mxu0
        %v4148 = vadd.f32 0.0, %v4147
        %4149 = vmatmul.bf16.gmra.mxu0 %v4083
        %v4150 = vpop.f32.mrf.mxu0
        %v4151 = vadd.f32 0.0, %v4150
        %v4152 = vpop.f32.mrf.mxu0
        %v4153 = vadd.f32 0.0, %v4152
        %4154 = vmatmul.bf16.gmra.mxu0 %v4086
        %v4155 = vpop.f32.mrf.mxu0
        %v4156 = vadd.f32 0.0, %v4155
        %v4157 = vpop.f32.mrf.mxu0
        %v4158 = vadd.f32 0.0, %v4157
        %4159 = vmatmul.bf16.gmra.mxu0 %v4089
        %v4160 = vpop.f32.mrf.mxu0
        %v4161 = vadd.f32 0.0, %v4160
        %v4162 = vpop.f32.mrf.mxu0
        %v4163 = vadd.f32 0.0, %v4162
        %4164 = vmatmul.bf16.gmra.mxu0 %v4092
        %v4165 = vpop.f32.mrf.mxu0
        %v4166 = vadd.f32 0.0, %v4165
        %v4167 = vpop.f32.mrf.mxu0
        %v4168 = vadd.f32 0.0, %v4167
        %4169 = vmatmul.bf16.gmra.mxu0 %v4095
        %v4170 = vpop.f32.mrf.mxu0
        %v4171 = vadd.f32 0.0, %v4170
        %v4172 = vpop.f32.mrf.mxu0
        %v4173 = vadd.f32 0.0, %v4172
        %4174 = vmatmul.bf16.gmra.mxu0 %v4098
        %v4175 = vpop.f32.mrf.mxu0
        %v4176 = vadd.f32 0.0, %v4175
        %v4177 = vpop.f32.mrf.mxu0
        %v4178 = vadd.f32 0.0, %v4177
        %4179 = vmatmul.bf16.gmra.mxu0 %v4101
        %v4180 = vpop.f32.mrf.mxu0
        %v4181 = vadd.f32 0.0, %v4180
        %v4182 = vpop.f32.mrf.mxu0
        %v4183 = vadd.f32 0.0, %v4182
        %4184 = vmatmul.bf16.gmra.mxu0 %v4104
        %v4185 = vpop.f32.mrf.mxu0
        %v4186 = vadd.f32 0.0, %v4185
        %v4187 = vpop.f32.mrf.mxu0
        %v4188 = vadd.f32 0.0, %v4187
        %4189 = vmatmul.bf16.gmra.mxu0 %v4107
        %v4190 = vpop.f32.mrf.mxu0
        %v4191 = vadd.f32 0.0, %v4190
        %v4192 = vpop.f32.mrf.mxu0
        %v4193 = vadd.f32 0.0, %v4192
        %4194 = vmatmul.bf16.gmra.mxu0 %v4110
        %v4195 = vpop.f32.mrf.mxu0
        %v4196 = vadd.f32 0.0, %v4195
        %v4197 = vpop.f32.mrf.mxu0
        %v4198 = vadd.f32 0.0, %v4197
        %4199 = vmatmul.bf16.gmra.mxu0 %v4113
        %v4200 = vpop.f32.mrf.mxu0
        %v4201 = vadd.f32 0.0, %v4200
        %v4202 = vpop.f32.mrf.mxu0
        %v4203 = vadd.f32 0.0, %v4202
        %4204 = vmatmul.bf16.gmra.mxu0 %v4116
        %v4205 = vpop.f32.mrf.mxu0
        %v4206 = vadd.f32 0.0, %v4205
        %v4207 = vpop.f32.mrf.mxu0
        %v4208 = vadd.f32 0.0, %v4207
        %4209 = vdwg.mxu0
        %v4210 = vadd.f32 %v3925, %v4131
        %v4211 = vadd.f32 %v3926, %v4133
        %v4212 = vadd.f32 %v3927, %v4136
        %v4213 = vadd.f32 %v3928, %v4138
        %v4214 = vadd.f32 %v3929, %v4141
        %v4215 = vadd.f32 %v3930, %v4143
        %v4216 = vadd.f32 %v3931, %v4146
        %v4217 = vadd.f32 %v3932, %v4148
        %v4218 = vadd.f32 %v3933, %v4151
        %v4219 = vadd.f32 %v3934, %v4153
        %v4220 = vadd.f32 %v3935, %v4156
        %v4221 = vadd.f32 %v3936, %v4158
        %v4222 = vadd.f32 %v3937, %v4161
        %v4223 = vadd.f32 %v3938, %v4163
        %v4224 = vadd.f32 %v3939, %v4166
        %v4225 = vadd.f32 %v3940, %v4168
        %v4226 = vadd.f32 %v3941, %v4171
        %v4227 = vadd.f32 %v3942, %v4173
        %v4228 = vadd.f32 %v3943, %v4176
        %v4229 = vadd.f32 %v3944, %v4178
        %v4230 = vadd.f32 %v3945, %v4181
        %v4231 = vadd.f32 %v3946, %v4183
        %v4232 = vadd.f32 %v3947, %v4186
        %v4233 = vadd.f32 %v3948, %v4188
        %v4234 = vadd.f32 %v3949, %v4191
        %v4235 = vadd.f32 %v3950, %v4193
        %v4236 = vadd.f32 %v3951, %v4196
        %v4237 = vadd.f32 %v3952, %v4198
        %v4238 = vadd.f32 %v3953, %v4201
        %v4239 = vadd.f32 %v3954, %v4203
        %v4240 = vadd.f32 %v3955, %v4206
        %v4241 = vadd.f32 %v3956, %v4208
        %v4242 = vld [vmem:[%s712 + $0x90] sm:$0xf]
        %v4243 = vld [vmem:[%s712 + $0x94] sm:$0xf]
        %v4244 = vld [vmem:[%s712 + $0x98] sm:$0xf]
        %v4245 = vld [vmem:[%s712 + $0x9c] sm:$0xf]
        %v4246 = vld [vmem:[%s712 + $0xa0] sm:$0xf]
        %v4247 = vld [vmem:[%s712 + $0xa4] sm:$0xf]
        %v4248 = vld [vmem:[%s712 + $0xa8] sm:$0xf]
        %v4249 = vld [vmem:[%s712 + $0xac] sm:$0xf]
        %v4250 = vld [vmem:[%s712 + $0xb0] sm:$0xf]
        %v4251 = vld [vmem:[%s712 + $0xb4] sm:$0xf]
        %v4252 = vld [vmem:[%s712 + $0xb8] sm:$0xf]
        %v4253 = vld [vmem:[%s712 + $0xbc] sm:$0xf]
        %v4254 = vld [vmem:[%s712 + $0xc0] sm:$0xf]
        %v4255 = vld [vmem:[%s712 + $0xc4] sm:$0xf]
        %v4256 = vld [vmem:[%s712 + $0xc8] sm:$0xf]
        %v4257 = vld [vmem:[%s712 + $0xcc] sm:$0xf]
        %v4258 = vld [vmem:[%s712 + $0xd0] sm:$0xf]
        %v4259 = vld [vmem:[%s712 + $0xd4] sm:$0xf]
        %v4260 = vld [vmem:[%s712 + $0xd8] sm:$0xf]
        %v4261 = vld [vmem:[%s712 + $0xdc] sm:$0xf]
        %v4262 = vld [vmem:[%s712 + $0xe0] sm:$0xf]
        %v4263 = vld [vmem:[%s712 + $0xe4] sm:$0xf]
        %v4264 = vld [vmem:[%s712 + $0xe8] sm:$0xf]
        %v4265 = vld [vmem:[%s712 + $0xec] sm:$0xf]
        %v4266 = vld [vmem:[%s712 + $0xf0] sm:$0xf]
        %v4267 = vld [vmem:[%s712 + $0xf4] sm:$0xf]
        %v4268 = vld [vmem:[%s712 + $0xf8] sm:$0xf]
        %v4269 = vld [vmem:[%s712 + $0xfc] sm:$0xf]
        %v4270 = vld [vmem:[%s712 + $0x100] sm:$0xf]
        %v4271 = vld [vmem:[%s712 + $0x104] sm:$0xf]
        %v4272 = vld [vmem:[%s712 + $0x108] sm:$0xf]
        %v4273 = vld [vmem:[%s712 + $0x10c] sm:$0xf]
        %v4274 = vld [vmem:[%s1603] sm:$0x3]
        %v4307 = vunpack.c.l.b16 %v4242
        %v4308 = vunpack.c.l.b16 %v4243
        %v4309 = vunpack.c.l.b16 %v4244
        %v4310 = vunpack.c.l.b16 %v4245
        %v4311 = vunpack.c.l.b16 %v4246
        %v4312 = vunpack.c.l.b16 %v4247
        %v4313 = vunpack.c.l.b16 %v4248
        %v4314 = vunpack.c.l.b16 %v4249
        %v4315 = vunpack.c.l.b16 %v4250
        %v4316 = vunpack.c.l.b16 %v4251
        %v4317 = vunpack.c.l.b16 %v4252
        %v4318 = vunpack.c.l.b16 %v4253
        %v4319 = vunpack.c.l.b16 %v4254
        %v4320 = vunpack.c.l.b16 %v4255
        %v4321 = vunpack.c.l.b16 %v4256
        %v4322 = vunpack.c.l.b16 %v4257
        %v4323 = vunpack.c.l.b16 %v4258
        %v4324 = vunpack.c.l.b16 %v4259
        %v4325 = vunpack.c.l.b16 %v4260
        %v4326 = vunpack.c.l.b16 %v4261
        %v4327 = vunpack.c.l.b16 %v4262
        %v4328 = vunpack.c.l.b16 %v4263
        %v4329 = vunpack.c.l.b16 %v4264
        %v4330 = vunpack.c.l.b16 %v4265
        %v4331 = vunpack.c.l.b16 %v4266
        %v4332 = vunpack.c.l.b16 %v4267
        %v4333 = vunpack.c.l.b16 %v4268
        %v4334 = vunpack.c.l.b16 %v4269
        %v4335 = vunpack.c.l.b16 %v4270
        %v4336 = vunpack.c.l.b16 %v4271
        %v4337 = vunpack.c.l.b16 %v4272
        %v4338 = vunpack.c.l.b16 %v4273
        %v4339 = vpack.c.b16 %v4308, %v4307
        %v4340 = vpack.c.b16 %v4310, %v4309
        %v4341 = vpack.c.b16 %v4312, %v4311
        %v4342 = vpack.c.b16 %v4314, %v4313
        %v4343 = vpack.c.b16 %v4316, %v4315
        %v4344 = vpack.c.b16 %v4318, %v4317
        %v4345 = vpack.c.b16 %v4320, %v4319
        %v4346 = vpack.c.b16 %v4322, %v4321
        %v4347 = vpack.c.b16 %v4324, %v4323
        %v4348 = vpack.c.b16 %v4326, %v4325
        %v4349 = vpack.c.b16 %v4328, %v4327
        %v4350 = vpack.c.b16 %v4330, %v4329
        %v4351 = vpack.c.b16 %v4332, %v4331
        %v4352 = vpack.c.b16 %v4334, %v4333
        %v4353 = vpack.c.b16 %v4336, %v4335
        %v4354 = vpack.c.b16 %v4338, %v4337
        %v4356 = vsel %vm347, %v4339, 0
        %v4359 = vsel %vm347, %v4340, 0
        %v4362 = vsel %vm347, %v4341, 0
        %v4365 = vsel %vm347, %v4342, 0
        %v4368 = vsel %vm347, %v4343, 0
        %v4371 = vsel %vm347, %v4344, 0
        %v4374 = vsel %vm347, %v4345, 0
        %v4377 = vsel %vm347, %v4346, 0
        %v4380 = vsel %vm347, %v4347, 0
        %v4383 = vsel %vm347, %v4348, 0
        %v4386 = vsel %vm347, %v4349, 0
        %v4389 = vsel %vm347, %v4350, 0
        %v4392 = vsel %vm347, %v4351, 0
        %v4395 = vsel %vm347, %v4352, 0
        %v4398 = vsel %vm347, %v4353, 0
        %v4401 = vsel %vm347, %v4354, 0
        %v4404 = vand.u32 %v4274, %v399
        %4406 = vmatpush.bf16.msra.mxu0 0
        %4407 = vmatpush.bf16.msra.mxu0 0
        %4408 = vmatpush.bf16.msra.mxu0 0
        %4409 = vmatpush.bf16.msra.mxu0 0
        %4410 = vmatpush.bf16.msra.mxu0 0
        %4411 = vmatpush.bf16.msra.mxu0 0
        %4412 = vmatpush.bf16.msra.mxu0 0
        %4413 = vmatpush.bf16.msra.mxu0 %v4404
        %4414 = vmatmul.bf16.gmra.mxu0 %v4356
        %v4415 = vpop.f32.mrf.mxu0
        %v4416 = vadd.f32 0.0, %v4415
        %v4417 = vpop.f32.mrf.mxu0
        %v4418 = vadd.f32 0.0, %v4417
        %4419 = vmatmul.bf16.gmra.mxu0 %v4359
        %v4420 = vpop.f32.mrf.mxu0
        %v4421 = vadd.f32 0.0, %v4420
        %v4422 = vpop.f32.mrf.mxu0
        %v4423 = vadd.f32 0.0, %v4422
        %4424 = vmatmul.bf16.gmra.mxu0 %v4362
        %v4425 = vpop.f32.mrf.mxu0
        %v4426 = vadd.f32 0.0, %v4425
        %v4427 = vpop.f32.mrf.mxu0
        %v4428 = vadd.f32 0.0, %v4427
        %4429 = vmatmul.bf16.gmra.mxu0 %v4365
        %v4430 = vpop.f32.mrf.mxu0
        %v4431 = vadd.f32 0.0, %v4430
        %v4432 = vpop.f32.mrf.mxu0
        %v4433 = vadd.f32 0.0, %v4432
        %4434 = vmatmul.bf16.gmra.mxu0 %v4368
        %v4435 = vpop.f32.mrf.mxu0
        %v4436 = vadd.f32 0.0, %v4435
        %v4437 = vpop.f32.mrf.mxu0
        %v4438 = vadd.f32 0.0, %v4437
        %4439 = vmatmul.bf16.gmra.mxu0 %v4371
        %v4440 = vpop.f32.mrf.mxu0
        %v4441 = vadd.f32 0.0, %v4440
        %v4442 = vpop.f32.mrf.mxu0
        %v4443 = vadd.f32 0.0, %v4442
        %4444 = vmatmul.bf16.gmra.mxu0 %v4374
        %v4445 = vpop.f32.mrf.mxu0
        %v4446 = vadd.f32 0.0, %v4445
        %v4447 = vpop.f32.mrf.mxu0
        %v4448 = vadd.f32 0.0, %v4447
        %4449 = vmatmul.bf16.gmra.mxu0 %v4377
        %v4450 = vpop.f32.mrf.mxu0
        %v4451 = vadd.f32 0.0, %v4450
        %v4452 = vpop.f32.mrf.mxu0
        %v4453 = vadd.f32 0.0, %v4452
        %4454 = vmatmul.bf16.gmra.mxu0 %v4380
        %v4455 = vpop.f32.mrf.mxu0
        %v4456 = vadd.f32 0.0, %v4455
        %v4457 = vpop.f32.mrf.mxu0
        %v4458 = vadd.f32 0.0, %v4457
        %4459 = vmatmul.bf16.gmra.mxu0 %v4383
        %v4460 = vpop.f32.mrf.mxu0
        %v4461 = vadd.f32 0.0, %v4460
        %v4462 = vpop.f32.mrf.mxu0
        %v4463 = vadd.f32 0.0, %v4462
        %4464 = vmatmul.bf16.gmra.mxu0 %v4386
        %v4465 = vpop.f32.mrf.mxu0
        %v4466 = vadd.f32 0.0, %v4465
        %v4467 = vpop.f32.mrf.mxu0
        %v4468 = vadd.f32 0.0, %v4467
        %4469 = vmatmul.bf16.gmra.mxu0 %v4389
        %v4470 = vpop.f32.mrf.mxu0
        %v4471 = vadd.f32 0.0, %v4470
        %v4472 = vpop.f32.mrf.mxu0
        %v4473 = vadd.f32 0.0, %v4472
        %4474 = vmatmul.bf16.gmra.mxu0 %v4392
        %v4475 = vpop.f32.mrf.mxu0
        %v4476 = vadd.f32 0.0, %v4475
        %v4477 = vpop.f32.mrf.mxu0
        %v4478 = vadd.f32 0.0, %v4477
        %4479 = vmatmul.bf16.gmra.mxu0 %v4395
        %v4480 = vpop.f32.mrf.mxu0
        %v4481 = vadd.f32 0.0, %v4480
        %v4482 = vpop.f32.mrf.mxu0
        %v4483 = vadd.f32 0.0, %v4482
        %4484 = vmatmul.bf16.gmra.mxu0 %v4398
        %v4485 = vpop.f32.mrf.mxu0
        %v4486 = vadd.f32 0.0, %v4485
        %v4487 = vpop.f32.mrf.mxu0
        %v4488 = vadd.f32 0.0, %v4487
        %4489 = vmatmul.bf16.gmra.mxu0 %v4401
        %v4490 = vpop.f32.mrf.mxu0
        %v4491 = vadd.f32 0.0, %v4490
        %v4492 = vpop.f32.mrf.mxu0
        %v4493 = vadd.f32 0.0, %v4492
        %4494 = vdwg.mxu0
        %v4495 = vadd.f32 %v4210, %v4416
        %v4496 = vadd.f32 %v4211, %v4418
        %v4497 = vadd.f32 %v4212, %v4421
        %v4498 = vadd.f32 %v4213, %v4423
        %v4499 = vadd.f32 %v4214, %v4426
        %v4500 = vadd.f32 %v4215, %v4428
        %v4501 = vadd.f32 %v4216, %v4431
        %v4502 = vadd.f32 %v4217, %v4433
        %v4503 = vadd.f32 %v4218, %v4436
        %v4504 = vadd.f32 %v4219, %v4438
        %v4505 = vadd.f32 %v4220, %v4441
        %v4506 = vadd.f32 %v4221, %v4443
        %v4507 = vadd.f32 %v4222, %v4446
        %v4508 = vadd.f32 %v4223, %v4448
        %v4509 = vadd.f32 %v4224, %v4451
        %v4510 = vadd.f32 %v4225, %v4453
        %v4511 = vadd.f32 %v4226, %v4456
        %v4512 = vadd.f32 %v4227, %v4458
        %v4513 = vadd.f32 %v4228, %v4461
        %v4514 = vadd.f32 %v4229, %v4463
        %v4515 = vadd.f32 %v4230, %v4466
        %v4516 = vadd.f32 %v4231, %v4468
        %v4517 = vadd.f32 %v4232, %v4471
        %v4518 = vadd.f32 %v4233, %v4473
        %v4519 = vadd.f32 %v4234, %v4476
        %v4520 = vadd.f32 %v4235, %v4478
        %v4521 = vadd.f32 %v4236, %v4481
        %v4522 = vadd.f32 %v4237, %v4483
        %v4523 = vadd.f32 %v4238, %v4486
        %v4524 = vadd.f32 %v4239, %v4488
        %v4525 = vadd.f32 %v4240, %v4491
        %v4526 = vadd.f32 %v4241, %v4493
        %v4527 = vld [vmem:[%s195 + $0xa0] sm:$0xf]
        %v4528 = vld [vmem:[%s195 + $0xa4] sm:$0xf]
        %v4529 = vld [vmem:[%s195 + $0xa8] sm:$0xf]
        %v4530 = vld [vmem:[%s195 + $0xac] sm:$0xf]
        %v4531 = vld [vmem:[%s195 + $0xb0] sm:$0xf]
        %v4532 = vld [vmem:[%s195 + $0xb4] sm:$0xf]
        %v4533 = vld [vmem:[%s195 + $0xb8] sm:$0xf]
        %v4534 = vld [vmem:[%s195 + $0xbc] sm:$0xf]
        %v4535 = vld [vmem:[%s195 + $0xc0] sm:$0xf]
        %v4536 = vld [vmem:[%s195 + $0xc4] sm:$0xf]
        %v4537 = vld [vmem:[%s195 + $0xc8] sm:$0xf]
        %v4538 = vld [vmem:[%s195 + $0xcc] sm:$0xf]
        %v4539 = vld [vmem:[%s195 + $0xd0] sm:$0xf]
        %v4540 = vld [vmem:[%s195 + $0xd4] sm:$0xf]
        %v4541 = vld [vmem:[%s195 + $0xd8] sm:$0xf]
        %v4542 = vld [vmem:[%s195 + $0xdc] sm:$0xf]
        %v4543 = vld [vmem:[%s195 + $0xe0] sm:$0xf]
        %v4544 = vld [vmem:[%s195 + $0xe4] sm:$0xf]
        %v4545 = vld [vmem:[%s195 + $0xe8] sm:$0xf]
        %v4546 = vld [vmem:[%s195 + $0xec] sm:$0xf]
        %v4547 = vld [vmem:[%s195 + $0xf0] sm:$0xf]
        %v4548 = vld [vmem:[%s195 + $0xf4] sm:$0xf]
        %v4549 = vld [vmem:[%s195 + $0xf8] sm:$0xf]
        %v4550 = vld [vmem:[%s195 + $0xfc] sm:$0xf]
        %v4551 = vld [vmem:[%s195 + $0x100] sm:$0xf]
        %v4552 = vld [vmem:[%s195 + $0x104] sm:$0xf]
        %v4553 = vld [vmem:[%s195 + $0x108] sm:$0xf]
        %v4554 = vld [vmem:[%s195 + $0x10c] sm:$0xf]
        %v4555 = vld [vmem:[%s195 + $0x110] sm:$0xf]
        %v4556 = vld [vmem:[%s195 + $0x114] sm:$0xf]
        %v4557 = vld [vmem:[%s195 + $0x118] sm:$0xf]
        %v4558 = vld [vmem:[%s195 + $0x11c] sm:$0xf]
        %v4559 = vld [vmem:[%s1889] sm:$0x3]
        %v4592 = vunpack.c.l.b16 %v4527
        %v4593 = vunpack.c.l.b16 %v4528
        %v4594 = vunpack.c.l.b16 %v4529
        %v4595 = vunpack.c.l.b16 %v4530
        %v4596 = vunpack.c.l.b16 %v4531
        %v4597 = vunpack.c.l.b16 %v4532
        %v4598 = vunpack.c.l.b16 %v4533
        %v4599 = vunpack.c.l.b16 %v4534
        %v4600 = vunpack.c.l.b16 %v4535
        %v4601 = vunpack.c.l.b16 %v4536
        %v4602 = vunpack.c.l.b16 %v4537
        %v4603 = vunpack.c.l.b16 %v4538
        %v4604 = vunpack.c.l.b16 %v4539
        %v4605 = vunpack.c.l.b16 %v4540
        %v4606 = vunpack.c.l.b16 %v4541
        %v4607 = vunpack.c.l.b16 %v4542
        %v4608 = vunpack.c.l.b16 %v4543
        %v4609 = vunpack.c.l.b16 %v4544
        %v4610 = vunpack.c.l.b16 %v4545
        %v4611 = vunpack.c.l.b16 %v4546
        %v4612 = vunpack.c.l.b16 %v4547
        %v4613 = vunpack.c.l.b16 %v4548
        %v4614 = vunpack.c.l.b16 %v4549
        %v4615 = vunpack.c.l.b16 %v4550
        %v4616 = vunpack.c.l.b16 %v4551
        %v4617 = vunpack.c.l.b16 %v4552
        %v4618 = vunpack.c.l.b16 %v4553
        %v4619 = vunpack.c.l.b16 %v4554
        %v4620 = vunpack.c.l.b16 %v4555
        %v4621 = vunpack.c.l.b16 %v4556
        %v4622 = vunpack.c.l.b16 %v4557
        %v4623 = vunpack.c.l.b16 %v4558
        %v4624 = vpack.c.b16 %v4593, %v4592
        %v4625 = vpack.c.b16 %v4595, %v4594
        %v4626 = vpack.c.b16 %v4597, %v4596
        %v4627 = vpack.c.b16 %v4599, %v4598
        %v4628 = vpack.c.b16 %v4601, %v4600
        %v4629 = vpack.c.b16 %v4603, %v4602
        %v4630 = vpack.c.b16 %v4605, %v4604
        %v4631 = vpack.c.b16 %v4607, %v4606
        %v4632 = vpack.c.b16 %v4609, %v4608
        %v4633 = vpack.c.b16 %v4611, %v4610
        %v4634 = vpack.c.b16 %v4613, %v4612
        %v4635 = vpack.c.b16 %v4615, %v4614
        %v4636 = vpack.c.b16 %v4617, %v4616
        %v4637 = vpack.c.b16 %v4619, %v4618
        %v4638 = vpack.c.b16 %v4621, %v4620
        %v4639 = vpack.c.b16 %v4623, %v4622
        %v4641 = vsel %vm347, %v4624, 0
        %v4644 = vsel %vm347, %v4625, 0
        %v4647 = vsel %vm347, %v4626, 0
        %v4650 = vsel %vm347, %v4627, 0
        %v4653 = vsel %vm347, %v4628, 0
        %v4656 = vsel %vm347, %v4629, 0
        %v4659 = vsel %vm347, %v4630, 0
        %v4662 = vsel %vm347, %v4631, 0
        %v4665 = vsel %vm347, %v4632, 0
        %v4668 = vsel %vm347, %v4633, 0
        %v4671 = vsel %vm347, %v4634, 0
        %v4674 = vsel %vm347, %v4635, 0
        %v4677 = vsel %vm347, %v4636, 0
        %v4680 = vsel %vm347, %v4637, 0
        %v4683 = vsel %vm347, %v4638, 0
        %v4686 = vsel %vm347, %v4639, 0
        %v4689 = vand.u32 %v4559, %v399
        %4691 = vmatpush.bf16.msra.mxu0 0
        %4692 = vmatpush.bf16.msra.mxu0 0
        %4693 = vmatpush.bf16.msra.mxu0 0
        %4694 = vmatpush.bf16.msra.mxu0 0
        %4695 = vmatpush.bf16.msra.mxu0 0
        %4696 = vmatpush.bf16.msra.mxu0 0
        %4697 = vmatpush.bf16.msra.mxu0 0
        %4698 = vmatpush.bf16.msra.mxu0 %v4689
        %4699 = vmatmul.bf16.gmra.mxu0 %v4641
        %v4700 = vpop.f32.mrf.mxu0
        %v4701 = vadd.f32 0.0, %v4700
        %v4702 = vpop.f32.mrf.mxu0
        %v4703 = vadd.f32 0.0, %v4702
        %4704 = vmatmul.bf16.gmra.mxu0 %v4644
        %v4705 = vpop.f32.mrf.mxu0
        %v4706 = vadd.f32 0.0, %v4705
        %v4707 = vpop.f32.mrf.mxu0
        %v4708 = vadd.f32 0.0, %v4707
        %4709 = vmatmul.bf16.gmra.mxu0 %v4647
        %v4710 = vpop.f32.mrf.mxu0
        %v4711 = vadd.f32 0.0, %v4710
        %v4712 = vpop.f32.mrf.mxu0
        %v4713 = vadd.f32 0.0, %v4712
        %4714 = vmatmul.bf16.gmra.mxu0 %v4650
        %v4715 = vpop.f32.mrf.mxu0
        %v4716 = vadd.f32 0.0, %v4715
        %v4717 = vpop.f32.mrf.mxu0
        %v4718 = vadd.f32 0.0, %v4717
        %4719 = vmatmul.bf16.gmra.mxu0 %v4653
        %v4720 = vpop.f32.mrf.mxu0
        %v4721 = vadd.f32 0.0, %v4720
        %v4722 = vpop.f32.mrf.mxu0
        %v4723 = vadd.f32 0.0, %v4722
        %4724 = vmatmul.bf16.gmra.mxu0 %v4656
        %v4725 = vpop.f32.mrf.mxu0
        %v4726 = vadd.f32 0.0, %v4725
        %v4727 = vpop.f32.mrf.mxu0
        %v4728 = vadd.f32 0.0, %v4727
        %4729 = vmatmul.bf16.gmra.mxu0 %v4659
        %v4730 = vpop.f32.mrf.mxu0
        %v4731 = vadd.f32 0.0, %v4730
        %v4732 = vpop.f32.mrf.mxu0
        %v4733 = vadd.f32 0.0, %v4732
        %4734 = vmatmul.bf16.gmra.mxu0 %v4662
        %v4735 = vpop.f32.mrf.mxu0
        %v4736 = vadd.f32 0.0, %v4735
        %v4737 = vpop.f32.mrf.mxu0
        %v4738 = vadd.f32 0.0, %v4737
        %4739 = vmatmul.bf16.gmra.mxu0 %v4665
        %v4740 = vpop.f32.mrf.mxu0
        %v4741 = vadd.f32 0.0, %v4740
        %v4742 = vpop.f32.mrf.mxu0
        %v4743 = vadd.f32 0.0, %v4742
        %4744 = vmatmul.bf16.gmra.mxu0 %v4668
        %v4745 = vpop.f32.mrf.mxu0
        %v4746 = vadd.f32 0.0, %v4745
        %v4747 = vpop.f32.mrf.mxu0
        %v4748 = vadd.f32 0.0, %v4747
        %4749 = vmatmul.bf16.gmra.mxu0 %v4671
        %v4750 = vpop.f32.mrf.mxu0
        %v4751 = vadd.f32 0.0, %v4750
        %v4752 = vpop.f32.mrf.mxu0
        %v4753 = vadd.f32 0.0, %v4752
        %4754 = vmatmul.bf16.gmra.mxu0 %v4674
        %v4755 = vpop.f32.mrf.mxu0
        %v4756 = vadd.f32 0.0, %v4755
        %v4757 = vpop.f32.mrf.mxu0
        %v4758 = vadd.f32 0.0, %v4757
        %4759 = vmatmul.bf16.gmra.mxu0 %v4677
        %v4760 = vpop.f32.mrf.mxu0
        %v4761 = vadd.f32 0.0, %v4760
        %v4762 = vpop.f32.mrf.mxu0
        %v4763 = vadd.f32 0.0, %v4762
        %4764 = vmatmul.bf16.gmra.mxu0 %v4680
        %v4765 = vpop.f32.mrf.mxu0
        %v4766 = vadd.f32 0.0, %v4765
        %v4767 = vpop.f32.mrf.mxu0
        %v4768 = vadd.f32 0.0, %v4767
        %4769 = vmatmul.bf16.gmra.mxu0 %v4683
        %v4770 = vpop.f32.mrf.mxu0
        %v4771 = vadd.f32 0.0, %v4770
        %v4772 = vpop.f32.mrf.mxu0
        %v4773 = vadd.f32 0.0, %v4772
        %4774 = vmatmul.bf16.gmra.mxu0 %v4686
        %v4775 = vpop.f32.mrf.mxu0
        %v4776 = vadd.f32 0.0, %v4775
        %v4777 = vpop.f32.mrf.mxu0
        %v4778 = vadd.f32 0.0, %v4777
        %4779 = vdwg.mxu0
        %v4780 = vadd.f32 %v4495, %v4701
        %v4781 = vadd.f32 %v4496, %v4703
        %v4782 = vadd.f32 %v4497, %v4706
        %v4783 = vadd.f32 %v4498, %v4708
        %v4784 = vadd.f32 %v4499, %v4711
        %v4785 = vadd.f32 %v4500, %v4713
        %v4786 = vadd.f32 %v4501, %v4716
        %v4787 = vadd.f32 %v4502, %v4718
        %v4788 = vadd.f32 %v4503, %v4721
        %v4789 = vadd.f32 %v4504, %v4723
        %v4790 = vadd.f32 %v4505, %v4726
        %v4791 = vadd.f32 %v4506, %v4728
        %v4792 = vadd.f32 %v4507, %v4731
        %v4793 = vadd.f32 %v4508, %v4733
        %v4794 = vadd.f32 %v4509, %v4736
        %v4795 = vadd.f32 %v4510, %v4738
        %v4796 = vadd.f32 %v4511, %v4741
        %v4797 = vadd.f32 %v4512, %v4743
        %v4798 = vadd.f32 %v4513, %v4746
        %v4799 = vadd.f32 %v4514, %v4748
        %v4800 = vadd.f32 %v4515, %v4751
        %v4801 = vadd.f32 %v4516, %v4753
        %v4802 = vadd.f32 %v4517, %v4756
        %v4803 = vadd.f32 %v4518, %v4758
        %v4804 = vadd.f32 %v4519, %v4761
        %v4805 = vadd.f32 %v4520, %v4763
        %v4806 = vadd.f32 %v4521, %v4766
        %v4807 = vadd.f32 %v4522, %v4768
        %v4808 = vadd.f32 %v4523, %v4771
        %v4809 = vadd.f32 %v4524, %v4773
        %v4810 = vadd.f32 %v4525, %v4776
        %v4811 = vadd.f32 %v4526, %v4778
        %v4812 = vld [vmem:[%s232 + $0xa0] sm:$0xf]
        %v4813 = vld [vmem:[%s232 + $0xa4] sm:$0xf]
        %v4814 = vld [vmem:[%s232 + $0xa8] sm:$0xf]
        %v4815 = vld [vmem:[%s232 + $0xac] sm:$0xf]
        %v4816 = vld [vmem:[%s232 + $0xb0] sm:$0xf]
        %v4817 = vld [vmem:[%s232 + $0xb4] sm:$0xf]
        %v4818 = vld [vmem:[%s232 + $0xb8] sm:$0xf]
        %v4819 = vld [vmem:[%s232 + $0xbc] sm:$0xf]
        %v4820 = vld [vmem:[%s232 + $0xc0] sm:$0xf]
        %v4821 = vld [vmem:[%s232 + $0xc4] sm:$0xf]
        %v4822 = vld [vmem:[%s232 + $0xc8] sm:$0xf]
        %v4823 = vld [vmem:[%s232 + $0xcc] sm:$0xf]
        %v4824 = vld [vmem:[%s232 + $0xd0] sm:$0xf]
        %v4825 = vld [vmem:[%s232 + $0xd4] sm:$0xf]
        %v4826 = vld [vmem:[%s232 + $0xd8] sm:$0xf]
        %v4827 = vld [vmem:[%s232 + $0xdc] sm:$0xf]
        %v4828 = vld [vmem:[%s232 + $0xe0] sm:$0xf]
        %v4829 = vld [vmem:[%s232 + $0xe4] sm:$0xf]
        %v4830 = vld [vmem:[%s232 + $0xe8] sm:$0xf]
        %v4831 = vld [vmem:[%s232 + $0xec] sm:$0xf]
        %v4832 = vld [vmem:[%s232 + $0xf0] sm:$0xf]
        %v4833 = vld [vmem:[%s232 + $0xf4] sm:$0xf]
        %v4834 = vld [vmem:[%s232 + $0xf8] sm:$0xf]
        %v4835 = vld [vmem:[%s232 + $0xfc] sm:$0xf]
        %v4836 = vld [vmem:[%s232 + $0x100] sm:$0xf]
        %v4837 = vld [vmem:[%s232 + $0x104] sm:$0xf]
        %v4838 = vld [vmem:[%s232 + $0x108] sm:$0xf]
        %v4839 = vld [vmem:[%s232 + $0x10c] sm:$0xf]
        %v4840 = vld [vmem:[%s232 + $0x110] sm:$0xf]
        %v4841 = vld [vmem:[%s232 + $0x114] sm:$0xf]
        %v4842 = vld [vmem:[%s232 + $0x118] sm:$0xf]
        %v4843 = vld [vmem:[%s232 + $0x11c] sm:$0xf]
        %v4844 = vld [vmem:[%s2175] sm:$0x3]
        %v4877 = vunpack.c.l.b16 %v4812
        %v4878 = vunpack.c.l.b16 %v4813
        %v4879 = vunpack.c.l.b16 %v4814
        %v4880 = vunpack.c.l.b16 %v4815
        %v4881 = vunpack.c.l.b16 %v4816
        %v4882 = vunpack.c.l.b16 %v4817
        %v4883 = vunpack.c.l.b16 %v4818
        %v4884 = vunpack.c.l.b16 %v4819
        %v4885 = vunpack.c.l.b16 %v4820
        %v4886 = vunpack.c.l.b16 %v4821
        %v4887 = vunpack.c.l.b16 %v4822
        %v4888 = vunpack.c.l.b16 %v4823
        %v4889 = vunpack.c.l.b16 %v4824
        %v4890 = vunpack.c.l.b16 %v4825
        %v4891 = vunpack.c.l.b16 %v4826
        %v4892 = vunpack.c.l.b16 %v4827
        %v4893 = vunpack.c.l.b16 %v4828
        %v4894 = vunpack.c.l.b16 %v4829
        %v4895 = vunpack.c.l.b16 %v4830
        %v4896 = vunpack.c.l.b16 %v4831
        %v4897 = vunpack.c.l.b16 %v4832
        %v4898 = vunpack.c.l.b16 %v4833
        %v4899 = vunpack.c.l.b16 %v4834
        %v4900 = vunpack.c.l.b16 %v4835
        %v4901 = vunpack.c.l.b16 %v4836
        %v4902 = vunpack.c.l.b16 %v4837
        %v4903 = vunpack.c.l.b16 %v4838
        %v4904 = vunpack.c.l.b16 %v4839
        %v4905 = vunpack.c.l.b16 %v4840
        %v4906 = vunpack.c.l.b16 %v4841
        %v4907 = vunpack.c.l.b16 %v4842
        %v4908 = vunpack.c.l.b16 %v4843
        %v4909 = vpack.c.b16 %v4878, %v4877
        %v4910 = vpack.c.b16 %v4880, %v4879
        %v4911 = vpack.c.b16 %v4882, %v4881
        %v4912 = vpack.c.b16 %v4884, %v4883
        %v4913 = vpack.c.b16 %v4886, %v4885
        %v4914 = vpack.c.b16 %v4888, %v4887
        %v4915 = vpack.c.b16 %v4890, %v4889
        %v4916 = vpack.c.b16 %v4892, %v4891
        %v4917 = vpack.c.b16 %v4894, %v4893
        %v4918 = vpack.c.b16 %v4896, %v4895
        %v4919 = vpack.c.b16 %v4898, %v4897
        %v4920 = vpack.c.b16 %v4900, %v4899
        %v4921 = vpack.c.b16 %v4902, %v4901
        %v4922 = vpack.c.b16 %v4904, %v4903
        %v4923 = vpack.c.b16 %v4906, %v4905
        %v4924 = vpack.c.b16 %v4908, %v4907
        %v4926 = vsel %vm347, %v4909, 0
        %v4929 = vsel %vm347, %v4910, 0
        %v4932 = vsel %vm347, %v4911, 0
        %v4935 = vsel %vm347, %v4912, 0
        %v4938 = vsel %vm347, %v4913, 0
        %v4941 = vsel %vm347, %v4914, 0
        %v4944 = vsel %vm347, %v4915, 0
        %v4947 = vsel %vm347, %v4916, 0
        %v4950 = vsel %vm347, %v4917, 0
        %v4953 = vsel %vm347, %v4918, 0
        %v4956 = vsel %vm347, %v4919, 0
        %v4959 = vsel %vm347, %v4920, 0
        %v4962 = vsel %vm347, %v4921, 0
        %v4965 = vsel %vm347, %v4922, 0
        %v4968 = vsel %vm347, %v4923, 0
        %v4971 = vsel %vm347, %v4924, 0
        %v4974 = vand.u32 %v4844, %v399
        %4976 = vmatpush.bf16.msra.mxu0 0
        %4977 = vmatpush.bf16.msra.mxu0 0
        %4978 = vmatpush.bf16.msra.mxu0 0
        %4979 = vmatpush.bf16.msra.mxu0 0
        %4980 = vmatpush.bf16.msra.mxu0 0
        %4981 = vmatpush.bf16.msra.mxu0 0
        %4982 = vmatpush.bf16.msra.mxu0 0
        %4983 = vmatpush.bf16.msra.mxu0 %v4974
        %4984 = vmatmul.bf16.gmra.mxu0 %v4926
        %v4985 = vpop.f32.mrf.mxu0
        %v4986 = vadd.f32 0.0, %v4985
        %v4987 = vpop.f32.mrf.mxu0
        %v4988 = vadd.f32 0.0, %v4987
        %4989 = vmatmul.bf16.gmra.mxu0 %v4929
        %v4990 = vpop.f32.mrf.mxu0
        %v4991 = vadd.f32 0.0, %v4990
        %v4992 = vpop.f32.mrf.mxu0
        %v4993 = vadd.f32 0.0, %v4992
        %4994 = vmatmul.bf16.gmra.mxu0 %v4932
        %v4995 = vpop.f32.mrf.mxu0
        %v4996 = vadd.f32 0.0, %v4995
        %v4997 = vpop.f32.mrf.mxu0
        %v4998 = vadd.f32 0.0, %v4997
        %4999 = vmatmul.bf16.gmra.mxu0 %v4935
        %v5000 = vpop.f32.mrf.mxu0
        %v5001 = vadd.f32 0.0, %v5000
        %v5002 = vpop.f32.mrf.mxu0
        %v5003 = vadd.f32 0.0, %v5002
        %5004 = vmatmul.bf16.gmra.mxu0 %v4938
        %v5005 = vpop.f32.mrf.mxu0
        %v5006 = vadd.f32 0.0, %v5005
        %v5007 = vpop.f32.mrf.mxu0
        %v5008 = vadd.f32 0.0, %v5007
        %5009 = vmatmul.bf16.gmra.mxu0 %v4941
        %v5010 = vpop.f32.mrf.mxu0
        %v5011 = vadd.f32 0.0, %v5010
        %v5012 = vpop.f32.mrf.mxu0
        %v5013 = vadd.f32 0.0, %v5012
        %5014 = vmatmul.bf16.gmra.mxu0 %v4944
        %v5015 = vpop.f32.mrf.mxu0
        %v5016 = vadd.f32 0.0, %v5015
        %v5017 = vpop.f32.mrf.mxu0
        %v5018 = vadd.f32 0.0, %v5017
        %5019 = vmatmul.bf16.gmra.mxu0 %v4947
        %v5020 = vpop.f32.mrf.mxu0
        %v5021 = vadd.f32 0.0, %v5020
        %v5022 = vpop.f32.mrf.mxu0
        %v5023 = vadd.f32 0.0, %v5022
        %5024 = vmatmul.bf16.gmra.mxu0 %v4950
        %v5025 = vpop.f32.mrf.mxu0
        %v5026 = vadd.f32 0.0, %v5025
        %v5027 = vpop.f32.mrf.mxu0
        %v5028 = vadd.f32 0.0, %v5027
        %5029 = vmatmul.bf16.gmra.mxu0 %v4953
        %v5030 = vpop.f32.mrf.mxu0
        %v5031 = vadd.f32 0.0, %v5030
        %v5032 = vpop.f32.mrf.mxu0
        %v5033 = vadd.f32 0.0, %v5032
        %5034 = vmatmul.bf16.gmra.mxu0 %v4956
        %v5035 = vpop.f32.mrf.mxu0
        %v5036 = vadd.f32 0.0, %v5035
        %v5037 = vpop.f32.mrf.mxu0
        %v5038 = vadd.f32 0.0, %v5037
        %5039 = vmatmul.bf16.gmra.mxu0 %v4959
        %v5040 = vpop.f32.mrf.mxu0
        %v5041 = vadd.f32 0.0, %v5040
        %v5042 = vpop.f32.mrf.mxu0
        %v5043 = vadd.f32 0.0, %v5042
        %5044 = vmatmul.bf16.gmra.mxu0 %v4962
        %v5045 = vpop.f32.mrf.mxu0
        %v5046 = vadd.f32 0.0, %v5045
        %v5047 = vpop.f32.mrf.mxu0
        %v5048 = vadd.f32 0.0, %v5047
        %5049 = vmatmul.bf16.gmra.mxu0 %v4965
        %v5050 = vpop.f32.mrf.mxu0
        %v5051 = vadd.f32 0.0, %v5050
        %v5052 = vpop.f32.mrf.mxu0
        %v5053 = vadd.f32 0.0, %v5052
        %5054 = vmatmul.bf16.gmra.mxu0 %v4968
        %v5055 = vpop.f32.mrf.mxu0
        %v5056 = vadd.f32 0.0, %v5055
        %v5057 = vpop.f32.mrf.mxu0
        %v5058 = vadd.f32 0.0, %v5057
        %5059 = vmatmul.bf16.gmra.mxu0 %v4971
        %v5060 = vpop.f32.mrf.mxu0
        %v5061 = vadd.f32 0.0, %v5060
        %v5062 = vpop.f32.mrf.mxu0
        %v5063 = vadd.f32 0.0, %v5062
        %5064 = vdwg.mxu0
        %v5065 = vadd.f32 %v4780, %v4986
        %v5066 = vadd.f32 %v4781, %v4988
        %v5067 = vadd.f32 %v4782, %v4991
        %v5068 = vadd.f32 %v4783, %v4993
        %v5069 = vadd.f32 %v4784, %v4996
        %v5070 = vadd.f32 %v4785, %v4998
        %v5071 = vadd.f32 %v4786, %v5001
        %v5072 = vadd.f32 %v4787, %v5003
        %v5073 = vadd.f32 %v4788, %v5006
        %v5074 = vadd.f32 %v4789, %v5008
        %v5075 = vadd.f32 %v4790, %v5011
        %v5076 = vadd.f32 %v4791, %v5013
        %v5077 = vadd.f32 %v4792, %v5016
        %v5078 = vadd.f32 %v4793, %v5018
        %v5079 = vadd.f32 %v4794, %v5021
        %v5080 = vadd.f32 %v4795, %v5023
        %v5081 = vadd.f32 %v4796, %v5026
        %v5082 = vadd.f32 %v4797, %v5028
        %v5083 = vadd.f32 %v4798, %v5031
        %v5084 = vadd.f32 %v4799, %v5033
        %v5085 = vadd.f32 %v4800, %v5036
        %v5086 = vadd.f32 %v4801, %v5038
        %v5087 = vadd.f32 %v4802, %v5041
        %v5088 = vadd.f32 %v4803, %v5043
        %v5089 = vadd.f32 %v4804, %v5046
        %v5090 = vadd.f32 %v4805, %v5048
        %v5091 = vadd.f32 %v4806, %v5051
        %v5092 = vadd.f32 %v4807, %v5053
        %v5093 = vadd.f32 %v4808, %v5056
        %v5094 = vadd.f32 %v4809, %v5058
        %v5095 = vadd.f32 %v4810, %v5061
        %v5096 = vadd.f32 %v4811, %v5063
        %v5097 = vld [vmem:[%s712 + $0xa0] sm:$0xf]
        %v5098 = vld [vmem:[%s712 + $0xa4] sm:$0xf]
        %v5099 = vld [vmem:[%s712 + $0xa8] sm:$0xf]
        %v5100 = vld [vmem:[%s712 + $0xac] sm:$0xf]
        %v5101 = vld [vmem:[%s712 + $0xb0] sm:$0xf]
        %v5102 = vld [vmem:[%s712 + $0xb4] sm:$0xf]
        %v5103 = vld [vmem:[%s712 + $0xb8] sm:$0xf]
        %v5104 = vld [vmem:[%s712 + $0xbc] sm:$0xf]
        %v5105 = vld [vmem:[%s712 + $0xc0] sm:$0xf]
        %v5106 = vld [vmem:[%s712 + $0xc4] sm:$0xf]
        %v5107 = vld [vmem:[%s712 + $0xc8] sm:$0xf]
        %v5108 = vld [vmem:[%s712 + $0xcc] sm:$0xf]
        %v5109 = vld [vmem:[%s712 + $0xd0] sm:$0xf]
        %v5110 = vld [vmem:[%s712 + $0xd4] sm:$0xf]
        %v5111 = vld [vmem:[%s712 + $0xd8] sm:$0xf]
        %v5112 = vld [vmem:[%s712 + $0xdc] sm:$0xf]
        %v5113 = vld [vmem:[%s712 + $0xe0] sm:$0xf]
        %v5114 = vld [vmem:[%s712 + $0xe4] sm:$0xf]
        %v5115 = vld [vmem:[%s712 + $0xe8] sm:$0xf]
        %v5116 = vld [vmem:[%s712 + $0xec] sm:$0xf]
        %v5117 = vld [vmem:[%s712 + $0xf0] sm:$0xf]
        %v5118 = vld [vmem:[%s712 + $0xf4] sm:$0xf]
        %v5119 = vld [vmem:[%s712 + $0xf8] sm:$0xf]
        %v5120 = vld [vmem:[%s712 + $0xfc] sm:$0xf]
        %v5121 = vld [vmem:[%s712 + $0x100] sm:$0xf]
        %v5122 = vld [vmem:[%s712 + $0x104] sm:$0xf]
        %v5123 = vld [vmem:[%s712 + $0x108] sm:$0xf]
        %v5124 = vld [vmem:[%s712 + $0x10c] sm:$0xf]
        %v5125 = vld [vmem:[%s712 + $0x110] sm:$0xf]
        %v5126 = vld [vmem:[%s712 + $0x114] sm:$0xf]
        %v5127 = vld [vmem:[%s712 + $0x118] sm:$0xf]
        %v5128 = vld [vmem:[%s712 + $0x11c] sm:$0xf]
        %v5129 = vld [vmem:[%s2461] sm:$0x3]
        %v5162 = vunpack.c.l.b16 %v5097
        %v5163 = vunpack.c.l.b16 %v5098
        %v5164 = vunpack.c.l.b16 %v5099
        %v5165 = vunpack.c.l.b16 %v5100
        %v5166 = vunpack.c.l.b16 %v5101
        %v5167 = vunpack.c.l.b16 %v5102
        %v5168 = vunpack.c.l.b16 %v5103
        %v5169 = vunpack.c.l.b16 %v5104
        %v5170 = vunpack.c.l.b16 %v5105
        %v5171 = vunpack.c.l.b16 %v5106
        %v5172 = vunpack.c.l.b16 %v5107
        %v5173 = vunpack.c.l.b16 %v5108
        %v5174 = vunpack.c.l.b16 %v5109
        %v5175 = vunpack.c.l.b16 %v5110
        %v5176 = vunpack.c.l.b16 %v5111
        %v5177 = vunpack.c.l.b16 %v5112
        %v5178 = vunpack.c.l.b16 %v5113
        %v5179 = vunpack.c.l.b16 %v5114
        %v5180 = vunpack.c.l.b16 %v5115
        %v5181 = vunpack.c.l.b16 %v5116
        %v5182 = vunpack.c.l.b16 %v5117
        %v5183 = vunpack.c.l.b16 %v5118
        %v5184 = vunpack.c.l.b16 %v5119
        %v5185 = vunpack.c.l.b16 %v5120
        %v5186 = vunpack.c.l.b16 %v5121
        %v5187 = vunpack.c.l.b16 %v5122
        %v5188 = vunpack.c.l.b16 %v5123
        %v5189 = vunpack.c.l.b16 %v5124
        %v5190 = vunpack.c.l.b16 %v5125
        %v5191 = vunpack.c.l.b16 %v5126
        %v5192 = vunpack.c.l.b16 %v5127
        %v5193 = vunpack.c.l.b16 %v5128
        %v5194 = vpack.c.b16 %v5163, %v5162
        %v5195 = vpack.c.b16 %v5165, %v5164
        %v5196 = vpack.c.b16 %v5167, %v5166
        %v5197 = vpack.c.b16 %v5169, %v5168
        %v5198 = vpack.c.b16 %v5171, %v5170
        %v5199 = vpack.c.b16 %v5173, %v5172
        %v5200 = vpack.c.b16 %v5175, %v5174
        %v5201 = vpack.c.b16 %v5177, %v5176
        %v5202 = vpack.c.b16 %v5179, %v5178
        %v5203 = vpack.c.b16 %v5181, %v5180
        %v5204 = vpack.c.b16 %v5183, %v5182
        %v5205 = vpack.c.b16 %v5185, %v5184
        %v5206 = vpack.c.b16 %v5187, %v5186
        %v5207 = vpack.c.b16 %v5189, %v5188
        %v5208 = vpack.c.b16 %v5191, %v5190
        %v5209 = vpack.c.b16 %v5193, %v5192
        %v5211 = vsel %vm347, %v5194, 0
        %v5214 = vsel %vm347, %v5195, 0
        %v5217 = vsel %vm347, %v5196, 0
        %v5220 = vsel %vm347, %v5197, 0
        %v5223 = vsel %vm347, %v5198, 0
        %v5226 = vsel %vm347, %v5199, 0
        %v5229 = vsel %vm347, %v5200, 0
        %v5232 = vsel %vm347, %v5201, 0
        %v5235 = vsel %vm347, %v5202, 0
        %v5238 = vsel %vm347, %v5203, 0
        %v5241 = vsel %vm347, %v5204, 0
        %v5244 = vsel %vm347, %v5205, 0
        %v5247 = vsel %vm347, %v5206, 0
        %v5250 = vsel %vm347, %v5207, 0
        %v5253 = vsel %vm347, %v5208, 0
        %v5256 = vsel %vm347, %v5209, 0
        %v5259 = vand.u32 %v5129, %v399
        %5261 = vmatpush.bf16.msra.mxu0 0
        %5262 = vmatpush.bf16.msra.mxu0 0
        %5263 = vmatpush.bf16.msra.mxu0 0
        %5264 = vmatpush.bf16.msra.mxu0 0
        %5265 = vmatpush.bf16.msra.mxu0 0
        %5266 = vmatpush.bf16.msra.mxu0 0
        %5267 = vmatpush.bf16.msra.mxu0 0
        %5268 = vmatpush.bf16.msra.mxu0 %v5259
        %5269 = vmatmul.bf16.gmra.mxu0 %v5211
        %v5270 = vpop.f32.mrf.mxu0
        %v5271 = vadd.f32 0.0, %v5270
        %v5272 = vpop.f32.mrf.mxu0
        %v5273 = vadd.f32 0.0, %v5272
        %5274 = vmatmul.bf16.gmra.mxu0 %v5214
        %v5275 = vpop.f32.mrf.mxu0
        %v5276 = vadd.f32 0.0, %v5275
        %v5277 = vpop.f32.mrf.mxu0
        %v5278 = vadd.f32 0.0, %v5277
        %5279 = vmatmul.bf16.gmra.mxu0 %v5217
        %v5280 = vpop.f32.mrf.mxu0
        %v5281 = vadd.f32 0.0, %v5280
        %v5282 = vpop.f32.mrf.mxu0
        %v5283 = vadd.f32 0.0, %v5282
        %5284 = vmatmul.bf16.gmra.mxu0 %v5220
        %v5285 = vpop.f32.mrf.mxu0
        %v5286 = vadd.f32 0.0, %v5285
        %v5287 = vpop.f32.mrf.mxu0
        %v5288 = vadd.f32 0.0, %v5287
        %5289 = vmatmul.bf16.gmra.mxu0 %v5223
        %v5290 = vpop.f32.mrf.mxu0
        %v5291 = vadd.f32 0.0, %v5290
        %v5292 = vpop.f32.mrf.mxu0
        %v5293 = vadd.f32 0.0, %v5292
        %5294 = vmatmul.bf16.gmra.mxu0 %v5226
        %v5295 = vpop.f32.mrf.mxu0
        %v5296 = vadd.f32 0.0, %v5295
        %v5297 = vpop.f32.mrf.mxu0
        %v5298 = vadd.f32 0.0, %v5297
        %5299 = vmatmul.bf16.gmra.mxu0 %v5229
        %v5300 = vpop.f32.mrf.mxu0
        %v5301 = vadd.f32 0.0, %v5300
        %v5302 = vpop.f32.mrf.mxu0
        %v5303 = vadd.f32 0.0, %v5302
        %5304 = vmatmul.bf16.gmra.mxu0 %v5232
        %v5305 = vpop.f32.mrf.mxu0
        %v5306 = vadd.f32 0.0, %v5305
        %v5307 = vpop.f32.mrf.mxu0
        %v5308 = vadd.f32 0.0, %v5307
        %5309 = vmatmul.bf16.gmra.mxu0 %v5235
        %v5310 = vpop.f32.mrf.mxu0
        %v5311 = vadd.f32 0.0, %v5310
        %v5312 = vpop.f32.mrf.mxu0
        %v5313 = vadd.f32 0.0, %v5312
        %5314 = vmatmul.bf16.gmra.mxu0 %v5238
        %v5315 = vpop.f32.mrf.mxu0
        %v5316 = vadd.f32 0.0, %v5315
        %v5317 = vpop.f32.mrf.mxu0
        %v5318 = vadd.f32 0.0, %v5317
        %5319 = vmatmul.bf16.gmra.mxu0 %v5241
        %v5320 = vpop.f32.mrf.mxu0
        %v5321 = vadd.f32 0.0, %v5320
        %v5322 = vpop.f32.mrf.mxu0
        %v5323 = vadd.f32 0.0, %v5322
        %5324 = vmatmul.bf16.gmra.mxu0 %v5244
        %v5325 = vpop.f32.mrf.mxu0
        %v5326 = vadd.f32 0.0, %v5325
        %v5327 = vpop.f32.mrf.mxu0
        %v5328 = vadd.f32 0.0, %v5327
        %5329 = vmatmul.bf16.gmra.mxu0 %v5247
        %v5330 = vpop.f32.mrf.mxu0
        %v5331 = vadd.f32 0.0, %v5330
        %v5332 = vpop.f32.mrf.mxu0
        %v5333 = vadd.f32 0.0, %v5332
        %5334 = vmatmul.bf16.gmra.mxu0 %v5250
        %v5335 = vpop.f32.mrf.mxu0
        %v5336 = vadd.f32 0.0, %v5335
        %v5337 = vpop.f32.mrf.mxu0
        %v5338 = vadd.f32 0.0, %v5337
        %5339 = vmatmul.bf16.gmra.mxu0 %v5253
        %v5340 = vpop.f32.mrf.mxu0
        %v5341 = vadd.f32 0.0, %v5340
        %v5342 = vpop.f32.mrf.mxu0
        %v5343 = vadd.f32 0.0, %v5342
        %5344 = vmatmul.bf16.gmra.mxu0 %v5256
        %v5345 = vpop.f32.mrf.mxu0
        %v5346 = vadd.f32 0.0, %v5345
        %v5347 = vpop.f32.mrf.mxu0
        %v5348 = vadd.f32 0.0, %v5347
        %5349 = vdwg.mxu0
        %v5350 = vadd.f32 %v5065, %v5271
        %v5351 = vadd.f32 %v5066, %v5273
        %v5352 = vadd.f32 %v5067, %v5276
        %v5353 = vadd.f32 %v5068, %v5278
        %v5354 = vadd.f32 %v5069, %v5281
        %v5355 = vadd.f32 %v5070, %v5283
        %v5356 = vadd.f32 %v5071, %v5286
        %v5357 = vadd.f32 %v5072, %v5288
        %v5358 = vadd.f32 %v5073, %v5291
        %v5359 = vadd.f32 %v5074, %v5293
        %v5360 = vadd.f32 %v5075, %v5296
        %v5361 = vadd.f32 %v5076, %v5298
        %v5362 = vadd.f32 %v5077, %v5301
        %v5363 = vadd.f32 %v5078, %v5303
        %v5364 = vadd.f32 %v5079, %v5306
        %v5365 = vadd.f32 %v5080, %v5308
        %v5366 = vadd.f32 %v5081, %v5311
        %v5367 = vadd.f32 %v5082, %v5313
        %v5368 = vadd.f32 %v5083, %v5316
        %v5369 = vadd.f32 %v5084, %v5318
        %v5370 = vadd.f32 %v5085, %v5321
        %v5371 = vadd.f32 %v5086, %v5323
        %v5372 = vadd.f32 %v5087, %v5326
        %v5373 = vadd.f32 %v5088, %v5328
        %v5374 = vadd.f32 %v5089, %v5331
        %v5375 = vadd.f32 %v5090, %v5333
        %v5376 = vadd.f32 %v5091, %v5336
        %v5377 = vadd.f32 %v5092, %v5338
        %v5378 = vadd.f32 %v5093, %v5341
        %v5379 = vadd.f32 %v5094, %v5343
        %v5380 = vadd.f32 %v5095, %v5346
        %v5381 = vadd.f32 %v5096, %v5348
        %v5382 = vmul.f32 %v5350, %v2716
        %v5383 = vmul.f32 %v5351, %v2716
        %v5384 = vmul.f32 %v5352, %v2716
        %v5385 = vmul.f32 %v5353, %v2716
        %v5386 = vmul.f32 %v5354, %v2716
        %v5387 = vmul.f32 %v5355, %v2716
        %v5388 = vmul.f32 %v5356, %v2716
        %v5389 = vmul.f32 %v5357, %v2716
        %v5390 = vmul.f32 %v5358, %v2716
        %v5391 = vmul.f32 %v5359, %v2716
        %v5392 = vmul.f32 %v5360, %v2716
        %v5393 = vmul.f32 %v5361, %v2716
        %v5394 = vmul.f32 %v5362, %v2716
        %v5395 = vmul.f32 %v5363, %v2716
        %v5396 = vmul.f32 %v5364, %v2716
        %v5397 = vmul.f32 %v5365, %v2716
        %v5398 = vmul.f32 %v5366, %v2716
        %v5399 = vmul.f32 %v5367, %v2716
        %v5400 = vmul.f32 %v5368, %v2716
        %v5401 = vmul.f32 %v5369, %v2716
        %v5402 = vmul.f32 %v5370, %v2716
        %v5403 = vmul.f32 %v5371, %v2716
        %v5404 = vmul.f32 %v5372, %v2716
        %v5405 = vmul.f32 %v5373, %v2716
        %v5406 = vmul.f32 %v5374, %v2716
        %v5407 = vmul.f32 %v5375, %v2716
        %v5408 = vmul.f32 %v5376, %v2716
        %v5409 = vmul.f32 %v5377, %v2716
        %v5410 = vmul.f32 %v5378, %v2716
        %v5411 = vmul.f32 %v5379, %v2716
        %v5412 = vmul.f32 %v5380, %v2716
        %v5413 = vmul.f32 %v5381, %v2716
        %v5414 = vadd.f32 %v5382, %v2751
        %v5415 = vadd.f32 %v5383, %v2751
        %v5416 = vadd.f32 %v5384, %v2751
        %v5417 = vadd.f32 %v5385, %v2751
        %v5418 = vadd.f32 %v5386, %v2751
        %v5419 = vadd.f32 %v5387, %v2751
        %v5420 = vadd.f32 %v5388, %v2751
        %v5421 = vadd.f32 %v5389, %v2751
        %v5422 = vadd.f32 %v5390, %v2751
        %v5423 = vadd.f32 %v5391, %v2751
        %v5424 = vadd.f32 %v5392, %v2751
        %v5425 = vadd.f32 %v5393, %v2751
        %v5426 = vadd.f32 %v5394, %v2751
        %v5427 = vadd.f32 %v5395, %v2751
        %v5428 = vadd.f32 %v5396, %v2751
        %v5429 = vadd.f32 %v5397, %v2751
        %v5430 = vadd.f32 %v5398, %v2751
        %v5431 = vadd.f32 %v5399, %v2751
        %v5432 = vadd.f32 %v5400, %v2751
        %v5433 = vadd.f32 %v5401, %v2751
        %v5434 = vadd.f32 %v5402, %v2751
        %v5435 = vadd.f32 %v5403, %v2751
        %v5436 = vadd.f32 %v5404, %v2751
        %v5437 = vadd.f32 %v5405, %v2751
        %v5438 = vadd.f32 %v5406, %v2751
        %v5439 = vadd.f32 %v5407, %v2751
        %v5440 = vadd.f32 %v5408, %v2751
        %v5441 = vadd.f32 %v5409, %v2751
        %v5442 = vadd.f32 %v5410, %v2751
        %v5443 = vadd.f32 %v5411, %v2751
        %v5444 = vadd.f32 %v5412, %v2751
        %v5445 = vadd.f32 %v5413, %v2751
        %v5446 = vmax.f32 %v5414, 0.0
        %v5447 = vmax.f32 %v5415, 0.0
        %v5448 = vmax.f32 %v5416, 0.0
        %v5449 = vmax.f32 %v5417, 0.0
        %v5450 = vmax.f32 %v5418, 0.0
        %v5451 = vmax.f32 %v5419, 0.0
        %v5452 = vmax.f32 %v5420, 0.0
        %v5453 = vmax.f32 %v5421, 0.0
        %v5454 = vmax.f32 %v5422, 0.0
        %v5455 = vmax.f32 %v5423, 0.0
        %v5456 = vmax.f32 %v5424, 0.0
        %v5457 = vmax.f32 %v5425, 0.0
        %v5458 = vmax.f32 %v5426, 0.0
        %v5459 = vmax.f32 %v5427, 0.0
        %v5460 = vmax.f32 %v5428, 0.0
        %v5461 = vmax.f32 %v5429, 0.0
        %v5462 = vmax.f32 %v5430, 0.0
        %v5463 = vmax.f32 %v5431, 0.0
        %v5464 = vmax.f32 %v5432, 0.0
        %v5465 = vmax.f32 %v5433, 0.0
        %v5466 = vmax.f32 %v5434, 0.0
        %v5467 = vmax.f32 %v5435, 0.0
        %v5468 = vmax.f32 %v5436, 0.0
        %v5469 = vmax.f32 %v5437, 0.0
        %v5470 = vmax.f32 %v5438, 0.0
        %v5471 = vmax.f32 %v5439, 0.0
        %v5472 = vmax.f32 %v5440, 0.0
        %v5473 = vmax.f32 %v5441, 0.0
        %v5474 = vmax.f32 %v5442, 0.0
        %v5475 = vmax.f32 %v5443, 0.0
        %v5476 = vmax.f32 %v5444, 0.0
        %v5477 = vmax.f32 %v5445, 0.0
        %v5478 = vpack.c.bf16 %v5446, %v5446
        %v5479 = vpack.c.bf16 %v5447, %v5447
        %v5480 = vpack.c.bf16 %v5448, %v5448
        %v5481 = vpack.c.bf16 %v5449, %v5449
        %v5482 = vpack.c.bf16 %v5450, %v5450
        %v5483 = vpack.c.bf16 %v5451, %v5451
        %v5484 = vpack.c.bf16 %v5452, %v5452
        %v5485 = vpack.c.bf16 %v5453, %v5453
        %v5486 = vpack.c.bf16 %v5454, %v5454
        %v5487 = vpack.c.bf16 %v5455, %v5455
        %v5488 = vpack.c.bf16 %v5456, %v5456
        %v5489 = vpack.c.bf16 %v5457, %v5457
        %v5490 = vpack.c.bf16 %v5458, %v5458
        %v5491 = vpack.c.bf16 %v5459, %v5459
        %v5492 = vpack.c.bf16 %v5460, %v5460
        %v5493 = vpack.c.bf16 %v5461, %v5461
        %v5494 = vpack.c.bf16 %v5462, %v5462
        %v5495 = vpack.c.bf16 %v5463, %v5463
        %v5496 = vpack.c.bf16 %v5464, %v5464
        %v5497 = vpack.c.bf16 %v5465, %v5465
        %v5498 = vpack.c.bf16 %v5466, %v5466
        %v5499 = vpack.c.bf16 %v5467, %v5467
        %v5500 = vpack.c.bf16 %v5468, %v5468
        %v5501 = vpack.c.bf16 %v5469, %v5469
        %v5502 = vpack.c.bf16 %v5470, %v5470
        %v5503 = vpack.c.bf16 %v5471, %v5471
        %v5504 = vpack.c.bf16 %v5472, %v5472
        %v5505 = vpack.c.bf16 %v5473, %v5473
        %v5506 = vpack.c.bf16 %v5474, %v5474
        %v5507 = vpack.c.bf16 %v5475, %v5475
        %v5508 = vpack.c.bf16 %v5476, %v5476
        %v5509 = vpack.c.bf16 %v5477, %v5477
        %5510 = vst [vmem:[%s190 + $0x80] sm:$0xf] %v5478
        %5511 = vst [vmem:[%s190 + $0x84] sm:$0xf] %v5479
        %5512 = vst [vmem:[%s190 + $0x88] sm:$0xf] %v5480
        %5513 = vst [vmem:[%s190 + $0x8c] sm:$0xf] %v5481
        %5514 = vst [vmem:[%s190 + $0x90] sm:$0xf] %v5482
        %5515 = vst [vmem:[%s190 + $0x94] sm:$0xf] %v5483
        %5516 = vst [vmem:[%s190 + $0x98] sm:$0xf] %v5484
        %5517 = vst [vmem:[%s190 + $0x9c] sm:$0xf] %v5485
        %5518 = vst [vmem:[%s190 + $0xa0] sm:$0xf] %v5486
        %5519 = vst [vmem:[%s190 + $0xa4] sm:$0xf] %v5487
        %5520 = vst [vmem:[%s190 + $0xa8] sm:$0xf] %v5488
        %5521 = vst [vmem:[%s190 + $0xac] sm:$0xf] %v5489
        %5522 = vst [vmem:[%s190 + $0xb0] sm:$0xf] %v5490
        %5523 = vst [vmem:[%s190 + $0xb4] sm:$0xf] %v5491
        %5524 = vst [vmem:[%s190 + $0xb8] sm:$0xf] %v5492
        %5525 = vst [vmem:[%s190 + $0xbc] sm:$0xf] %v5493
        %5526 = vst [vmem:[%s190 + $0xc0] sm:$0xf] %v5494
        %5527 = vst [vmem:[%s190 + $0xc4] sm:$0xf] %v5495
        %5528 = vst [vmem:[%s190 + $0xc8] sm:$0xf] %v5496
        %5529 = vst [vmem:[%s190 + $0xcc] sm:$0xf] %v5497
        %5530 = vst [vmem:[%s190 + $0xd0] sm:$0xf] %v5498
        %5531 = vst [vmem:[%s190 + $0xd4] sm:$0xf] %v5499
        %5532 = vst [vmem:[%s190 + $0xd8] sm:$0xf] %v5500
        %5533 = vst [vmem:[%s190 + $0xdc] sm:$0xf] %v5501
        %5534 = vst [vmem:[%s190 + $0xe0] sm:$0xf] %v5502
        %5535 = vst [vmem:[%s190 + $0xe4] sm:$0xf] %v5503
        %5536 = vst [vmem:[%s190 + $0xe8] sm:$0xf] %v5504
        %5537 = vst [vmem:[%s190 + $0xec] sm:$0xf] %v5505
        %5538 = vst [vmem:[%s190 + $0xf0] sm:$0xf] %v5506
        %5539 = vst [vmem:[%s190 + $0xf4] sm:$0xf] %v5507
        %5540 = vst [vmem:[%s190 + $0xf8] sm:$0xf] %v5508
        %5541 = vst [vmem:[%s190 + $0xfc] sm:$0xf] %v5509
        %v5542 = vld [vmem:[%s195 + $0x100] sm:$0xf]
        %v5543 = vld [vmem:[%s195 + $0x104] sm:$0xf]
        %v5544 = vld [vmem:[%s195 + $0x108] sm:$0xf]
        %v5545 = vld [vmem:[%s195 + $0x10c] sm:$0xf]
        %v5546 = vld [vmem:[%s195 + $0x110] sm:$0xf]
        %v5547 = vld [vmem:[%s195 + $0x114] sm:$0xf]
        %v5548 = vld [vmem:[%s195 + $0x118] sm:$0xf]
        %v5549 = vld [vmem:[%s195 + $0x11c] sm:$0xf]
        %v5550 = vld [vmem:[%s195 + $0x120] sm:$0xf]
        %v5551 = vld [vmem:[%s195 + $0x124] sm:$0xf]
        %v5552 = vld [vmem:[%s195 + $0x128] sm:$0xf]
        %v5553 = vld [vmem:[%s195 + $0x12c] sm:$0xf]
        %v5554 = vld [vmem:[%s195 + $0x130] sm:$0xf]
        %v5555 = vld [vmem:[%s195 + $0x134] sm:$0xf]
        %v5556 = vld [vmem:[%s195 + $0x138] sm:$0xf]
        %v5557 = vld [vmem:[%s195 + $0x13c] sm:$0xf]
        %v5558 = vld [vmem:[%s195 + $0x140] sm:$0xf]
        %v5559 = vld [vmem:[%s195 + $0x144] sm:$0xf]
        %v5560 = vld [vmem:[%s195 + $0x148] sm:$0xf]
        %v5561 = vld [vmem:[%s195 + $0x14c] sm:$0xf]
        %v5562 = vld [vmem:[%s195 + $0x150] sm:$0xf]
        %v5563 = vld [vmem:[%s195 + $0x154] sm:$0xf]
        %v5564 = vld [vmem:[%s195 + $0x158] sm:$0xf]
        %v5565 = vld [vmem:[%s195 + $0x15c] sm:$0xf]
        %v5566 = vld [vmem:[%s195 + $0x160] sm:$0xf]
        %v5567 = vld [vmem:[%s195 + $0x164] sm:$0xf]
        %v5568 = vld [vmem:[%s195 + $0x168] sm:$0xf]
        %v5569 = vld [vmem:[%s195 + $0x16c] sm:$0xf]
        %v5570 = vld [vmem:[%s195 + $0x170] sm:$0xf]
        %v5571 = vld [vmem:[%s195 + $0x174] sm:$0xf]
        %v5572 = vld [vmem:[%s195 + $0x178] sm:$0xf]
        %v5573 = vld [vmem:[%s195 + $0x17c] sm:$0xf]
        %v5574 = vld [vmem:[%s1] sm:$0x3]
        %v5575 = vld [vmem:[%s232 + $0x100] sm:$0xf]
        %v5576 = vld [vmem:[%s232 + $0x104] sm:$0xf]
        %v5577 = vld [vmem:[%s232 + $0x108] sm:$0xf]
        %v5578 = vld [vmem:[%s232 + $0x10c] sm:$0xf]
        %v5579 = vld [vmem:[%s232 + $0x110] sm:$0xf]
        %v5580 = vld [vmem:[%s232 + $0x114] sm:$0xf]
        %v5581 = vld [vmem:[%s232 + $0x118] sm:$0xf]
        %v5582 = vld [vmem:[%s232 + $0x11c] sm:$0xf]
        %v5583 = vld [vmem:[%s232 + $0x120] sm:$0xf]
        %v5584 = vld [vmem:[%s232 + $0x124] sm:$0xf]
        %v5585 = vld [vmem:[%s232 + $0x128] sm:$0xf]
        %v5586 = vld [vmem:[%s232 + $0x12c] sm:$0xf]
        %v5587 = vld [vmem:[%s232 + $0x130] sm:$0xf]
        %v5588 = vld [vmem:[%s232 + $0x134] sm:$0xf]
        %v5589 = vld [vmem:[%s232 + $0x138] sm:$0xf]
        %v5590 = vld [vmem:[%s232 + $0x13c] sm:$0xf]
        %v5591 = vld [vmem:[%s232 + $0x140] sm:$0xf]
        %v5592 = vld [vmem:[%s232 + $0x144] sm:$0xf]
        %v5593 = vld [vmem:[%s232 + $0x148] sm:$0xf]
        %v5594 = vld [vmem:[%s232 + $0x14c] sm:$0xf]
        %v5595 = vld [vmem:[%s232 + $0x150] sm:$0xf]
        %v5596 = vld [vmem:[%s232 + $0x154] sm:$0xf]
        %v5597 = vld [vmem:[%s232 + $0x158] sm:$0xf]
        %v5598 = vld [vmem:[%s232 + $0x15c] sm:$0xf]
        %v5599 = vld [vmem:[%s232 + $0x160] sm:$0xf]
        %v5600 = vld [vmem:[%s232 + $0x164] sm:$0xf]
        %v5601 = vld [vmem:[%s232 + $0x168] sm:$0xf]
        %v5602 = vld [vmem:[%s232 + $0x16c] sm:$0xf]
        %v5603 = vld [vmem:[%s232 + $0x170] sm:$0xf]
        %v5604 = vld [vmem:[%s232 + $0x174] sm:$0xf]
        %v5605 = vld [vmem:[%s232 + $0x178] sm:$0xf]
        %v5606 = vld [vmem:[%s232 + $0x17c] sm:$0xf]
        %v5607 = vld [vmem:[%s265] sm:$0x3]
        %v5640 = vunpack.c.l.b16 %v5575
        %v5641 = vunpack.c.l.b16 %v5576
        %v5642 = vunpack.c.l.b16 %v5577
        %v5643 = vunpack.c.l.b16 %v5578
        %v5644 = vunpack.c.l.b16 %v5579
        %v5645 = vunpack.c.l.b16 %v5580
        %v5646 = vunpack.c.l.b16 %v5581
        %v5647 = vunpack.c.l.b16 %v5582
        %v5648 = vunpack.c.l.b16 %v5583
        %v5649 = vunpack.c.l.b16 %v5584
        %v5650 = vunpack.c.l.b16 %v5585
        %v5651 = vunpack.c.l.b16 %v5586
        %v5652 = vunpack.c.l.b16 %v5587
        %v5653 = vunpack.c.l.b16 %v5588
        %v5654 = vunpack.c.l.b16 %v5589
        %v5655 = vunpack.c.l.b16 %v5590
        %v5656 = vunpack.c.l.b16 %v5591
        %v5657 = vunpack.c.l.b16 %v5592
        %v5658 = vunpack.c.l.b16 %v5593
        %v5659 = vunpack.c.l.b16 %v5594
        %v5660 = vunpack.c.l.b16 %v5595
        %v5661 = vunpack.c.l.b16 %v5596
        %v5662 = vunpack.c.l.b16 %v5597
        %v5663 = vunpack.c.l.b16 %v5598
        %v5664 = vunpack.c.l.b16 %v5599
        %v5665 = vunpack.c.l.b16 %v5600
        %v5666 = vunpack.c.l.b16 %v5601
        %v5667 = vunpack.c.l.b16 %v5602
        %v5668 = vunpack.c.l.b16 %v5603
        %v5669 = vunpack.c.l.b16 %v5604
        %v5670 = vunpack.c.l.b16 %v5605
        %v5671 = vunpack.c.l.b16 %v5606
        %v5672 = vpack.c.b16 %v5641, %v5640
        %v5673 = vpack.c.b16 %v5643, %v5642
        %v5674 = vpack.c.b16 %v5645, %v5644
        %v5675 = vpack.c.b16 %v5647, %v5646
        %v5676 = vpack.c.b16 %v5649, %v5648
        %v5677 = vpack.c.b16 %v5651, %v5650
        %v5678 = vpack.c.b16 %v5653, %v5652
        %v5679 = vpack.c.b16 %v5655, %v5654
        %v5680 = vpack.c.b16 %v5657, %v5656
        %v5681 = vpack.c.b16 %v5659, %v5658
        %v5682 = vpack.c.b16 %v5661, %v5660
        %v5683 = vpack.c.b16 %v5663, %v5662
        %v5684 = vpack.c.b16 %v5665, %v5664
        %v5685 = vpack.c.b16 %v5667, %v5666
        %v5686 = vpack.c.b16 %v5669, %v5668
        %v5687 = vpack.c.b16 %v5671, %v5670
        %v5689 = vsel %vm347, %v5672, 0
        %v5692 = vsel %vm347, %v5673, 0
        %v5695 = vsel %vm347, %v5674, 0
        %v5698 = vsel %vm347, %v5675, 0
        %v5701 = vsel %vm347, %v5676, 0
        %v5704 = vsel %vm347, %v5677, 0
        %v5707 = vsel %vm347, %v5678, 0
        %v5710 = vsel %vm347, %v5679, 0
        %v5713 = vsel %vm347, %v5680, 0
        %v5716 = vsel %vm347, %v5681, 0
        %v5719 = vsel %vm347, %v5682, 0
        %v5722 = vsel %vm347, %v5683, 0
        %v5725 = vsel %vm347, %v5684, 0
        %v5728 = vsel %vm347, %v5685, 0
        %v5731 = vsel %vm347, %v5686, 0
        %v5734 = vsel %vm347, %v5687, 0
        %v5737 = vand.u32 %v5607, %v399
        %5739 = vmatpush.bf16.msra.mxu0 0
        %5740 = vmatpush.bf16.msra.mxu0 0
        %5741 = vmatpush.bf16.msra.mxu0 0
        %5742 = vmatpush.bf16.msra.mxu0 0
        %5743 = vmatpush.bf16.msra.mxu0 0
        %5744 = vmatpush.bf16.msra.mxu0 0
        %5745 = vmatpush.bf16.msra.mxu0 0
        %5746 = vmatpush.bf16.msra.mxu0 %v5737
        %5747 = vmatmul.bf16.gmra.mxu0 %v5689
        %v5748 = vpop.f32.mrf.mxu0
        %v5749 = vadd.f32 0.0, %v5748
        %v5750 = vpop.f32.mrf.mxu0
        %v5751 = vadd.f32 0.0, %v5750
        %5752 = vmatmul.bf16.gmra.mxu0 %v5692
        %v5753 = vpop.f32.mrf.mxu0
        %v5754 = vadd.f32 0.0, %v5753
        %v5755 = vpop.f32.mrf.mxu0
        %v5756 = vadd.f32 0.0, %v5755
        %5757 = vmatmul.bf16.gmra.mxu0 %v5695
        %v5758 = vpop.f32.mrf.mxu0
        %v5759 = vadd.f32 0.0, %v5758
        %v5760 = vpop.f32.mrf.mxu0
        %v5761 = vadd.f32 0.0, %v5760
        %5762 = vmatmul.bf16.gmra.mxu0 %v5698
        %v5763 = vpop.f32.mrf.mxu0
        %v5764 = vadd.f32 0.0, %v5763
        %v5765 = vpop.f32.mrf.mxu0
        %v5766 = vadd.f32 0.0, %v5765
        %5767 = vmatmul.bf16.gmra.mxu0 %v5701
        %v5768 = vpop.f32.mrf.mxu0
        %v5769 = vadd.f32 0.0, %v5768
        %v5770 = vpop.f32.mrf.mxu0
        %v5771 = vadd.f32 0.0, %v5770
        %5772 = vmatmul.bf16.gmra.mxu0 %v5704
        %v5773 = vpop.f32.mrf.mxu0
        %v5774 = vadd.f32 0.0, %v5773
        %v5775 = vpop.f32.mrf.mxu0
        %v5776 = vadd.f32 0.0, %v5775
        %5777 = vmatmul.bf16.gmra.mxu0 %v5707
        %v5778 = vpop.f32.mrf.mxu0
        %v5779 = vadd.f32 0.0, %v5778
        %v5780 = vpop.f32.mrf.mxu0
        %v5781 = vadd.f32 0.0, %v5780
        %5782 = vmatmul.bf16.gmra.mxu0 %v5710
        %v5783 = vpop.f32.mrf.mxu0
        %v5784 = vadd.f32 0.0, %v5783
        %v5785 = vpop.f32.mrf.mxu0
        %v5786 = vadd.f32 0.0, %v5785
        %5787 = vmatmul.bf16.gmra.mxu0 %v5713
        %v5788 = vpop.f32.mrf.mxu0
        %v5789 = vadd.f32 0.0, %v5788
        %v5790 = vpop.f32.mrf.mxu0
        %v5791 = vadd.f32 0.0, %v5790
        %5792 = vmatmul.bf16.gmra.mxu0 %v5716
        %v5793 = vpop.f32.mrf.mxu0
        %v5794 = vadd.f32 0.0, %v5793
        %v5795 = vpop.f32.mrf.mxu0
        %v5796 = vadd.f32 0.0, %v5795
        %5797 = vmatmul.bf16.gmra.mxu0 %v5719
        %v5798 = vpop.f32.mrf.mxu0
        %v5799 = vadd.f32 0.0, %v5798
        %v5800 = vpop.f32.mrf.mxu0
        %v5801 = vadd.f32 0.0, %v5800
        %5802 = vmatmul.bf16.gmra.mxu0 %v5722
        %v5803 = vpop.f32.mrf.mxu0
        %v5804 = vadd.f32 0.0, %v5803
        %v5805 = vpop.f32.mrf.mxu0
        %v5806 = vadd.f32 0.0, %v5805
        %5807 = vmatmul.bf16.gmra.mxu0 %v5725
        %v5808 = vpop.f32.mrf.mxu0
        %v5809 = vadd.f32 0.0, %v5808
        %v5810 = vpop.f32.mrf.mxu0
        %v5811 = vadd.f32 0.0, %v5810
        %5812 = vmatmul.bf16.gmra.mxu0 %v5728
        %v5813 = vpop.f32.mrf.mxu0
        %v5814 = vadd.f32 0.0, %v5813
        %v5815 = vpop.f32.mrf.mxu0
        %v5816 = vadd.f32 0.0, %v5815
        %5817 = vmatmul.bf16.gmra.mxu0 %v5731
        %v5818 = vpop.f32.mrf.mxu0
        %v5819 = vadd.f32 0.0, %v5818
        %v5820 = vpop.f32.mrf.mxu0
        %v5821 = vadd.f32 0.0, %v5820
        %5822 = vmatmul.bf16.gmra.mxu0 %v5734
        %v5823 = vpop.f32.mrf.mxu0
        %v5824 = vadd.f32 0.0, %v5823
        %v5825 = vpop.f32.mrf.mxu0
        %v5826 = vadd.f32 0.0, %v5825
        %5827 = vdwg.mxu0
        %v5860 = vunpack.c.l.b16 %v5542
        %v5861 = vunpack.c.l.b16 %v5543
        %v5862 = vunpack.c.l.b16 %v5544
        %v5863 = vunpack.c.l.b16 %v5545
        %v5864 = vunpack.c.l.b16 %v5546
        %v5865 = vunpack.c.l.b16 %v5547
        %v5866 = vunpack.c.l.b16 %v5548
        %v5867 = vunpack.c.l.b16 %v5549
        %v5868 = vunpack.c.l.b16 %v5550
        %v5869 = vunpack.c.l.b16 %v5551
        %v5870 = vunpack.c.l.b16 %v5552
        %v5871 = vunpack.c.l.b16 %v5553
        %v5872 = vunpack.c.l.b16 %v5554
        %v5873 = vunpack.c.l.b16 %v5555
        %v5874 = vunpack.c.l.b16 %v5556
        %v5875 = vunpack.c.l.b16 %v5557
        %v5876 = vunpack.c.l.b16 %v5558
        %v5877 = vunpack.c.l.b16 %v5559
        %v5878 = vunpack.c.l.b16 %v5560
        %v5879 = vunpack.c.l.b16 %v5561
        %v5880 = vunpack.c.l.b16 %v5562
        %v5881 = vunpack.c.l.b16 %v5563
        %v5882 = vunpack.c.l.b16 %v5564
        %v5883 = vunpack.c.l.b16 %v5565
        %v5884 = vunpack.c.l.b16 %v5566
        %v5885 = vunpack.c.l.b16 %v5567
        %v5886 = vunpack.c.l.b16 %v5568
        %v5887 = vunpack.c.l.b16 %v5569
        %v5888 = vunpack.c.l.b16 %v5570
        %v5889 = vunpack.c.l.b16 %v5571
        %v5890 = vunpack.c.l.b16 %v5572
        %v5891 = vunpack.c.l.b16 %v5573
        %v5892 = vpack.c.b16 %v5861, %v5860
        %v5893 = vpack.c.b16 %v5863, %v5862
        %v5894 = vpack.c.b16 %v5865, %v5864
        %v5895 = vpack.c.b16 %v5867, %v5866
        %v5896 = vpack.c.b16 %v5869, %v5868
        %v5897 = vpack.c.b16 %v5871, %v5870
        %v5898 = vpack.c.b16 %v5873, %v5872
        %v5899 = vpack.c.b16 %v5875, %v5874
        %v5900 = vpack.c.b16 %v5877, %v5876
        %v5901 = vpack.c.b16 %v5879, %v5878
        %v5902 = vpack.c.b16 %v5881, %v5880
        %v5903 = vpack.c.b16 %v5883, %v5882
        %v5904 = vpack.c.b16 %v5885, %v5884
        %v5905 = vpack.c.b16 %v5887, %v5886
        %v5906 = vpack.c.b16 %v5889, %v5888
        %v5907 = vpack.c.b16 %v5891, %v5890
        %v5909 = vsel %vm347, %v5892, 0
        %v5912 = vsel %vm347, %v5893, 0
        %v5915 = vsel %vm347, %v5894, 0
        %v5918 = vsel %vm347, %v5895, 0
        %v5921 = vsel %vm347, %v5896, 0
        %v5924 = vsel %vm347, %v5897, 0
        %v5927 = vsel %vm347, %v5898, 0
        %v5930 = vsel %vm347, %v5899, 0
        %v5933 = vsel %vm347, %v5900, 0
        %v5936 = vsel %vm347, %v5901, 0
        %v5939 = vsel %vm347, %v5902, 0
        %v5942 = vsel %vm347, %v5903, 0
        %v5945 = vsel %vm347, %v5904, 0
        %v5948 = vsel %vm347, %v5905, 0
        %v5951 = vsel %vm347, %v5906, 0
        %v5954 = vsel %vm347, %v5907, 0
        %v5957 = vand.u32 %v5574, %v399
        %5959 = vmatpush.bf16.msra.mxu0 0
        %5960 = vmatpush.bf16.msra.mxu0 0
        %5961 = vmatpush.bf16.msra.mxu0 0
        %5962 = vmatpush.bf16.msra.mxu0 0
        %5963 = vmatpush.bf16.msra.mxu0 0
        %5964 = vmatpush.bf16.msra.mxu0 0
        %5965 = vmatpush.bf16.msra.mxu0 0
        %5966 = vmatpush.bf16.msra.mxu0 %v5957
        %5967 = vmatmul.bf16.gmra.mxu0 %v5909
        %v5968 = vpop.f32.mrf.mxu0
        %v5969 = vadd.f32 %v5749, %v5968
        %v5970 = vpop.f32.mrf.mxu0
        %v5971 = vadd.f32 %v5751, %v5970
        %5972 = vmatmul.bf16.gmra.mxu0 %v5912
        %v5973 = vpop.f32.mrf.mxu0
        %v5974 = vadd.f32 %v5754, %v5973
        %v5975 = vpop.f32.mrf.mxu0
        %v5976 = vadd.f32 %v5756, %v5975
        %5977 = vmatmul.bf16.gmra.mxu0 %v5915
        %v5978 = vpop.f32.mrf.mxu0
        %v5979 = vadd.f32 %v5759, %v5978
        %v5980 = vpop.f32.mrf.mxu0
        %v5981 = vadd.f32 %v5761, %v5980
        %5982 = vmatmul.bf16.gmra.mxu0 %v5918
        %v5983 = vpop.f32.mrf.mxu0
        %v5984 = vadd.f32 %v5764, %v5983
        %v5985 = vpop.f32.mrf.mxu0
        %v5986 = vadd.f32 %v5766, %v5985
        %5987 = vmatmul.bf16.gmra.mxu0 %v5921
        %v5988 = vpop.f32.mrf.mxu0
        %v5989 = vadd.f32 %v5769, %v5988
        %v5990 = vpop.f32.mrf.mxu0
        %v5991 = vadd.f32 %v5771, %v5990
        %5992 = vmatmul.bf16.gmra.mxu0 %v5924
        %v5993 = vpop.f32.mrf.mxu0
        %v5994 = vadd.f32 %v5774, %v5993
        %v5995 = vpop.f32.mrf.mxu0
        %v5996 = vadd.f32 %v5776, %v5995
        %5997 = vmatmul.bf16.gmra.mxu0 %v5927
        %v5998 = vpop.f32.mrf.mxu0
        %v5999 = vadd.f32 %v5779, %v5998
        %v6000 = vpop.f32.mrf.mxu0
        %v6001 = vadd.f32 %v5781, %v6000
        %6002 = vmatmul.bf16.gmra.mxu0 %v5930
        %v6003 = vpop.f32.mrf.mxu0
        %v6004 = vadd.f32 %v5784, %v6003
        %v6005 = vpop.f32.mrf.mxu0
        %v6006 = vadd.f32 %v5786, %v6005
        %6007 = vmatmul.bf16.gmra.mxu0 %v5933
        %v6008 = vpop.f32.mrf.mxu0
        %v6009 = vadd.f32 %v5789, %v6008
        %v6010 = vpop.f32.mrf.mxu0
        %v6011 = vadd.f32 %v5791, %v6010
        %6012 = vmatmul.bf16.gmra.mxu0 %v5936
        %v6013 = vpop.f32.mrf.mxu0
        %v6014 = vadd.f32 %v5794, %v6013
        %v6015 = vpop.f32.mrf.mxu0
        %v6016 = vadd.f32 %v5796, %v6015
        %6017 = vmatmul.bf16.gmra.mxu0 %v5939
        %v6018 = vpop.f32.mrf.mxu0
        %v6019 = vadd.f32 %v5799, %v6018
        %v6020 = vpop.f32.mrf.mxu0
        %v6021 = vadd.f32 %v5801, %v6020
        %6022 = vmatmul.bf16.gmra.mxu0 %v5942
        %v6023 = vpop.f32.mrf.mxu0
        %v6024 = vadd.f32 %v5804, %v6023
        %v6025 = vpop.f32.mrf.mxu0
        %v6026 = vadd.f32 %v5806, %v6025
        %6027 = vmatmul.bf16.gmra.mxu0 %v5945
        %v6028 = vpop.f32.mrf.mxu0
        %v6029 = vadd.f32 %v5809, %v6028
        %v6030 = vpop.f32.mrf.mxu0
        %v6031 = vadd.f32 %v5811, %v6030
        %6032 = vmatmul.bf16.gmra.mxu0 %v5948
        %v6033 = vpop.f32.mrf.mxu0
        %v6034 = vadd.f32 %v5814, %v6033
        %v6035 = vpop.f32.mrf.mxu0
        %v6036 = vadd.f32 %v5816, %v6035
        %6037 = vmatmul.bf16.gmra.mxu0 %v5951
        %v6038 = vpop.f32.mrf.mxu0
        %v6039 = vadd.f32 %v5819, %v6038
        %v6040 = vpop.f32.mrf.mxu0
        %v6041 = vadd.f32 %v5821, %v6040
        %6042 = vmatmul.bf16.gmra.mxu0 %v5954
        %v6043 = vpop.f32.mrf.mxu0
        %v6044 = vadd.f32 %v5824, %v6043
        %v6045 = vpop.f32.mrf.mxu0
        %v6046 = vadd.f32 %v5826, %v6045
        %6047 = vdwg.mxu0
        %v6048 = vld [vmem:[%s712 + $0x100] sm:$0xf]
        %v6049 = vld [vmem:[%s712 + $0x104] sm:$0xf]
        %v6050 = vld [vmem:[%s712 + $0x108] sm:$0xf]
        %v6051 = vld [vmem:[%s712 + $0x10c] sm:$0xf]
        %v6052 = vld [vmem:[%s712 + $0x110] sm:$0xf]
        %v6053 = vld [vmem:[%s712 + $0x114] sm:$0xf]
        %v6054 = vld [vmem:[%s712 + $0x118] sm:$0xf]
        %v6055 = vld [vmem:[%s712 + $0x11c] sm:$0xf]
        %v6056 = vld [vmem:[%s712 + $0x120] sm:$0xf]
        %v6057 = vld [vmem:[%s712 + $0x124] sm:$0xf]
        %v6058 = vld [vmem:[%s712 + $0x128] sm:$0xf]
        %v6059 = vld [vmem:[%s712 + $0x12c] sm:$0xf]
        %v6060 = vld [vmem:[%s712 + $0x130] sm:$0xf]
        %v6061 = vld [vmem:[%s712 + $0x134] sm:$0xf]
        %v6062 = vld [vmem:[%s712 + $0x138] sm:$0xf]
        %v6063 = vld [vmem:[%s712 + $0x13c] sm:$0xf]
        %v6064 = vld [vmem:[%s712 + $0x140] sm:$0xf]
        %v6065 = vld [vmem:[%s712 + $0x144] sm:$0xf]
        %v6066 = vld [vmem:[%s712 + $0x148] sm:$0xf]
        %v6067 = vld [vmem:[%s712 + $0x14c] sm:$0xf]
        %v6068 = vld [vmem:[%s712 + $0x150] sm:$0xf]
        %v6069 = vld [vmem:[%s712 + $0x154] sm:$0xf]
        %v6070 = vld [vmem:[%s712 + $0x158] sm:$0xf]
        %v6071 = vld [vmem:[%s712 + $0x15c] sm:$0xf]
        %v6072 = vld [vmem:[%s712 + $0x160] sm:$0xf]
        %v6073 = vld [vmem:[%s712 + $0x164] sm:$0xf]
        %v6074 = vld [vmem:[%s712 + $0x168] sm:$0xf]
        %v6075 = vld [vmem:[%s712 + $0x16c] sm:$0xf]
        %v6076 = vld [vmem:[%s712 + $0x170] sm:$0xf]
        %v6077 = vld [vmem:[%s712 + $0x174] sm:$0xf]
        %v6078 = vld [vmem:[%s712 + $0x178] sm:$0xf]
        %v6079 = vld [vmem:[%s712 + $0x17c] sm:$0xf]
        %v6080 = vld [vmem:[%s745] sm:$0x3]
        %v6113 = vunpack.c.l.b16 %v6048
        %v6114 = vunpack.c.l.b16 %v6049
        %v6115 = vunpack.c.l.b16 %v6050
        %v6116 = vunpack.c.l.b16 %v6051
        %v6117 = vunpack.c.l.b16 %v6052
        %v6118 = vunpack.c.l.b16 %v6053
        %v6119 = vunpack.c.l.b16 %v6054
        %v6120 = vunpack.c.l.b16 %v6055
        %v6121 = vunpack.c.l.b16 %v6056
        %v6122 = vunpack.c.l.b16 %v6057
        %v6123 = vunpack.c.l.b16 %v6058
        %v6124 = vunpack.c.l.b16 %v6059
        %v6125 = vunpack.c.l.b16 %v6060
        %v6126 = vunpack.c.l.b16 %v6061
        %v6127 = vunpack.c.l.b16 %v6062
        %v6128 = vunpack.c.l.b16 %v6063
        %v6129 = vunpack.c.l.b16 %v6064
        %v6130 = vunpack.c.l.b16 %v6065
        %v6131 = vunpack.c.l.b16 %v6066
        %v6132 = vunpack.c.l.b16 %v6067
        %v6133 = vunpack.c.l.b16 %v6068
        %v6134 = vunpack.c.l.b16 %v6069
        %v6135 = vunpack.c.l.b16 %v6070
        %v6136 = vunpack.c.l.b16 %v6071
        %v6137 = vunpack.c.l.b16 %v6072
        %v6138 = vunpack.c.l.b16 %v6073
        %v6139 = vunpack.c.l.b16 %v6074
        %v6140 = vunpack.c.l.b16 %v6075
        %v6141 = vunpack.c.l.b16 %v6076
        %v6142 = vunpack.c.l.b16 %v6077
        %v6143 = vunpack.c.l.b16 %v6078
        %v6144 = vunpack.c.l.b16 %v6079
        %v6145 = vpack.c.b16 %v6114, %v6113
        %v6146 = vpack.c.b16 %v6116, %v6115
        %v6147 = vpack.c.b16 %v6118, %v6117
        %v6148 = vpack.c.b16 %v6120, %v6119
        %v6149 = vpack.c.b16 %v6122, %v6121
        %v6150 = vpack.c.b16 %v6124, %v6123
        %v6151 = vpack.c.b16 %v6126, %v6125
        %v6152 = vpack.c.b16 %v6128, %v6127
        %v6153 = vpack.c.b16 %v6130, %v6129
        %v6154 = vpack.c.b16 %v6132, %v6131
        %v6155 = vpack.c.b16 %v6134, %v6133
        %v6156 = vpack.c.b16 %v6136, %v6135
        %v6157 = vpack.c.b16 %v6138, %v6137
        %v6158 = vpack.c.b16 %v6140, %v6139
        %v6159 = vpack.c.b16 %v6142, %v6141
        %v6160 = vpack.c.b16 %v6144, %v6143
        %v6162 = vsel %vm347, %v6145, 0
        %v6165 = vsel %vm347, %v6146, 0
        %v6168 = vsel %vm347, %v6147, 0
        %v6171 = vsel %vm347, %v6148, 0
        %v6174 = vsel %vm347, %v6149, 0
        %v6177 = vsel %vm347, %v6150, 0
        %v6180 = vsel %vm347, %v6151, 0
        %v6183 = vsel %vm347, %v6152, 0
        %v6186 = vsel %vm347, %v6153, 0
        %v6189 = vsel %vm347, %v6154, 0
        %v6192 = vsel %vm347, %v6155, 0
        %v6195 = vsel %vm347, %v6156, 0
        %v6198 = vsel %vm347, %v6157, 0
        %v6201 = vsel %vm347, %v6158, 0
        %v6204 = vsel %vm347, %v6159, 0
        %v6207 = vsel %vm347, %v6160, 0
        %v6210 = vand.u32 %v6080, %v399
        %6212 = vmatpush.bf16.msra.mxu0 0
        %6213 = vmatpush.bf16.msra.mxu0 0
        %6214 = vmatpush.bf16.msra.mxu0 0
        %6215 = vmatpush.bf16.msra.mxu0 0
        %6216 = vmatpush.bf16.msra.mxu0 0
        %6217 = vmatpush.bf16.msra.mxu0 0
        %6218 = vmatpush.bf16.msra.mxu0 0
        %6219 = vmatpush.bf16.msra.mxu0 %v6210
        %6220 = vmatmul.bf16.gmra.mxu0 %v6162
        %v6221 = vpop.f32.mrf.mxu0
        %v6222 = vadd.f32 0.0, %v6221
        %v6223 = vpop.f32.mrf.mxu0
        %v6224 = vadd.f32 0.0, %v6223
        %6225 = vmatmul.bf16.gmra.mxu0 %v6165
        %v6226 = vpop.f32.mrf.mxu0
        %v6227 = vadd.f32 0.0, %v6226
        %v6228 = vpop.f32.mrf.mxu0
        %v6229 = vadd.f32 0.0, %v6228
        %6230 = vmatmul.bf16.gmra.mxu0 %v6168
        %v6231 = vpop.f32.mrf.mxu0
        %v6232 = vadd.f32 0.0, %v6231
        %v6233 = vpop.f32.mrf.mxu0
        %v6234 = vadd.f32 0.0, %v6233
        %6235 = vmatmul.bf16.gmra.mxu0 %v6171
        %v6236 = vpop.f32.mrf.mxu0
        %v6237 = vadd.f32 0.0, %v6236
        %v6238 = vpop.f32.mrf.mxu0
        %v6239 = vadd.f32 0.0, %v6238
        %6240 = vmatmul.bf16.gmra.mxu0 %v6174
        %v6241 = vpop.f32.mrf.mxu0
        %v6242 = vadd.f32 0.0, %v6241
        %v6243 = vpop.f32.mrf.mxu0
        %v6244 = vadd.f32 0.0, %v6243
        %6245 = vmatmul.bf16.gmra.mxu0 %v6177
        %v6246 = vpop.f32.mrf.mxu0
        %v6247 = vadd.f32 0.0, %v6246
        %v6248 = vpop.f32.mrf.mxu0
        %v6249 = vadd.f32 0.0, %v6248
        %6250 = vmatmul.bf16.gmra.mxu0 %v6180
        %v6251 = vpop.f32.mrf.mxu0
        %v6252 = vadd.f32 0.0, %v6251
        %v6253 = vpop.f32.mrf.mxu0
        %v6254 = vadd.f32 0.0, %v6253
        %6255 = vmatmul.bf16.gmra.mxu0 %v6183
        %v6256 = vpop.f32.mrf.mxu0
        %v6257 = vadd.f32 0.0, %v6256
        %v6258 = vpop.f32.mrf.mxu0
        %v6259 = vadd.f32 0.0, %v6258
        %6260 = vmatmul.bf16.gmra.mxu0 %v6186
        %v6261 = vpop.f32.mrf.mxu0
        %v6262 = vadd.f32 0.0, %v6261
        %v6263 = vpop.f32.mrf.mxu0
        %v6264 = vadd.f32 0.0, %v6263
        %6265 = vmatmul.bf16.gmra.mxu0 %v6189
        %v6266 = vpop.f32.mrf.mxu0
        %v6267 = vadd.f32 0.0, %v6266
        %v6268 = vpop.f32.mrf.mxu0
        %v6269 = vadd.f32 0.0, %v6268
        %6270 = vmatmul.bf16.gmra.mxu0 %v6192
        %v6271 = vpop.f32.mrf.mxu0
        %v6272 = vadd.f32 0.0, %v6271
        %v6273 = vpop.f32.mrf.mxu0
        %v6274 = vadd.f32 0.0, %v6273
        %6275 = vmatmul.bf16.gmra.mxu0 %v6195
        %v6276 = vpop.f32.mrf.mxu0
        %v6277 = vadd.f32 0.0, %v6276
        %v6278 = vpop.f32.mrf.mxu0
        %v6279 = vadd.f32 0.0, %v6278
        %6280 = vmatmul.bf16.gmra.mxu0 %v6198
        %v6281 = vpop.f32.mrf.mxu0
        %v6282 = vadd.f32 0.0, %v6281
        %v6283 = vpop.f32.mrf.mxu0
        %v6284 = vadd.f32 0.0, %v6283
        %6285 = vmatmul.bf16.gmra.mxu0 %v6201
        %v6286 = vpop.f32.mrf.mxu0
        %v6287 = vadd.f32 0.0, %v6286
        %v6288 = vpop.f32.mrf.mxu0
        %v6289 = vadd.f32 0.0, %v6288
        %6290 = vmatmul.bf16.gmra.mxu0 %v6204
        %v6291 = vpop.f32.mrf.mxu0
        %v6292 = vadd.f32 0.0, %v6291
        %v6293 = vpop.f32.mrf.mxu0
        %v6294 = vadd.f32 0.0, %v6293
        %6295 = vmatmul.bf16.gmra.mxu0 %v6207
        %v6296 = vpop.f32.mrf.mxu0
        %v6297 = vadd.f32 0.0, %v6296
        %v6298 = vpop.f32.mrf.mxu0
        %v6299 = vadd.f32 0.0, %v6298
        %6300 = vdwg.mxu0
        %v6301 = vadd.f32 %v5969, %v6222
        %v6302 = vadd.f32 %v5971, %v6224
        %v6303 = vadd.f32 %v5974, %v6227
        %v6304 = vadd.f32 %v5976, %v6229
        %v6305 = vadd.f32 %v5979, %v6232
        %v6306 = vadd.f32 %v5981, %v6234
        %v6307 = vadd.f32 %v5984, %v6237
        %v6308 = vadd.f32 %v5986, %v6239
        %v6309 = vadd.f32 %v5989, %v6242
        %v6310 = vadd.f32 %v5991, %v6244
        %v6311 = vadd.f32 %v5994, %v6247
        %v6312 = vadd.f32 %v5996, %v6249
        %v6313 = vadd.f32 %v5999, %v6252
        %v6314 = vadd.f32 %v6001, %v6254
        %v6315 = vadd.f32 %v6004, %v6257
        %v6316 = vadd.f32 %v6006, %v6259
        %v6317 = vadd.f32 %v6009, %v6262
        %v6318 = vadd.f32 %v6011, %v6264
        %v6319 = vadd.f32 %v6014, %v6267
        %v6320 = vadd.f32 %v6016, %v6269
        %v6321 = vadd.f32 %v6019, %v6272
        %v6322 = vadd.f32 %v6021, %v6274
        %v6323 = vadd.f32 %v6024, %v6277
        %v6324 = vadd.f32 %v6026, %v6279
        %v6325 = vadd.f32 %v6029, %v6282
        %v6326 = vadd.f32 %v6031, %v6284
        %v6327 = vadd.f32 %v6034, %v6287
        %v6328 = vadd.f32 %v6036, %v6289
        %v6329 = vadd.f32 %v6039, %v6292
        %v6330 = vadd.f32 %v6041, %v6294
        %v6331 = vadd.f32 %v6044, %v6297
        %v6332 = vadd.f32 %v6046, %v6299
        %v6333 = vld [vmem:[%s195 + $0x110] sm:$0xf]
        %v6334 = vld [vmem:[%s195 + $0x114] sm:$0xf]
        %v6335 = vld [vmem:[%s195 + $0x118] sm:$0xf]
        %v6336 = vld [vmem:[%s195 + $0x11c] sm:$0xf]
        %v6337 = vld [vmem:[%s195 + $0x120] sm:$0xf]
        %v6338 = vld [vmem:[%s195 + $0x124] sm:$0xf]
        %v6339 = vld [vmem:[%s195 + $0x128] sm:$0xf]
        %v6340 = vld [vmem:[%s195 + $0x12c] sm:$0xf]
        %v6341 = vld [vmem:[%s195 + $0x130] sm:$0xf]
        %v6342 = vld [vmem:[%s195 + $0x134] sm:$0xf]
        %v6343 = vld [vmem:[%s195 + $0x138] sm:$0xf]
        %v6344 = vld [vmem:[%s195 + $0x13c] sm:$0xf]
        %v6345 = vld [vmem:[%s195 + $0x140] sm:$0xf]
        %v6346 = vld [vmem:[%s195 + $0x144] sm:$0xf]
        %v6347 = vld [vmem:[%s195 + $0x148] sm:$0xf]
        %v6348 = vld [vmem:[%s195 + $0x14c] sm:$0xf]
        %v6349 = vld [vmem:[%s195 + $0x150] sm:$0xf]
        %v6350 = vld [vmem:[%s195 + $0x154] sm:$0xf]
        %v6351 = vld [vmem:[%s195 + $0x158] sm:$0xf]
        %v6352 = vld [vmem:[%s195 + $0x15c] sm:$0xf]
        %v6353 = vld [vmem:[%s195 + $0x160] sm:$0xf]
        %v6354 = vld [vmem:[%s195 + $0x164] sm:$0xf]
        %v6355 = vld [vmem:[%s195 + $0x168] sm:$0xf]
        %v6356 = vld [vmem:[%s195 + $0x16c] sm:$0xf]
        %v6357 = vld [vmem:[%s195 + $0x170] sm:$0xf]
        %v6358 = vld [vmem:[%s195 + $0x174] sm:$0xf]
        %v6359 = vld [vmem:[%s195 + $0x178] sm:$0xf]
        %v6360 = vld [vmem:[%s195 + $0x17c] sm:$0xf]
        %v6361 = vld [vmem:[%s195 + $0x180] sm:$0xf]
        %v6362 = vld [vmem:[%s195 + $0x184] sm:$0xf]
        %v6363 = vld [vmem:[%s195 + $0x188] sm:$0xf]
        %v6364 = vld [vmem:[%s195 + $0x18c] sm:$0xf]
        %v6365 = vld [vmem:[%s1031] sm:$0x3]
        %v6398 = vunpack.c.l.b16 %v6333
        %v6399 = vunpack.c.l.b16 %v6334
        %v6400 = vunpack.c.l.b16 %v6335
        %v6401 = vunpack.c.l.b16 %v6336
        %v6402 = vunpack.c.l.b16 %v6337
        %v6403 = vunpack.c.l.b16 %v6338
        %v6404 = vunpack.c.l.b16 %v6339
        %v6405 = vunpack.c.l.b16 %v6340
        %v6406 = vunpack.c.l.b16 %v6341
        %v6407 = vunpack.c.l.b16 %v6342
        %v6408 = vunpack.c.l.b16 %v6343
        %v6409 = vunpack.c.l.b16 %v6344
        %v6410 = vunpack.c.l.b16 %v6345
        %v6411 = vunpack.c.l.b16 %v6346
        %v6412 = vunpack.c.l.b16 %v6347
        %v6413 = vunpack.c.l.b16 %v6348
        %v6414 = vunpack.c.l.b16 %v6349
        %v6415 = vunpack.c.l.b16 %v6350
        %v6416 = vunpack.c.l.b16 %v6351
        %v6417 = vunpack.c.l.b16 %v6352
        %v6418 = vunpack.c.l.b16 %v6353
        %v6419 = vunpack.c.l.b16 %v6354
        %v6420 = vunpack.c.l.b16 %v6355
        %v6421 = vunpack.c.l.b16 %v6356
        %v6422 = vunpack.c.l.b16 %v6357
        %v6423 = vunpack.c.l.b16 %v6358
        %v6424 = vunpack.c.l.b16 %v6359
        %v6425 = vunpack.c.l.b16 %v6360
        %v6426 = vunpack.c.l.b16 %v6361
        %v6427 = vunpack.c.l.b16 %v6362
        %v6428 = vunpack.c.l.b16 %v6363
        %v6429 = vunpack.c.l.b16 %v6364
        %v6430 = vpack.c.b16 %v6399, %v6398
        %v6431 = vpack.c.b16 %v6401, %v6400
        %v6432 = vpack.c.b16 %v6403, %v6402
        %v6433 = vpack.c.b16 %v6405, %v6404
        %v6434 = vpack.c.b16 %v6407, %v6406
        %v6435 = vpack.c.b16 %v6409, %v6408
        %v6436 = vpack.c.b16 %v6411, %v6410
        %v6437 = vpack.c.b16 %v6413, %v6412
        %v6438 = vpack.c.b16 %v6415, %v6414
        %v6439 = vpack.c.b16 %v6417, %v6416
        %v6440 = vpack.c.b16 %v6419, %v6418
        %v6441 = vpack.c.b16 %v6421, %v6420
        %v6442 = vpack.c.b16 %v6423, %v6422
        %v6443 = vpack.c.b16 %v6425, %v6424
        %v6444 = vpack.c.b16 %v6427, %v6426
        %v6445 = vpack.c.b16 %v6429, %v6428
        %v6447 = vsel %vm347, %v6430, 0
        %v6450 = vsel %vm347, %v6431, 0
        %v6453 = vsel %vm347, %v6432, 0
        %v6456 = vsel %vm347, %v6433, 0
        %v6459 = vsel %vm347, %v6434, 0
        %v6462 = vsel %vm347, %v6435, 0
        %v6465 = vsel %vm347, %v6436, 0
        %v6468 = vsel %vm347, %v6437, 0
        %v6471 = vsel %vm347, %v6438, 0
        %v6474 = vsel %vm347, %v6439, 0
        %v6477 = vsel %vm347, %v6440, 0
        %v6480 = vsel %vm347, %v6441, 0
        %v6483 = vsel %vm347, %v6442, 0
        %v6486 = vsel %vm347, %v6443, 0
        %v6489 = vsel %vm347, %v6444, 0
        %v6492 = vsel %vm347, %v6445, 0
        %v6495 = vand.u32 %v6365, %v399
        %6497 = vmatpush.bf16.msra.mxu0 0
        %6498 = vmatpush.bf16.msra.mxu0 0
        %6499 = vmatpush.bf16.msra.mxu0 0
        %6500 = vmatpush.bf16.msra.mxu0 0
        %6501 = vmatpush.bf16.msra.mxu0 0
        %6502 = vmatpush.bf16.msra.mxu0 0
        %6503 = vmatpush.bf16.msra.mxu0 0
        %6504 = vmatpush.bf16.msra.mxu0 %v6495
        %6505 = vmatmul.bf16.gmra.mxu0 %v6447
        %v6506 = vpop.f32.mrf.mxu0
        %v6507 = vadd.f32 0.0, %v6506
        %v6508 = vpop.f32.mrf.mxu0
        %v6509 = vadd.f32 0.0, %v6508
        %6510 = vmatmul.bf16.gmra.mxu0 %v6450
        %v6511 = vpop.f32.mrf.mxu0
        %v6512 = vadd.f32 0.0, %v6511
        %v6513 = vpop.f32.mrf.mxu0
        %v6514 = vadd.f32 0.0, %v6513
        %6515 = vmatmul.bf16.gmra.mxu0 %v6453
        %v6516 = vpop.f32.mrf.mxu0
        %v6517 = vadd.f32 0.0, %v6516
        %v6518 = vpop.f32.mrf.mxu0
        %v6519 = vadd.f32 0.0, %v6518
        %6520 = vmatmul.bf16.gmra.mxu0 %v6456
        %v6521 = vpop.f32.mrf.mxu0
        %v6522 = vadd.f32 0.0, %v6521
        %v6523 = vpop.f32.mrf.mxu0
        %v6524 = vadd.f32 0.0, %v6523
        %6525 = vmatmul.bf16.gmra.mxu0 %v6459
        %v6526 = vpop.f32.mrf.mxu0
        %v6527 = vadd.f32 0.0, %v6526
        %v6528 = vpop.f32.mrf.mxu0
        %v6529 = vadd.f32 0.0, %v6528
        %6530 = vmatmul.bf16.gmra.mxu0 %v6462
        %v6531 = vpop.f32.mrf.mxu0
        %v6532 = vadd.f32 0.0, %v6531
        %v6533 = vpop.f32.mrf.mxu0
        %v6534 = vadd.f32 0.0, %v6533
        %6535 = vmatmul.bf16.gmra.mxu0 %v6465
        %v6536 = vpop.f32.mrf.mxu0
        %v6537 = vadd.f32 0.0, %v6536
        %v6538 = vpop.f32.mrf.mxu0
        %v6539 = vadd.f32 0.0, %v6538
        %6540 = vmatmul.bf16.gmra.mxu0 %v6468
        %v6541 = vpop.f32.mrf.mxu0
        %v6542 = vadd.f32 0.0, %v6541
        %v6543 = vpop.f32.mrf.mxu0
        %v6544 = vadd.f32 0.0, %v6543
        %6545 = vmatmul.bf16.gmra.mxu0 %v6471
        %v6546 = vpop.f32.mrf.mxu0
        %v6547 = vadd.f32 0.0, %v6546
        %v6548 = vpop.f32.mrf.mxu0
        %v6549 = vadd.f32 0.0, %v6548
        %6550 = vmatmul.bf16.gmra.mxu0 %v6474
        %v6551 = vpop.f32.mrf.mxu0
        %v6552 = vadd.f32 0.0, %v6551
        %v6553 = vpop.f32.mrf.mxu0
        %v6554 = vadd.f32 0.0, %v6553
        %6555 = vmatmul.bf16.gmra.mxu0 %v6477
        %v6556 = vpop.f32.mrf.mxu0
        %v6557 = vadd.f32 0.0, %v6556
        %v6558 = vpop.f32.mrf.mxu0
        %v6559 = vadd.f32 0.0, %v6558
        %6560 = vmatmul.bf16.gmra.mxu0 %v6480
        %v6561 = vpop.f32.mrf.mxu0
        %v6562 = vadd.f32 0.0, %v6561
        %v6563 = vpop.f32.mrf.mxu0
        %v6564 = vadd.f32 0.0, %v6563
        %6565 = vmatmul.bf16.gmra.mxu0 %v6483
        %v6566 = vpop.f32.mrf.mxu0
        %v6567 = vadd.f32 0.0, %v6566
        %v6568 = vpop.f32.mrf.mxu0
        %v6569 = vadd.f32 0.0, %v6568
        %6570 = vmatmul.bf16.gmra.mxu0 %v6486
        %v6571 = vpop.f32.mrf.mxu0
        %v6572 = vadd.f32 0.0, %v6571
        %v6573 = vpop.f32.mrf.mxu0
        %v6574 = vadd.f32 0.0, %v6573
        %6575 = vmatmul.bf16.gmra.mxu0 %v6489
        %v6576 = vpop.f32.mrf.mxu0
        %v6577 = vadd.f32 0.0, %v6576
        %v6578 = vpop.f32.mrf.mxu0
        %v6579 = vadd.f32 0.0, %v6578
        %6580 = vmatmul.bf16.gmra.mxu0 %v6492
        %v6581 = vpop.f32.mrf.mxu0
        %v6582 = vadd.f32 0.0, %v6581
        %v6583 = vpop.f32.mrf.mxu0
        %v6584 = vadd.f32 0.0, %v6583
        %6585 = vdwg.mxu0
        %v6586 = vadd.f32 %v6301, %v6507
        %v6587 = vadd.f32 %v6302, %v6509
        %v6588 = vadd.f32 %v6303, %v6512
        %v6589 = vadd.f32 %v6304, %v6514
        %v6590 = vadd.f32 %v6305, %v6517
        %v6591 = vadd.f32 %v6306, %v6519
        %v6592 = vadd.f32 %v6307, %v6522
        %v6593 = vadd.f32 %v6308, %v6524
        %v6594 = vadd.f32 %v6309, %v6527
        %v6595 = vadd.f32 %v6310, %v6529
        %v6596 = vadd.f32 %v6311, %v6532
        %v6597 = vadd.f32 %v6312, %v6534
        %v6598 = vadd.f32 %v6313, %v6537
        %v6599 = vadd.f32 %v6314, %v6539
        %v6600 = vadd.f32 %v6315, %v6542
        %v6601 = vadd.f32 %v6316, %v6544
        %v6602 = vadd.f32 %v6317, %v6547
        %v6603 = vadd.f32 %v6318, %v6549
        %v6604 = vadd.f32 %v6319, %v6552
        %v6605 = vadd.f32 %v6320, %v6554
        %v6606 = vadd.f32 %v6321, %v6557
        %v6607 = vadd.f32 %v6322, %v6559
        %v6608 = vadd.f32 %v6323, %v6562
        %v6609 = vadd.f32 %v6324, %v6564
        %v6610 = vadd.f32 %v6325, %v6567
        %v6611 = vadd.f32 %v6326, %v6569
        %v6612 = vadd.f32 %v6327, %v6572
        %v6613 = vadd.f32 %v6328, %v6574
        %v6614 = vadd.f32 %v6329, %v6577
        %v6615 = vadd.f32 %v6330, %v6579
        %v6616 = vadd.f32 %v6331, %v6582
        %v6617 = vadd.f32 %v6332, %v6584
        %v6618 = vld [vmem:[%s232 + $0x110] sm:$0xf]
        %v6619 = vld [vmem:[%s232 + $0x114] sm:$0xf]
        %v6620 = vld [vmem:[%s232 + $0x118] sm:$0xf]
        %v6621 = vld [vmem:[%s232 + $0x11c] sm:$0xf]
        %v6622 = vld [vmem:[%s232 + $0x120] sm:$0xf]
        %v6623 = vld [vmem:[%s232 + $0x124] sm:$0xf]
        %v6624 = vld [vmem:[%s232 + $0x128] sm:$0xf]
        %v6625 = vld [vmem:[%s232 + $0x12c] sm:$0xf]
        %v6626 = vld [vmem:[%s232 + $0x130] sm:$0xf]
        %v6627 = vld [vmem:[%s232 + $0x134] sm:$0xf]
        %v6628 = vld [vmem:[%s232 + $0x138] sm:$0xf]
        %v6629 = vld [vmem:[%s232 + $0x13c] sm:$0xf]
        %v6630 = vld [vmem:[%s232 + $0x140] sm:$0xf]
        %v6631 = vld [vmem:[%s232 + $0x144] sm:$0xf]
        %v6632 = vld [vmem:[%s232 + $0x148] sm:$0xf]
        %v6633 = vld [vmem:[%s232 + $0x14c] sm:$0xf]
        %v6634 = vld [vmem:[%s232 + $0x150] sm:$0xf]
        %v6635 = vld [vmem:[%s232 + $0x154] sm:$0xf]
        %v6636 = vld [vmem:[%s232 + $0x158] sm:$0xf]
        %v6637 = vld [vmem:[%s232 + $0x15c] sm:$0xf]
        %v6638 = vld [vmem:[%s232 + $0x160] sm:$0xf]
        %v6639 = vld [vmem:[%s232 + $0x164] sm:$0xf]
        %v6640 = vld [vmem:[%s232 + $0x168] sm:$0xf]
        %v6641 = vld [vmem:[%s232 + $0x16c] sm:$0xf]
        %v6642 = vld [vmem:[%s232 + $0x170] sm:$0xf]
        %v6643 = vld [vmem:[%s232 + $0x174] sm:$0xf]
        %v6644 = vld [vmem:[%s232 + $0x178] sm:$0xf]
        %v6645 = vld [vmem:[%s232 + $0x17c] sm:$0xf]
        %v6646 = vld [vmem:[%s232 + $0x180] sm:$0xf]
        %v6647 = vld [vmem:[%s232 + $0x184] sm:$0xf]
        %v6648 = vld [vmem:[%s232 + $0x188] sm:$0xf]
        %v6649 = vld [vmem:[%s232 + $0x18c] sm:$0xf]
        %v6650 = vld [vmem:[%s1317] sm:$0x3]
        %v6683 = vunpack.c.l.b16 %v6618
        %v6684 = vunpack.c.l.b16 %v6619
        %v6685 = vunpack.c.l.b16 %v6620
        %v6686 = vunpack.c.l.b16 %v6621
        %v6687 = vunpack.c.l.b16 %v6622
        %v6688 = vunpack.c.l.b16 %v6623
        %v6689 = vunpack.c.l.b16 %v6624
        %v6690 = vunpack.c.l.b16 %v6625
        %v6691 = vunpack.c.l.b16 %v6626
        %v6692 = vunpack.c.l.b16 %v6627
        %v6693 = vunpack.c.l.b16 %v6628
        %v6694 = vunpack.c.l.b16 %v6629
        %v6695 = vunpack.c.l.b16 %v6630
        %v6696 = vunpack.c.l.b16 %v6631
        %v6697 = vunpack.c.l.b16 %v6632
        %v6698 = vunpack.c.l.b16 %v6633
        %v6699 = vunpack.c.l.b16 %v6634
        %v6700 = vunpack.c.l.b16 %v6635
        %v6701 = vunpack.c.l.b16 %v6636
        %v6702 = vunpack.c.l.b16 %v6637
        %v6703 = vunpack.c.l.b16 %v6638
        %v6704 = vunpack.c.l.b16 %v6639
        %v6705 = vunpack.c.l.b16 %v6640
        %v6706 = vunpack.c.l.b16 %v6641
        %v6707 = vunpack.c.l.b16 %v6642
        %v6708 = vunpack.c.l.b16 %v6643
        %v6709 = vunpack.c.l.b16 %v6644
        %v6710 = vunpack.c.l.b16 %v6645
        %v6711 = vunpack.c.l.b16 %v6646
        %v6712 = vunpack.c.l.b16 %v6647
        %v6713 = vunpack.c.l.b16 %v6648
        %v6714 = vunpack.c.l.b16 %v6649
        %v6715 = vpack.c.b16 %v6684, %v6683
        %v6716 = vpack.c.b16 %v6686, %v6685
        %v6717 = vpack.c.b16 %v6688, %v6687
        %v6718 = vpack.c.b16 %v6690, %v6689
        %v6719 = vpack.c.b16 %v6692, %v6691
        %v6720 = vpack.c.b16 %v6694, %v6693
        %v6721 = vpack.c.b16 %v6696, %v6695
        %v6722 = vpack.c.b16 %v6698, %v6697
        %v6723 = vpack.c.b16 %v6700, %v6699
        %v6724 = vpack.c.b16 %v6702, %v6701
        %v6725 = vpack.c.b16 %v6704, %v6703
        %v6726 = vpack.c.b16 %v6706, %v6705
        %v6727 = vpack.c.b16 %v6708, %v6707
        %v6728 = vpack.c.b16 %v6710, %v6709
        %v6729 = vpack.c.b16 %v6712, %v6711
        %v6730 = vpack.c.b16 %v6714, %v6713
        %v6732 = vsel %vm347, %v6715, 0
        %v6735 = vsel %vm347, %v6716, 0
        %v6738 = vsel %vm347, %v6717, 0
        %v6741 = vsel %vm347, %v6718, 0
        %v6744 = vsel %vm347, %v6719, 0
        %v6747 = vsel %vm347, %v6720, 0
        %v6750 = vsel %vm347, %v6721, 0
        %v6753 = vsel %vm347, %v6722, 0
        %v6756 = vsel %vm347, %v6723, 0
        %v6759 = vsel %vm347, %v6724, 0
        %v6762 = vsel %vm347, %v6725, 0
        %v6765 = vsel %vm347, %v6726, 0
        %v6768 = vsel %vm347, %v6727, 0
        %v6771 = vsel %vm347, %v6728, 0
        %v6774 = vsel %vm347, %v6729, 0
        %v6777 = vsel %vm347, %v6730, 0
        %v6780 = vand.u32 %v6650, %v399
        %6782 = vmatpush.bf16.msra.mxu0 0
        %6783 = vmatpush.bf16.msra.mxu0 0
        %6784 = vmatpush.bf16.msra.mxu0 0
        %6785 = vmatpush.bf16.msra.mxu0 0
        %6786 = vmatpush.bf16.msra.mxu0 0
        %6787 = vmatpush.bf16.msra.mxu0 0
        %6788 = vmatpush.bf16.msra.mxu0 0
        %6789 = vmatpush.bf16.msra.mxu0 %v6780
        %6790 = vmatmul.bf16.gmra.mxu0 %v6732
        %v6791 = vpop.f32.mrf.mxu0
        %v6792 = vadd.f32 0.0, %v6791
        %v6793 = vpop.f32.mrf.mxu0
        %v6794 = vadd.f32 0.0, %v6793
        %6795 = vmatmul.bf16.gmra.mxu0 %v6735
        %v6796 = vpop.f32.mrf.mxu0
        %v6797 = vadd.f32 0.0, %v6796
        %v6798 = vpop.f32.mrf.mxu0
        %v6799 = vadd.f32 0.0, %v6798
        %6800 = vmatmul.bf16.gmra.mxu0 %v6738
        %v6801 = vpop.f32.mrf.mxu0
        %v6802 = vadd.f32 0.0, %v6801
        %v6803 = vpop.f32.mrf.mxu0
        %v6804 = vadd.f32 0.0, %v6803
        %6805 = vmatmul.bf16.gmra.mxu0 %v6741
        %v6806 = vpop.f32.mrf.mxu0
        %v6807 = vadd.f32 0.0, %v6806
        %v6808 = vpop.f32.mrf.mxu0
        %v6809 = vadd.f32 0.0, %v6808
        %6810 = vmatmul.bf16.gmra.mxu0 %v6744
        %v6811 = vpop.f32.mrf.mxu0
        %v6812 = vadd.f32 0.0, %v6811
        %v6813 = vpop.f32.mrf.mxu0
        %v6814 = vadd.f32 0.0, %v6813
        %6815 = vmatmul.bf16.gmra.mxu0 %v6747
        %v6816 = vpop.f32.mrf.mxu0
        %v6817 = vadd.f32 0.0, %v6816
        %v6818 = vpop.f32.mrf.mxu0
        %v6819 = vadd.f32 0.0, %v6818
        %6820 = vmatmul.bf16.gmra.mxu0 %v6750
        %v6821 = vpop.f32.mrf.mxu0
        %v6822 = vadd.f32 0.0, %v6821
        %v6823 = vpop.f32.mrf.mxu0
        %v6824 = vadd.f32 0.0, %v6823
        %6825 = vmatmul.bf16.gmra.mxu0 %v6753
        %v6826 = vpop.f32.mrf.mxu0
        %v6827 = vadd.f32 0.0, %v6826
        %v6828 = vpop.f32.mrf.mxu0
        %v6829 = vadd.f32 0.0, %v6828
        %6830 = vmatmul.bf16.gmra.mxu0 %v6756
        %v6831 = vpop.f32.mrf.mxu0
        %v6832 = vadd.f32 0.0, %v6831
        %v6833 = vpop.f32.mrf.mxu0
        %v6834 = vadd.f32 0.0, %v6833
        %6835 = vmatmul.bf16.gmra.mxu0 %v6759
        %v6836 = vpop.f32.mrf.mxu0
        %v6837 = vadd.f32 0.0, %v6836
        %v6838 = vpop.f32.mrf.mxu0
        %v6839 = vadd.f32 0.0, %v6838
        %6840 = vmatmul.bf16.gmra.mxu0 %v6762
        %v6841 = vpop.f32.mrf.mxu0
        %v6842 = vadd.f32 0.0, %v6841
        %v6843 = vpop.f32.mrf.mxu0
        %v6844 = vadd.f32 0.0, %v6843
        %6845 = vmatmul.bf16.gmra.mxu0 %v6765
        %v6846 = vpop.f32.mrf.mxu0
        %v6847 = vadd.f32 0.0, %v6846
        %v6848 = vpop.f32.mrf.mxu0
        %v6849 = vadd.f32 0.0, %v6848
        %6850 = vmatmul.bf16.gmra.mxu0 %v6768
        %v6851 = vpop.f32.mrf.mxu0
        %v6852 = vadd.f32 0.0, %v6851
        %v6853 = vpop.f32.mrf.mxu0
        %v6854 = vadd.f32 0.0, %v6853
        %6855 = vmatmul.bf16.gmra.mxu0 %v6771
        %v6856 = vpop.f32.mrf.mxu0
        %v6857 = vadd.f32 0.0, %v6856
        %v6858 = vpop.f32.mrf.mxu0
        %v6859 = vadd.f32 0.0, %v6858
        %6860 = vmatmul.bf16.gmra.mxu0 %v6774
        %v6861 = vpop.f32.mrf.mxu0
        %v6862 = vadd.f32 0.0, %v6861
        %v6863 = vpop.f32.mrf.mxu0
        %v6864 = vadd.f32 0.0, %v6863
        %6865 = vmatmul.bf16.gmra.mxu0 %v6777
        %v6866 = vpop.f32.mrf.mxu0
        %v6867 = vadd.f32 0.0, %v6866
        %v6868 = vpop.f32.mrf.mxu0
        %v6869 = vadd.f32 0.0, %v6868
        %6870 = vdwg.mxu0
        %v6871 = vadd.f32 %v6586, %v6792
        %v6872 = vadd.f32 %v6587, %v6794
        %v6873 = vadd.f32 %v6588, %v6797
        %v6874 = vadd.f32 %v6589, %v6799
        %v6875 = vadd.f32 %v6590, %v6802
        %v6876 = vadd.f32 %v6591, %v6804
        %v6877 = vadd.f32 %v6592, %v6807
        %v6878 = vadd.f32 %v6593, %v6809
        %v6879 = vadd.f32 %v6594, %v6812
        %v6880 = vadd.f32 %v6595, %v6814
        %v6881 = vadd.f32 %v6596, %v6817
        %v6882 = vadd.f32 %v6597, %v6819
        %v6883 = vadd.f32 %v6598, %v6822
        %v6884 = vadd.f32 %v6599, %v6824
        %v6885 = vadd.f32 %v6600, %v6827
        %v6886 = vadd.f32 %v6601, %v6829
        %v6887 = vadd.f32 %v6602, %v6832
        %v6888 = vadd.f32 %v6603, %v6834
        %v6889 = vadd.f32 %v6604, %v6837
        %v6890 = vadd.f32 %v6605, %v6839
        %v6891 = vadd.f32 %v6606, %v6842
        %v6892 = vadd.f32 %v6607, %v6844
        %v6893 = vadd.f32 %v6608, %v6847
        %v6894 = vadd.f32 %v6609, %v6849
        %v6895 = vadd.f32 %v6610, %v6852
        %v6896 = vadd.f32 %v6611, %v6854
        %v6897 = vadd.f32 %v6612, %v6857
        %v6898 = vadd.f32 %v6613, %v6859
        %v6899 = vadd.f32 %v6614, %v6862
        %v6900 = vadd.f32 %v6615, %v6864
        %v6901 = vadd.f32 %v6616, %v6867
        %v6902 = vadd.f32 %v6617, %v6869
        %v6903 = vld [vmem:[%s712 + $0x110] sm:$0xf]
        %v6904 = vld [vmem:[%s712 + $0x114] sm:$0xf]
        %v6905 = vld [vmem:[%s712 + $0x118] sm:$0xf]
        %v6906 = vld [vmem:[%s712 + $0x11c] sm:$0xf]
        %v6907 = vld [vmem:[%s712 + $0x120] sm:$0xf]
        %v6908 = vld [vmem:[%s712 + $0x124] sm:$0xf]
        %v6909 = vld [vmem:[%s712 + $0x128] sm:$0xf]
        %v6910 = vld [vmem:[%s712 + $0x12c] sm:$0xf]
        %v6911 = vld [vmem:[%s712 + $0x130] sm:$0xf]
        %v6912 = vld [vmem:[%s712 + $0x134] sm:$0xf]
        %v6913 = vld [vmem:[%s712 + $0x138] sm:$0xf]
        %v6914 = vld [vmem:[%s712 + $0x13c] sm:$0xf]
        %v6915 = vld [vmem:[%s712 + $0x140] sm:$0xf]
        %v6916 = vld [vmem:[%s712 + $0x144] sm:$0xf]
        %v6917 = vld [vmem:[%s712 + $0x148] sm:$0xf]
        %v6918 = vld [vmem:[%s712 + $0x14c] sm:$0xf]
        %v6919 = vld [vmem:[%s712 + $0x150] sm:$0xf]
        %v6920 = vld [vmem:[%s712 + $0x154] sm:$0xf]
        %v6921 = vld [vmem:[%s712 + $0x158] sm:$0xf]
        %v6922 = vld [vmem:[%s712 + $0x15c] sm:$0xf]
        %v6923 = vld [vmem:[%s712 + $0x160] sm:$0xf]
        %v6924 = vld [vmem:[%s712 + $0x164] sm:$0xf]
        %v6925 = vld [vmem:[%s712 + $0x168] sm:$0xf]
        %v6926 = vld [vmem:[%s712 + $0x16c] sm:$0xf]
        %v6927 = vld [vmem:[%s712 + $0x170] sm:$0xf]
        %v6928 = vld [vmem:[%s712 + $0x174] sm:$0xf]
        %v6929 = vld [vmem:[%s712 + $0x178] sm:$0xf]
        %v6930 = vld [vmem:[%s712 + $0x17c] sm:$0xf]
        %v6931 = vld [vmem:[%s712 + $0x180] sm:$0xf]
        %v6932 = vld [vmem:[%s712 + $0x184] sm:$0xf]
        %v6933 = vld [vmem:[%s712 + $0x188] sm:$0xf]
        %v6934 = vld [vmem:[%s712 + $0x18c] sm:$0xf]
        %v6935 = vld [vmem:[%s1603] sm:$0x3]
        %v6968 = vunpack.c.l.b16 %v6903
        %v6969 = vunpack.c.l.b16 %v6904
        %v6970 = vunpack.c.l.b16 %v6905
        %v6971 = vunpack.c.l.b16 %v6906
        %v6972 = vunpack.c.l.b16 %v6907
        %v6973 = vunpack.c.l.b16 %v6908
        %v6974 = vunpack.c.l.b16 %v6909
        %v6975 = vunpack.c.l.b16 %v6910
        %v6976 = vunpack.c.l.b16 %v6911
        %v6977 = vunpack.c.l.b16 %v6912
        %v6978 = vunpack.c.l.b16 %v6913
        %v6979 = vunpack.c.l.b16 %v6914
        %v6980 = vunpack.c.l.b16 %v6915
        %v6981 = vunpack.c.l.b16 %v6916
        %v6982 = vunpack.c.l.b16 %v6917
        %v6983 = vunpack.c.l.b16 %v6918
        %v6984 = vunpack.c.l.b16 %v6919
        %v6985 = vunpack.c.l.b16 %v6920
        %v6986 = vunpack.c.l.b16 %v6921
        %v6987 = vunpack.c.l.b16 %v6922
        %v6988 = vunpack.c.l.b16 %v6923
        %v6989 = vunpack.c.l.b16 %v6924
        %v6990 = vunpack.c.l.b16 %v6925
        %v6991 = vunpack.c.l.b16 %v6926
        %v6992 = vunpack.c.l.b16 %v6927
        %v6993 = vunpack.c.l.b16 %v6928
        %v6994 = vunpack.c.l.b16 %v6929
        %v6995 = vunpack.c.l.b16 %v6930
        %v6996 = vunpack.c.l.b16 %v6931
        %v6997 = vunpack.c.l.b16 %v6932
        %v6998 = vunpack.c.l.b16 %v6933
        %v6999 = vunpack.c.l.b16 %v6934
        %v7000 = vpack.c.b16 %v6969, %v6968
        %v7001 = vpack.c.b16 %v6971, %v6970
        %v7002 = vpack.c.b16 %v6973, %v6972
        %v7003 = vpack.c.b16 %v6975, %v6974
        %v7004 = vpack.c.b16 %v6977, %v6976
        %v7005 = vpack.c.b16 %v6979, %v6978
        %v7006 = vpack.c.b16 %v6981, %v6980
        %v7007 = vpack.c.b16 %v6983, %v6982
        %v7008 = vpack.c.b16 %v6985, %v6984
        %v7009 = vpack.c.b16 %v6987, %v6986
        %v7010 = vpack.c.b16 %v6989, %v6988
        %v7011 = vpack.c.b16 %v6991, %v6990
        %v7012 = vpack.c.b16 %v6993, %v6992
        %v7013 = vpack.c.b16 %v6995, %v6994
        %v7014 = vpack.c.b16 %v6997, %v6996
        %v7015 = vpack.c.b16 %v6999, %v6998
        %v7017 = vsel %vm347, %v7000, 0
        %v7020 = vsel %vm347, %v7001, 0
        %v7023 = vsel %vm347, %v7002, 0
        %v7026 = vsel %vm347, %v7003, 0
        %v7029 = vsel %vm347, %v7004, 0
        %v7032 = vsel %vm347, %v7005, 0
        %v7035 = vsel %vm347, %v7006, 0
        %v7038 = vsel %vm347, %v7007, 0
        %v7041 = vsel %vm347, %v7008, 0
        %v7044 = vsel %vm347, %v7009, 0
        %v7047 = vsel %vm347, %v7010, 0
        %v7050 = vsel %vm347, %v7011, 0
        %v7053 = vsel %vm347, %v7012, 0
        %v7056 = vsel %vm347, %v7013, 0
        %v7059 = vsel %vm347, %v7014, 0
        %v7062 = vsel %vm347, %v7015, 0
        %v7065 = vand.u32 %v6935, %v399
        %7067 = vmatpush.bf16.msra.mxu0 0
        %7068 = vmatpush.bf16.msra.mxu0 0
        %7069 = vmatpush.bf16.msra.mxu0 0
        %7070 = vmatpush.bf16.msra.mxu0 0
        %7071 = vmatpush.bf16.msra.mxu0 0
        %7072 = vmatpush.bf16.msra.mxu0 0
        %7073 = vmatpush.bf16.msra.mxu0 0
        %7074 = vmatpush.bf16.msra.mxu0 %v7065
        %7075 = vmatmul.bf16.gmra.mxu0 %v7017
        %v7076 = vpop.f32.mrf.mxu0
        %v7077 = vadd.f32 0.0, %v7076
        %v7078 = vpop.f32.mrf.mxu0
        %v7079 = vadd.f32 0.0, %v7078
        %7080 = vmatmul.bf16.gmra.mxu0 %v7020
        %v7081 = vpop.f32.mrf.mxu0
        %v7082 = vadd.f32 0.0, %v7081
        %v7083 = vpop.f32.mrf.mxu0
        %v7084 = vadd.f32 0.0, %v7083
        %7085 = vmatmul.bf16.gmra.mxu0 %v7023
        %v7086 = vpop.f32.mrf.mxu0
        %v7087 = vadd.f32 0.0, %v7086
        %v7088 = vpop.f32.mrf.mxu0
        %v7089 = vadd.f32 0.0, %v7088
        %7090 = vmatmul.bf16.gmra.mxu0 %v7026
        %v7091 = vpop.f32.mrf.mxu0
        %v7092 = vadd.f32 0.0, %v7091
        %v7093 = vpop.f32.mrf.mxu0
        %v7094 = vadd.f32 0.0, %v7093
        %7095 = vmatmul.bf16.gmra.mxu0 %v7029
        %v7096 = vpop.f32.mrf.mxu0
        %v7097 = vadd.f32 0.0, %v7096
        %v7098 = vpop.f32.mrf.mxu0
        %v7099 = vadd.f32 0.0, %v7098
        %7100 = vmatmul.bf16.gmra.mxu0 %v7032
        %v7101 = vpop.f32.mrf.mxu0
        %v7102 = vadd.f32 0.0, %v7101
        %v7103 = vpop.f32.mrf.mxu0
        %v7104 = vadd.f32 0.0, %v7103
        %7105 = vmatmul.bf16.gmra.mxu0 %v7035
        %v7106 = vpop.f32.mrf.mxu0
        %v7107 = vadd.f32 0.0, %v7106
        %v7108 = vpop.f32.mrf.mxu0
        %v7109 = vadd.f32 0.0, %v7108
        %7110 = vmatmul.bf16.gmra.mxu0 %v7038
        %v7111 = vpop.f32.mrf.mxu0
        %v7112 = vadd.f32 0.0, %v7111
        %v7113 = vpop.f32.mrf.mxu0
        %v7114 = vadd.f32 0.0, %v7113
        %7115 = vmatmul.bf16.gmra.mxu0 %v7041
        %v7116 = vpop.f32.mrf.mxu0
        %v7117 = vadd.f32 0.0, %v7116
        %v7118 = vpop.f32.mrf.mxu0
        %v7119 = vadd.f32 0.0, %v7118
        %7120 = vmatmul.bf16.gmra.mxu0 %v7044
        %v7121 = vpop.f32.mrf.mxu0
        %v7122 = vadd.f32 0.0, %v7121
        %v7123 = vpop.f32.mrf.mxu0
        %v7124 = vadd.f32 0.0, %v7123
        %7125 = vmatmul.bf16.gmra.mxu0 %v7047
        %v7126 = vpop.f32.mrf.mxu0
        %v7127 = vadd.f32 0.0, %v7126
        %v7128 = vpop.f32.mrf.mxu0
        %v7129 = vadd.f32 0.0, %v7128
        %7130 = vmatmul.bf16.gmra.mxu0 %v7050
        %v7131 = vpop.f32.mrf.mxu0
        %v7132 = vadd.f32 0.0, %v7131
        %v7133 = vpop.f32.mrf.mxu0
        %v7134 = vadd.f32 0.0, %v7133
        %7135 = vmatmul.bf16.gmra.mxu0 %v7053
        %v7136 = vpop.f32.mrf.mxu0
        %v7137 = vadd.f32 0.0, %v7136
        %v7138 = vpop.f32.mrf.mxu0
        %v7139 = vadd.f32 0.0, %v7138
        %7140 = vmatmul.bf16.gmra.mxu0 %v7056
        %v7141 = vpop.f32.mrf.mxu0
        %v7142 = vadd.f32 0.0, %v7141
        %v7143 = vpop.f32.mrf.mxu0
        %v7144 = vadd.f32 0.0, %v7143
        %7145 = vmatmul.bf16.gmra.mxu0 %v7059
        %v7146 = vpop.f32.mrf.mxu0
        %v7147 = vadd.f32 0.0, %v7146
        %v7148 = vpop.f32.mrf.mxu0
        %v7149 = vadd.f32 0.0, %v7148
        %7150 = vmatmul.bf16.gmra.mxu0 %v7062
        %v7151 = vpop.f32.mrf.mxu0
        %v7152 = vadd.f32 0.0, %v7151
        %v7153 = vpop.f32.mrf.mxu0
        %v7154 = vadd.f32 0.0, %v7153
        %7155 = vdwg.mxu0
        %v7156 = vadd.f32 %v6871, %v7077
        %v7157 = vadd.f32 %v6872, %v7079
        %v7158 = vadd.f32 %v6873, %v7082
        %v7159 = vadd.f32 %v6874, %v7084
        %v7160 = vadd.f32 %v6875, %v7087
        %v7161 = vadd.f32 %v6876, %v7089
        %v7162 = vadd.f32 %v6877, %v7092
        %v7163 = vadd.f32 %v6878, %v7094
        %v7164 = vadd.f32 %v6879, %v7097
        %v7165 = vadd.f32 %v6880, %v7099
        %v7166 = vadd.f32 %v6881, %v7102
        %v7167 = vadd.f32 %v6882, %v7104
        %v7168 = vadd.f32 %v6883, %v7107
        %v7169 = vadd.f32 %v6884, %v7109
        %v7170 = vadd.f32 %v6885, %v7112
        %v7171 = vadd.f32 %v6886, %v7114
        %v7172 = vadd.f32 %v6887, %v7117
        %v7173 = vadd.f32 %v6888, %v7119
        %v7174 = vadd.f32 %v6889, %v7122
        %v7175 = vadd.f32 %v6890, %v7124
        %v7176 = vadd.f32 %v6891, %v7127
        %v7177 = vadd.f32 %v6892, %v7129
        %v7178 = vadd.f32 %v6893, %v7132
        %v7179 = vadd.f32 %v6894, %v7134
        %v7180 = vadd.f32 %v6895, %v7137
        %v7181 = vadd.f32 %v6896, %v7139
        %v7182 = vadd.f32 %v6897, %v7142
        %v7183 = vadd.f32 %v6898, %v7144
        %v7184 = vadd.f32 %v6899, %v7147
        %v7185 = vadd.f32 %v6900, %v7149
        %v7186 = vadd.f32 %v6901, %v7152
        %v7187 = vadd.f32 %v6902, %v7154
        %v7188 = vld [vmem:[%s195 + $0x120] sm:$0xf]
        %v7189 = vld [vmem:[%s195 + $0x124] sm:$0xf]
        %v7190 = vld [vmem:[%s195 + $0x128] sm:$0xf]
        %v7191 = vld [vmem:[%s195 + $0x12c] sm:$0xf]
        %v7192 = vld [vmem:[%s195 + $0x130] sm:$0xf]
        %v7193 = vld [vmem:[%s195 + $0x134] sm:$0xf]
        %v7194 = vld [vmem:[%s195 + $0x138] sm:$0xf]
        %v7195 = vld [vmem:[%s195 + $0x13c] sm:$0xf]
        %v7196 = vld [vmem:[%s195 + $0x140] sm:$0xf]
        %v7197 = vld [vmem:[%s195 + $0x144] sm:$0xf]
        %v7198 = vld [vmem:[%s195 + $0x148] sm:$0xf]
        %v7199 = vld [vmem:[%s195 + $0x14c] sm:$0xf]
        %v7200 = vld [vmem:[%s195 + $0x150] sm:$0xf]
        %v7201 = vld [vmem:[%s195 + $0x154] sm:$0xf]
        %v7202 = vld [vmem:[%s195 + $0x158] sm:$0xf]
        %v7203 = vld [vmem:[%s195 + $0x15c] sm:$0xf]
        %v7204 = vld [vmem:[%s195 + $0x160] sm:$0xf]
        %v7205 = vld [vmem:[%s195 + $0x164] sm:$0xf]
        %v7206 = vld [vmem:[%s195 + $0x168] sm:$0xf]
        %v7207 = vld [vmem:[%s195 + $0x16c] sm:$0xf]
        %v7208 = vld [vmem:[%s195 + $0x170] sm:$0xf]
        %v7209 = vld [vmem:[%s195 + $0x174] sm:$0xf]
        %v7210 = vld [vmem:[%s195 + $0x178] sm:$0xf]
        %v7211 = vld [vmem:[%s195 + $0x17c] sm:$0xf]
        %v7212 = vld [vmem:[%s195 + $0x180] sm:$0xf]
        %v7213 = vld [vmem:[%s195 + $0x184] sm:$0xf]
        %v7214 = vld [vmem:[%s195 + $0x188] sm:$0xf]
        %v7215 = vld [vmem:[%s195 + $0x18c] sm:$0xf]
        %v7216 = vld [vmem:[%s195 + $0x190] sm:$0xf]
        %v7217 = vld [vmem:[%s195 + $0x194] sm:$0xf]
        %v7218 = vld [vmem:[%s195 + $0x198] sm:$0xf]
        %v7219 = vld [vmem:[%s195 + $0x19c] sm:$0xf]
        %v7220 = vld [vmem:[%s1889] sm:$0x3]
        %v7253 = vunpack.c.l.b16 %v7188
        %v7254 = vunpack.c.l.b16 %v7189
        %v7255 = vunpack.c.l.b16 %v7190
        %v7256 = vunpack.c.l.b16 %v7191
        %v7257 = vunpack.c.l.b16 %v7192
        %v7258 = vunpack.c.l.b16 %v7193
        %v7259 = vunpack.c.l.b16 %v7194
        %v7260 = vunpack.c.l.b16 %v7195
        %v7261 = vunpack.c.l.b16 %v7196
        %v7262 = vunpack.c.l.b16 %v7197
        %v7263 = vunpack.c.l.b16 %v7198
        %v7264 = vunpack.c.l.b16 %v7199
        %v7265 = vunpack.c.l.b16 %v7200
        %v7266 = vunpack.c.l.b16 %v7201
        %v7267 = vunpack.c.l.b16 %v7202
        %v7268 = vunpack.c.l.b16 %v7203
        %v7269 = vunpack.c.l.b16 %v7204
        %v7270 = vunpack.c.l.b16 %v7205
        %v7271 = vunpack.c.l.b16 %v7206
        %v7272 = vunpack.c.l.b16 %v7207
        %v7273 = vunpack.c.l.b16 %v7208
        %v7274 = vunpack.c.l.b16 %v7209
        %v7275 = vunpack.c.l.b16 %v7210
        %v7276 = vunpack.c.l.b16 %v7211
        %v7277 = vunpack.c.l.b16 %v7212
        %v7278 = vunpack.c.l.b16 %v7213
        %v7279 = vunpack.c.l.b16 %v7214
        %v7280 = vunpack.c.l.b16 %v7215
        %v7281 = vunpack.c.l.b16 %v7216
        %v7282 = vunpack.c.l.b16 %v7217
        %v7283 = vunpack.c.l.b16 %v7218
        %v7284 = vunpack.c.l.b16 %v7219
        %v7285 = vpack.c.b16 %v7254, %v7253
        %v7286 = vpack.c.b16 %v7256, %v7255
        %v7287 = vpack.c.b16 %v7258, %v7257
        %v7288 = vpack.c.b16 %v7260, %v7259
        %v7289 = vpack.c.b16 %v7262, %v7261
        %v7290 = vpack.c.b16 %v7264, %v7263
        %v7291 = vpack.c.b16 %v7266, %v7265
        %v7292 = vpack.c.b16 %v7268, %v7267
        %v7293 = vpack.c.b16 %v7270, %v7269
        %v7294 = vpack.c.b16 %v7272, %v7271
        %v7295 = vpack.c.b16 %v7274, %v7273
        %v7296 = vpack.c.b16 %v7276, %v7275
        %v7297 = vpack.c.b16 %v7278, %v7277
        %v7298 = vpack.c.b16 %v7280, %v7279
        %v7299 = vpack.c.b16 %v7282, %v7281
        %v7300 = vpack.c.b16 %v7284, %v7283
        %v7302 = vsel %vm347, %v7285, 0
        %v7305 = vsel %vm347, %v7286, 0
        %v7308 = vsel %vm347, %v7287, 0
        %v7311 = vsel %vm347, %v7288, 0
        %v7314 = vsel %vm347, %v7289, 0
        %v7317 = vsel %vm347, %v7290, 0
        %v7320 = vsel %vm347, %v7291, 0
        %v7323 = vsel %vm347, %v7292, 0
        %v7326 = vsel %vm347, %v7293, 0
        %v7329 = vsel %vm347, %v7294, 0
        %v7332 = vsel %vm347, %v7295, 0
        %v7335 = vsel %vm347, %v7296, 0
        %v7338 = vsel %vm347, %v7297, 0
        %v7341 = vsel %vm347, %v7298, 0
        %v7344 = vsel %vm347, %v7299, 0
        %v7347 = vsel %vm347, %v7300, 0
        %v7350 = vand.u32 %v7220, %v399
        %7352 = vmatpush.bf16.msra.mxu0 0
        %7353 = vmatpush.bf16.msra.mxu0 0
        %7354 = vmatpush.bf16.msra.mxu0 0
        %7355 = vmatpush.bf16.msra.mxu0 0
        %7356 = vmatpush.bf16.msra.mxu0 0
        %7357 = vmatpush.bf16.msra.mxu0 0
        %7358 = vmatpush.bf16.msra.mxu0 0
        %7359 = vmatpush.bf16.msra.mxu0 %v7350
        %7360 = vmatmul.bf16.gmra.mxu0 %v7302
        %v7361 = vpop.f32.mrf.mxu0
        %v7362 = vadd.f32 0.0, %v7361
        %v7363 = vpop.f32.mrf.mxu0
        %v7364 = vadd.f32 0.0, %v7363
        %7365 = vmatmul.bf16.gmra.mxu0 %v7305
        %v7366 = vpop.f32.mrf.mxu0
        %v7367 = vadd.f32 0.0, %v7366
        %v7368 = vpop.f32.mrf.mxu0
        %v7369 = vadd.f32 0.0, %v7368
        %7370 = vmatmul.bf16.gmra.mxu0 %v7308
        %v7371 = vpop.f32.mrf.mxu0
        %v7372 = vadd.f32 0.0, %v7371
        %v7373 = vpop.f32.mrf.mxu0
        %v7374 = vadd.f32 0.0, %v7373
        %7375 = vmatmul.bf16.gmra.mxu0 %v7311
        %v7376 = vpop.f32.mrf.mxu0
        %v7377 = vadd.f32 0.0, %v7376
        %v7378 = vpop.f32.mrf.mxu0
        %v7379 = vadd.f32 0.0, %v7378
        %7380 = vmatmul.bf16.gmra.mxu0 %v7314
        %v7381 = vpop.f32.mrf.mxu0
        %v7382 = vadd.f32 0.0, %v7381
        %v7383 = vpop.f32.mrf.mxu0
        %v7384 = vadd.f32 0.0, %v7383
        %7385 = vmatmul.bf16.gmra.mxu0 %v7317
        %v7386 = vpop.f32.mrf.mxu0
        %v7387 = vadd.f32 0.0, %v7386
        %v7388 = vpop.f32.mrf.mxu0
        %v7389 = vadd.f32 0.0, %v7388
        %7390 = vmatmul.bf16.gmra.mxu0 %v7320
        %v7391 = vpop.f32.mrf.mxu0
        %v7392 = vadd.f32 0.0, %v7391
        %v7393 = vpop.f32.mrf.mxu0
        %v7394 = vadd.f32 0.0, %v7393
        %7395 = vmatmul.bf16.gmra.mxu0 %v7323
        %v7396 = vpop.f32.mrf.mxu0
        %v7397 = vadd.f32 0.0, %v7396
        %v7398 = vpop.f32.mrf.mxu0
        %v7399 = vadd.f32 0.0, %v7398
        %7400 = vmatmul.bf16.gmra.mxu0 %v7326
        %v7401 = vpop.f32.mrf.mxu0
        %v7402 = vadd.f32 0.0, %v7401
        %v7403 = vpop.f32.mrf.mxu0
        %v7404 = vadd.f32 0.0, %v7403
        %7405 = vmatmul.bf16.gmra.mxu0 %v7329
        %v7406 = vpop.f32.mrf.mxu0
        %v7407 = vadd.f32 0.0, %v7406
        %v7408 = vpop.f32.mrf.mxu0
        %v7409 = vadd.f32 0.0, %v7408
        %7410 = vmatmul.bf16.gmra.mxu0 %v7332
        %v7411 = vpop.f32.mrf.mxu0
        %v7412 = vadd.f32 0.0, %v7411
        %v7413 = vpop.f32.mrf.mxu0
        %v7414 = vadd.f32 0.0, %v7413
        %7415 = vmatmul.bf16.gmra.mxu0 %v7335
        %v7416 = vpop.f32.mrf.mxu0
        %v7417 = vadd.f32 0.0, %v7416
        %v7418 = vpop.f32.mrf.mxu0
        %v7419 = vadd.f32 0.0, %v7418
        %7420 = vmatmul.bf16.gmra.mxu0 %v7338
        %v7421 = vpop.f32.mrf.mxu0
        %v7422 = vadd.f32 0.0, %v7421
        %v7423 = vpop.f32.mrf.mxu0
        %v7424 = vadd.f32 0.0, %v7423
        %7425 = vmatmul.bf16.gmra.mxu0 %v7341
        %v7426 = vpop.f32.mrf.mxu0
        %v7427 = vadd.f32 0.0, %v7426
        %v7428 = vpop.f32.mrf.mxu0
        %v7429 = vadd.f32 0.0, %v7428
        %7430 = vmatmul.bf16.gmra.mxu0 %v7344
        %v7431 = vpop.f32.mrf.mxu0
        %v7432 = vadd.f32 0.0, %v7431
        %v7433 = vpop.f32.mrf.mxu0
        %v7434 = vadd.f32 0.0, %v7433
        %7435 = vmatmul.bf16.gmra.mxu0 %v7347
        %v7436 = vpop.f32.mrf.mxu0
        %v7437 = vadd.f32 0.0, %v7436
        %v7438 = vpop.f32.mrf.mxu0
        %v7439 = vadd.f32 0.0, %v7438
        %7440 = vdwg.mxu0
        %v7441 = vadd.f32 %v7156, %v7362
        %v7442 = vadd.f32 %v7157, %v7364
        %v7443 = vadd.f32 %v7158, %v7367
        %v7444 = vadd.f32 %v7159, %v7369
        %v7445 = vadd.f32 %v7160, %v7372
        %v7446 = vadd.f32 %v7161, %v7374
        %v7447 = vadd.f32 %v7162, %v7377
        %v7448 = vadd.f32 %v7163, %v7379
        %v7449 = vadd.f32 %v7164, %v7382
        %v7450 = vadd.f32 %v7165, %v7384
        %v7451 = vadd.f32 %v7166, %v7387
        %v7452 = vadd.f32 %v7167, %v7389
        %v7453 = vadd.f32 %v7168, %v7392
        %v7454 = vadd.f32 %v7169, %v7394
        %v7455 = vadd.f32 %v7170, %v7397
        %v7456 = vadd.f32 %v7171, %v7399
        %v7457 = vadd.f32 %v7172, %v7402
        %v7458 = vadd.f32 %v7173, %v7404
        %v7459 = vadd.f32 %v7174, %v7407
        %v7460 = vadd.f32 %v7175, %v7409
        %v7461 = vadd.f32 %v7176, %v7412
        %v7462 = vadd.f32 %v7177, %v7414
        %v7463 = vadd.f32 %v7178, %v7417
        %v7464 = vadd.f32 %v7179, %v7419
        %v7465 = vadd.f32 %v7180, %v7422
        %v7466 = vadd.f32 %v7181, %v7424
        %v7467 = vadd.f32 %v7182, %v7427
        %v7468 = vadd.f32 %v7183, %v7429
        %v7469 = vadd.f32 %v7184, %v7432
        %v7470 = vadd.f32 %v7185, %v7434
        %v7471 = vadd.f32 %v7186, %v7437
        %v7472 = vadd.f32 %v7187, %v7439
        %v7473 = vld [vmem:[%s232 + $0x120] sm:$0xf]
        %v7474 = vld [vmem:[%s232 + $0x124] sm:$0xf]
        %v7475 = vld [vmem:[%s232 + $0x128] sm:$0xf]
        %v7476 = vld [vmem:[%s232 + $0x12c] sm:$0xf]
        %v7477 = vld [vmem:[%s232 + $0x130] sm:$0xf]
        %v7478 = vld [vmem:[%s232 + $0x134] sm:$0xf]
        %v7479 = vld [vmem:[%s232 + $0x138] sm:$0xf]
        %v7480 = vld [vmem:[%s232 + $0x13c] sm:$0xf]
        %v7481 = vld [vmem:[%s232 + $0x140] sm:$0xf]
        %v7482 = vld [vmem:[%s232 + $0x144] sm:$0xf]
        %v7483 = vld [vmem:[%s232 + $0x148] sm:$0xf]
        %v7484 = vld [vmem:[%s232 + $0x14c] sm:$0xf]
        %v7485 = vld [vmem:[%s232 + $0x150] sm:$0xf]
        %v7486 = vld [vmem:[%s232 + $0x154] sm:$0xf]
        %v7487 = vld [vmem:[%s232 + $0x158] sm:$0xf]
        %v7488 = vld [vmem:[%s232 + $0x15c] sm:$0xf]
        %v7489 = vld [vmem:[%s232 + $0x160] sm:$0xf]
        %v7490 = vld [vmem:[%s232 + $0x164] sm:$0xf]
        %v7491 = vld [vmem:[%s232 + $0x168] sm:$0xf]
        %v7492 = vld [vmem:[%s232 + $0x16c] sm:$0xf]
        %v7493 = vld [vmem:[%s232 + $0x170] sm:$0xf]
        %v7494 = vld [vmem:[%s232 + $0x174] sm:$0xf]
        %v7495 = vld [vmem:[%s232 + $0x178] sm:$0xf]
        %v7496 = vld [vmem:[%s232 + $0x17c] sm:$0xf]
        %v7497 = vld [vmem:[%s232 + $0x180] sm:$0xf]
        %v7498 = vld [vmem:[%s232 + $0x184] sm:$0xf]
        %v7499 = vld [vmem:[%s232 + $0x188] sm:$0xf]
        %v7500 = vld [vmem:[%s232 + $0x18c] sm:$0xf]
        %v7501 = vld [vmem:[%s232 + $0x190] sm:$0xf]
        %v7502 = vld [vmem:[%s232 + $0x194] sm:$0xf]
        %v7503 = vld [vmem:[%s232 + $0x198] sm:$0xf]
        %v7504 = vld [vmem:[%s232 + $0x19c] sm:$0xf]
        %v7505 = vld [vmem:[%s2175] sm:$0x3]
        %v7538 = vunpack.c.l.b16 %v7473
        %v7539 = vunpack.c.l.b16 %v7474
        %v7540 = vunpack.c.l.b16 %v7475
        %v7541 = vunpack.c.l.b16 %v7476
        %v7542 = vunpack.c.l.b16 %v7477
        %v7543 = vunpack.c.l.b16 %v7478
        %v7544 = vunpack.c.l.b16 %v7479
        %v7545 = vunpack.c.l.b16 %v7480
        %v7546 = vunpack.c.l.b16 %v7481
        %v7547 = vunpack.c.l.b16 %v7482
        %v7548 = vunpack.c.l.b16 %v7483
        %v7549 = vunpack.c.l.b16 %v7484
        %v7550 = vunpack.c.l.b16 %v7485
        %v7551 = vunpack.c.l.b16 %v7486
        %v7552 = vunpack.c.l.b16 %v7487
        %v7553 = vunpack.c.l.b16 %v7488
        %v7554 = vunpack.c.l.b16 %v7489
        %v7555 = vunpack.c.l.b16 %v7490
        %v7556 = vunpack.c.l.b16 %v7491
        %v7557 = vunpack.c.l.b16 %v7492
        %v7558 = vunpack.c.l.b16 %v7493
        %v7559 = vunpack.c.l.b16 %v7494
        %v7560 = vunpack.c.l.b16 %v7495
        %v7561 = vunpack.c.l.b16 %v7496
        %v7562 = vunpack.c.l.b16 %v7497
        %v7563 = vunpack.c.l.b16 %v7498
        %v7564 = vunpack.c.l.b16 %v7499
        %v7565 = vunpack.c.l.b16 %v7500
        %v7566 = vunpack.c.l.b16 %v7501
        %v7567 = vunpack.c.l.b16 %v7502
        %v7568 = vunpack.c.l.b16 %v7503
        %v7569 = vunpack.c.l.b16 %v7504
        %v7570 = vpack.c.b16 %v7539, %v7538
        %v7571 = vpack.c.b16 %v7541, %v7540
        %v7572 = vpack.c.b16 %v7543, %v7542
        %v7573 = vpack.c.b16 %v7545, %v7544
        %v7574 = vpack.c.b16 %v7547, %v7546
        %v7575 = vpack.c.b16 %v7549, %v7548
        %v7576 = vpack.c.b16 %v7551, %v7550
        %v7577 = vpack.c.b16 %v7553, %v7552
        %v7578 = vpack.c.b16 %v7555, %v7554
        %v7579 = vpack.c.b16 %v7557, %v7556
        %v7580 = vpack.c.b16 %v7559, %v7558
        %v7581 = vpack.c.b16 %v7561, %v7560
        %v7582 = vpack.c.b16 %v7563, %v7562
        %v7583 = vpack.c.b16 %v7565, %v7564
        %v7584 = vpack.c.b16 %v7567, %v7566
        %v7585 = vpack.c.b16 %v7569, %v7568
        %v7587 = vsel %vm347, %v7570, 0
        %v7590 = vsel %vm347, %v7571, 0
        %v7593 = vsel %vm347, %v7572, 0
        %v7596 = vsel %vm347, %v7573, 0
        %v7599 = vsel %vm347, %v7574, 0
        %v7602 = vsel %vm347, %v7575, 0
        %v7605 = vsel %vm347, %v7576, 0
        %v7608 = vsel %vm347, %v7577, 0
        %v7611 = vsel %vm347, %v7578, 0
        %v7614 = vsel %vm347, %v7579, 0
        %v7617 = vsel %vm347, %v7580, 0
        %v7620 = vsel %vm347, %v7581, 0
        %v7623 = vsel %vm347, %v7582, 0
        %v7626 = vsel %vm347, %v7583, 0
        %v7629 = vsel %vm347, %v7584, 0
        %v7632 = vsel %vm347, %v7585, 0
        %v7635 = vand.u32 %v7505, %v399
        %7637 = vmatpush.bf16.msra.mxu0 0
        %7638 = vmatpush.bf16.msra.mxu0 0
        %7639 = vmatpush.bf16.msra.mxu0 0
        %7640 = vmatpush.bf16.msra.mxu0 0
        %7641 = vmatpush.bf16.msra.mxu0 0
        %7642 = vmatpush.bf16.msra.mxu0 0
        %7643 = vmatpush.bf16.msra.mxu0 0
        %7644 = vmatpush.bf16.msra.mxu0 %v7635
        %7645 = vmatmul.bf16.gmra.mxu0 %v7587
        %v7646 = vpop.f32.mrf.mxu0
        %v7647 = vadd.f32 0.0, %v7646
        %v7648 = vpop.f32.mrf.mxu0
        %v7649 = vadd.f32 0.0, %v7648
        %7650 = vmatmul.bf16.gmra.mxu0 %v7590
        %v7651 = vpop.f32.mrf.mxu0
        %v7652 = vadd.f32 0.0, %v7651
        %v7653 = vpop.f32.mrf.mxu0
        %v7654 = vadd.f32 0.0, %v7653
        %7655 = vmatmul.bf16.gmra.mxu0 %v7593
        %v7656 = vpop.f32.mrf.mxu0
        %v7657 = vadd.f32 0.0, %v7656
        %v7658 = vpop.f32.mrf.mxu0
        %v7659 = vadd.f32 0.0, %v7658
        %7660 = vmatmul.bf16.gmra.mxu0 %v7596
        %v7661 = vpop.f32.mrf.mxu0
        %v7662 = vadd.f32 0.0, %v7661
        %v7663 = vpop.f32.mrf.mxu0
        %v7664 = vadd.f32 0.0, %v7663
        %7665 = vmatmul.bf16.gmra.mxu0 %v7599
        %v7666 = vpop.f32.mrf.mxu0
        %v7667 = vadd.f32 0.0, %v7666
        %v7668 = vpop.f32.mrf.mxu0
        %v7669 = vadd.f32 0.0, %v7668
        %7670 = vmatmul.bf16.gmra.mxu0 %v7602
        %v7671 = vpop.f32.mrf.mxu0
        %v7672 = vadd.f32 0.0, %v7671
        %v7673 = vpop.f32.mrf.mxu0
        %v7674 = vadd.f32 0.0, %v7673
        %7675 = vmatmul.bf16.gmra.mxu0 %v7605
        %v7676 = vpop.f32.mrf.mxu0
        %v7677 = vadd.f32 0.0, %v7676
        %v7678 = vpop.f32.mrf.mxu0
        %v7679 = vadd.f32 0.0, %v7678
        %7680 = vmatmul.bf16.gmra.mxu0 %v7608
        %v7681 = vpop.f32.mrf.mxu0
        %v7682 = vadd.f32 0.0, %v7681
        %v7683 = vpop.f32.mrf.mxu0
        %v7684 = vadd.f32 0.0, %v7683
        %7685 = vmatmul.bf16.gmra.mxu0 %v7611
        %v7686 = vpop.f32.mrf.mxu0
        %v7687 = vadd.f32 0.0, %v7686
        %v7688 = vpop.f32.mrf.mxu0
        %v7689 = vadd.f32 0.0, %v7688
        %7690 = vmatmul.bf16.gmra.mxu0 %v7614
        %v7691 = vpop.f32.mrf.mxu0
        %v7692 = vadd.f32 0.0, %v7691
        %v7693 = vpop.f32.mrf.mxu0
        %v7694 = vadd.f32 0.0, %v7693
        %7695 = vmatmul.bf16.gmra.mxu0 %v7617
        %v7696 = vpop.f32.mrf.mxu0
        %v7697 = vadd.f32 0.0, %v7696
        %v7698 = vpop.f32.mrf.mxu0
        %v7699 = vadd.f32 0.0, %v7698
        %7700 = vmatmul.bf16.gmra.mxu0 %v7620
        %v7701 = vpop.f32.mrf.mxu0
        %v7702 = vadd.f32 0.0, %v7701
        %v7703 = vpop.f32.mrf.mxu0
        %v7704 = vadd.f32 0.0, %v7703
        %7705 = vmatmul.bf16.gmra.mxu0 %v7623
        %v7706 = vpop.f32.mrf.mxu0
        %v7707 = vadd.f32 0.0, %v7706
        %v7708 = vpop.f32.mrf.mxu0
        %v7709 = vadd.f32 0.0, %v7708
        %7710 = vmatmul.bf16.gmra.mxu0 %v7626
        %v7711 = vpop.f32.mrf.mxu0
        %v7712 = vadd.f32 0.0, %v7711
        %v7713 = vpop.f32.mrf.mxu0
        %v7714 = vadd.f32 0.0, %v7713
        %7715 = vmatmul.bf16.gmra.mxu0 %v7629
        %v7716 = vpop.f32.mrf.mxu0
        %v7717 = vadd.f32 0.0, %v7716
        %v7718 = vpop.f32.mrf.mxu0
        %v7719 = vadd.f32 0.0, %v7718
        %7720 = vmatmul.bf16.gmra.mxu0 %v7632
        %v7721 = vpop.f32.mrf.mxu0
        %v7722 = vadd.f32 0.0, %v7721
        %v7723 = vpop.f32.mrf.mxu0
        %v7724 = vadd.f32 0.0, %v7723
        %7725 = vdwg.mxu0
        %v7726 = vadd.f32 %v7441, %v7647
        %v7727 = vadd.f32 %v7442, %v7649
        %v7728 = vadd.f32 %v7443, %v7652
        %v7729 = vadd.f32 %v7444, %v7654
        %v7730 = vadd.f32 %v7445, %v7657
        %v7731 = vadd.f32 %v7446, %v7659
        %v7732 = vadd.f32 %v7447, %v7662
        %v7733 = vadd.f32 %v7448, %v7664
        %v7734 = vadd.f32 %v7449, %v7667
        %v7735 = vadd.f32 %v7450, %v7669
        %v7736 = vadd.f32 %v7451, %v7672
        %v7737 = vadd.f32 %v7452, %v7674
        %v7738 = vadd.f32 %v7453, %v7677
        %v7739 = vadd.f32 %v7454, %v7679
        %v7740 = vadd.f32 %v7455, %v7682
        %v7741 = vadd.f32 %v7456, %v7684
        %v7742 = vadd.f32 %v7457, %v7687
        %v7743 = vadd.f32 %v7458, %v7689
        %v7744 = vadd.f32 %v7459, %v7692
        %v7745 = vadd.f32 %v7460, %v7694
        %v7746 = vadd.f32 %v7461, %v7697
        %v7747 = vadd.f32 %v7462, %v7699
        %v7748 = vadd.f32 %v7463, %v7702
        %v7749 = vadd.f32 %v7464, %v7704
        %v7750 = vadd.f32 %v7465, %v7707
        %v7751 = vadd.f32 %v7466, %v7709
        %v7752 = vadd.f32 %v7467, %v7712
        %v7753 = vadd.f32 %v7468, %v7714
        %v7754 = vadd.f32 %v7469, %v7717
        %v7755 = vadd.f32 %v7470, %v7719
        %v7756 = vadd.f32 %v7471, %v7722
        %v7757 = vadd.f32 %v7472, %v7724
        %v7758 = vld [vmem:[%s712 + $0x120] sm:$0xf]
        %v7759 = vld [vmem:[%s712 + $0x124] sm:$0xf]
        %v7760 = vld [vmem:[%s712 + $0x128] sm:$0xf]
        %v7761 = vld [vmem:[%s712 + $0x12c] sm:$0xf]
        %v7762 = vld [vmem:[%s712 + $0x130] sm:$0xf]
        %v7763 = vld [vmem:[%s712 + $0x134] sm:$0xf]
        %v7764 = vld [vmem:[%s712 + $0x138] sm:$0xf]
        %v7765 = vld [vmem:[%s712 + $0x13c] sm:$0xf]
        %v7766 = vld [vmem:[%s712 + $0x140] sm:$0xf]
        %v7767 = vld [vmem:[%s712 + $0x144] sm:$0xf]
        %v7768 = vld [vmem:[%s712 + $0x148] sm:$0xf]
        %v7769 = vld [vmem:[%s712 + $0x14c] sm:$0xf]
        %v7770 = vld [vmem:[%s712 + $0x150] sm:$0xf]
        %v7771 = vld [vmem:[%s712 + $0x154] sm:$0xf]
        %v7772 = vld [vmem:[%s712 + $0x158] sm:$0xf]
        %v7773 = vld [vmem:[%s712 + $0x15c] sm:$0xf]
        %v7774 = vld [vmem:[%s712 + $0x160] sm:$0xf]
        %v7775 = vld [vmem:[%s712 + $0x164] sm:$0xf]
        %v7776 = vld [vmem:[%s712 + $0x168] sm:$0xf]
        %v7777 = vld [vmem:[%s712 + $0x16c] sm:$0xf]
        %v7778 = vld [vmem:[%s712 + $0x170] sm:$0xf]
        %v7779 = vld [vmem:[%s712 + $0x174] sm:$0xf]
        %v7780 = vld [vmem:[%s712 + $0x178] sm:$0xf]
        %v7781 = vld [vmem:[%s712 + $0x17c] sm:$0xf]
        %v7782 = vld [vmem:[%s712 + $0x180] sm:$0xf]
        %v7783 = vld [vmem:[%s712 + $0x184] sm:$0xf]
        %v7784 = vld [vmem:[%s712 + $0x188] sm:$0xf]
        %v7785 = vld [vmem:[%s712 + $0x18c] sm:$0xf]
        %v7786 = vld [vmem:[%s712 + $0x190] sm:$0xf]
        %v7787 = vld [vmem:[%s712 + $0x194] sm:$0xf]
        %v7788 = vld [vmem:[%s712 + $0x198] sm:$0xf]
        %v7789 = vld [vmem:[%s712 + $0x19c] sm:$0xf]
        %v7790 = vld [vmem:[%s2461] sm:$0x3]
        %v7823 = vunpack.c.l.b16 %v7758
        %v7824 = vunpack.c.l.b16 %v7759
        %v7825 = vunpack.c.l.b16 %v7760
        %v7826 = vunpack.c.l.b16 %v7761
        %v7827 = vunpack.c.l.b16 %v7762
        %v7828 = vunpack.c.l.b16 %v7763
        %v7829 = vunpack.c.l.b16 %v7764
        %v7830 = vunpack.c.l.b16 %v7765
        %v7831 = vunpack.c.l.b16 %v7766
        %v7832 = vunpack.c.l.b16 %v7767
        %v7833 = vunpack.c.l.b16 %v7768
        %v7834 = vunpack.c.l.b16 %v7769
        %v7835 = vunpack.c.l.b16 %v7770
        %v7836 = vunpack.c.l.b16 %v7771
        %v7837 = vunpack.c.l.b16 %v7772
        %v7838 = vunpack.c.l.b16 %v7773
        %v7839 = vunpack.c.l.b16 %v7774
        %v7840 = vunpack.c.l.b16 %v7775
        %v7841 = vunpack.c.l.b16 %v7776
        %v7842 = vunpack.c.l.b16 %v7777
        %v7843 = vunpack.c.l.b16 %v7778
        %v7844 = vunpack.c.l.b16 %v7779
        %v7845 = vunpack.c.l.b16 %v7780
        %v7846 = vunpack.c.l.b16 %v7781
        %v7847 = vunpack.c.l.b16 %v7782
        %v7848 = vunpack.c.l.b16 %v7783
        %v7849 = vunpack.c.l.b16 %v7784
        %v7850 = vunpack.c.l.b16 %v7785
        %v7851 = vunpack.c.l.b16 %v7786
        %v7852 = vunpack.c.l.b16 %v7787
        %v7853 = vunpack.c.l.b16 %v7788
        %v7854 = vunpack.c.l.b16 %v7789
        %v7855 = vpack.c.b16 %v7824, %v7823
        %v7856 = vpack.c.b16 %v7826, %v7825
        %v7857 = vpack.c.b16 %v7828, %v7827
        %v7858 = vpack.c.b16 %v7830, %v7829
        %v7859 = vpack.c.b16 %v7832, %v7831
        %v7860 = vpack.c.b16 %v7834, %v7833
        %v7861 = vpack.c.b16 %v7836, %v7835
        %v7862 = vpack.c.b16 %v7838, %v7837
        %v7863 = vpack.c.b16 %v7840, %v7839
        %v7864 = vpack.c.b16 %v7842, %v7841
        %v7865 = vpack.c.b16 %v7844, %v7843
        %v7866 = vpack.c.b16 %v7846, %v7845
        %v7867 = vpack.c.b16 %v7848, %v7847
        %v7868 = vpack.c.b16 %v7850, %v7849
        %v7869 = vpack.c.b16 %v7852, %v7851
        %v7870 = vpack.c.b16 %v7854, %v7853
        %v7872 = vsel %vm347, %v7855, 0
        %v7875 = vsel %vm347, %v7856, 0
        %v7878 = vsel %vm347, %v7857, 0
        %v7881 = vsel %vm347, %v7858, 0
        %v7884 = vsel %vm347, %v7859, 0
        %v7887 = vsel %vm347, %v7860, 0
        %v7890 = vsel %vm347, %v7861, 0
        %v7893 = vsel %vm347, %v7862, 0
        %v7896 = vsel %vm347, %v7863, 0
        %v7899 = vsel %vm347, %v7864, 0
        %v7902 = vsel %vm347, %v7865, 0
        %v7905 = vsel %vm347, %v7866, 0
        %v7908 = vsel %vm347, %v7867, 0
        %v7911 = vsel %vm347, %v7868, 0
        %v7914 = vsel %vm347, %v7869, 0
        %v7917 = vsel %vm347, %v7870, 0
        %v7920 = vand.u32 %v7790, %v399
        %7922 = vmatpush.bf16.msra.mxu0 0
        %7923 = vmatpush.bf16.msra.mxu0 0
        %7924 = vmatpush.bf16.msra.mxu0 0
        %7925 = vmatpush.bf16.msra.mxu0 0
        %7926 = vmatpush.bf16.msra.mxu0 0
        %7927 = vmatpush.bf16.msra.mxu0 0
        %7928 = vmatpush.bf16.msra.mxu0 0
        %7929 = vmatpush.bf16.msra.mxu0 %v7920
        %7930 = vmatmul.bf16.gmra.mxu0 %v7872
        %v7931 = vpop.f32.mrf.mxu0
        %v7932 = vadd.f32 0.0, %v7931
        %v7933 = vpop.f32.mrf.mxu0
        %v7934 = vadd.f32 0.0, %v7933
        %7935 = vmatmul.bf16.gmra.mxu0 %v7875
        %v7936 = vpop.f32.mrf.mxu0
        %v7937 = vadd.f32 0.0, %v7936
        %v7938 = vpop.f32.mrf.mxu0
        %v7939 = vadd.f32 0.0, %v7938
        %7940 = vmatmul.bf16.gmra.mxu0 %v7878
        %v7941 = vpop.f32.mrf.mxu0
        %v7942 = vadd.f32 0.0, %v7941
        %v7943 = vpop.f32.mrf.mxu0
        %v7944 = vadd.f32 0.0, %v7943
        %7945 = vmatmul.bf16.gmra.mxu0 %v7881
        %v7946 = vpop.f32.mrf.mxu0
        %v7947 = vadd.f32 0.0, %v7946
        %v7948 = vpop.f32.mrf.mxu0
        %v7949 = vadd.f32 0.0, %v7948
        %7950 = vmatmul.bf16.gmra.mxu0 %v7884
        %v7951 = vpop.f32.mrf.mxu0
        %v7952 = vadd.f32 0.0, %v7951
        %v7953 = vpop.f32.mrf.mxu0
        %v7954 = vadd.f32 0.0, %v7953
        %7955 = vmatmul.bf16.gmra.mxu0 %v7887
        %v7956 = vpop.f32.mrf.mxu0
        %v7957 = vadd.f32 0.0, %v7956
        %v7958 = vpop.f32.mrf.mxu0
        %v7959 = vadd.f32 0.0, %v7958
        %7960 = vmatmul.bf16.gmra.mxu0 %v7890
        %v7961 = vpop.f32.mrf.mxu0
        %v7962 = vadd.f32 0.0, %v7961
        %v7963 = vpop.f32.mrf.mxu0
        %v7964 = vadd.f32 0.0, %v7963
        %7965 = vmatmul.bf16.gmra.mxu0 %v7893
        %v7966 = vpop.f32.mrf.mxu0
        %v7967 = vadd.f32 0.0, %v7966
        %v7968 = vpop.f32.mrf.mxu0
        %v7969 = vadd.f32 0.0, %v7968
        %7970 = vmatmul.bf16.gmra.mxu0 %v7896
        %v7971 = vpop.f32.mrf.mxu0
        %v7972 = vadd.f32 0.0, %v7971
        %v7973 = vpop.f32.mrf.mxu0
        %v7974 = vadd.f32 0.0, %v7973
        %7975 = vmatmul.bf16.gmra.mxu0 %v7899
        %v7976 = vpop.f32.mrf.mxu0
        %v7977 = vadd.f32 0.0, %v7976
        %v7978 = vpop.f32.mrf.mxu0
        %v7979 = vadd.f32 0.0, %v7978
        %7980 = vmatmul.bf16.gmra.mxu0 %v7902
        %v7981 = vpop.f32.mrf.mxu0
        %v7982 = vadd.f32 0.0, %v7981
        %v7983 = vpop.f32.mrf.mxu0
        %v7984 = vadd.f32 0.0, %v7983
        %7985 = vmatmul.bf16.gmra.mxu0 %v7905
        %v7986 = vpop.f32.mrf.mxu0
        %v7987 = vadd.f32 0.0, %v7986
        %v7988 = vpop.f32.mrf.mxu0
        %v7989 = vadd.f32 0.0, %v7988
        %7990 = vmatmul.bf16.gmra.mxu0 %v7908
        %v7991 = vpop.f32.mrf.mxu0
        %v7992 = vadd.f32 0.0, %v7991
        %v7993 = vpop.f32.mrf.mxu0
        %v7994 = vadd.f32 0.0, %v7993
        %7995 = vmatmul.bf16.gmra.mxu0 %v7911
        %v7996 = vpop.f32.mrf.mxu0
        %v7997 = vadd.f32 0.0, %v7996
        %v7998 = vpop.f32.mrf.mxu0
        %v7999 = vadd.f32 0.0, %v7998
        %8000 = vmatmul.bf16.gmra.mxu0 %v7914
        %v8001 = vpop.f32.mrf.mxu0
        %v8002 = vadd.f32 0.0, %v8001
        %v8003 = vpop.f32.mrf.mxu0
        %v8004 = vadd.f32 0.0, %v8003
        %8005 = vmatmul.bf16.gmra.mxu0 %v7917
        %v8006 = vpop.f32.mrf.mxu0
        %v8007 = vadd.f32 0.0, %v8006
        %v8008 = vpop.f32.mrf.mxu0
        %v8009 = vadd.f32 0.0, %v8008
        %8010 = vdwg.mxu0
        %v8011 = vadd.f32 %v7726, %v7932
        %v8012 = vadd.f32 %v7727, %v7934
        %v8013 = vadd.f32 %v7728, %v7937
        %v8014 = vadd.f32 %v7729, %v7939
        %v8015 = vadd.f32 %v7730, %v7942
        %v8016 = vadd.f32 %v7731, %v7944
        %v8017 = vadd.f32 %v7732, %v7947
        %v8018 = vadd.f32 %v7733, %v7949
        %v8019 = vadd.f32 %v7734, %v7952
        %v8020 = vadd.f32 %v7735, %v7954
        %v8021 = vadd.f32 %v7736, %v7957
        %v8022 = vadd.f32 %v7737, %v7959
        %v8023 = vadd.f32 %v7738, %v7962
        %v8024 = vadd.f32 %v7739, %v7964
        %v8025 = vadd.f32 %v7740, %v7967
        %v8026 = vadd.f32 %v7741, %v7969
        %v8027 = vadd.f32 %v7742, %v7972
        %v8028 = vadd.f32 %v7743, %v7974
        %v8029 = vadd.f32 %v7744, %v7977
        %v8030 = vadd.f32 %v7745, %v7979
        %v8031 = vadd.f32 %v7746, %v7982
        %v8032 = vadd.f32 %v7747, %v7984
        %v8033 = vadd.f32 %v7748, %v7987
        %v8034 = vadd.f32 %v7749, %v7989
        %v8035 = vadd.f32 %v7750, %v7992
        %v8036 = vadd.f32 %v7751, %v7994
        %v8037 = vadd.f32 %v7752, %v7997
        %v8038 = vadd.f32 %v7753, %v7999
        %v8039 = vadd.f32 %v7754, %v8002
        %v8040 = vadd.f32 %v7755, %v8004
        %v8041 = vadd.f32 %v7756, %v8007
        %v8042 = vadd.f32 %v7757, %v8009
        %v8043 = vmul.f32 %v8011, %v2716
        %v8044 = vmul.f32 %v8012, %v2716
        %v8045 = vmul.f32 %v8013, %v2716
        %v8046 = vmul.f32 %v8014, %v2716
        %v8047 = vmul.f32 %v8015, %v2716
        %v8048 = vmul.f32 %v8016, %v2716
        %v8049 = vmul.f32 %v8017, %v2716
        %v8050 = vmul.f32 %v8018, %v2716
        %v8051 = vmul.f32 %v8019, %v2716
        %v8052 = vmul.f32 %v8020, %v2716
        %v8053 = vmul.f32 %v8021, %v2716
        %v8054 = vmul.f32 %v8022, %v2716
        %v8055 = vmul.f32 %v8023, %v2716
        %v8056 = vmul.f32 %v8024, %v2716
        %v8057 = vmul.f32 %v8025, %v2716
        %v8058 = vmul.f32 %v8026, %v2716
        %v8059 = vmul.f32 %v8027, %v2716
        %v8060 = vmul.f32 %v8028, %v2716
        %v8061 = vmul.f32 %v8029, %v2716
        %v8062 = vmul.f32 %v8030, %v2716
        %v8063 = vmul.f32 %v8031, %v2716
        %v8064 = vmul.f32 %v8032, %v2716
        %v8065 = vmul.f32 %v8033, %v2716
        %v8066 = vmul.f32 %v8034, %v2716
        %v8067 = vmul.f32 %v8035, %v2716
        %v8068 = vmul.f32 %v8036, %v2716
        %v8069 = vmul.f32 %v8037, %v2716
        %v8070 = vmul.f32 %v8038, %v2716
        %v8071 = vmul.f32 %v8039, %v2716
        %v8072 = vmul.f32 %v8040, %v2716
        %v8073 = vmul.f32 %v8041, %v2716
        %v8074 = vmul.f32 %v8042, %v2716
        %v8075 = vadd.f32 %v8043, %v2751
        %v8076 = vadd.f32 %v8044, %v2751
        %v8077 = vadd.f32 %v8045, %v2751
        %v8078 = vadd.f32 %v8046, %v2751
        %v8079 = vadd.f32 %v8047, %v2751
        %v8080 = vadd.f32 %v8048, %v2751
        %v8081 = vadd.f32 %v8049, %v2751
        %v8082 = vadd.f32 %v8050, %v2751
        %v8083 = vadd.f32 %v8051, %v2751
        %v8084 = vadd.f32 %v8052, %v2751
        %v8085 = vadd.f32 %v8053, %v2751
        %v8086 = vadd.f32 %v8054, %v2751
        %v8087 = vadd.f32 %v8055, %v2751
        %v8088 = vadd.f32 %v8056, %v2751
        %v8089 = vadd.f32 %v8057, %v2751
        %v8090 = vadd.f32 %v8058, %v2751
        %v8091 = vadd.f32 %v8059, %v2751
        %v8092 = vadd.f32 %v8060, %v2751
        %v8093 = vadd.f32 %v8061, %v2751
        %v8094 = vadd.f32 %v8062, %v2751
        %v8095 = vadd.f32 %v8063, %v2751
        %v8096 = vadd.f32 %v8064, %v2751
        %v8097 = vadd.f32 %v8065, %v2751
        %v8098 = vadd.f32 %v8066, %v2751
        %v8099 = vadd.f32 %v8067, %v2751
        %v8100 = vadd.f32 %v8068, %v2751
        %v8101 = vadd.f32 %v8069, %v2751
        %v8102 = vadd.f32 %v8070, %v2751
        %v8103 = vadd.f32 %v8071, %v2751
        %v8104 = vadd.f32 %v8072, %v2751
        %v8105 = vadd.f32 %v8073, %v2751
        %v8106 = vadd.f32 %v8074, %v2751
        %v8107 = vmax.f32 %v8075, 0.0
        %v8108 = vmax.f32 %v8076, 0.0
        %v8109 = vmax.f32 %v8077, 0.0
        %v8110 = vmax.f32 %v8078, 0.0
        %v8111 = vmax.f32 %v8079, 0.0
        %v8112 = vmax.f32 %v8080, 0.0
        %v8113 = vmax.f32 %v8081, 0.0
        %v8114 = vmax.f32 %v8082, 0.0
        %v8115 = vmax.f32 %v8083, 0.0
        %v8116 = vmax.f32 %v8084, 0.0
        %v8117 = vmax.f32 %v8085, 0.0
        %v8118 = vmax.f32 %v8086, 0.0
        %v8119 = vmax.f32 %v8087, 0.0
        %v8120 = vmax.f32 %v8088, 0.0
        %v8121 = vmax.f32 %v8089, 0.0
        %v8122 = vmax.f32 %v8090, 0.0
        %v8123 = vmax.f32 %v8091, 0.0
        %v8124 = vmax.f32 %v8092, 0.0
        %v8125 = vmax.f32 %v8093, 0.0
        %v8126 = vmax.f32 %v8094, 0.0
        %v8127 = vmax.f32 %v8095, 0.0
        %v8128 = vmax.f32 %v8096, 0.0
        %v8129 = vmax.f32 %v8097, 0.0
        %v8130 = vmax.f32 %v8098, 0.0
        %v8131 = vmax.f32 %v8099, 0.0
        %v8132 = vmax.f32 %v8100, 0.0
        %v8133 = vmax.f32 %v8101, 0.0
        %v8134 = vmax.f32 %v8102, 0.0
        %v8135 = vmax.f32 %v8103, 0.0
        %v8136 = vmax.f32 %v8104, 0.0
        %v8137 = vmax.f32 %v8105, 0.0
        %v8138 = vmax.f32 %v8106, 0.0
        %v8139 = vpack.c.bf16 %v8107, %v8107
        %v8140 = vpack.c.bf16 %v8108, %v8108
        %v8141 = vpack.c.bf16 %v8109, %v8109
        %v8142 = vpack.c.bf16 %v8110, %v8110
        %v8143 = vpack.c.bf16 %v8111, %v8111
        %v8144 = vpack.c.bf16 %v8112, %v8112
        %v8145 = vpack.c.bf16 %v8113, %v8113
        %v8146 = vpack.c.bf16 %v8114, %v8114
        %v8147 = vpack.c.bf16 %v8115, %v8115
        %v8148 = vpack.c.bf16 %v8116, %v8116
        %v8149 = vpack.c.bf16 %v8117, %v8117
        %v8150 = vpack.c.bf16 %v8118, %v8118
        %v8151 = vpack.c.bf16 %v8119, %v8119
        %v8152 = vpack.c.bf16 %v8120, %v8120
        %v8153 = vpack.c.bf16 %v8121, %v8121
        %v8154 = vpack.c.bf16 %v8122, %v8122
        %v8155 = vpack.c.bf16 %v8123, %v8123
        %v8156 = vpack.c.bf16 %v8124, %v8124
        %v8157 = vpack.c.bf16 %v8125, %v8125
        %v8158 = vpack.c.bf16 %v8126, %v8126
        %v8159 = vpack.c.bf16 %v8127, %v8127
        %v8160 = vpack.c.bf16 %v8128, %v8128
        %v8161 = vpack.c.bf16 %v8129, %v8129
        %v8162 = vpack.c.bf16 %v8130, %v8130
        %v8163 = vpack.c.bf16 %v8131, %v8131
        %v8164 = vpack.c.bf16 %v8132, %v8132
        %v8165 = vpack.c.bf16 %v8133, %v8133
        %v8166 = vpack.c.bf16 %v8134, %v8134
        %v8167 = vpack.c.bf16 %v8135, %v8135
        %v8168 = vpack.c.bf16 %v8136, %v8136
        %v8169 = vpack.c.bf16 %v8137, %v8137
        %v8170 = vpack.c.bf16 %v8138, %v8138
        %8171 = vst [vmem:[%s190 + $0x100] sm:$0xf] %v8139
        %8172 = vst [vmem:[%s190 + $0x104] sm:$0xf] %v8140
        %8173 = vst [vmem:[%s190 + $0x108] sm:$0xf] %v8141
        %8174 = vst [vmem:[%s190 + $0x10c] sm:$0xf] %v8142
        %8175 = vst [vmem:[%s190 + $0x110] sm:$0xf] %v8143
        %8176 = vst [vmem:[%s190 + $0x114] sm:$0xf] %v8144
        %8177 = vst [vmem:[%s190 + $0x118] sm:$0xf] %v8145
        %8178 = vst [vmem:[%s190 + $0x11c] sm:$0xf] %v8146
        %8179 = vst [vmem:[%s190 + $0x120] sm:$0xf] %v8147
        %8180 = vst [vmem:[%s190 + $0x124] sm:$0xf] %v8148
        %8181 = vst [vmem:[%s190 + $0x128] sm:$0xf] %v8149
        %8182 = vst [vmem:[%s190 + $0x12c] sm:$0xf] %v8150
        %8183 = vst [vmem:[%s190 + $0x130] sm:$0xf] %v8151
        %8184 = vst [vmem:[%s190 + $0x134] sm:$0xf] %v8152
        %8185 = vst [vmem:[%s190 + $0x138] sm:$0xf] %v8153
        %8186 = vst [vmem:[%s190 + $0x13c] sm:$0xf] %v8154
        %8187 = vst [vmem:[%s190 + $0x140] sm:$0xf] %v8155
        %8188 = vst [vmem:[%s190 + $0x144] sm:$0xf] %v8156
        %8189 = vst [vmem:[%s190 + $0x148] sm:$0xf] %v8157
        %8190 = vst [vmem:[%s190 + $0x14c] sm:$0xf] %v8158
        %8191 = vst [vmem:[%s190 + $0x150] sm:$0xf] %v8159
        %8192 = vst [vmem:[%s190 + $0x154] sm:$0xf] %v8160
        %8193 = vst [vmem:[%s190 + $0x158] sm:$0xf] %v8161
        %8194 = vst [vmem:[%s190 + $0x15c] sm:$0xf] %v8162
        %8195 = vst [vmem:[%s190 + $0x160] sm:$0xf] %v8163
        %8196 = vst [vmem:[%s190 + $0x164] sm:$0xf] %v8164
        %8197 = vst [vmem:[%s190 + $0x168] sm:$0xf] %v8165
        %8198 = vst [vmem:[%s190 + $0x16c] sm:$0xf] %v8166
        %8199 = vst [vmem:[%s190 + $0x170] sm:$0xf] %v8167
        %8200 = vst [vmem:[%s190 + $0x174] sm:$0xf] %v8168
        %8201 = vst [vmem:[%s190 + $0x178] sm:$0xf] %v8169
        %8202 = vst [vmem:[%s190 + $0x17c] sm:$0xf] %v8170
        %v8203 = vld [vmem:[%s195 + $0x180] sm:$0xf]
        %v8204 = vld [vmem:[%s195 + $0x184] sm:$0xf]
        %v8205 = vld [vmem:[%s195 + $0x188] sm:$0xf]
        %v8206 = vld [vmem:[%s195 + $0x18c] sm:$0xf]
        %v8207 = vld [vmem:[%s195 + $0x190] sm:$0xf]
        %v8208 = vld [vmem:[%s195 + $0x194] sm:$0xf]
        %v8209 = vld [vmem:[%s195 + $0x198] sm:$0xf]
        %v8210 = vld [vmem:[%s195 + $0x19c] sm:$0xf]
        %v8211 = vld [vmem:[%s195 + $0x1a0] sm:$0xf]
        %v8212 = vld [vmem:[%s195 + $0x1a4] sm:$0xf]
        %v8213 = vld [vmem:[%s195 + $0x1a8] sm:$0xf]
        %v8214 = vld [vmem:[%s195 + $0x1ac] sm:$0xf]
        %v8215 = vld [vmem:[%s195 + $0x1b0] sm:$0xf]
        %v8216 = vld [vmem:[%s195 + $0x1b4] sm:$0xf]
        %v8217 = vld [vmem:[%s195 + $0x1b8] sm:$0xf]
        %v8218 = vld [vmem:[%s195 + $0x1bc] sm:$0xf]
        %v8219 = vld [vmem:[%s195 + $0x1c0] sm:$0xf]
        %v8220 = vld [vmem:[%s195 + $0x1c4] sm:$0xf]
        %v8221 = vld [vmem:[%s195 + $0x1c8] sm:$0xf]
        %v8222 = vld [vmem:[%s195 + $0x1cc] sm:$0xf]
        %v8223 = vld [vmem:[%s195 + $0x1d0] sm:$0xf]
        %v8224 = vld [vmem:[%s195 + $0x1d4] sm:$0xf]
        %v8225 = vld [vmem:[%s195 + $0x1d8] sm:$0xf]
        %v8226 = vld [vmem:[%s195 + $0x1dc] sm:$0xf]
        %v8227 = vld [vmem:[%s195 + $0x1e0] sm:$0xf]
        %v8228 = vld [vmem:[%s195 + $0x1e4] sm:$0xf]
        %v8229 = vld [vmem:[%s195 + $0x1e8] sm:$0xf]
        %v8230 = vld [vmem:[%s195 + $0x1ec] sm:$0xf]
        %v8231 = vld [vmem:[%s195 + $0x1f0] sm:$0xf]
        %v8232 = vld [vmem:[%s195 + $0x1f4] sm:$0xf]
        %v8233 = vld [vmem:[%s195 + $0x1f8] sm:$0xf]
        %v8234 = vld [vmem:[%s195 + $0x1fc] sm:$0xf]
        %v8235 = vld [vmem:[%s1] sm:$0x3]
        %v8236 = vld [vmem:[%s232 + $0x180] sm:$0xf]
        %v8237 = vld [vmem:[%s232 + $0x184] sm:$0xf]
        %v8238 = vld [vmem:[%s232 + $0x188] sm:$0xf]
        %v8239 = vld [vmem:[%s232 + $0x18c] sm:$0xf]
        %v8240 = vld [vmem:[%s232 + $0x190] sm:$0xf]
        %v8241 = vld [vmem:[%s232 + $0x194] sm:$0xf]
        %v8242 = vld [vmem:[%s232 + $0x198] sm:$0xf]
        %v8243 = vld [vmem:[%s232 + $0x19c] sm:$0xf]
        %v8244 = vld [vmem:[%s232 + $0x1a0] sm:$0xf]
        %v8245 = vld [vmem:[%s232 + $0x1a4] sm:$0xf]
        %v8246 = vld [vmem:[%s232 + $0x1a8] sm:$0xf]
        %v8247 = vld [vmem:[%s232 + $0x1ac] sm:$0xf]
        %v8248 = vld [vmem:[%s232 + $0x1b0] sm:$0xf]
        %v8249 = vld [vmem:[%s232 + $0x1b4] sm:$0xf]
        %v8250 = vld [vmem:[%s232 + $0x1b8] sm:$0xf]
        %v8251 = vld [vmem:[%s232 + $0x1bc] sm:$0xf]
        %v8252 = vld [vmem:[%s232 + $0x1c0] sm:$0xf]
        %v8253 = vld [vmem:[%s232 + $0x1c4] sm:$0xf]
        %v8254 = vld [vmem:[%s232 + $0x1c8] sm:$0xf]
        %v8255 = vld [vmem:[%s232 + $0x1cc] sm:$0xf]
        %v8256 = vld [vmem:[%s232 + $0x1d0] sm:$0xf]
        %v8257 = vld [vmem:[%s232 + $0x1d4] sm:$0xf]
        %v8258 = vld [vmem:[%s232 + $0x1d8] sm:$0xf]
        %v8259 = vld [vmem:[%s232 + $0x1dc] sm:$0xf]
        %v8260 = vld [vmem:[%s232 + $0x1e0] sm:$0xf]
        %v8261 = vld [vmem:[%s232 + $0x1e4] sm:$0xf]
        %v8262 = vld [vmem:[%s232 + $0x1e8] sm:$0xf]
        %v8263 = vld [vmem:[%s232 + $0x1ec] sm:$0xf]
        %v8264 = vld [vmem:[%s232 + $0x1f0] sm:$0xf]
        %v8265 = vld [vmem:[%s232 + $0x1f4] sm:$0xf]
        %v8266 = vld [vmem:[%s232 + $0x1f8] sm:$0xf]
        %v8267 = vld [vmem:[%s232 + $0x1fc] sm:$0xf]
        %v8268 = vld [vmem:[%s265] sm:$0x3]
        %v8301 = vunpack.c.l.b16 %v8236
        %v8302 = vunpack.c.l.b16 %v8237
        %v8303 = vunpack.c.l.b16 %v8238
        %v8304 = vunpack.c.l.b16 %v8239
        %v8305 = vunpack.c.l.b16 %v8240
        %v8306 = vunpack.c.l.b16 %v8241
        %v8307 = vunpack.c.l.b16 %v8242
        %v8308 = vunpack.c.l.b16 %v8243
        %v8309 = vunpack.c.l.b16 %v8244
        %v8310 = vunpack.c.l.b16 %v8245
        %v8311 = vunpack.c.l.b16 %v8246
        %v8312 = vunpack.c.l.b16 %v8247
        %v8313 = vunpack.c.l.b16 %v8248
        %v8314 = vunpack.c.l.b16 %v8249
        %v8315 = vunpack.c.l.b16 %v8250
        %v8316 = vunpack.c.l.b16 %v8251
        %v8317 = vunpack.c.l.b16 %v8252
        %v8318 = vunpack.c.l.b16 %v8253
        %v8319 = vunpack.c.l.b16 %v8254
        %v8320 = vunpack.c.l.b16 %v8255
        %v8321 = vunpack.c.l.b16 %v8256
        %v8322 = vunpack.c.l.b16 %v8257
        %v8323 = vunpack.c.l.b16 %v8258
        %v8324 = vunpack.c.l.b16 %v8259
        %v8325 = vunpack.c.l.b16 %v8260
        %v8326 = vunpack.c.l.b16 %v8261
        %v8327 = vunpack.c.l.b16 %v8262
        %v8328 = vunpack.c.l.b16 %v8263
        %v8329 = vunpack.c.l.b16 %v8264
        %v8330 = vunpack.c.l.b16 %v8265
        %v8331 = vunpack.c.l.b16 %v8266
        %v8332 = vunpack.c.l.b16 %v8267
        %v8333 = vpack.c.b16 %v8302, %v8301
        %v8334 = vpack.c.b16 %v8304, %v8303
        %v8335 = vpack.c.b16 %v8306, %v8305
        %v8336 = vpack.c.b16 %v8308, %v8307
        %v8337 = vpack.c.b16 %v8310, %v8309
        %v8338 = vpack.c.b16 %v8312, %v8311
        %v8339 = vpack.c.b16 %v8314, %v8313
        %v8340 = vpack.c.b16 %v8316, %v8315
        %v8341 = vpack.c.b16 %v8318, %v8317
        %v8342 = vpack.c.b16 %v8320, %v8319
        %v8343 = vpack.c.b16 %v8322, %v8321
        %v8344 = vpack.c.b16 %v8324, %v8323
        %v8345 = vpack.c.b16 %v8326, %v8325
        %v8346 = vpack.c.b16 %v8328, %v8327
        %v8347 = vpack.c.b16 %v8330, %v8329
        %v8348 = vpack.c.b16 %v8332, %v8331
        %v8350 = vsel %vm347, %v8333, 0
        %v8353 = vsel %vm347, %v8334, 0
        %v8356 = vsel %vm347, %v8335, 0
        %v8359 = vsel %vm347, %v8336, 0
        %v8362 = vsel %vm347, %v8337, 0
        %v8365 = vsel %vm347, %v8338, 0
        %v8368 = vsel %vm347, %v8339, 0
        %v8371 = vsel %vm347, %v8340, 0
        %v8374 = vsel %vm347, %v8341, 0
        %v8377 = vsel %vm347, %v8342, 0
        %v8380 = vsel %vm347, %v8343, 0
        %v8383 = vsel %vm347, %v8344, 0
        %v8386 = vsel %vm347, %v8345, 0
        %v8389 = vsel %vm347, %v8346, 0
        %v8392 = vsel %vm347, %v8347, 0
        %v8395 = vsel %vm347, %v8348, 0
        %v8398 = vand.u32 %v8268, %v399
        %8400 = vmatpush.bf16.msra.mxu0 0
        %8401 = vmatpush.bf16.msra.mxu0 0
        %8402 = vmatpush.bf16.msra.mxu0 0
        %8403 = vmatpush.bf16.msra.mxu0 0
        %8404 = vmatpush.bf16.msra.mxu0 0
        %8405 = vmatpush.bf16.msra.mxu0 0
        %8406 = vmatpush.bf16.msra.mxu0 0
        %8407 = vmatpush.bf16.msra.mxu0 %v8398
        %8408 = vmatmul.bf16.gmra.mxu0 %v8350
        %v8409 = vpop.f32.mrf.mxu0
        %v8410 = vadd.f32 0.0, %v8409
        %v8411 = vpop.f32.mrf.mxu0
        %v8412 = vadd.f32 0.0, %v8411
        %8413 = vmatmul.bf16.gmra.mxu0 %v8353
        %v8414 = vpop.f32.mrf.mxu0
        %v8415 = vadd.f32 0.0, %v8414
        %v8416 = vpop.f32.mrf.mxu0
        %v8417 = vadd.f32 0.0, %v8416
        %8418 = vmatmul.bf16.gmra.mxu0 %v8356
        %v8419 = vpop.f32.mrf.mxu0
        %v8420 = vadd.f32 0.0, %v8419
        %v8421 = vpop.f32.mrf.mxu0
        %v8422 = vadd.f32 0.0, %v8421
        %8423 = vmatmul.bf16.gmra.mxu0 %v8359
        %v8424 = vpop.f32.mrf.mxu0
        %v8425 = vadd.f32 0.0, %v8424
        %v8426 = vpop.f32.mrf.mxu0
        %v8427 = vadd.f32 0.0, %v8426
        %8428 = vmatmul.bf16.gmra.mxu0 %v8362
        %v8429 = vpop.f32.mrf.mxu0
        %v8430 = vadd.f32 0.0, %v8429
        %v8431 = vpop.f32.mrf.mxu0
        %v8432 = vadd.f32 0.0, %v8431
        %8433 = vmatmul.bf16.gmra.mxu0 %v8365
        %v8434 = vpop.f32.mrf.mxu0
        %v8435 = vadd.f32 0.0, %v8434
        %v8436 = vpop.f32.mrf.mxu0
        %v8437 = vadd.f32 0.0, %v8436
        %8438 = vmatmul.bf16.gmra.mxu0 %v8368
        %v8439 = vpop.f32.mrf.mxu0
        %v8440 = vadd.f32 0.0, %v8439
        %v8441 = vpop.f32.mrf.mxu0
        %v8442 = vadd.f32 0.0, %v8441
        %8443 = vmatmul.bf16.gmra.mxu0 %v8371
        %v8444 = vpop.f32.mrf.mxu0
        %v8445 = vadd.f32 0.0, %v8444
        %v8446 = vpop.f32.mrf.mxu0
        %v8447 = vadd.f32 0.0, %v8446
        %8448 = vmatmul.bf16.gmra.mxu0 %v8374
        %v8449 = vpop.f32.mrf.mxu0
        %v8450 = vadd.f32 0.0, %v8449
        %v8451 = vpop.f32.mrf.mxu0
        %v8452 = vadd.f32 0.0, %v8451
        %8453 = vmatmul.bf16.gmra.mxu0 %v8377
        %v8454 = vpop.f32.mrf.mxu0
        %v8455 = vadd.f32 0.0, %v8454
        %v8456 = vpop.f32.mrf.mxu0
        %v8457 = vadd.f32 0.0, %v8456
        %8458 = vmatmul.bf16.gmra.mxu0 %v8380
        %v8459 = vpop.f32.mrf.mxu0
        %v8460 = vadd.f32 0.0, %v8459
        %v8461 = vpop.f32.mrf.mxu0
        %v8462 = vadd.f32 0.0, %v8461
        %8463 = vmatmul.bf16.gmra.mxu0 %v8383
        %v8464 = vpop.f32.mrf.mxu0
        %v8465 = vadd.f32 0.0, %v8464
        %v8466 = vpop.f32.mrf.mxu0
        %v8467 = vadd.f32 0.0, %v8466
        %8468 = vmatmul.bf16.gmra.mxu0 %v8386
        %v8469 = vpop.f32.mrf.mxu0
        %v8470 = vadd.f32 0.0, %v8469
        %v8471 = vpop.f32.mrf.mxu0
        %v8472 = vadd.f32 0.0, %v8471
        %8473 = vmatmul.bf16.gmra.mxu0 %v8389
        %v8474 = vpop.f32.mrf.mxu0
        %v8475 = vadd.f32 0.0, %v8474
        %v8476 = vpop.f32.mrf.mxu0
        %v8477 = vadd.f32 0.0, %v8476
        %8478 = vmatmul.bf16.gmra.mxu0 %v8392
        %v8479 = vpop.f32.mrf.mxu0
        %v8480 = vadd.f32 0.0, %v8479
        %v8481 = vpop.f32.mrf.mxu0
        %v8482 = vadd.f32 0.0, %v8481
        %8483 = vmatmul.bf16.gmra.mxu0 %v8395
        %v8484 = vpop.f32.mrf.mxu0
        %v8485 = vadd.f32 0.0, %v8484
        %v8486 = vpop.f32.mrf.mxu0
        %v8487 = vadd.f32 0.0, %v8486
        %8488 = vdwg.mxu0
        %v8521 = vunpack.c.l.b16 %v8203
        %v8522 = vunpack.c.l.b16 %v8204
        %v8523 = vunpack.c.l.b16 %v8205
        %v8524 = vunpack.c.l.b16 %v8206
        %v8525 = vunpack.c.l.b16 %v8207
        %v8526 = vunpack.c.l.b16 %v8208
        %v8527 = vunpack.c.l.b16 %v8209
        %v8528 = vunpack.c.l.b16 %v8210
        %v8529 = vunpack.c.l.b16 %v8211
        %v8530 = vunpack.c.l.b16 %v8212
        %v8531 = vunpack.c.l.b16 %v8213
        %v8532 = vunpack.c.l.b16 %v8214
        %v8533 = vunpack.c.l.b16 %v8215
        %v8534 = vunpack.c.l.b16 %v8216
        %v8535 = vunpack.c.l.b16 %v8217
        %v8536 = vunpack.c.l.b16 %v8218
        %v8537 = vunpack.c.l.b16 %v8219
        %v8538 = vunpack.c.l.b16 %v8220
        %v8539 = vunpack.c.l.b16 %v8221
        %v8540 = vunpack.c.l.b16 %v8222
        %v8541 = vunpack.c.l.b16 %v8223
        %v8542 = vunpack.c.l.b16 %v8224
        %v8543 = vunpack.c.l.b16 %v8225
        %v8544 = vunpack.c.l.b16 %v8226
        %v8545 = vunpack.c.l.b16 %v8227
        %v8546 = vunpack.c.l.b16 %v8228
        %v8547 = vunpack.c.l.b16 %v8229
        %v8548 = vunpack.c.l.b16 %v8230
        %v8549 = vunpack.c.l.b16 %v8231
        %v8550 = vunpack.c.l.b16 %v8232
        %v8551 = vunpack.c.l.b16 %v8233
        %v8552 = vunpack.c.l.b16 %v8234
        %v8553 = vpack.c.b16 %v8522, %v8521
        %v8554 = vpack.c.b16 %v8524, %v8523
        %v8555 = vpack.c.b16 %v8526, %v8525
        %v8556 = vpack.c.b16 %v8528, %v8527
        %v8557 = vpack.c.b16 %v8530, %v8529
        %v8558 = vpack.c.b16 %v8532, %v8531
        %v8559 = vpack.c.b16 %v8534, %v8533
        %v8560 = vpack.c.b16 %v8536, %v8535
        %v8561 = vpack.c.b16 %v8538, %v8537
        %v8562 = vpack.c.b16 %v8540, %v8539
        %v8563 = vpack.c.b16 %v8542, %v8541
        %v8564 = vpack.c.b16 %v8544, %v8543
        %v8565 = vpack.c.b16 %v8546, %v8545
        %v8566 = vpack.c.b16 %v8548, %v8547
        %v8567 = vpack.c.b16 %v8550, %v8549
        %v8568 = vpack.c.b16 %v8552, %v8551
        %v8570 = vsel %vm347, %v8553, 0
        %v8573 = vsel %vm347, %v8554, 0
        %v8576 = vsel %vm347, %v8555, 0
        %v8579 = vsel %vm347, %v8556, 0
        %v8582 = vsel %vm347, %v8557, 0
        %v8585 = vsel %vm347, %v8558, 0
        %v8588 = vsel %vm347, %v8559, 0
        %v8591 = vsel %vm347, %v8560, 0
        %v8594 = vsel %vm347, %v8561, 0
        %v8597 = vsel %vm347, %v8562, 0
        %v8600 = vsel %vm347, %v8563, 0
        %v8603 = vsel %vm347, %v8564, 0
        %v8606 = vsel %vm347, %v8565, 0
        %v8609 = vsel %vm347, %v8566, 0
        %v8612 = vsel %vm347, %v8567, 0
        %v8615 = vsel %vm347, %v8568, 0
        %v8618 = vand.u32 %v8235, %v399
        %8620 = vmatpush.bf16.msra.mxu0 0
        %8621 = vmatpush.bf16.msra.mxu0 0
        %8622 = vmatpush.bf16.msra.mxu0 0
        %8623 = vmatpush.bf16.msra.mxu0 0
        %8624 = vmatpush.bf16.msra.mxu0 0
        %8625 = vmatpush.bf16.msra.mxu0 0
        %8626 = vmatpush.bf16.msra.mxu0 0
        %8627 = vmatpush.bf16.msra.mxu0 %v8618
        %8628 = vmatmul.bf16.gmra.mxu0 %v8570
        %v8629 = vpop.f32.mrf.mxu0
        %v8630 = vadd.f32 %v8410, %v8629
        %v8631 = vpop.f32.mrf.mxu0
        %v8632 = vadd.f32 %v8412, %v8631
        %8633 = vmatmul.bf16.gmra.mxu0 %v8573
        %v8634 = vpop.f32.mrf.mxu0
        %v8635 = vadd.f32 %v8415, %v8634
        %v8636 = vpop.f32.mrf.mxu0
        %v8637 = vadd.f32 %v8417, %v8636
        %8638 = vmatmul.bf16.gmra.mxu0 %v8576
        %v8639 = vpop.f32.mrf.mxu0
        %v8640 = vadd.f32 %v8420, %v8639
        %v8641 = vpop.f32.mrf.mxu0
        %v8642 = vadd.f32 %v8422, %v8641
        %8643 = vmatmul.bf16.gmra.mxu0 %v8579
        %v8644 = vpop.f32.mrf.mxu0
        %v8645 = vadd.f32 %v8425, %v8644
        %v8646 = vpop.f32.mrf.mxu0
        %v8647 = vadd.f32 %v8427, %v8646
        %8648 = vmatmul.bf16.gmra.mxu0 %v8582
        %v8649 = vpop.f32.mrf.mxu0
        %v8650 = vadd.f32 %v8430, %v8649
        %v8651 = vpop.f32.mrf.mxu0
        %v8652 = vadd.f32 %v8432, %v8651
        %8653 = vmatmul.bf16.gmra.mxu0 %v8585
        %v8654 = vpop.f32.mrf.mxu0
        %v8655 = vadd.f32 %v8435, %v8654
        %v8656 = vpop.f32.mrf.mxu0
        %v8657 = vadd.f32 %v8437, %v8656
        %8658 = vmatmul.bf16.gmra.mxu0 %v8588
        %v8659 = vpop.f32.mrf.mxu0
        %v8660 = vadd.f32 %v8440, %v8659
        %v8661 = vpop.f32.mrf.mxu0
        %v8662 = vadd.f32 %v8442, %v8661
        %8663 = vmatmul.bf16.gmra.mxu0 %v8591
        %v8664 = vpop.f32.mrf.mxu0
        %v8665 = vadd.f32 %v8445, %v8664
        %v8666 = vpop.f32.mrf.mxu0
        %v8667 = vadd.f32 %v8447, %v8666
        %8668 = vmatmul.bf16.gmra.mxu0 %v8594
        %v8669 = vpop.f32.mrf.mxu0
        %v8670 = vadd.f32 %v8450, %v8669
        %v8671 = vpop.f32.mrf.mxu0
        %v8672 = vadd.f32 %v8452, %v8671
        %8673 = vmatmul.bf16.gmra.mxu0 %v8597
        %v8674 = vpop.f32.mrf.mxu0
        %v8675 = vadd.f32 %v8455, %v8674
        %v8676 = vpop.f32.mrf.mxu0
        %v8677 = vadd.f32 %v8457, %v8676
        %8678 = vmatmul.bf16.gmra.mxu0 %v8600
        %v8679 = vpop.f32.mrf.mxu0
        %v8680 = vadd.f32 %v8460, %v8679
        %v8681 = vpop.f32.mrf.mxu0
        %v8682 = vadd.f32 %v8462, %v8681
        %8683 = vmatmul.bf16.gmra.mxu0 %v8603
        %v8684 = vpop.f32.mrf.mxu0
        %v8685 = vadd.f32 %v8465, %v8684
        %v8686 = vpop.f32.mrf.mxu0
        %v8687 = vadd.f32 %v8467, %v8686
        %8688 = vmatmul.bf16.gmra.mxu0 %v8606
        %v8689 = vpop.f32.mrf.mxu0
        %v8690 = vadd.f32 %v8470, %v8689
        %v8691 = vpop.f32.mrf.mxu0
        %v8692 = vadd.f32 %v8472, %v8691
        %8693 = vmatmul.bf16.gmra.mxu0 %v8609
        %v8694 = vpop.f32.mrf.mxu0
        %v8695 = vadd.f32 %v8475, %v8694
        %v8696 = vpop.f32.mrf.mxu0
        %v8697 = vadd.f32 %v8477, %v8696
        %8698 = vmatmul.bf16.gmra.mxu0 %v8612
        %v8699 = vpop.f32.mrf.mxu0
        %v8700 = vadd.f32 %v8480, %v8699
        %v8701 = vpop.f32.mrf.mxu0
        %v8702 = vadd.f32 %v8482, %v8701
        %8703 = vmatmul.bf16.gmra.mxu0 %v8615
        %v8704 = vpop.f32.mrf.mxu0
        %v8705 = vadd.f32 %v8485, %v8704
        %v8706 = vpop.f32.mrf.mxu0
        %v8707 = vadd.f32 %v8487, %v8706
        %8708 = vdwg.mxu0
        %v8709 = vld [vmem:[%s712 + $0x180] sm:$0xf]
        %v8710 = vld [vmem:[%s712 + $0x184] sm:$0xf]
        %v8711 = vld [vmem:[%s712 + $0x188] sm:$0xf]
        %v8712 = vld [vmem:[%s712 + $0x18c] sm:$0xf]
        %v8713 = vld [vmem:[%s712 + $0x190] sm:$0xf]
        %v8714 = vld [vmem:[%s712 + $0x194] sm:$0xf]
        %v8715 = vld [vmem:[%s712 + $0x198] sm:$0xf]
        %v8716 = vld [vmem:[%s712 + $0x19c] sm:$0xf]
        %v8717 = vld [vmem:[%s712 + $0x1a0] sm:$0xf]
        %v8718 = vld [vmem:[%s712 + $0x1a4] sm:$0xf]
        %v8719 = vld [vmem:[%s712 + $0x1a8] sm:$0xf]
        %v8720 = vld [vmem:[%s712 + $0x1ac] sm:$0xf]
        %v8721 = vld [vmem:[%s712 + $0x1b0] sm:$0xf]
        %v8722 = vld [vmem:[%s712 + $0x1b4] sm:$0xf]
        %v8723 = vld [vmem:[%s712 + $0x1b8] sm:$0xf]
        %v8724 = vld [vmem:[%s712 + $0x1bc] sm:$0xf]
        %v8725 = vld [vmem:[%s712 + $0x1c0] sm:$0xf]
        %v8726 = vld [vmem:[%s712 + $0x1c4] sm:$0xf]
        %v8727 = vld [vmem:[%s712 + $0x1c8] sm:$0xf]
        %v8728 = vld [vmem:[%s712 + $0x1cc] sm:$0xf]
        %v8729 = vld [vmem:[%s712 + $0x1d0] sm:$0xf]
        %v8730 = vld [vmem:[%s712 + $0x1d4] sm:$0xf]
        %v8731 = vld [vmem:[%s712 + $0x1d8] sm:$0xf]
        %v8732 = vld [vmem:[%s712 + $0x1dc] sm:$0xf]
        %v8733 = vld [vmem:[%s712 + $0x1e0] sm:$0xf]
        %v8734 = vld [vmem:[%s712 + $0x1e4] sm:$0xf]
        %v8735 = vld [vmem:[%s712 + $0x1e8] sm:$0xf]
        %v8736 = vld [vmem:[%s712 + $0x1ec] sm:$0xf]
        %v8737 = vld [vmem:[%s712 + $0x1f0] sm:$0xf]
        %v8738 = vld [vmem:[%s712 + $0x1f4] sm:$0xf]
        %v8739 = vld [vmem:[%s712 + $0x1f8] sm:$0xf]
        %v8740 = vld [vmem:[%s712 + $0x1fc] sm:$0xf]
        %v8741 = vld [vmem:[%s745] sm:$0x3]
        %v8774 = vunpack.c.l.b16 %v8709
        %v8775 = vunpack.c.l.b16 %v8710
        %v8776 = vunpack.c.l.b16 %v8711
        %v8777 = vunpack.c.l.b16 %v8712
        %v8778 = vunpack.c.l.b16 %v8713
        %v8779 = vunpack.c.l.b16 %v8714
        %v8780 = vunpack.c.l.b16 %v8715
        %v8781 = vunpack.c.l.b16 %v8716
        %v8782 = vunpack.c.l.b16 %v8717
        %v8783 = vunpack.c.l.b16 %v8718
        %v8784 = vunpack.c.l.b16 %v8719
        %v8785 = vunpack.c.l.b16 %v8720
        %v8786 = vunpack.c.l.b16 %v8721
        %v8787 = vunpack.c.l.b16 %v8722
        %v8788 = vunpack.c.l.b16 %v8723
        %v8789 = vunpack.c.l.b16 %v8724
        %v8790 = vunpack.c.l.b16 %v8725
        %v8791 = vunpack.c.l.b16 %v8726
        %v8792 = vunpack.c.l.b16 %v8727
        %v8793 = vunpack.c.l.b16 %v8728
        %v8794 = vunpack.c.l.b16 %v8729
        %v8795 = vunpack.c.l.b16 %v8730
        %v8796 = vunpack.c.l.b16 %v8731
        %v8797 = vunpack.c.l.b16 %v8732
        %v8798 = vunpack.c.l.b16 %v8733
        %v8799 = vunpack.c.l.b16 %v8734
        %v8800 = vunpack.c.l.b16 %v8735
        %v8801 = vunpack.c.l.b16 %v8736
        %v8802 = vunpack.c.l.b16 %v8737
        %v8803 = vunpack.c.l.b16 %v8738
        %v8804 = vunpack.c.l.b16 %v8739
        %v8805 = vunpack.c.l.b16 %v8740
        %v8806 = vpack.c.b16 %v8775, %v8774
        %v8807 = vpack.c.b16 %v8777, %v8776
        %v8808 = vpack.c.b16 %v8779, %v8778
        %v8809 = vpack.c.b16 %v8781, %v8780
        %v8810 = vpack.c.b16 %v8783, %v8782
        %v8811 = vpack.c.b16 %v8785, %v8784
        %v8812 = vpack.c.b16 %v8787, %v8786
        %v8813 = vpack.c.b16 %v8789, %v8788
        %v8814 = vpack.c.b16 %v8791, %v8790
        %v8815 = vpack.c.b16 %v8793, %v8792
        %v8816 = vpack.c.b16 %v8795, %v8794
        %v8817 = vpack.c.b16 %v8797, %v8796
        %v8818 = vpack.c.b16 %v8799, %v8798
        %v8819 = vpack.c.b16 %v8801, %v8800
        %v8820 = vpack.c.b16 %v8803, %v8802
        %v8821 = vpack.c.b16 %v8805, %v8804
        %v8823 = vsel %vm347, %v8806, 0
        %v8826 = vsel %vm347, %v8807, 0
        %v8829 = vsel %vm347, %v8808, 0
        %v8832 = vsel %vm347, %v8809, 0
        %v8835 = vsel %vm347, %v8810, 0
        %v8838 = vsel %vm347, %v8811, 0
        %v8841 = vsel %vm347, %v8812, 0
        %v8844 = vsel %vm347, %v8813, 0
        %v8847 = vsel %vm347, %v8814, 0
        %v8850 = vsel %vm347, %v8815, 0
        %v8853 = vsel %vm347, %v8816, 0
        %v8856 = vsel %vm347, %v8817, 0
        %v8859 = vsel %vm347, %v8818, 0
        %v8862 = vsel %vm347, %v8819, 0
        %v8865 = vsel %vm347, %v8820, 0
        %v8868 = vsel %vm347, %v8821, 0
        %v8871 = vand.u32 %v8741, %v399
        %8873 = vmatpush.bf16.msra.mxu0 0
        %8874 = vmatpush.bf16.msra.mxu0 0
        %8875 = vmatpush.bf16.msra.mxu0 0
        %8876 = vmatpush.bf16.msra.mxu0 0
        %8877 = vmatpush.bf16.msra.mxu0 0
        %8878 = vmatpush.bf16.msra.mxu0 0
        %8879 = vmatpush.bf16.msra.mxu0 0
        %8880 = vmatpush.bf16.msra.mxu0 %v8871
        %8881 = vmatmul.bf16.gmra.mxu0 %v8823
        %v8882 = vpop.f32.mrf.mxu0
        %v8883 = vadd.f32 0.0, %v8882
        %v8884 = vpop.f32.mrf.mxu0
        %v8885 = vadd.f32 0.0, %v8884
        %8886 = vmatmul.bf16.gmra.mxu0 %v8826
        %v8887 = vpop.f32.mrf.mxu0
        %v8888 = vadd.f32 0.0, %v8887
        %v8889 = vpop.f32.mrf.mxu0
        %v8890 = vadd.f32 0.0, %v8889
        %8891 = vmatmul.bf16.gmra.mxu0 %v8829
        %v8892 = vpop.f32.mrf.mxu0
        %v8893 = vadd.f32 0.0, %v8892
        %v8894 = vpop.f32.mrf.mxu0
        %v8895 = vadd.f32 0.0, %v8894
        %8896 = vmatmul.bf16.gmra.mxu0 %v8832
        %v8897 = vpop.f32.mrf.mxu0
        %v8898 = vadd.f32 0.0, %v8897
        %v8899 = vpop.f32.mrf.mxu0
        %v8900 = vadd.f32 0.0, %v8899
        %8901 = vmatmul.bf16.gmra.mxu0 %v8835
        %v8902 = vpop.f32.mrf.mxu0
        %v8903 = vadd.f32 0.0, %v8902
        %v8904 = vpop.f32.mrf.mxu0
        %v8905 = vadd.f32 0.0, %v8904
        %8906 = vmatmul.bf16.gmra.mxu0 %v8838
        %v8907 = vpop.f32.mrf.mxu0
        %v8908 = vadd.f32 0.0, %v8907
        %v8909 = vpop.f32.mrf.mxu0
        %v8910 = vadd.f32 0.0, %v8909
        %8911 = vmatmul.bf16.gmra.mxu0 %v8841
        %v8912 = vpop.f32.mrf.mxu0
        %v8913 = vadd.f32 0.0, %v8912
        %v8914 = vpop.f32.mrf.mxu0
        %v8915 = vadd.f32 0.0, %v8914
        %8916 = vmatmul.bf16.gmra.mxu0 %v8844
        %v8917 = vpop.f32.mrf.mxu0
        %v8918 = vadd.f32 0.0, %v8917
        %v8919 = vpop.f32.mrf.mxu0
        %v8920 = vadd.f32 0.0, %v8919
        %8921 = vmatmul.bf16.gmra.mxu0 %v8847
        %v8922 = vpop.f32.mrf.mxu0
        %v8923 = vadd.f32 0.0, %v8922
        %v8924 = vpop.f32.mrf.mxu0
        %v8925 = vadd.f32 0.0, %v8924
        %8926 = vmatmul.bf16.gmra.mxu0 %v8850
        %v8927 = vpop.f32.mrf.mxu0
        %v8928 = vadd.f32 0.0, %v8927
        %v8929 = vpop.f32.mrf.mxu0
        %v8930 = vadd.f32 0.0, %v8929
        %8931 = vmatmul.bf16.gmra.mxu0 %v8853
        %v8932 = vpop.f32.mrf.mxu0
        %v8933 = vadd.f32 0.0, %v8932
        %v8934 = vpop.f32.mrf.mxu0
        %v8935 = vadd.f32 0.0, %v8934
        %8936 = vmatmul.bf16.gmra.mxu0 %v8856
        %v8937 = vpop.f32.mrf.mxu0
        %v8938 = vadd.f32 0.0, %v8937
        %v8939 = vpop.f32.mrf.mxu0
        %v8940 = vadd.f32 0.0, %v8939
        %8941 = vmatmul.bf16.gmra.mxu0 %v8859
        %v8942 = vpop.f32.mrf.mxu0
        %v8943 = vadd.f32 0.0, %v8942
        %v8944 = vpop.f32.mrf.mxu0
        %v8945 = vadd.f32 0.0, %v8944
        %8946 = vmatmul.bf16.gmra.mxu0 %v8862
        %v8947 = vpop.f32.mrf.mxu0
        %v8948 = vadd.f32 0.0, %v8947
        %v8949 = vpop.f32.mrf.mxu0
        %v8950 = vadd.f32 0.0, %v8949
        %8951 = vmatmul.bf16.gmra.mxu0 %v8865
        %v8952 = vpop.f32.mrf.mxu0
        %v8953 = vadd.f32 0.0, %v8952
        %v8954 = vpop.f32.mrf.mxu0
        %v8955 = vadd.f32 0.0, %v8954
        %8956 = vmatmul.bf16.gmra.mxu0 %v8868
        %v8957 = vpop.f32.mrf.mxu0
        %v8958 = vadd.f32 0.0, %v8957
        %v8959 = vpop.f32.mrf.mxu0
        %v8960 = vadd.f32 0.0, %v8959
        %8961 = vdwg.mxu0
        %v8962 = vadd.f32 %v8630, %v8883
        %v8963 = vadd.f32 %v8632, %v8885
        %v8964 = vadd.f32 %v8635, %v8888
        %v8965 = vadd.f32 %v8637, %v8890
        %v8966 = vadd.f32 %v8640, %v8893
        %v8967 = vadd.f32 %v8642, %v8895
        %v8968 = vadd.f32 %v8645, %v8898
        %v8969 = vadd.f32 %v8647, %v8900
        %v8970 = vadd.f32 %v8650, %v8903
        %v8971 = vadd.f32 %v8652, %v8905
        %v8972 = vadd.f32 %v8655, %v8908
        %v8973 = vadd.f32 %v8657, %v8910
        %v8974 = vadd.f32 %v8660, %v8913
        %v8975 = vadd.f32 %v8662, %v8915
        %v8976 = vadd.f32 %v8665, %v8918
        %v8977 = vadd.f32 %v8667, %v8920
        %v8978 = vadd.f32 %v8670, %v8923
        %v8979 = vadd.f32 %v8672, %v8925
        %v8980 = vadd.f32 %v8675, %v8928
        %v8981 = vadd.f32 %v8677, %v8930
        %v8982 = vadd.f32 %v8680, %v8933
        %v8983 = vadd.f32 %v8682, %v8935
        %v8984 = vadd.f32 %v8685, %v8938
        %v8985 = vadd.f32 %v8687, %v8940
        %v8986 = vadd.f32 %v8690, %v8943
        %v8987 = vadd.f32 %v8692, %v8945
        %v8988 = vadd.f32 %v8695, %v8948
        %v8989 = vadd.f32 %v8697, %v8950
        %v8990 = vadd.f32 %v8700, %v8953
        %v8991 = vadd.f32 %v8702, %v8955
        %v8992 = vadd.f32 %v8705, %v8958
        %v8993 = vadd.f32 %v8707, %v8960
        %v8994 = vld [vmem:[%s195 + $0x190] sm:$0xf]
        %v8995 = vld [vmem:[%s195 + $0x194] sm:$0xf]
        %v8996 = vld [vmem:[%s195 + $0x198] sm:$0xf]
        %v8997 = vld [vmem:[%s195 + $0x19c] sm:$0xf]
        %v8998 = vld [vmem:[%s195 + $0x1a0] sm:$0xf]
        %v8999 = vld [vmem:[%s195 + $0x1a4] sm:$0xf]
        %v9000 = vld [vmem:[%s195 + $0x1a8] sm:$0xf]
        %v9001 = vld [vmem:[%s195 + $0x1ac] sm:$0xf]
        %v9002 = vld [vmem:[%s195 + $0x1b0] sm:$0xf]
        %v9003 = vld [vmem:[%s195 + $0x1b4] sm:$0xf]
        %v9004 = vld [vmem:[%s195 + $0x1b8] sm:$0xf]
        %v9005 = vld [vmem:[%s195 + $0x1bc] sm:$0xf]
        %v9006 = vld [vmem:[%s195 + $0x1c0] sm:$0xf]
        %v9007 = vld [vmem:[%s195 + $0x1c4] sm:$0xf]
        %v9008 = vld [vmem:[%s195 + $0x1c8] sm:$0xf]
        %v9009 = vld [vmem:[%s195 + $0x1cc] sm:$0xf]
        %v9010 = vld [vmem:[%s195 + $0x1d0] sm:$0xf]
        %v9011 = vld [vmem:[%s195 + $0x1d4] sm:$0xf]
        %v9012 = vld [vmem:[%s195 + $0x1d8] sm:$0xf]
        %v9013 = vld [vmem:[%s195 + $0x1dc] sm:$0xf]
        %v9014 = vld [vmem:[%s195 + $0x1e0] sm:$0xf]
        %v9015 = vld [vmem:[%s195 + $0x1e4] sm:$0xf]
        %v9016 = vld [vmem:[%s195 + $0x1e8] sm:$0xf]
        %v9017 = vld [vmem:[%s195 + $0x1ec] sm:$0xf]
        %v9018 = vld [vmem:[%s195 + $0x1f0] sm:$0xf]
        %v9019 = vld [vmem:[%s195 + $0x1f4] sm:$0xf]
        %v9020 = vld [vmem:[%s195 + $0x1f8] sm:$0xf]
        %v9021 = vld [vmem:[%s195 + $0x1fc] sm:$0xf]
        %v9022 = vld [vmem:[%s195 + $0x200] sm:$0xf]
        %v9023 = vld [vmem:[%s195 + $0x204] sm:$0xf]
        %v9024 = vld [vmem:[%s195 + $0x208] sm:$0xf]
        %v9025 = vld [vmem:[%s195 + $0x20c] sm:$0xf]
        %v9026 = vld [vmem:[%s1031] sm:$0x3]
        %v9059 = vunpack.c.l.b16 %v8994
        %v9060 = vunpack.c.l.b16 %v8995
        %v9061 = vunpack.c.l.b16 %v8996
        %v9062 = vunpack.c.l.b16 %v8997
        %v9063 = vunpack.c.l.b16 %v8998
        %v9064 = vunpack.c.l.b16 %v8999
        %v9065 = vunpack.c.l.b16 %v9000
        %v9066 = vunpack.c.l.b16 %v9001
        %v9067 = vunpack.c.l.b16 %v9002
        %v9068 = vunpack.c.l.b16 %v9003
        %v9069 = vunpack.c.l.b16 %v9004
        %v9070 = vunpack.c.l.b16 %v9005
        %v9071 = vunpack.c.l.b16 %v9006
        %v9072 = vunpack.c.l.b16 %v9007
        %v9073 = vunpack.c.l.b16 %v9008
        %v9074 = vunpack.c.l.b16 %v9009
        %v9075 = vunpack.c.l.b16 %v9010
        %v9076 = vunpack.c.l.b16 %v9011
        %v9077 = vunpack.c.l.b16 %v9012
        %v9078 = vunpack.c.l.b16 %v9013
        %v9079 = vunpack.c.l.b16 %v9014
        %v9080 = vunpack.c.l.b16 %v9015
        %v9081 = vunpack.c.l.b16 %v9016
        %v9082 = vunpack.c.l.b16 %v9017
        %v9083 = vunpack.c.l.b16 %v9018
        %v9084 = vunpack.c.l.b16 %v9019
        %v9085 = vunpack.c.l.b16 %v9020
        %v9086 = vunpack.c.l.b16 %v9021
        %v9087 = vunpack.c.l.b16 %v9022
        %v9088 = vunpack.c.l.b16 %v9023
        %v9089 = vunpack.c.l.b16 %v9024
        %v9090 = vunpack.c.l.b16 %v9025
        %v9091 = vpack.c.b16 %v9060, %v9059
        %v9092 = vpack.c.b16 %v9062, %v9061
        %v9093 = vpack.c.b16 %v9064, %v9063
        %v9094 = vpack.c.b16 %v9066, %v9065
        %v9095 = vpack.c.b16 %v9068, %v9067
        %v9096 = vpack.c.b16 %v9070, %v9069
        %v9097 = vpack.c.b16 %v9072, %v9071
        %v9098 = vpack.c.b16 %v9074, %v9073
        %v9099 = vpack.c.b16 %v9076, %v9075
        %v9100 = vpack.c.b16 %v9078, %v9077
        %v9101 = vpack.c.b16 %v9080, %v9079
        %v9102 = vpack.c.b16 %v9082, %v9081
        %v9103 = vpack.c.b16 %v9084, %v9083
        %v9104 = vpack.c.b16 %v9086, %v9085
        %v9105 = vpack.c.b16 %v9088, %v9087
        %v9106 = vpack.c.b16 %v9090, %v9089
        %v9108 = vsel %vm347, %v9091, 0
        %v9111 = vsel %vm347, %v9092, 0
        %v9114 = vsel %vm347, %v9093, 0
        %v9117 = vsel %vm347, %v9094, 0
        %v9120 = vsel %vm347, %v9095, 0
        %v9123 = vsel %vm347, %v9096, 0
        %v9126 = vsel %vm347, %v9097, 0
        %v9129 = vsel %vm347, %v9098, 0
        %v9132 = vsel %vm347, %v9099, 0
        %v9135 = vsel %vm347, %v9100, 0
        %v9138 = vsel %vm347, %v9101, 0
        %v9141 = vsel %vm347, %v9102, 0
        %v9144 = vsel %vm347, %v9103, 0
        %v9147 = vsel %vm347, %v9104, 0
        %v9150 = vsel %vm347, %v9105, 0
        %v9153 = vsel %vm347, %v9106, 0
        %v9156 = vand.u32 %v9026, %v399
        %9158 = vmatpush.bf16.msra.mxu0 0
        %9159 = vmatpush.bf16.msra.mxu0 0
        %9160 = vmatpush.bf16.msra.mxu0 0
        %9161 = vmatpush.bf16.msra.mxu0 0
        %9162 = vmatpush.bf16.msra.mxu0 0
        %9163 = vmatpush.bf16.msra.mxu0 0
        %9164 = vmatpush.bf16.msra.mxu0 0
        %9165 = vmatpush.bf16.msra.mxu0 %v9156
        %9166 = vmatmul.bf16.gmra.mxu0 %v9108
        %v9167 = vpop.f32.mrf.mxu0
        %v9168 = vadd.f32 0.0, %v9167
        %v9169 = vpop.f32.mrf.mxu0
        %v9170 = vadd.f32 0.0, %v9169
        %9171 = vmatmul.bf16.gmra.mxu0 %v9111
        %v9172 = vpop.f32.mrf.mxu0
        %v9173 = vadd.f32 0.0, %v9172
        %v9174 = vpop.f32.mrf.mxu0
        %v9175 = vadd.f32 0.0, %v9174
        %9176 = vmatmul.bf16.gmra.mxu0 %v9114
        %v9177 = vpop.f32.mrf.mxu0
        %v9178 = vadd.f32 0.0, %v9177
        %v9179 = vpop.f32.mrf.mxu0
        %v9180 = vadd.f32 0.0, %v9179
        %9181 = vmatmul.bf16.gmra.mxu0 %v9117
        %v9182 = vpop.f32.mrf.mxu0
        %v9183 = vadd.f32 0.0, %v9182
        %v9184 = vpop.f32.mrf.mxu0
        %v9185 = vadd.f32 0.0, %v9184
        %9186 = vmatmul.bf16.gmra.mxu0 %v9120
        %v9187 = vpop.f32.mrf.mxu0
        %v9188 = vadd.f32 0.0, %v9187
        %v9189 = vpop.f32.mrf.mxu0
        %v9190 = vadd.f32 0.0, %v9189
        %9191 = vmatmul.bf16.gmra.mxu0 %v9123
        %v9192 = vpop.f32.mrf.mxu0
        %v9193 = vadd.f32 0.0, %v9192
        %v9194 = vpop.f32.mrf.mxu0
        %v9195 = vadd.f32 0.0, %v9194
        %9196 = vmatmul.bf16.gmra.mxu0 %v9126
        %v9197 = vpop.f32.mrf.mxu0
        %v9198 = vadd.f32 0.0, %v9197
        %v9199 = vpop.f32.mrf.mxu0
        %v9200 = vadd.f32 0.0, %v9199
        %9201 = vmatmul.bf16.gmra.mxu0 %v9129
        %v9202 = vpop.f32.mrf.mxu0
        %v9203 = vadd.f32 0.0, %v9202
        %v9204 = vpop.f32.mrf.mxu0
        %v9205 = vadd.f32 0.0, %v9204
        %9206 = vmatmul.bf16.gmra.mxu0 %v9132
        %v9207 = vpop.f32.mrf.mxu0
        %v9208 = vadd.f32 0.0, %v9207
        %v9209 = vpop.f32.mrf.mxu0
        %v9210 = vadd.f32 0.0, %v9209
        %9211 = vmatmul.bf16.gmra.mxu0 %v9135
        %v9212 = vpop.f32.mrf.mxu0
        %v9213 = vadd.f32 0.0, %v9212
        %v9214 = vpop.f32.mrf.mxu0
        %v9215 = vadd.f32 0.0, %v9214
        %9216 = vmatmul.bf16.gmra.mxu0 %v9138
        %v9217 = vpop.f32.mrf.mxu0
        %v9218 = vadd.f32 0.0, %v9217
        %v9219 = vpop.f32.mrf.mxu0
        %v9220 = vadd.f32 0.0, %v9219
        %9221 = vmatmul.bf16.gmra.mxu0 %v9141
        %v9222 = vpop.f32.mrf.mxu0
        %v9223 = vadd.f32 0.0, %v9222
        %v9224 = vpop.f32.mrf.mxu0
        %v9225 = vadd.f32 0.0, %v9224
        %9226 = vmatmul.bf16.gmra.mxu0 %v9144
        %v9227 = vpop.f32.mrf.mxu0
        %v9228 = vadd.f32 0.0, %v9227
        %v9229 = vpop.f32.mrf.mxu0
        %v9230 = vadd.f32 0.0, %v9229
        %9231 = vmatmul.bf16.gmra.mxu0 %v9147
        %v9232 = vpop.f32.mrf.mxu0
        %v9233 = vadd.f32 0.0, %v9232
        %v9234 = vpop.f32.mrf.mxu0
        %v9235 = vadd.f32 0.0, %v9234
        %9236 = vmatmul.bf16.gmra.mxu0 %v9150
        %v9237 = vpop.f32.mrf.mxu0
        %v9238 = vadd.f32 0.0, %v9237
        %v9239 = vpop.f32.mrf.mxu0
        %v9240 = vadd.f32 0.0, %v9239
        %9241 = vmatmul.bf16.gmra.mxu0 %v9153
        %v9242 = vpop.f32.mrf.mxu0
        %v9243 = vadd.f32 0.0, %v9242
        %v9244 = vpop.f32.mrf.mxu0
        %v9245 = vadd.f32 0.0, %v9244
        %9246 = vdwg.mxu0
        %v9247 = vadd.f32 %v8962, %v9168
        %v9248 = vadd.f32 %v8963, %v9170
        %v9249 = vadd.f32 %v8964, %v9173
        %v9250 = vadd.f32 %v8965, %v9175
        %v9251 = vadd.f32 %v8966, %v9178
        %v9252 = vadd.f32 %v8967, %v9180
        %v9253 = vadd.f32 %v8968, %v9183
        %v9254 = vadd.f32 %v8969, %v9185
        %v9255 = vadd.f32 %v8970, %v9188
        %v9256 = vadd.f32 %v8971, %v9190
        %v9257 = vadd.f32 %v8972, %v9193
        %v9258 = vadd.f32 %v8973, %v9195
        %v9259 = vadd.f32 %v8974, %v9198
        %v9260 = vadd.f32 %v8975, %v9200
        %v9261 = vadd.f32 %v8976, %v9203
        %v9262 = vadd.f32 %v8977, %v9205
        %v9263 = vadd.f32 %v8978, %v9208
        %v9264 = vadd.f32 %v8979, %v9210
        %v9265 = vadd.f32 %v8980, %v9213
        %v9266 = vadd.f32 %v8981, %v9215
        %v9267 = vadd.f32 %v8982, %v9218
        %v9268 = vadd.f32 %v8983, %v9220
        %v9269 = vadd.f32 %v8984, %v9223
        %v9270 = vadd.f32 %v8985, %v9225
        %v9271 = vadd.f32 %v8986, %v9228
        %v9272 = vadd.f32 %v8987, %v9230
        %v9273 = vadd.f32 %v8988, %v9233
        %v9274 = vadd.f32 %v8989, %v9235
        %v9275 = vadd.f32 %v8990, %v9238
        %v9276 = vadd.f32 %v8991, %v9240
        %v9277 = vadd.f32 %v8992, %v9243
        %v9278 = vadd.f32 %v8993, %v9245
        %v9279 = vld [vmem:[%s232 + $0x190] sm:$0xf]
        %v9280 = vld [vmem:[%s232 + $0x194] sm:$0xf]
        %v9281 = vld [vmem:[%s232 + $0x198] sm:$0xf]
        %v9282 = vld [vmem:[%s232 + $0x19c] sm:$0xf]
        %v9283 = vld [vmem:[%s232 + $0x1a0] sm:$0xf]
        %v9284 = vld [vmem:[%s232 + $0x1a4] sm:$0xf]
        %v9285 = vld [vmem:[%s232 + $0x1a8] sm:$0xf]
        %v9286 = vld [vmem:[%s232 + $0x1ac] sm:$0xf]
        %v9287 = vld [vmem:[%s232 + $0x1b0] sm:$0xf]
        %v9288 = vld [vmem:[%s232 + $0x1b4] sm:$0xf]
        %v9289 = vld [vmem:[%s232 + $0x1b8] sm:$0xf]
        %v9290 = vld [vmem:[%s232 + $0x1bc] sm:$0xf]
        %v9291 = vld [vmem:[%s232 + $0x1c0] sm:$0xf]
        %v9292 = vld [vmem:[%s232 + $0x1c4] sm:$0xf]
        %v9293 = vld [vmem:[%s232 + $0x1c8] sm:$0xf]
        %v9294 = vld [vmem:[%s232 + $0x1cc] sm:$0xf]
        %v9295 = vld [vmem:[%s232 + $0x1d0] sm:$0xf]
        %v9296 = vld [vmem:[%s232 + $0x1d4] sm:$0xf]
        %v9297 = vld [vmem:[%s232 + $0x1d8] sm:$0xf]
        %v9298 = vld [vmem:[%s232 + $0x1dc] sm:$0xf]
        %v9299 = vld [vmem:[%s232 + $0x1e0] sm:$0xf]
        %v9300 = vld [vmem:[%s232 + $0x1e4] sm:$0xf]
        %v9301 = vld [vmem:[%s232 + $0x1e8] sm:$0xf]
        %v9302 = vld [vmem:[%s232 + $0x1ec] sm:$0xf]
        %v9303 = vld [vmem:[%s232 + $0x1f0] sm:$0xf]
        %v9304 = vld [vmem:[%s232 + $0x1f4] sm:$0xf]
        %v9305 = vld [vmem:[%s232 + $0x1f8] sm:$0xf]
        %v9306 = vld [vmem:[%s232 + $0x1fc] sm:$0xf]
        %v9307 = vld [vmem:[%s232 + $0x200] sm:$0xf]
        %v9308 = vld [vmem:[%s232 + $0x204] sm:$0xf]
        %v9309 = vld [vmem:[%s232 + $0x208] sm:$0xf]
        %v9310 = vld [vmem:[%s232 + $0x20c] sm:$0xf]
        %v9311 = vld [vmem:[%s1317] sm:$0x3]
        %v9344 = vunpack.c.l.b16 %v9279
        %v9345 = vunpack.c.l.b16 %v9280
        %v9346 = vunpack.c.l.b16 %v9281
        %v9347 = vunpack.c.l.b16 %v9282
        %v9348 = vunpack.c.l.b16 %v9283
        %v9349 = vunpack.c.l.b16 %v9284
        %v9350 = vunpack.c.l.b16 %v9285
        %v9351 = vunpack.c.l.b16 %v9286
        %v9352 = vunpack.c.l.b16 %v9287
        %v9353 = vunpack.c.l.b16 %v9288
        %v9354 = vunpack.c.l.b16 %v9289
        %v9355 = vunpack.c.l.b16 %v9290
        %v9356 = vunpack.c.l.b16 %v9291
        %v9357 = vunpack.c.l.b16 %v9292
        %v9358 = vunpack.c.l.b16 %v9293
        %v9359 = vunpack.c.l.b16 %v9294
        %v9360 = vunpack.c.l.b16 %v9295
        %v9361 = vunpack.c.l.b16 %v9296
        %v9362 = vunpack.c.l.b16 %v9297
        %v9363 = vunpack.c.l.b16 %v9298
        %v9364 = vunpack.c.l.b16 %v9299
        %v9365 = vunpack.c.l.b16 %v9300
        %v9366 = vunpack.c.l.b16 %v9301
        %v9367 = vunpack.c.l.b16 %v9302
        %v9368 = vunpack.c.l.b16 %v9303
        %v9369 = vunpack.c.l.b16 %v9304
        %v9370 = vunpack.c.l.b16 %v9305
        %v9371 = vunpack.c.l.b16 %v9306
        %v9372 = vunpack.c.l.b16 %v9307
        %v9373 = vunpack.c.l.b16 %v9308
        %v9374 = vunpack.c.l.b16 %v9309
        %v9375 = vunpack.c.l.b16 %v9310
        %v9376 = vpack.c.b16 %v9345, %v9344
        %v9377 = vpack.c.b16 %v9347, %v9346
        %v9378 = vpack.c.b16 %v9349, %v9348
        %v9379 = vpack.c.b16 %v9351, %v9350
        %v9380 = vpack.c.b16 %v9353, %v9352
        %v9381 = vpack.c.b16 %v9355, %v9354
        %v9382 = vpack.c.b16 %v9357, %v9356
        %v9383 = vpack.c.b16 %v9359, %v9358
        %v9384 = vpack.c.b16 %v9361, %v9360
        %v9385 = vpack.c.b16 %v9363, %v9362
        %v9386 = vpack.c.b16 %v9365, %v9364
        %v9387 = vpack.c.b16 %v9367, %v9366
        %v9388 = vpack.c.b16 %v9369, %v9368
        %v9389 = vpack.c.b16 %v9371, %v9370
        %v9390 = vpack.c.b16 %v9373, %v9372
        %v9391 = vpack.c.b16 %v9375, %v9374
        %v9393 = vsel %vm347, %v9376, 0
        %v9396 = vsel %vm347, %v9377, 0
        %v9399 = vsel %vm347, %v9378, 0
        %v9402 = vsel %vm347, %v9379, 0
        %v9405 = vsel %vm347, %v9380, 0
        %v9408 = vsel %vm347, %v9381, 0
        %v9411 = vsel %vm347, %v9382, 0
        %v9414 = vsel %vm347, %v9383, 0
        %v9417 = vsel %vm347, %v9384, 0
        %v9420 = vsel %vm347, %v9385, 0
        %v9423 = vsel %vm347, %v9386, 0
        %v9426 = vsel %vm347, %v9387, 0
        %v9429 = vsel %vm347, %v9388, 0
        %v9432 = vsel %vm347, %v9389, 0
        %v9435 = vsel %vm347, %v9390, 0
        %v9438 = vsel %vm347, %v9391, 0
        %v9441 = vand.u32 %v9311, %v399
        %9443 = vmatpush.bf16.msra.mxu0 0
        %9444 = vmatpush.bf16.msra.mxu0 0
        %9445 = vmatpush.bf16.msra.mxu0 0
        %9446 = vmatpush.bf16.msra.mxu0 0
        %9447 = vmatpush.bf16.msra.mxu0 0
        %9448 = vmatpush.bf16.msra.mxu0 0
        %9449 = vmatpush.bf16.msra.mxu0 0
        %9450 = vmatpush.bf16.msra.mxu0 %v9441
        %9451 = vmatmul.bf16.gmra.mxu0 %v9393
        %v9452 = vpop.f32.mrf.mxu0
        %v9453 = vadd.f32 0.0, %v9452
        %v9454 = vpop.f32.mrf.mxu0
        %v9455 = vadd.f32 0.0, %v9454
        %9456 = vmatmul.bf16.gmra.mxu0 %v9396
        %v9457 = vpop.f32.mrf.mxu0
        %v9458 = vadd.f32 0.0, %v9457
        %v9459 = vpop.f32.mrf.mxu0
        %v9460 = vadd.f32 0.0, %v9459
        %9461 = vmatmul.bf16.gmra.mxu0 %v9399
        %v9462 = vpop.f32.mrf.mxu0
        %v9463 = vadd.f32 0.0, %v9462
        %v9464 = vpop.f32.mrf.mxu0
        %v9465 = vadd.f32 0.0, %v9464
        %9466 = vmatmul.bf16.gmra.mxu0 %v9402
        %v9467 = vpop.f32.mrf.mxu0
        %v9468 = vadd.f32 0.0, %v9467
        %v9469 = vpop.f32.mrf.mxu0
        %v9470 = vadd.f32 0.0, %v9469
        %9471 = vmatmul.bf16.gmra.mxu0 %v9405
        %v9472 = vpop.f32.mrf.mxu0
        %v9473 = vadd.f32 0.0, %v9472
        %v9474 = vpop.f32.mrf.mxu0
        %v9475 = vadd.f32 0.0, %v9474
        %9476 = vmatmul.bf16.gmra.mxu0 %v9408
        %v9477 = vpop.f32.mrf.mxu0
        %v9478 = vadd.f32 0.0, %v9477
        %v9479 = vpop.f32.mrf.mxu0
        %v9480 = vadd.f32 0.0, %v9479
        %9481 = vmatmul.bf16.gmra.mxu0 %v9411
        %v9482 = vpop.f32.mrf.mxu0
        %v9483 = vadd.f32 0.0, %v9482
        %v9484 = vpop.f32.mrf.mxu0
        %v9485 = vadd.f32 0.0, %v9484
        %9486 = vmatmul.bf16.gmra.mxu0 %v9414
        %v9487 = vpop.f32.mrf.mxu0
        %v9488 = vadd.f32 0.0, %v9487
        %v9489 = vpop.f32.mrf.mxu0
        %v9490 = vadd.f32 0.0, %v9489
        %9491 = vmatmul.bf16.gmra.mxu0 %v9417
        %v9492 = vpop.f32.mrf.mxu0
        %v9493 = vadd.f32 0.0, %v9492
        %v9494 = vpop.f32.mrf.mxu0
        %v9495 = vadd.f32 0.0, %v9494
        %9496 = vmatmul.bf16.gmra.mxu0 %v9420
        %v9497 = vpop.f32.mrf.mxu0
        %v9498 = vadd.f32 0.0, %v9497
        %v9499 = vpop.f32.mrf.mxu0
        %v9500 = vadd.f32 0.0, %v9499
        %9501 = vmatmul.bf16.gmra.mxu0 %v9423
        %v9502 = vpop.f32.mrf.mxu0
        %v9503 = vadd.f32 0.0, %v9502
        %v9504 = vpop.f32.mrf.mxu0
        %v9505 = vadd.f32 0.0, %v9504
        %9506 = vmatmul.bf16.gmra.mxu0 %v9426
        %v9507 = vpop.f32.mrf.mxu0
        %v9508 = vadd.f32 0.0, %v9507
        %v9509 = vpop.f32.mrf.mxu0
        %v9510 = vadd.f32 0.0, %v9509
        %9511 = vmatmul.bf16.gmra.mxu0 %v9429
        %v9512 = vpop.f32.mrf.mxu0
        %v9513 = vadd.f32 0.0, %v9512
        %v9514 = vpop.f32.mrf.mxu0
        %v9515 = vadd.f32 0.0, %v9514
        %9516 = vmatmul.bf16.gmra.mxu0 %v9432
        %v9517 = vpop.f32.mrf.mxu0
        %v9518 = vadd.f32 0.0, %v9517
        %v9519 = vpop.f32.mrf.mxu0
        %v9520 = vadd.f32 0.0, %v9519
        %9521 = vmatmul.bf16.gmra.mxu0 %v9435
        %v9522 = vpop.f32.mrf.mxu0
        %v9523 = vadd.f32 0.0, %v9522
        %v9524 = vpop.f32.mrf.mxu0
        %v9525 = vadd.f32 0.0, %v9524
        %9526 = vmatmul.bf16.gmra.mxu0 %v9438
        %v9527 = vpop.f32.mrf.mxu0
        %v9528 = vadd.f32 0.0, %v9527
        %v9529 = vpop.f32.mrf.mxu0
        %v9530 = vadd.f32 0.0, %v9529
        %9531 = vdwg.mxu0
        %v9532 = vadd.f32 %v9247, %v9453
        %v9533 = vadd.f32 %v9248, %v9455
        %v9534 = vadd.f32 %v9249, %v9458
        %v9535 = vadd.f32 %v9250, %v9460
        %v9536 = vadd.f32 %v9251, %v9463
        %v9537 = vadd.f32 %v9252, %v9465
        %v9538 = vadd.f32 %v9253, %v9468
        %v9539 = vadd.f32 %v9254, %v9470
        %v9540 = vadd.f32 %v9255, %v9473
        %v9541 = vadd.f32 %v9256, %v9475
        %v9542 = vadd.f32 %v9257, %v9478
        %v9543 = vadd.f32 %v9258, %v9480
        %v9544 = vadd.f32 %v9259, %v9483
        %v9545 = vadd.f32 %v9260, %v9485
        %v9546 = vadd.f32 %v9261, %v9488
        %v9547 = vadd.f32 %v9262, %v9490
        %v9548 = vadd.f32 %v9263, %v9493
        %v9549 = vadd.f32 %v9264, %v9495
        %v9550 = vadd.f32 %v9265, %v9498
        %v9551 = vadd.f32 %v9266, %v9500
        %v9552 = vadd.f32 %v9267, %v9503
        %v9553 = vadd.f32 %v9268, %v9505
        %v9554 = vadd.f32 %v9269, %v9508
        %v9555 = vadd.f32 %v9270, %v9510
        %v9556 = vadd.f32 %v9271, %v9513
        %v9557 = vadd.f32 %v9272, %v9515
        %v9558 = vadd.f32 %v9273, %v9518
        %v9559 = vadd.f32 %v9274, %v9520
        %v9560 = vadd.f32 %v9275, %v9523
        %v9561 = vadd.f32 %v9276, %v9525
        %v9562 = vadd.f32 %v9277, %v9528
        %v9563 = vadd.f32 %v9278, %v9530
        %v9564 = vld [vmem:[%s712 + $0x190] sm:$0xf]
        %v9565 = vld [vmem:[%s712 + $0x194] sm:$0xf]
        %v9566 = vld [vmem:[%s712 + $0x198] sm:$0xf]
        %v9567 = vld [vmem:[%s712 + $0x19c] sm:$0xf]
        %v9568 = vld [vmem:[%s712 + $0x1a0] sm:$0xf]
        %v9569 = vld [vmem:[%s712 + $0x1a4] sm:$0xf]
        %v9570 = vld [vmem:[%s712 + $0x1a8] sm:$0xf]
        %v9571 = vld [vmem:[%s712 + $0x1ac] sm:$0xf]
        %v9572 = vld [vmem:[%s712 + $0x1b0] sm:$0xf]
        %v9573 = vld [vmem:[%s712 + $0x1b4] sm:$0xf]
        %v9574 = vld [vmem:[%s712 + $0x1b8] sm:$0xf]
        %v9575 = vld [vmem:[%s712 + $0x1bc] sm:$0xf]
        %v9576 = vld [vmem:[%s712 + $0x1c0] sm:$0xf]
        %v9577 = vld [vmem:[%s712 + $0x1c4] sm:$0xf]
        %v9578 = vld [vmem:[%s712 + $0x1c8] sm:$0xf]
        %v9579 = vld [vmem:[%s712 + $0x1cc] sm:$0xf]
        %v9580 = vld [vmem:[%s712 + $0x1d0] sm:$0xf]
        %v9581 = vld [vmem:[%s712 + $0x1d4] sm:$0xf]
        %v9582 = vld [vmem:[%s712 + $0x1d8] sm:$0xf]
        %v9583 = vld [vmem:[%s712 + $0x1dc] sm:$0xf]
        %v9584 = vld [vmem:[%s712 + $0x1e0] sm:$0xf]
        %v9585 = vld [vmem:[%s712 + $0x1e4] sm:$0xf]
        %v9586 = vld [vmem:[%s712 + $0x1e8] sm:$0xf]
        %v9587 = vld [vmem:[%s712 + $0x1ec] sm:$0xf]
        %v9588 = vld [vmem:[%s712 + $0x1f0] sm:$0xf]
        %v9589 = vld [vmem:[%s712 + $0x1f4] sm:$0xf]
        %v9590 = vld [vmem:[%s712 + $0x1f8] sm:$0xf]
        %v9591 = vld [vmem:[%s712 + $0x1fc] sm:$0xf]
        %v9592 = vld [vmem:[%s712 + $0x200] sm:$0xf]
        %v9593 = vld [vmem:[%s712 + $0x204] sm:$0xf]
        %v9594 = vld [vmem:[%s712 + $0x208] sm:$0xf]
        %v9595 = vld [vmem:[%s712 + $0x20c] sm:$0xf]
        %v9596 = vld [vmem:[%s1603] sm:$0x3]
        %v9629 = vunpack.c.l.b16 %v9564
        %v9630 = vunpack.c.l.b16 %v9565
        %v9631 = vunpack.c.l.b16 %v9566
        %v9632 = vunpack.c.l.b16 %v9567
        %v9633 = vunpack.c.l.b16 %v9568
        %v9634 = vunpack.c.l.b16 %v9569
        %v9635 = vunpack.c.l.b16 %v9570
        %v9636 = vunpack.c.l.b16 %v9571
        %v9637 = vunpack.c.l.b16 %v9572
        %v9638 = vunpack.c.l.b16 %v9573
        %v9639 = vunpack.c.l.b16 %v9574
        %v9640 = vunpack.c.l.b16 %v9575
        %v9641 = vunpack.c.l.b16 %v9576
        %v9642 = vunpack.c.l.b16 %v9577
        %v9643 = vunpack.c.l.b16 %v9578
        %v9644 = vunpack.c.l.b16 %v9579
        %v9645 = vunpack.c.l.b16 %v9580
        %v9646 = vunpack.c.l.b16 %v9581
        %v9647 = vunpack.c.l.b16 %v9582
        %v9648 = vunpack.c.l.b16 %v9583
        %v9649 = vunpack.c.l.b16 %v9584
        %v9650 = vunpack.c.l.b16 %v9585
        %v9651 = vunpack.c.l.b16 %v9586
        %v9652 = vunpack.c.l.b16 %v9587
        %v9653 = vunpack.c.l.b16 %v9588
        %v9654 = vunpack.c.l.b16 %v9589
        %v9655 = vunpack.c.l.b16 %v9590
        %v9656 = vunpack.c.l.b16 %v9591
        %v9657 = vunpack.c.l.b16 %v9592
        %v9658 = vunpack.c.l.b16 %v9593
        %v9659 = vunpack.c.l.b16 %v9594
        %v9660 = vunpack.c.l.b16 %v9595
        %v9661 = vpack.c.b16 %v9630, %v9629
        %v9662 = vpack.c.b16 %v9632, %v9631
        %v9663 = vpack.c.b16 %v9634, %v9633
        %v9664 = vpack.c.b16 %v9636, %v9635
        %v9665 = vpack.c.b16 %v9638, %v9637
        %v9666 = vpack.c.b16 %v9640, %v9639
        %v9667 = vpack.c.b16 %v9642, %v9641
        %v9668 = vpack.c.b16 %v9644, %v9643
        %v9669 = vpack.c.b16 %v9646, %v9645
        %v9670 = vpack.c.b16 %v9648, %v9647
        %v9671 = vpack.c.b16 %v9650, %v9649
        %v9672 = vpack.c.b16 %v9652, %v9651
        %v9673 = vpack.c.b16 %v9654, %v9653
        %v9674 = vpack.c.b16 %v9656, %v9655
        %v9675 = vpack.c.b16 %v9658, %v9657
        %v9676 = vpack.c.b16 %v9660, %v9659
        %v9678 = vsel %vm347, %v9661, 0
        %v9681 = vsel %vm347, %v9662, 0
        %v9684 = vsel %vm347, %v9663, 0
        %v9687 = vsel %vm347, %v9664, 0
        %v9690 = vsel %vm347, %v9665, 0
        %v9693 = vsel %vm347, %v9666, 0
        %v9696 = vsel %vm347, %v9667, 0
        %v9699 = vsel %vm347, %v9668, 0
        %v9702 = vsel %vm347, %v9669, 0
        %v9705 = vsel %vm347, %v9670, 0
        %v9708 = vsel %vm347, %v9671, 0
        %v9711 = vsel %vm347, %v9672, 0
        %v9714 = vsel %vm347, %v9673, 0
        %v9717 = vsel %vm347, %v9674, 0
        %v9720 = vsel %vm347, %v9675, 0
        %v9723 = vsel %vm347, %v9676, 0
        %v9726 = vand.u32 %v9596, %v399
        %9728 = vmatpush.bf16.msra.mxu0 0
        %9729 = vmatpush.bf16.msra.mxu0 0
        %9730 = vmatpush.bf16.msra.mxu0 0
        %9731 = vmatpush.bf16.msra.mxu0 0
        %9732 = vmatpush.bf16.msra.mxu0 0
        %9733 = vmatpush.bf16.msra.mxu0 0
        %9734 = vmatpush.bf16.msra.mxu0 0
        %9735 = vmatpush.bf16.msra.mxu0 %v9726
        %9736 = vmatmul.bf16.gmra.mxu0 %v9678
        %v9737 = vpop.f32.mrf.mxu0
        %v9738 = vadd.f32 0.0, %v9737
        %v9739 = vpop.f32.mrf.mxu0
        %v9740 = vadd.f32 0.0, %v9739
        %9741 = vmatmul.bf16.gmra.mxu0 %v9681
        %v9742 = vpop.f32.mrf.mxu0
        %v9743 = vadd.f32 0.0, %v9742
        %v9744 = vpop.f32.mrf.mxu0
        %v9745 = vadd.f32 0.0, %v9744
        %9746 = vmatmul.bf16.gmra.mxu0 %v9684
        %v9747 = vpop.f32.mrf.mxu0
        %v9748 = vadd.f32 0.0, %v9747
        %v9749 = vpop.f32.mrf.mxu0
        %v9750 = vadd.f32 0.0, %v9749
        %9751 = vmatmul.bf16.gmra.mxu0 %v9687
        %v9752 = vpop.f32.mrf.mxu0
        %v9753 = vadd.f32 0.0, %v9752
        %v9754 = vpop.f32.mrf.mxu0
        %v9755 = vadd.f32 0.0, %v9754
        %9756 = vmatmul.bf16.gmra.mxu0 %v9690
        %v9757 = vpop.f32.mrf.mxu0
        %v9758 = vadd.f32 0.0, %v9757
        %v9759 = vpop.f32.mrf.mxu0
        %v9760 = vadd.f32 0.0, %v9759
        %9761 = vmatmul.bf16.gmra.mxu0 %v9693
        %v9762 = vpop.f32.mrf.mxu0
        %v9763 = vadd.f32 0.0, %v9762
        %v9764 = vpop.f32.mrf.mxu0
        %v9765 = vadd.f32 0.0, %v9764
        %9766 = vmatmul.bf16.gmra.mxu0 %v9696
        %v9767 = vpop.f32.mrf.mxu0
        %v9768 = vadd.f32 0.0, %v9767
        %v9769 = vpop.f32.mrf.mxu0
        %v9770 = vadd.f32 0.0, %v9769
        %9771 = vmatmul.bf16.gmra.mxu0 %v9699
        %v9772 = vpop.f32.mrf.mxu0
        %v9773 = vadd.f32 0.0, %v9772
        %v9774 = vpop.f32.mrf.mxu0
        %v9775 = vadd.f32 0.0, %v9774
        %9776 = vmatmul.bf16.gmra.mxu0 %v9702
        %v9777 = vpop.f32.mrf.mxu0
        %v9778 = vadd.f32 0.0, %v9777
        %v9779 = vpop.f32.mrf.mxu0
        %v9780 = vadd.f32 0.0, %v9779
        %9781 = vmatmul.bf16.gmra.mxu0 %v9705
        %v9782 = vpop.f32.mrf.mxu0
        %v9783 = vadd.f32 0.0, %v9782
        %v9784 = vpop.f32.mrf.mxu0
        %v9785 = vadd.f32 0.0, %v9784
        %9786 = vmatmul.bf16.gmra.mxu0 %v9708
        %v9787 = vpop.f32.mrf.mxu0
        %v9788 = vadd.f32 0.0, %v9787
        %v9789 = vpop.f32.mrf.mxu0
        %v9790 = vadd.f32 0.0, %v9789
        %9791 = vmatmul.bf16.gmra.mxu0 %v9711
        %v9792 = vpop.f32.mrf.mxu0
        %v9793 = vadd.f32 0.0, %v9792
        %v9794 = vpop.f32.mrf.mxu0
        %v9795 = vadd.f32 0.0, %v9794
        %9796 = vmatmul.bf16.gmra.mxu0 %v9714
        %v9797 = vpop.f32.mrf.mxu0
        %v9798 = vadd.f32 0.0, %v9797
        %v9799 = vpop.f32.mrf.mxu0
        %v9800 = vadd.f32 0.0, %v9799
        %9801 = vmatmul.bf16.gmra.mxu0 %v9717
        %v9802 = vpop.f32.mrf.mxu0
        %v9803 = vadd.f32 0.0, %v9802
        %v9804 = vpop.f32.mrf.mxu0
        %v9805 = vadd.f32 0.0, %v9804
        %9806 = vmatmul.bf16.gmra.mxu0 %v9720
        %v9807 = vpop.f32.mrf.mxu0
        %v9808 = vadd.f32 0.0, %v9807
        %v9809 = vpop.f32.mrf.mxu0
        %v9810 = vadd.f32 0.0, %v9809
        %9811 = vmatmul.bf16.gmra.mxu0 %v9723
        %v9812 = vpop.f32.mrf.mxu0
        %v9813 = vadd.f32 0.0, %v9812
        %v9814 = vpop.f32.mrf.mxu0
        %v9815 = vadd.f32 0.0, %v9814
        %9816 = vdwg.mxu0
        %v9817 = vadd.f32 %v9532, %v9738
        %v9818 = vadd.f32 %v9533, %v9740
        %v9819 = vadd.f32 %v9534, %v9743
        %v9820 = vadd.f32 %v9535, %v9745
        %v9821 = vadd.f32 %v9536, %v9748
        %v9822 = vadd.f32 %v9537, %v9750
        %v9823 = vadd.f32 %v9538, %v9753
        %v9824 = vadd.f32 %v9539, %v9755
        %v9825 = vadd.f32 %v9540, %v9758
        %v9826 = vadd.f32 %v9541, %v9760
        %v9827 = vadd.f32 %v9542, %v9763
        %v9828 = vadd.f32 %v9543, %v9765
        %v9829 = vadd.f32 %v9544, %v9768
        %v9830 = vadd.f32 %v9545, %v9770
        %v9831 = vadd.f32 %v9546, %v9773
        %v9832 = vadd.f32 %v9547, %v9775
        %v9833 = vadd.f32 %v9548, %v9778
        %v9834 = vadd.f32 %v9549, %v9780
        %v9835 = vadd.f32 %v9550, %v9783
        %v9836 = vadd.f32 %v9551, %v9785
        %v9837 = vadd.f32 %v9552, %v9788
        %v9838 = vadd.f32 %v9553, %v9790
        %v9839 = vadd.f32 %v9554, %v9793
        %v9840 = vadd.f32 %v9555, %v9795
        %v9841 = vadd.f32 %v9556, %v9798
        %v9842 = vadd.f32 %v9557, %v9800
        %v9843 = vadd.f32 %v9558, %v9803
        %v9844 = vadd.f32 %v9559, %v9805
        %v9845 = vadd.f32 %v9560, %v9808
        %v9846 = vadd.f32 %v9561, %v9810
        %v9847 = vadd.f32 %v9562, %v9813
        %v9848 = vadd.f32 %v9563, %v9815
        %v9849 = vld [vmem:[%s195 + $0x1a0] sm:$0xf]
        %v9850 = vld [vmem:[%s195 + $0x1a4] sm:$0xf]
        %v9851 = vld [vmem:[%s195 + $0x1a8] sm:$0xf]
        %v9852 = vld [vmem:[%s195 + $0x1ac] sm:$0xf]
        %v9853 = vld [vmem:[%s195 + $0x1b0] sm:$0xf]
        %v9854 = vld [vmem:[%s195 + $0x1b4] sm:$0xf]
        %v9855 = vld [vmem:[%s195 + $0x1b8] sm:$0xf]
        %v9856 = vld [vmem:[%s195 + $0x1bc] sm:$0xf]
        %v9857 = vld [vmem:[%s195 + $0x1c0] sm:$0xf]
        %v9858 = vld [vmem:[%s195 + $0x1c4] sm:$0xf]
        %v9859 = vld [vmem:[%s195 + $0x1c8] sm:$0xf]
        %v9860 = vld [vmem:[%s195 + $0x1cc] sm:$0xf]
        %v9861 = vld [vmem:[%s195 + $0x1d0] sm:$0xf]
        %v9862 = vld [vmem:[%s195 + $0x1d4] sm:$0xf]
        %v9863 = vld [vmem:[%s195 + $0x1d8] sm:$0xf]
        %v9864 = vld [vmem:[%s195 + $0x1dc] sm:$0xf]
        %v9865 = vld [vmem:[%s195 + $0x1e0] sm:$0xf]
        %v9866 = vld [vmem:[%s195 + $0x1e4] sm:$0xf]
        %v9867 = vld [vmem:[%s195 + $0x1e8] sm:$0xf]
        %v9868 = vld [vmem:[%s195 + $0x1ec] sm:$0xf]
        %v9869 = vld [vmem:[%s195 + $0x1f0] sm:$0xf]
        %v9870 = vld [vmem:[%s195 + $0x1f4] sm:$0xf]
        %v9871 = vld [vmem:[%s195 + $0x1f8] sm:$0xf]
        %v9872 = vld [vmem:[%s195 + $0x1fc] sm:$0xf]
        %v9873 = vld [vmem:[%s195 + $0x200] sm:$0xf]
        %v9874 = vld [vmem:[%s195 + $0x204] sm:$0xf]
        %v9875 = vld [vmem:[%s195 + $0x208] sm:$0xf]
        %v9876 = vld [vmem:[%s195 + $0x20c] sm:$0xf]
        %v9877 = vld [vmem:[%s195 + $0x210] sm:$0xf]
        %v9878 = vld [vmem:[%s195 + $0x214] sm:$0xf]
        %v9879 = vld [vmem:[%s195 + $0x218] sm:$0xf]
        %v9880 = vld [vmem:[%s195 + $0x21c] sm:$0xf]
        %v9881 = vld [vmem:[%s1889] sm:$0x3]
        %v9914 = vunpack.c.l.b16 %v9849
        %v9915 = vunpack.c.l.b16 %v9850
        %v9916 = vunpack.c.l.b16 %v9851
        %v9917 = vunpack.c.l.b16 %v9852
        %v9918 = vunpack.c.l.b16 %v9853
        %v9919 = vunpack.c.l.b16 %v9854
        %v9920 = vunpack.c.l.b16 %v9855
        %v9921 = vunpack.c.l.b16 %v9856
        %v9922 = vunpack.c.l.b16 %v9857
        %v9923 = vunpack.c.l.b16 %v9858
        %v9924 = vunpack.c.l.b16 %v9859
        %v9925 = vunpack.c.l.b16 %v9860
        %v9926 = vunpack.c.l.b16 %v9861
        %v9927 = vunpack.c.l.b16 %v9862
        %v9928 = vunpack.c.l.b16 %v9863
        %v9929 = vunpack.c.l.b16 %v9864
        %v9930 = vunpack.c.l.b16 %v9865
        %v9931 = vunpack.c.l.b16 %v9866
        %v9932 = vunpack.c.l.b16 %v9867
        %v9933 = vunpack.c.l.b16 %v9868
        %v9934 = vunpack.c.l.b16 %v9869
        %v9935 = vunpack.c.l.b16 %v9870
        %v9936 = vunpack.c.l.b16 %v9871
        %v9937 = vunpack.c.l.b16 %v9872
        %v9938 = vunpack.c.l.b16 %v9873
        %v9939 = vunpack.c.l.b16 %v9874
        %v9940 = vunpack.c.l.b16 %v9875
        %v9941 = vunpack.c.l.b16 %v9876
        %v9942 = vunpack.c.l.b16 %v9877
        %v9943 = vunpack.c.l.b16 %v9878
        %v9944 = vunpack.c.l.b16 %v9879
        %v9945 = vunpack.c.l.b16 %v9880
        %v9946 = vpack.c.b16 %v9915, %v9914
        %v9947 = vpack.c.b16 %v9917, %v9916
        %v9948 = vpack.c.b16 %v9919, %v9918
        %v9949 = vpack.c.b16 %v9921, %v9920
        %v9950 = vpack.c.b16 %v9923, %v9922
        %v9951 = vpack.c.b16 %v9925, %v9924
        %v9952 = vpack.c.b16 %v9927, %v9926
        %v9953 = vpack.c.b16 %v9929, %v9928
        %v9954 = vpack.c.b16 %v9931, %v9930
        %v9955 = vpack.c.b16 %v9933, %v9932
        %v9956 = vpack.c.b16 %v9935, %v9934
        %v9957 = vpack.c.b16 %v9937, %v9936
        %v9958 = vpack.c.b16 %v9939, %v9938
        %v9959 = vpack.c.b16 %v9941, %v9940
        %v9960 = vpack.c.b16 %v9943, %v9942
        %v9961 = vpack.c.b16 %v9945, %v9944
        %v9963 = vsel %vm347, %v9946, 0
        %v9966 = vsel %vm347, %v9947, 0
        %v9969 = vsel %vm347, %v9948, 0
        %v9972 = vsel %vm347, %v9949, 0
        %v9975 = vsel %vm347, %v9950, 0
        %v9978 = vsel %vm347, %v9951, 0
        %v9981 = vsel %vm347, %v9952, 0
        %v9984 = vsel %vm347, %v9953, 0
        %v9987 = vsel %vm347, %v9954, 0
        %v9990 = vsel %vm347, %v9955, 0
        %v9993 = vsel %vm347, %v9956, 0
        %v9996 = vsel %vm347, %v9957, 0
        %v9999 = vsel %vm347, %v9958, 0
        %v10002 = vsel %vm347, %v9959, 0
        %v10005 = vsel %vm347, %v9960, 0
        %v10008 = vsel %vm347, %v9961, 0
        %v10011 = vand.u32 %v9881, %v399
        %10013 = vmatpush.bf16.msra.mxu0 0
        %10014 = vmatpush.bf16.msra.mxu0 0
        %10015 = vmatpush.bf16.msra.mxu0 0
        %10016 = vmatpush.bf16.msra.mxu0 0
        %10017 = vmatpush.bf16.msra.mxu0 0
        %10018 = vmatpush.bf16.msra.mxu0 0
        %10019 = vmatpush.bf16.msra.mxu0 0
        %10020 = vmatpush.bf16.msra.mxu0 %v10011
        %10021 = vmatmul.bf16.gmra.mxu0 %v9963
        %v10022 = vpop.f32.mrf.mxu0
        %v10023 = vadd.f32 0.0, %v10022
        %v10024 = vpop.f32.mrf.mxu0
        %v10025 = vadd.f32 0.0, %v10024
        %10026 = vmatmul.bf16.gmra.mxu0 %v9966
        %v10027 = vpop.f32.mrf.mxu0
        %v10028 = vadd.f32 0.0, %v10027
        %v10029 = vpop.f32.mrf.mxu0
        %v10030 = vadd.f32 0.0, %v10029
        %10031 = vmatmul.bf16.gmra.mxu0 %v9969
        %v10032 = vpop.f32.mrf.mxu0
        %v10033 = vadd.f32 0.0, %v10032
        %v10034 = vpop.f32.mrf.mxu0
        %v10035 = vadd.f32 0.0, %v10034
        %10036 = vmatmul.bf16.gmra.mxu0 %v9972
        %v10037 = vpop.f32.mrf.mxu0
        %v10038 = vadd.f32 0.0, %v10037
        %v10039 = vpop.f32.mrf.mxu0
        %v10040 = vadd.f32 0.0, %v10039
        %10041 = vmatmul.bf16.gmra.mxu0 %v9975
        %v10042 = vpop.f32.mrf.mxu0
        %v10043 = vadd.f32 0.0, %v10042
        %v10044 = vpop.f32.mrf.mxu0
        %v10045 = vadd.f32 0.0, %v10044
        %10046 = vmatmul.bf16.gmra.mxu0 %v9978
        %v10047 = vpop.f32.mrf.mxu0
        %v10048 = vadd.f32 0.0, %v10047
        %v10049 = vpop.f32.mrf.mxu0
        %v10050 = vadd.f32 0.0, %v10049
        %10051 = vmatmul.bf16.gmra.mxu0 %v9981
        %v10052 = vpop.f32.mrf.mxu0
        %v10053 = vadd.f32 0.0, %v10052
        %v10054 = vpop.f32.mrf.mxu0
        %v10055 = vadd.f32 0.0, %v10054
        %10056 = vmatmul.bf16.gmra.mxu0 %v9984
        %v10057 = vpop.f32.mrf.mxu0
        %v10058 = vadd.f32 0.0, %v10057
        %v10059 = vpop.f32.mrf.mxu0
        %v10060 = vadd.f32 0.0, %v10059
        %10061 = vmatmul.bf16.gmra.mxu0 %v9987
        %v10062 = vpop.f32.mrf.mxu0
        %v10063 = vadd.f32 0.0, %v10062
        %v10064 = vpop.f32.mrf.mxu0
        %v10065 = vadd.f32 0.0, %v10064
        %10066 = vmatmul.bf16.gmra.mxu0 %v9990
        %v10067 = vpop.f32.mrf.mxu0
        %v10068 = vadd.f32 0.0, %v10067
        %v10069 = vpop.f32.mrf.mxu0
        %v10070 = vadd.f32 0.0, %v10069
        %10071 = vmatmul.bf16.gmra.mxu0 %v9993
        %v10072 = vpop.f32.mrf.mxu0
        %v10073 = vadd.f32 0.0, %v10072
        %v10074 = vpop.f32.mrf.mxu0
        %v10075 = vadd.f32 0.0, %v10074
        %10076 = vmatmul.bf16.gmra.mxu0 %v9996
        %v10077 = vpop.f32.mrf.mxu0
        %v10078 = vadd.f32 0.0, %v10077
        %v10079 = vpop.f32.mrf.mxu0
        %v10080 = vadd.f32 0.0, %v10079
        %10081 = vmatmul.bf16.gmra.mxu0 %v9999
        %v10082 = vpop.f32.mrf.mxu0
        %v10083 = vadd.f32 0.0, %v10082
        %v10084 = vpop.f32.mrf.mxu0
        %v10085 = vadd.f32 0.0, %v10084
        %10086 = vmatmul.bf16.gmra.mxu0 %v10002
        %v10087 = vpop.f32.mrf.mxu0
        %v10088 = vadd.f32 0.0, %v10087
        %v10089 = vpop.f32.mrf.mxu0
        %v10090 = vadd.f32 0.0, %v10089
        %10091 = vmatmul.bf16.gmra.mxu0 %v10005
        %v10092 = vpop.f32.mrf.mxu0
        %v10093 = vadd.f32 0.0, %v10092
        %v10094 = vpop.f32.mrf.mxu0
        %v10095 = vadd.f32 0.0, %v10094
        %10096 = vmatmul.bf16.gmra.mxu0 %v10008
        %v10097 = vpop.f32.mrf.mxu0
        %v10098 = vadd.f32 0.0, %v10097
        %v10099 = vpop.f32.mrf.mxu0
        %v10100 = vadd.f32 0.0, %v10099
        %10101 = vdwg.mxu0
        %v10102 = vadd.f32 %v9817, %v10023
        %v10103 = vadd.f32 %v9818, %v10025
        %v10104 = vadd.f32 %v9819, %v10028
        %v10105 = vadd.f32 %v9820, %v10030
        %v10106 = vadd.f32 %v9821, %v10033
        %v10107 = vadd.f32 %v9822, %v10035
        %v10108 = vadd.f32 %v9823, %v10038
        %v10109 = vadd.f32 %v9824, %v10040
        %v10110 = vadd.f32 %v9825, %v10043
        %v10111 = vadd.f32 %v9826, %v10045
        %v10112 = vadd.f32 %v9827, %v10048
        %v10113 = vadd.f32 %v9828, %v10050
        %v10114 = vadd.f32 %v9829, %v10053
        %v10115 = vadd.f32 %v9830, %v10055
        %v10116 = vadd.f32 %v9831, %v10058
        %v10117 = vadd.f32 %v9832, %v10060
        %v10118 = vadd.f32 %v9833, %v10063
        %v10119 = vadd.f32 %v9834, %v10065
        %v10120 = vadd.f32 %v9835, %v10068
        %v10121 = vadd.f32 %v9836, %v10070
        %v10122 = vadd.f32 %v9837, %v10073
        %v10123 = vadd.f32 %v9838, %v10075
        %v10124 = vadd.f32 %v9839, %v10078
        %v10125 = vadd.f32 %v9840, %v10080
        %v10126 = vadd.f32 %v9841, %v10083
        %v10127 = vadd.f32 %v9842, %v10085
        %v10128 = vadd.f32 %v9843, %v10088
        %v10129 = vadd.f32 %v9844, %v10090
        %v10130 = vadd.f32 %v9845, %v10093
        %v10131 = vadd.f32 %v9846, %v10095
        %v10132 = vadd.f32 %v9847, %v10098
        %v10133 = vadd.f32 %v9848, %v10100
        %v10134 = vld [vmem:[%s232 + $0x1a0] sm:$0xf]
        %v10135 = vld [vmem:[%s232 + $0x1a4] sm:$0xf]
        %v10136 = vld [vmem:[%s232 + $0x1a8] sm:$0xf]
        %v10137 = vld [vmem:[%s232 + $0x1ac] sm:$0xf]
        %v10138 = vld [vmem:[%s232 + $0x1b0] sm:$0xf]
        %v10139 = vld [vmem:[%s232 + $0x1b4] sm:$0xf]
        %v10140 = vld [vmem:[%s232 + $0x1b8] sm:$0xf]
        %v10141 = vld [vmem:[%s232 + $0x1bc] sm:$0xf]
        %v10142 = vld [vmem:[%s232 + $0x1c0] sm:$0xf]
        %v10143 = vld [vmem:[%s232 + $0x1c4] sm:$0xf]
        %v10144 = vld [vmem:[%s232 + $0x1c8] sm:$0xf]
        %v10145 = vld [vmem:[%s232 + $0x1cc] sm:$0xf]
        %v10146 = vld [vmem:[%s232 + $0x1d0] sm:$0xf]
        %v10147 = vld [vmem:[%s232 + $0x1d4] sm:$0xf]
        %v10148 = vld [vmem:[%s232 + $0x1d8] sm:$0xf]
        %v10149 = vld [vmem:[%s232 + $0x1dc] sm:$0xf]
        %v10150 = vld [vmem:[%s232 + $0x1e0] sm:$0xf]
        %v10151 = vld [vmem:[%s232 + $0x1e4] sm:$0xf]
        %v10152 = vld [vmem:[%s232 + $0x1e8] sm:$0xf]
        %v10153 = vld [vmem:[%s232 + $0x1ec] sm:$0xf]
        %v10154 = vld [vmem:[%s232 + $0x1f0] sm:$0xf]
        %v10155 = vld [vmem:[%s232 + $0x1f4] sm:$0xf]
        %v10156 = vld [vmem:[%s232 + $0x1f8] sm:$0xf]
        %v10157 = vld [vmem:[%s232 + $0x1fc] sm:$0xf]
        %v10158 = vld [vmem:[%s232 + $0x200] sm:$0xf]
        %v10159 = vld [vmem:[%s232 + $0x204] sm:$0xf]
        %v10160 = vld [vmem:[%s232 + $0x208] sm:$0xf]
        %v10161 = vld [vmem:[%s232 + $0x20c] sm:$0xf]
        %v10162 = vld [vmem:[%s232 + $0x210] sm:$0xf]
        %v10163 = vld [vmem:[%s232 + $0x214] sm:$0xf]
        %v10164 = vld [vmem:[%s232 + $0x218] sm:$0xf]
        %v10165 = vld [vmem:[%s232 + $0x21c] sm:$0xf]
        %v10166 = vld [vmem:[%s2175] sm:$0x3]
        %v10199 = vunpack.c.l.b16 %v10134
        %v10200 = vunpack.c.l.b16 %v10135
        %v10201 = vunpack.c.l.b16 %v10136
        %v10202 = vunpack.c.l.b16 %v10137
        %v10203 = vunpack.c.l.b16 %v10138
        %v10204 = vunpack.c.l.b16 %v10139
        %v10205 = vunpack.c.l.b16 %v10140
        %v10206 = vunpack.c.l.b16 %v10141
        %v10207 = vunpack.c.l.b16 %v10142
        %v10208 = vunpack.c.l.b16 %v10143
        %v10209 = vunpack.c.l.b16 %v10144
        %v10210 = vunpack.c.l.b16 %v10145
        %v10211 = vunpack.c.l.b16 %v10146
        %v10212 = vunpack.c.l.b16 %v10147
        %v10213 = vunpack.c.l.b16 %v10148
        %v10214 = vunpack.c.l.b16 %v10149
        %v10215 = vunpack.c.l.b16 %v10150
        %v10216 = vunpack.c.l.b16 %v10151
        %v10217 = vunpack.c.l.b16 %v10152
        %v10218 = vunpack.c.l.b16 %v10153
        %v10219 = vunpack.c.l.b16 %v10154
        %v10220 = vunpack.c.l.b16 %v10155
        %v10221 = vunpack.c.l.b16 %v10156
        %v10222 = vunpack.c.l.b16 %v10157
        %v10223 = vunpack.c.l.b16 %v10158
        %v10224 = vunpack.c.l.b16 %v10159
        %v10225 = vunpack.c.l.b16 %v10160
        %v10226 = vunpack.c.l.b16 %v10161
        %v10227 = vunpack.c.l.b16 %v10162
        %v10228 = vunpack.c.l.b16 %v10163
        %v10229 = vunpack.c.l.b16 %v10164
        %v10230 = vunpack.c.l.b16 %v10165
        %v10231 = vpack.c.b16 %v10200, %v10199
        %v10232 = vpack.c.b16 %v10202, %v10201
        %v10233 = vpack.c.b16 %v10204, %v10203
        %v10234 = vpack.c.b16 %v10206, %v10205
        %v10235 = vpack.c.b16 %v10208, %v10207
        %v10236 = vpack.c.b16 %v10210, %v10209
        %v10237 = vpack.c.b16 %v10212, %v10211
        %v10238 = vpack.c.b16 %v10214, %v10213
        %v10239 = vpack.c.b16 %v10216, %v10215
        %v10240 = vpack.c.b16 %v10218, %v10217
        %v10241 = vpack.c.b16 %v10220, %v10219
        %v10242 = vpack.c.b16 %v10222, %v10221
        %v10243 = vpack.c.b16 %v10224, %v10223
        %v10244 = vpack.c.b16 %v10226, %v10225
        %v10245 = vpack.c.b16 %v10228, %v10227
        %v10246 = vpack.c.b16 %v10230, %v10229
        %v10248 = vsel %vm347, %v10231, 0
        %v10251 = vsel %vm347, %v10232, 0
        %v10254 = vsel %vm347, %v10233, 0
        %v10257 = vsel %vm347, %v10234, 0
        %v10260 = vsel %vm347, %v10235, 0
        %v10263 = vsel %vm347, %v10236, 0
        %v10266 = vsel %vm347, %v10237, 0
        %v10269 = vsel %vm347, %v10238, 0
        %v10272 = vsel %vm347, %v10239, 0
        %v10275 = vsel %vm347, %v10240, 0
        %v10278 = vsel %vm347, %v10241, 0
        %v10281 = vsel %vm347, %v10242, 0
        %v10284 = vsel %vm347, %v10243, 0
        %v10287 = vsel %vm347, %v10244, 0
        %v10290 = vsel %vm347, %v10245, 0
        %v10293 = vsel %vm347, %v10246, 0
        %v10296 = vand.u32 %v10166, %v399
        %10298 = vmatpush.bf16.msra.mxu0 0
        %10299 = vmatpush.bf16.msra.mxu0 0
        %10300 = vmatpush.bf16.msra.mxu0 0
        %10301 = vmatpush.bf16.msra.mxu0 0
        %10302 = vmatpush.bf16.msra.mxu0 0
        %10303 = vmatpush.bf16.msra.mxu0 0
        %10304 = vmatpush.bf16.msra.mxu0 0
        %10305 = vmatpush.bf16.msra.mxu0 %v10296
        %10306 = vmatmul.bf16.gmra.mxu0 %v10248
        %v10307 = vpop.f32.mrf.mxu0
        %v10308 = vadd.f32 0.0, %v10307
        %v10309 = vpop.f32.mrf.mxu0
        %v10310 = vadd.f32 0.0, %v10309
        %10311 = vmatmul.bf16.gmra.mxu0 %v10251
        %v10312 = vpop.f32.mrf.mxu0
        %v10313 = vadd.f32 0.0, %v10312
        %v10314 = vpop.f32.mrf.mxu0
        %v10315 = vadd.f32 0.0, %v10314
        %10316 = vmatmul.bf16.gmra.mxu0 %v10254
        %v10317 = vpop.f32.mrf.mxu0
        %v10318 = vadd.f32 0.0, %v10317
        %v10319 = vpop.f32.mrf.mxu0
        %v10320 = vadd.f32 0.0, %v10319
        %10321 = vmatmul.bf16.gmra.mxu0 %v10257
        %v10322 = vpop.f32.mrf.mxu0
        %v10323 = vadd.f32 0.0, %v10322
        %v10324 = vpop.f32.mrf.mxu0
        %v10325 = vadd.f32 0.0, %v10324
        %10326 = vmatmul.bf16.gmra.mxu0 %v10260
        %v10327 = vpop.f32.mrf.mxu0
        %v10328 = vadd.f32 0.0, %v10327
        %v10329 = vpop.f32.mrf.mxu0
        %v10330 = vadd.f32 0.0, %v10329
        %10331 = vmatmul.bf16.gmra.mxu0 %v10263
        %v10332 = vpop.f32.mrf.mxu0
        %v10333 = vadd.f32 0.0, %v10332
        %v10334 = vpop.f32.mrf.mxu0
        %v10335 = vadd.f32 0.0, %v10334
        %10336 = vmatmul.bf16.gmra.mxu0 %v10266
        %v10337 = vpop.f32.mrf.mxu0
        %v10338 = vadd.f32 0.0, %v10337
        %v10339 = vpop.f32.mrf.mxu0
        %v10340 = vadd.f32 0.0, %v10339
        %10341 = vmatmul.bf16.gmra.mxu0 %v10269
        %v10342 = vpop.f32.mrf.mxu0
        %v10343 = vadd.f32 0.0, %v10342
        %v10344 = vpop.f32.mrf.mxu0
        %v10345 = vadd.f32 0.0, %v10344
        %10346 = vmatmul.bf16.gmra.mxu0 %v10272
        %v10347 = vpop.f32.mrf.mxu0
        %v10348 = vadd.f32 0.0, %v10347
        %v10349 = vpop.f32.mrf.mxu0
        %v10350 = vadd.f32 0.0, %v10349
        %10351 = vmatmul.bf16.gmra.mxu0 %v10275
        %v10352 = vpop.f32.mrf.mxu0
        %v10353 = vadd.f32 0.0, %v10352
        %v10354 = vpop.f32.mrf.mxu0
        %v10355 = vadd.f32 0.0, %v10354
        %10356 = vmatmul.bf16.gmra.mxu0 %v10278
        %v10357 = vpop.f32.mrf.mxu0
        %v10358 = vadd.f32 0.0, %v10357
        %v10359 = vpop.f32.mrf.mxu0
        %v10360 = vadd.f32 0.0, %v10359
        %10361 = vmatmul.bf16.gmra.mxu0 %v10281
        %v10362 = vpop.f32.mrf.mxu0
        %v10363 = vadd.f32 0.0, %v10362
        %v10364 = vpop.f32.mrf.mxu0
        %v10365 = vadd.f32 0.0, %v10364
        %10366 = vmatmul.bf16.gmra.mxu0 %v10284
        %v10367 = vpop.f32.mrf.mxu0
        %v10368 = vadd.f32 0.0, %v10367
        %v10369 = vpop.f32.mrf.mxu0
        %v10370 = vadd.f32 0.0, %v10369
        %10371 = vmatmul.bf16.gmra.mxu0 %v10287
        %v10372 = vpop.f32.mrf.mxu0
        %v10373 = vadd.f32 0.0, %v10372
        %v10374 = vpop.f32.mrf.mxu0
        %v10375 = vadd.f32 0.0, %v10374
        %10376 = vmatmul.bf16.gmra.mxu0 %v10290
        %v10377 = vpop.f32.mrf.mxu0
        %v10378 = vadd.f32 0.0, %v10377
        %v10379 = vpop.f32.mrf.mxu0
        %v10380 = vadd.f32 0.0, %v10379
        %10381 = vmatmul.bf16.gmra.mxu0 %v10293
        %v10382 = vpop.f32.mrf.mxu0
        %v10383 = vadd.f32 0.0, %v10382
        %v10384 = vpop.f32.mrf.mxu0
        %v10385 = vadd.f32 0.0, %v10384
        %10386 = vdwg.mxu0
        %v10387 = vadd.f32 %v10102, %v10308
        %v10388 = vadd.f32 %v10103, %v10310
        %v10389 = vadd.f32 %v10104, %v10313
        %v10390 = vadd.f32 %v10105, %v10315
        %v10391 = vadd.f32 %v10106, %v10318
        %v10392 = vadd.f32 %v10107, %v10320
        %v10393 = vadd.f32 %v10108, %v10323
        %v10394 = vadd.f32 %v10109, %v10325
        %v10395 = vadd.f32 %v10110, %v10328
        %v10396 = vadd.f32 %v10111, %v10330
        %v10397 = vadd.f32 %v10112, %v10333
        %v10398 = vadd.f32 %v10113, %v10335
        %v10399 = vadd.f32 %v10114, %v10338
        %v10400 = vadd.f32 %v10115, %v10340
        %v10401 = vadd.f32 %v10116, %v10343
        %v10402 = vadd.f32 %v10117, %v10345
        %v10403 = vadd.f32 %v10118, %v10348
        %v10404 = vadd.f32 %v10119, %v10350
        %v10405 = vadd.f32 %v10120, %v10353
        %v10406 = vadd.f32 %v10121, %v10355
        %v10407 = vadd.f32 %v10122, %v10358
        %v10408 = vadd.f32 %v10123, %v10360
        %v10409 = vadd.f32 %v10124, %v10363
        %v10410 = vadd.f32 %v10125, %v10365
        %v10411 = vadd.f32 %v10126, %v10368
        %v10412 = vadd.f32 %v10127, %v10370
        %v10413 = vadd.f32 %v10128, %v10373
        %v10414 = vadd.f32 %v10129, %v10375
        %v10415 = vadd.f32 %v10130, %v10378
        %v10416 = vadd.f32 %v10131, %v10380
        %v10417 = vadd.f32 %v10132, %v10383
        %v10418 = vadd.f32 %v10133, %v10385
        %v10419 = vld [vmem:[%s712 + $0x1a0] sm:$0xf]
        %v10420 = vld [vmem:[%s712 + $0x1a4] sm:$0xf]
        %v10421 = vld [vmem:[%s712 + $0x1a8] sm:$0xf]
        %v10422 = vld [vmem:[%s712 + $0x1ac] sm:$0xf]
        %v10423 = vld [vmem:[%s712 + $0x1b0] sm:$0xf]
        %v10424 = vld [vmem:[%s712 + $0x1b4] sm:$0xf]
        %v10425 = vld [vmem:[%s712 + $0x1b8] sm:$0xf]
        %v10426 = vld [vmem:[%s712 + $0x1bc] sm:$0xf]
        %v10427 = vld [vmem:[%s712 + $0x1c0] sm:$0xf]
        %v10428 = vld [vmem:[%s712 + $0x1c4] sm:$0xf]
        %v10429 = vld [vmem:[%s712 + $0x1c8] sm:$0xf]
        %v10430 = vld [vmem:[%s712 + $0x1cc] sm:$0xf]
        %v10431 = vld [vmem:[%s712 + $0x1d0] sm:$0xf]
        %v10432 = vld [vmem:[%s712 + $0x1d4] sm:$0xf]
        %v10433 = vld [vmem:[%s712 + $0x1d8] sm:$0xf]
        %v10434 = vld [vmem:[%s712 + $0x1dc] sm:$0xf]
        %v10435 = vld [vmem:[%s712 + $0x1e0] sm:$0xf]
        %v10436 = vld [vmem:[%s712 + $0x1e4] sm:$0xf]
        %v10437 = vld [vmem:[%s712 + $0x1e8] sm:$0xf]
        %v10438 = vld [vmem:[%s712 + $0x1ec] sm:$0xf]
        %v10439 = vld [vmem:[%s712 + $0x1f0] sm:$0xf]
        %v10440 = vld [vmem:[%s712 + $0x1f4] sm:$0xf]
        %v10441 = vld [vmem:[%s712 + $0x1f8] sm:$0xf]
        %v10442 = vld [vmem:[%s712 + $0x1fc] sm:$0xf]
        %v10443 = vld [vmem:[%s712 + $0x200] sm:$0xf]
        %v10444 = vld [vmem:[%s712 + $0x204] sm:$0xf]
        %v10445 = vld [vmem:[%s712 + $0x208] sm:$0xf]
        %v10446 = vld [vmem:[%s712 + $0x20c] sm:$0xf]
        %v10447 = vld [vmem:[%s712 + $0x210] sm:$0xf]
        %v10448 = vld [vmem:[%s712 + $0x214] sm:$0xf]
        %v10449 = vld [vmem:[%s712 + $0x218] sm:$0xf]
        %v10450 = vld [vmem:[%s712 + $0x21c] sm:$0xf]
        %v10451 = vld [vmem:[%s2461] sm:$0x3]
        %v10484 = vunpack.c.l.b16 %v10419
        %v10485 = vunpack.c.l.b16 %v10420
        %v10486 = vunpack.c.l.b16 %v10421
        %v10487 = vunpack.c.l.b16 %v10422
        %v10488 = vunpack.c.l.b16 %v10423
        %v10489 = vunpack.c.l.b16 %v10424
        %v10490 = vunpack.c.l.b16 %v10425
        %v10491 = vunpack.c.l.b16 %v10426
        %v10492 = vunpack.c.l.b16 %v10427
        %v10493 = vunpack.c.l.b16 %v10428
        %v10494 = vunpack.c.l.b16 %v10429
        %v10495 = vunpack.c.l.b16 %v10430
        %v10496 = vunpack.c.l.b16 %v10431
        %v10497 = vunpack.c.l.b16 %v10432
        %v10498 = vunpack.c.l.b16 %v10433
        %v10499 = vunpack.c.l.b16 %v10434
        %v10500 = vunpack.c.l.b16 %v10435
        %v10501 = vunpack.c.l.b16 %v10436
        %v10502 = vunpack.c.l.b16 %v10437
        %v10503 = vunpack.c.l.b16 %v10438
        %v10504 = vunpack.c.l.b16 %v10439
        %v10505 = vunpack.c.l.b16 %v10440
        %v10506 = vunpack.c.l.b16 %v10441
        %v10507 = vunpack.c.l.b16 %v10442
        %v10508 = vunpack.c.l.b16 %v10443
        %v10509 = vunpack.c.l.b16 %v10444
        %v10510 = vunpack.c.l.b16 %v10445
        %v10511 = vunpack.c.l.b16 %v10446
        %v10512 = vunpack.c.l.b16 %v10447
        %v10513 = vunpack.c.l.b16 %v10448
        %v10514 = vunpack.c.l.b16 %v10449
        %v10515 = vunpack.c.l.b16 %v10450
        %v10516 = vpack.c.b16 %v10485, %v10484
        %v10517 = vpack.c.b16 %v10487, %v10486
        %v10518 = vpack.c.b16 %v10489, %v10488
        %v10519 = vpack.c.b16 %v10491, %v10490
        %v10520 = vpack.c.b16 %v10493, %v10492
        %v10521 = vpack.c.b16 %v10495, %v10494
        %v10522 = vpack.c.b16 %v10497, %v10496
        %v10523 = vpack.c.b16 %v10499, %v10498
        %v10524 = vpack.c.b16 %v10501, %v10500
        %v10525 = vpack.c.b16 %v10503, %v10502
        %v10526 = vpack.c.b16 %v10505, %v10504
        %v10527 = vpack.c.b16 %v10507, %v10506
        %v10528 = vpack.c.b16 %v10509, %v10508
        %v10529 = vpack.c.b16 %v10511, %v10510
        %v10530 = vpack.c.b16 %v10513, %v10512
        %v10531 = vpack.c.b16 %v10515, %v10514
        %v10533 = vsel %vm347, %v10516, 0
        %v10536 = vsel %vm347, %v10517, 0
        %v10539 = vsel %vm347, %v10518, 0
        %v10542 = vsel %vm347, %v10519, 0
        %v10545 = vsel %vm347, %v10520, 0
        %v10548 = vsel %vm347, %v10521, 0
        %v10551 = vsel %vm347, %v10522, 0
        %v10554 = vsel %vm347, %v10523, 0
        %v10557 = vsel %vm347, %v10524, 0
        %v10560 = vsel %vm347, %v10525, 0
        %v10563 = vsel %vm347, %v10526, 0
        %v10566 = vsel %vm347, %v10527, 0
        %v10569 = vsel %vm347, %v10528, 0
        %v10572 = vsel %vm347, %v10529, 0
        %v10575 = vsel %vm347, %v10530, 0
        %v10578 = vsel %vm347, %v10531, 0
        %v10581 = vand.u32 %v10451, %v399
        %10583 = vmatpush.bf16.msra.mxu0 0
        %10584 = vmatpush.bf16.msra.mxu0 0
        %10585 = vmatpush.bf16.msra.mxu0 0
        %10586 = vmatpush.bf16.msra.mxu0 0
        %10587 = vmatpush.bf16.msra.mxu0 0
        %10588 = vmatpush.bf16.msra.mxu0 0
        %10589 = vmatpush.bf16.msra.mxu0 0
        %10590 = vmatpush.bf16.msra.mxu0 %v10581
        %10591 = vmatmul.bf16.gmra.mxu0 %v10533
        %v10592 = vpop.f32.mrf.mxu0
        %v10593 = vadd.f32 0.0, %v10592
        %v10594 = vpop.f32.mrf.mxu0
        %v10595 = vadd.f32 0.0, %v10594
        %10596 = vmatmul.bf16.gmra.mxu0 %v10536
        %v10597 = vpop.f32.mrf.mxu0
        %v10598 = vadd.f32 0.0, %v10597
        %v10599 = vpop.f32.mrf.mxu0
        %v10600 = vadd.f32 0.0, %v10599
        %10601 = vmatmul.bf16.gmra.mxu0 %v10539
        %v10602 = vpop.f32.mrf.mxu0
        %v10603 = vadd.f32 0.0, %v10602
        %v10604 = vpop.f32.mrf.mxu0
        %v10605 = vadd.f32 0.0, %v10604
        %10606 = vmatmul.bf16.gmra.mxu0 %v10542
        %v10607 = vpop.f32.mrf.mxu0
        %v10608 = vadd.f32 0.0, %v10607
        %v10609 = vpop.f32.mrf.mxu0
        %v10610 = vadd.f32 0.0, %v10609
        %10611 = vmatmul.bf16.gmra.mxu0 %v10545
        %v10612 = vpop.f32.mrf.mxu0
        %v10613 = vadd.f32 0.0, %v10612
        %v10614 = vpop.f32.mrf.mxu0
        %v10615 = vadd.f32 0.0, %v10614
        %10616 = vmatmul.bf16.gmra.mxu0 %v10548
        %v10617 = vpop.f32.mrf.mxu0
        %v10618 = vadd.f32 0.0, %v10617
        %v10619 = vpop.f32.mrf.mxu0
        %v10620 = vadd.f32 0.0, %v10619
        %10621 = vmatmul.bf16.gmra.mxu0 %v10551
        %v10622 = vpop.f32.mrf.mxu0
        %v10623 = vadd.f32 0.0, %v10622
        %v10624 = vpop.f32.mrf.mxu0
        %v10625 = vadd.f32 0.0, %v10624
        %10626 = vmatmul.bf16.gmra.mxu0 %v10554
        %v10627 = vpop.f32.mrf.mxu0
        %v10628 = vadd.f32 0.0, %v10627
        %v10629 = vpop.f32.mrf.mxu0
        %v10630 = vadd.f32 0.0, %v10629
        %10631 = vmatmul.bf16.gmra.mxu0 %v10557
        %v10632 = vpop.f32.mrf.mxu0
        %v10633 = vadd.f32 0.0, %v10632
        %v10634 = vpop.f32.mrf.mxu0
        %v10635 = vadd.f32 0.0, %v10634
        %10636 = vmatmul.bf16.gmra.mxu0 %v10560
        %v10637 = vpop.f32.mrf.mxu0
        %v10638 = vadd.f32 0.0, %v10637
        %v10639 = vpop.f32.mrf.mxu0
        %v10640 = vadd.f32 0.0, %v10639
        %10641 = vmatmul.bf16.gmra.mxu0 %v10563
        %v10642 = vpop.f32.mrf.mxu0
        %v10643 = vadd.f32 0.0, %v10642
        %v10644 = vpop.f32.mrf.mxu0
        %v10645 = vadd.f32 0.0, %v10644
        %10646 = vmatmul.bf16.gmra.mxu0 %v10566
        %v10647 = vpop.f32.mrf.mxu0
        %v10648 = vadd.f32 0.0, %v10647
        %v10649 = vpop.f32.mrf.mxu0
        %v10650 = vadd.f32 0.0, %v10649
        %10651 = vmatmul.bf16.gmra.mxu0 %v10569
        %v10652 = vpop.f32.mrf.mxu0
        %v10653 = vadd.f32 0.0, %v10652
        %v10654 = vpop.f32.mrf.mxu0
        %v10655 = vadd.f32 0.0, %v10654
        %10656 = vmatmul.bf16.gmra.mxu0 %v10572
        %v10657 = vpop.f32.mrf.mxu0
        %v10658 = vadd.f32 0.0, %v10657
        %v10659 = vpop.f32.mrf.mxu0
        %v10660 = vadd.f32 0.0, %v10659
        %10661 = vmatmul.bf16.gmra.mxu0 %v10575
        %v10662 = vpop.f32.mrf.mxu0
        %v10663 = vadd.f32 0.0, %v10662
        %v10664 = vpop.f32.mrf.mxu0
        %v10665 = vadd.f32 0.0, %v10664
        %10666 = vmatmul.bf16.gmra.mxu0 %v10578
        %v10667 = vpop.f32.mrf.mxu0
        %v10668 = vadd.f32 0.0, %v10667
        %v10669 = vpop.f32.mrf.mxu0
        %v10670 = vadd.f32 0.0, %v10669
        %10671 = vdwg.mxu0
        %v10672 = vadd.f32 %v10387, %v10593
        %v10673 = vadd.f32 %v10388, %v10595
        %v10674 = vadd.f32 %v10389, %v10598
        %v10675 = vadd.f32 %v10390, %v10600
        %v10676 = vadd.f32 %v10391, %v10603
        %v10677 = vadd.f32 %v10392, %v10605
        %v10678 = vadd.f32 %v10393, %v10608
        %v10679 = vadd.f32 %v10394, %v10610
        %v10680 = vadd.f32 %v10395, %v10613
        %v10681 = vadd.f32 %v10396, %v10615
        %v10682 = vadd.f32 %v10397, %v10618
        %v10683 = vadd.f32 %v10398, %v10620
        %v10684 = vadd.f32 %v10399, %v10623
        %v10685 = vadd.f32 %v10400, %v10625
        %v10686 = vadd.f32 %v10401, %v10628
        %v10687 = vadd.f32 %v10402, %v10630
        %v10688 = vadd.f32 %v10403, %v10633
        %v10689 = vadd.f32 %v10404, %v10635
        %v10690 = vadd.f32 %v10405, %v10638
        %v10691 = vadd.f32 %v10406, %v10640
        %v10692 = vadd.f32 %v10407, %v10643
        %v10693 = vadd.f32 %v10408, %v10645
        %v10694 = vadd.f32 %v10409, %v10648
        %v10695 = vadd.f32 %v10410, %v10650
        %v10696 = vadd.f32 %v10411, %v10653
        %v10697 = vadd.f32 %v10412, %v10655
        %v10698 = vadd.f32 %v10413, %v10658
        %v10699 = vadd.f32 %v10414, %v10660
        %v10700 = vadd.f32 %v10415, %v10663
        %v10701 = vadd.f32 %v10416, %v10665
        %v10702 = vadd.f32 %v10417, %v10668
        %v10703 = vadd.f32 %v10418, %v10670
        %v10704 = vmul.f32 %v10672, %v2716
        %v10705 = vmul.f32 %v10673, %v2716
        %v10706 = vmul.f32 %v10674, %v2716
        %v10707 = vmul.f32 %v10675, %v2716
        %v10708 = vmul.f32 %v10676, %v2716
        %v10709 = vmul.f32 %v10677, %v2716
        %v10710 = vmul.f32 %v10678, %v2716
        %v10711 = vmul.f32 %v10679, %v2716
        %v10712 = vmul.f32 %v10680, %v2716
        %v10713 = vmul.f32 %v10681, %v2716
        %v10714 = vmul.f32 %v10682, %v2716
        %v10715 = vmul.f32 %v10683, %v2716
        %v10716 = vmul.f32 %v10684, %v2716
        %v10717 = vmul.f32 %v10685, %v2716
        %v10718 = vmul.f32 %v10686, %v2716
        %v10719 = vmul.f32 %v10687, %v2716
        %v10720 = vmul.f32 %v10688, %v2716
        %v10721 = vmul.f32 %v10689, %v2716
        %v10722 = vmul.f32 %v10690, %v2716
        %v10723 = vmul.f32 %v10691, %v2716
        %v10724 = vmul.f32 %v10692, %v2716
        %v10725 = vmul.f32 %v10693, %v2716
        %v10726 = vmul.f32 %v10694, %v2716
        %v10727 = vmul.f32 %v10695, %v2716
        %v10728 = vmul.f32 %v10696, %v2716
        %v10729 = vmul.f32 %v10697, %v2716
        %v10730 = vmul.f32 %v10698, %v2716
        %v10731 = vmul.f32 %v10699, %v2716
        %v10732 = vmul.f32 %v10700, %v2716
        %v10733 = vmul.f32 %v10701, %v2716
        %v10734 = vmul.f32 %v10702, %v2716
        %v10735 = vmul.f32 %v10703, %v2716
        %v10736 = vadd.f32 %v10704, %v2751
        %v10737 = vadd.f32 %v10705, %v2751
        %v10738 = vadd.f32 %v10706, %v2751
        %v10739 = vadd.f32 %v10707, %v2751
        %v10740 = vadd.f32 %v10708, %v2751
        %v10741 = vadd.f32 %v10709, %v2751
        %v10742 = vadd.f32 %v10710, %v2751
        %v10743 = vadd.f32 %v10711, %v2751
        %v10744 = vadd.f32 %v10712, %v2751
        %v10745 = vadd.f32 %v10713, %v2751
        %v10746 = vadd.f32 %v10714, %v2751
        %v10747 = vadd.f32 %v10715, %v2751
        %v10748 = vadd.f32 %v10716, %v2751
        %v10749 = vadd.f32 %v10717, %v2751
        %v10750 = vadd.f32 %v10718, %v2751
        %v10751 = vadd.f32 %v10719, %v2751
        %v10752 = vadd.f32 %v10720, %v2751
        %v10753 = vadd.f32 %v10721, %v2751
        %v10754 = vadd.f32 %v10722, %v2751
        %v10755 = vadd.f32 %v10723, %v2751
        %v10756 = vadd.f32 %v10724, %v2751
        %v10757 = vadd.f32 %v10725, %v2751
        %v10758 = vadd.f32 %v10726, %v2751
        %v10759 = vadd.f32 %v10727, %v2751
        %v10760 = vadd.f32 %v10728, %v2751
        %v10761 = vadd.f32 %v10729, %v2751
        %v10762 = vadd.f32 %v10730, %v2751
        %v10763 = vadd.f32 %v10731, %v2751
        %v10764 = vadd.f32 %v10732, %v2751
        %v10765 = vadd.f32 %v10733, %v2751
        %v10766 = vadd.f32 %v10734, %v2751
        %v10767 = vadd.f32 %v10735, %v2751
        %v10768 = vmax.f32 %v10736, 0.0
        %v10769 = vmax.f32 %v10737, 0.0
        %v10770 = vmax.f32 %v10738, 0.0
        %v10771 = vmax.f32 %v10739, 0.0
        %v10772 = vmax.f32 %v10740, 0.0
        %v10773 = vmax.f32 %v10741, 0.0
        %v10774 = vmax.f32 %v10742, 0.0
        %v10775 = vmax.f32 %v10743, 0.0
        %v10776 = vmax.f32 %v10744, 0.0
        %v10777 = vmax.f32 %v10745, 0.0
        %v10778 = vmax.f32 %v10746, 0.0
        %v10779 = vmax.f32 %v10747, 0.0
        %v10780 = vmax.f32 %v10748, 0.0
        %v10781 = vmax.f32 %v10749, 0.0
        %v10782 = vmax.f32 %v10750, 0.0
        %v10783 = vmax.f32 %v10751, 0.0
        %v10784 = vmax.f32 %v10752, 0.0
        %v10785 = vmax.f32 %v10753, 0.0
        %v10786 = vmax.f32 %v10754, 0.0
        %v10787 = vmax.f32 %v10755, 0.0
        %v10788 = vmax.f32 %v10756, 0.0
        %v10789 = vmax.f32 %v10757, 0.0
        %v10790 = vmax.f32 %v10758, 0.0
        %v10791 = vmax.f32 %v10759, 0.0
        %v10792 = vmax.f32 %v10760, 0.0
        %v10793 = vmax.f32 %v10761, 0.0
        %v10794 = vmax.f32 %v10762, 0.0
        %v10795 = vmax.f32 %v10763, 0.0
        %v10796 = vmax.f32 %v10764, 0.0
        %v10797 = vmax.f32 %v10765, 0.0
        %v10798 = vmax.f32 %v10766, 0.0
        %v10799 = vmax.f32 %v10767, 0.0
        %v10800 = vpack.c.bf16 %v10768, %v10768
        %v10801 = vpack.c.bf16 %v10769, %v10769
        %v10802 = vpack.c.bf16 %v10770, %v10770
        %v10803 = vpack.c.bf16 %v10771, %v10771
        %v10804 = vpack.c.bf16 %v10772, %v10772
        %v10805 = vpack.c.bf16 %v10773, %v10773
        %v10806 = vpack.c.bf16 %v10774, %v10774
        %v10807 = vpack.c.bf16 %v10775, %v10775
        %v10808 = vpack.c.bf16 %v10776, %v10776
        %v10809 = vpack.c.bf16 %v10777, %v10777
        %v10810 = vpack.c.bf16 %v10778, %v10778
        %v10811 = vpack.c.bf16 %v10779, %v10779
        %v10812 = vpack.c.bf16 %v10780, %v10780
        %v10813 = vpack.c.bf16 %v10781, %v10781
        %v10814 = vpack.c.bf16 %v10782, %v10782
        %v10815 = vpack.c.bf16 %v10783, %v10783
        %v10816 = vpack.c.bf16 %v10784, %v10784
        %v10817 = vpack.c.bf16 %v10785, %v10785
        %v10818 = vpack.c.bf16 %v10786, %v10786
        %v10819 = vpack.c.bf16 %v10787, %v10787
        %v10820 = vpack.c.bf16 %v10788, %v10788
        %v10821 = vpack.c.bf16 %v10789, %v10789
        %v10822 = vpack.c.bf16 %v10790, %v10790
        %v10823 = vpack.c.bf16 %v10791, %v10791
        %v10824 = vpack.c.bf16 %v10792, %v10792
        %v10825 = vpack.c.bf16 %v10793, %v10793
        %v10826 = vpack.c.bf16 %v10794, %v10794
        %v10827 = vpack.c.bf16 %v10795, %v10795
        %v10828 = vpack.c.bf16 %v10796, %v10796
        %v10829 = vpack.c.bf16 %v10797, %v10797
        %v10830 = vpack.c.bf16 %v10798, %v10798
        %v10831 = vpack.c.bf16 %v10799, %v10799
        %10832 = vst [vmem:[%s190 + $0x180] sm:$0xf] %v10800
        %10833 = vst [vmem:[%s190 + $0x184] sm:$0xf] %v10801
        %10834 = vst [vmem:[%s190 + $0x188] sm:$0xf] %v10802
        %10835 = vst [vmem:[%s190 + $0x18c] sm:$0xf] %v10803
        %10836 = vst [vmem:[%s190 + $0x190] sm:$0xf] %v10804
        %10837 = vst [vmem:[%s190 + $0x194] sm:$0xf] %v10805
        %10838 = vst [vmem:[%s190 + $0x198] sm:$0xf] %v10806
        %10839 = vst [vmem:[%s190 + $0x19c] sm:$0xf] %v10807
        %10840 = vst [vmem:[%s190 + $0x1a0] sm:$0xf] %v10808
        %10841 = vst [vmem:[%s190 + $0x1a4] sm:$0xf] %v10809
        %10842 = vst [vmem:[%s190 + $0x1a8] sm:$0xf] %v10810
        %10843 = vst [vmem:[%s190 + $0x1ac] sm:$0xf] %v10811
        %10844 = vst [vmem:[%s190 + $0x1b0] sm:$0xf] %v10812
        %10845 = vst [vmem:[%s190 + $0x1b4] sm:$0xf] %v10813
        %10846 = vst [vmem:[%s190 + $0x1b8] sm:$0xf] %v10814
        %10847 = vst [vmem:[%s190 + $0x1bc] sm:$0xf] %v10815
        %10848 = vst [vmem:[%s190 + $0x1c0] sm:$0xf] %v10816
        %10849 = vst [vmem:[%s190 + $0x1c4] sm:$0xf] %v10817
        %10850 = vst [vmem:[%s190 + $0x1c8] sm:$0xf] %v10818
        %10851 = vst [vmem:[%s190 + $0x1cc] sm:$0xf] %v10819
        %10852 = vst [vmem:[%s190 + $0x1d0] sm:$0xf] %v10820
        %10853 = vst [vmem:[%s190 + $0x1d4] sm:$0xf] %v10821
        %10854 = vst [vmem:[%s190 + $0x1d8] sm:$0xf] %v10822
        %10855 = vst [vmem:[%s190 + $0x1dc] sm:$0xf] %v10823
        %10856 = vst [vmem:[%s190 + $0x1e0] sm:$0xf] %v10824
        %10857 = vst [vmem:[%s190 + $0x1e4] sm:$0xf] %v10825
        %10858 = vst [vmem:[%s190 + $0x1e8] sm:$0xf] %v10826
        %10859 = vst [vmem:[%s190 + $0x1ec] sm:$0xf] %v10827
        %10860 = vst [vmem:[%s190 + $0x1f0] sm:$0xf] %v10828
        %10861 = vst [vmem:[%s190 + $0x1f4] sm:$0xf] %v10829
        %10862 = vst [vmem:[%s190 + $0x1f8] sm:$0xf] %v10830
        %10863 = vst [vmem:[%s190 + $0x1fc] sm:$0xf] %v10831
        %s10864 = sand.u32 %s115, 1
        %s10865 = scalar_lea.sflag [#allocation3], %s10864
        %s10866 = sand.u32 %s115, 1
        %s10867 = smul.addr %s10866, 512
        %s10868 = scalar_lea.vmem [#allocation2], %s10867
        // Predicated region
        $region37: #{tpu_custom_call.1} parent=35 // pred_check
          %p10869 = pneg %p125
        $region38: #{tpu_custom_call.1} parent=35 // pred_check_branch
          %10871 = sbr.rel (%p10869) target = $region40
        $region39: #{tpu_custom_call.1} parent=35 // pred_region
          %10873 = vsyncadd %s10865, 0
          %s10874 = smul.addr %s18, 128
          %s10875 = smul.addr %s10874, 4
          %s10876 = scalar_lea.hbm %s4, %s10875
          %s10877 = sshll.u32 %s10868, 4
          %s10878 = int_to_ptr.vmem [resolvable:$true] %s10877
          %s10879 = sshll.u32 %s10876, 4
          %s10880 = int_to_ptr.hbm [resolvable:$true] %s10879
          %10885 = dma.vmem_to_hbm [thread:$0]  %s10878, 8192, %s10880, %s10865, 64, 64, 4
        $region40: #{tpu_custom_call.1} parent=35 // pred_fallthru
          _
      $region36: #{tpu_custom_call.1} parent=5 // pred_fallthru
        _
      %p10886 = scmp.le.s32.totalorder 2, %s13
      // Predicated region
      $region41: #{tpu_custom_call.1} parent=5 // pred_check
        %p10887 = pneg %p10886
      $region42: #{tpu_custom_call.1} parent=5 // pred_check_branch
        %10889 = sbr.rel (%p10887) target = $region44
      $region43: #{tpu_custom_call.1} parent=5 // pred_region
        %s10890 = ssub.s32 %s13, 2
        // Predicated region
        $region45: #{tpu_custom_call.1} parent=43 // pred_check
          %p10891 = pneg %p131
        $region46: #{tpu_custom_call.1} parent=43 // pred_check_branch
          %10893 = sbr.rel (%p10891) target = $region48
        $region47: #{tpu_custom_call.1} parent=43 // pred_region
          %s10894 = sand.u32 %s116, 1
          %s10895 = scalar_lea.sflag [#allocation3], %s10894
          %s10896 = sand.u32 %s116, 1
          %s10897 = smul.addr %s10896, 512
          %s10898 = scalar_lea.vmem [#allocation2], %s10897
          %10900 = dma.done %s10895, 8192
        $region48: #{tpu_custom_call.1} parent=43 // pred_fallthru
          _
      $region44: #{tpu_custom_call.1} parent=5 // pred_fallthru
        _
    $region6: #{tpu_custom_call.1} parent=1 // loop_footer
      %s17 = sadd.s32 1, %s13
    $region7: #{tpu_custom_call.1} parent=1 // loop_footer_branch
      %12 = sbr.rel target = $region3
    $region8: #{tpu_custom_call.1} parent=1 // loop_exit
      _
    %10901 = vsyncpa [#allocation3], 1
    %s10902 = scalar_lea.sflag [#allocation3], 1
    %10903 = vsyncpa %s10902, 1

</llo_original>
